<compile_context>
chip_gen: v7x
topology: tpu7x:2x2x1
jax: 0.10.0
libtpu: 0.0.40
codegen_flags: <defaults>
</compile_context>

<pallas_src>
import functools
import math

import jax
import jax.numpy as jnp
from jax.experimental import pallas as pl
from jax.experimental.pallas import tpu as pltpu


NEG = -1e9  # additive mask value (plain Python float: must NOT be a traced constant)

# Row layout of the consolidated per-layer vector block (biases + LN params).
ROW_B_QKV = 0    # self-attn fused QKV bias   (width 3D)
ROW_B_SO = 1     # self-attn output bias      (width D)
ROW_B_CQ = 2     # cross-attn Q bias          (width D)
ROW_B_CKV = 3    # cross-attn fused KV bias   (width 2D)
ROW_B_CO = 4     # cross-attn output bias     (width D)
ROW_B_FC1 = 5    # fc1 bias                   (width F)
ROW_B_FC2 = 6    # fc2 bias                   (width D)
ROW_LN = 7       # 6 rows: self_g, self_b, cross_g, cross_b, final_g, final_b (width D)
N_VEC_ROWS = 13


# ----------------------------------------------------------------------------
# Fused decoder kernel: grid = (batch_tiles, layers); output block carries the activation
# ----------------------------------------------------------------------------

def _decoder_kernel(x0_ref, enc_ref, dpad_ref, epad_ref,
                    w_qkv_ref, w_so_ref, w_cq_ref, w_ckv_ref, w_co_ref,
                    w_fc1_ref, w_fc2_ref, vec_ref,
                    o_ref,
                    self_bias_ref, cross_bias_ref,
                    *, n_heads, eps):
    layer = pl.program_id(1)
    Bt, S, D = o_ref.shape
    S_enc = enc_ref.shape[1]
    H = n_heads
    Dh = D // H
    F = w_fc1_ref.shape[1]
    scale = 1.0 / math.sqrt(Dh)
    cdt = w_qkv_ref.dtype                      # MXU operand dtype (bf16 by default)

    def vrow(r, width):
        # (1, width) f32 row from the consolidated bias/LN block.
        return vec_ref[r:r + 1, 0:width]

    def layernorm(x, g, b):
        mu = jnp.mean(x, axis=-1, keepdims=True)
        var = jnp.mean(jnp.square(x - mu), axis=-1, keepdims=True)
        return (x - mu) * jax.lax.rsqrt(var + eps) * g + b

    def linear(x, w_ref, bias):
        w = w_ref[...]
        y = jnp.dot(x.astype(w.dtype), w, preferred_element_type=jnp.float32)
        return y + bias

    def mha(q_all, k_all, v_all, s_k, bias_of_batch):
        """q_all: (Bt*S, D); k_all/v_all: (Bt*s_k, D).
        Per-batch, per-head softmax attention.  Per-head contexts are concatenated
        into one (Bt*S, D) slab so the output projection is a single MXU matmul."""
        ctx_rows = []
        for b in range(Bt):
            qb = q_all[b * S:(b + 1) * S]
            kb = k_all[b * s_k:(b + 1) * s_k]
            vb = v_all[b * s_k:(b + 1) * s_k]
            bias = bias_of_batch(b)                               # (S or 1, s_k)
            heads = []
            for h in range(H):
                sl = slice(h * Dh, (h + 1) * Dh)
                s = jax.lax.dot_general(
                    qb[:, sl].astype(cdt), kb[:, sl].astype(cdt),
                    (((1,), (1,)), ((), ())),
                    preferred_element_type=jnp.float32)           # (S, s_k)
                s = s * scale + bias
                s = s - jnp.max(s, axis=-1, keepdims=True)
                p = jnp.exp(s)
                p = p * pl.reciprocal(jnp.sum(p, axis=-1, keepdims=True), approx=True)
                heads.append(jnp.dot(p.astype(cdt), vb[:, sl].astype(cdt),
                                     preferred_element_type=jnp.float32))   # (S, Dh)
            ctx_rows.append(jnp.concatenate(heads, axis=-1))      # (S, D)
        return jnp.concatenate(ctx_rows, axis=0)                  # (Bt*S, D)

    # ---- first step along the layer axis (per batch block): seed carried activation
    #      (x0 is already embedding-LayerNorm'ed in the XLA wrapper) and hoist the
    #      attention biases into VMEM scratch (reused by every layer). ----
    @pl.when(layer == 0)
    def _():
        o_ref[...] = x0_ref[...]
        qi = jax.lax.broadcasted_iota(jnp.int32, (S, S), 0)
        ki = jax.lax.broadcasted_iota(jnp.int32, (S, S), 1)
        causal = (ki <= qi)[None, :, :]                                      # (1, S, S)
        keep = jnp.logical_and(causal, dpad_ref[...] > 0.0)                  # (Bt, S, S)
        self_bias_ref[...] = jnp.where(keep, 0.0, NEG)
        cross_bias_ref[...] = jnp.where(epad_ref[...] > 0.0, 0.0, NEG)       # (Bt, 1, S_enc)

    x = o_ref[...].astype(jnp.float32).reshape(Bt * S, D)         # carried activation

    # ---- self attention: fused QKV matmul, single output-projection matmul ----
    qkv = linear(x, w_qkv_ref, vrow(ROW_B_QKV, 3 * D))            # (Bt*S, 3D)
    ctx = mha(qkv[:, 0:D], qkv[:, D:2 * D], qkv[:, 2 * D:3 * D], S,
              lambda b: self_bias_ref[b])
    a = linear(ctx, w_so_ref, vrow(ROW_B_SO, D))
    x = layernorm(x + a, vrow(ROW_LN + 0, D), vrow(ROW_LN + 1, D))

    # ---- cross attention: fused K/V projection on (bf16) encoder states ----
    q = linear(x, w_cq_ref, vrow(ROW_B_CQ, D))                    # (Bt*S, D)
    enc = enc_ref[...].reshape(Bt * S_enc, D)
    kv = linear(enc, w_ckv_ref, vrow(ROW_B_CKV, 2 * D))           # (Bt*S_enc, 2D)
    ctx = mha(q, kv[:, 0:D], kv[:, D:2 * D], S_enc,
              lambda b: cross_bias_ref[b])
    a = linear(ctx, w_co_ref, vrow(ROW_B_CO, D))
    x = layernorm(x + a, vrow(ROW_LN + 2, D), vrow(ROW_LN + 3, D))

    # ---- feed-forward: fc1 + exact-erf GELU (HF 'gelu') + fc2, residual + LN ----
    h = linear(x, w_fc1_ref, vrow(ROW_B_FC1, F))                  # (Bt*S, F)
    h = 0.5 * h * (1.0 + jax.lax.erf(h * (1.0 / math.sqrt(2.0))))
    h = linear(h, w_fc2_ref, vrow(ROW_B_FC2, D))                  # (Bt*S, D)
    x = layernorm(x + h, vrow(ROW_LN + 4, D), vrow(ROW_LN + 5, D))

    o_ref[...] = x.reshape(Bt, S, D).astype(o_ref.dtype)


# ----------------------------------------------------------------------------
# Parameters (per-layer weights stacked on a leading layer axis)
# ----------------------------------------------------------------------------

def init_params(key, vocab, max_pos, d_model, n_heads, ffn_dim, n_layers,
                matmul_dtype=jnp.bfloat16):
    D, F, L = d_model, ffn_dim, n_layers
    W = max(3 * D, F)

    def nrm(k, shape):
        return 0.02 * jax.random.normal(k, shape, jnp.float32)

    keys = iter(jax.random.split(key, 16))
    ones = jnp.ones((D,), jnp.float32)
    zeros = jnp.zeros((D,), jnp.float32)

    # Consolidated per-layer small vectors: 7 biases (zero-init) + 6 LN rows.
    vec = jnp.zeros((L, N_VEC_ROWS, W), jnp.float32)
    for r in (ROW_LN + 0, ROW_LN + 2, ROW_LN + 4):      # LN gammas = 1
        vec = vec.at[:, r, 0:D].set(1.0)

    return {
        "embed_tokens": nrm(next(keys), (vocab, D)),
        "embed_positions": nrm(next(keys), (max_pos + 2, D)),     # offset=2 table
        "ln_emb": jnp.stack([ones, zeros], axis=0),               # (2, D)
        # Matmul weights in matmul_dtype (bf16 by default: halves weight DMA, feeds
        # the bf16 MXU path); biases / LN params stay f32 inside `vec`.
        "w_self_qkv": nrm(next(keys), (L, D, 3 * D)).astype(matmul_dtype),
        "w_self_o": nrm(next(keys), (L, D, D)).astype(matmul_dtype),
        "w_cross_q": nrm(next(keys), (L, D, D)).astype(matmul_dtype),
        "w_cross_kv": nrm(next(keys), (L, D, 2 * D)).astype(matmul_dtype),
        "w_cross_o": nrm(next(keys), (L, D, D)).astype(matmul_dtype),
        "w_fc1": nrm(next(keys), (L, D, F)).astype(matmul_dtype),
        "w_fc2": nrm(next(keys), (L, F, D)).astype(matmul_dtype),
        "vec": vec,                                               # (L, 13, W)
    }


# ----------------------------------------------------------------------------
# Forward pass: XLA glue (gather + embedding LN) + one fused pallas_call
# ----------------------------------------------------------------------------

def modified_decoder_forward(params, input_ids, encoder_hidden_states,
                             attention_mask, decoder_attention_mask,
                             memory_output, n_heads, batch_tile=None, eps=1e-5):
    B, S = input_ids.shape
    D = params["embed_tokens"].shape[1]
    F = params["w_fc1"].shape[2]
    L = params["w_self_qkv"].shape[0]
    S_enc = encoder_hidden_states.shape[1]
    W = params["vec"].shape[2]
    mdt = params["w_self_qkv"].dtype

    if batch_tile is None:
        batch_tile = B      # fold the whole batch; use B//2 on v7x to keep both TCs busy
    assert B % batch_tile == 0
    nb = B // batch_tile

    # --- embeddings + embedding LayerNorm (gather / one-shot LN glue stays in XLA) ---
    x0 = jnp.take(params["embed_tokens"], input_ids, axis=0)      # (B, S, D); embed_scale = 1.0
    x0 = x0.at[:, 0, :].add(memory_output)                        # input_embeddings[:, 0, :] += memory_output
    x0 = x0 + params["embed_positions"][2:2 + S][None, :, :]      # learned pos. emb, offset = 2
    g, b = params["ln_emb"][0], params["ln_emb"][1]
    mu = jnp.mean(x0, axis=-1, keepdims=True)
    var = jnp.mean(jnp.square(x0 - mu), axis=-1, keepdims=True)
    x0 = (x0 - mu) * jax.lax.rsqrt(var + eps) * g + b

    enc = encoder_hidden_states.astype(mdt)   # pre-cast: halves encoder DMA, no per-layer cast
    dec_pad = decoder_attention_mask.astype(jnp.float32).reshape(B, 1, S)
    enc_pad = attention_mask.astype(jnp.float32).reshape(B, 1, S_enc)

    _bmap = lambda gb, l: (gb, 0, 0)   # per-batch-tile blocks (constant along the layer axis)
    _lmap = lambda gb, l: (l, 0, 0)    # per-layer weight blocks (pipelined over layers)

    in_specs = [
        pl.BlockSpec((batch_tile, S, D), _bmap),           # x0 (post embedding-LN)
        pl.BlockSpec((batch_tile, S_enc, D), _bmap),       # encoder hidden states (matmul dtype)
        pl.BlockSpec((batch_tile, 1, S), _bmap),           # decoder padding mask rows
        pl.BlockSpec((batch_tile, 1, S_enc), _bmap),       # encoder padding mask rows
        pl.BlockSpec((None, D, 3 * D), _lmap),             # w_self_qkv
        pl.BlockSpec((None, D, D), _lmap),                 # w_self_o
        pl.BlockSpec((None, D, D), _lmap),                 # w_cross_q
        pl.BlockSpec((None, D, 2 * D), _lmap),             # w_cross_kv
        pl.BlockSpec((None, D, D), _lmap),                 # w_cross_o
        pl.BlockSpec((None, D, F), _lmap),                 # w_fc1
        pl.BlockSpec((None, F, D), _lmap),                 # w_fc2
        pl.BlockSpec((None, N_VEC_ROWS, W), _lmap),        # consolidated biases + LN params
    ]

    kernel = functools.partial(_decoder_kernel, n_heads=n_heads, eps=eps)

    return pl.pallas_call(
        kernel,
        out_shape=jax.ShapeDtypeStruct((B, S, D), jnp.float32),
        grid_spec=pltpu.PrefetchScalarGridSpec(
            num_scalar_prefetch=0,
            grid=(nb, L),                                  # layer axis last (carried state)
            in_specs=in_specs,
            out_specs=pl.BlockSpec((batch_tile, S, D), _bmap),   # resident across the layer axis
            scratch_shapes=[
                pltpu.VMEM((batch_tile, S, S), jnp.float32),      # hoisted self-attn bias
                pltpu.VMEM((batch_tile, 1, S_enc), jnp.float32),  # hoisted cross-attn bias
            ]),
        compiler_params=pltpu.CompilerParams(
            dimension_semantics=("parallel", "arbitrary"),
            vmem_limit_bytes=64 * 1024 * 1024),
    )(x0, enc, dec_pad, enc_pad,
      params["w_self_qkv"], params["w_self_o"], params["w_cross_q"],
      params["w_cross_kv"], params["w_cross_o"],
      params["w_fc1"], params["w_fc2"], params["vec"])


# ----------------------------------------------------------------------------
# Demo
# ----------------------------------------------------------------------------

if __name__ == "__main__":
    # small, BART-like synthetic config
    B, S, S_enc = 2, 8, 8
    vocab, max_pos = 100, 32
    d_model, n_heads, ffn_dim, n_layers = 64, 4, 128, 2

    root = jax.random.PRNGKey(0)
    kp, k_ids, k_enc, k_mem = jax.random.split(root, 4)

    input_ids = jax.random.randint(k_ids, (B, S), 0, vocab, dtype=jnp.int32)
    encoder_hidden_states = jax.random.normal(k_enc, (B, S_enc, d_model), jnp.float32)
    memory_output = jax.random.normal(k_mem, (B, d_model), jnp.float32)

    # 1 = keep, 0 = pad (exercise both mask paths)
    attention_mask = jnp.ones((B, S_enc), jnp.int32).at[:, -1].set(0)
    decoder_attention_mask = jnp.ones((B, S), jnp.int32).at[:, -1].set(0)

    def run(matmul_dtype):
        params = init_params(kp, vocab, max_pos, d_model, n_heads, ffn_dim, n_layers,
                             matmul_dtype=matmul_dtype)
        fwd = jax.jit(functools.partial(modified_decoder_forward, n_heads=n_heads))
        out = fwd(params, input_ids, encoder_hidden_states,
                  attention_mask, decoder_attention_mask, memory_output)
        return jax.block_until_ready(out)

    try:
        out = run(jnp.bfloat16)     # bf16 MXU operands, f32 accumulation (fast path)
    except Exception:
        out = run(jnp.float32)      # fallback if this Mosaic build rejects tiny bf16 matmuls

    assert out.shape == (B, S, d_model), out.shape
    assert bool(jnp.all(jnp.isfinite(out)))
    print("KERNEL_OK")
</pallas_src>

<mosaic_0001>
module attributes {stable_mosaic.version = 11 : i64} {
  func.func @_decoder_kernel(%arg0: i32, %arg1: i32, %arg2: memref<2x8x64xf32, #tpu.memory_space<vmem>>, %arg3: memref<2x8x64xbf16, #tpu.memory_space<vmem>>, %arg4: memref<2x1x8xf32, #tpu.memory_space<vmem>>, %arg5: memref<2x1x8xf32, #tpu.memory_space<vmem>>, %arg6: memref<1x64x192xbf16, #tpu.memory_space<vmem>>, %arg7: memref<1x64x64xbf16, #tpu.memory_space<vmem>>, %arg8: memref<1x64x64xbf16, #tpu.memory_space<vmem>>, %arg9: memref<1x64x128xbf16, #tpu.memory_space<vmem>>, %arg10: memref<1x64x64xbf16, #tpu.memory_space<vmem>>, %arg11: memref<1x64x128xbf16, #tpu.memory_space<vmem>>, %arg12: memref<1x128x64xbf16, #tpu.memory_space<vmem>>, %arg13: memref<1x13x192xf32, #tpu.memory_space<vmem>>, %arg14: memref<2x8x64xf32, #tpu.memory_space<vmem>>, %arg15: memref<2x8x8xf32, #tpu.memory_space<vmem>>, %arg16: memref<2x1x8xf32, #tpu.memory_space<vmem>>) attributes {dimension_semantics = [#tpu.dimension_semantics<parallel>, #tpu.dimension_semantics<arbitrary>], iteration_bounds = array<i64: 1, 2>, scalar_prefetch = 0 : i64, scratch_operands = 2 : i64, tpu.core_type = #tpu.core_type<tc>, window_params = [{transform_indices = @transform_0, window_bounds = array<i64: 2, 8, 64>}, {transform_indices = @transform_1, window_bounds = array<i64: 2, 8, 64>}, {transform_indices = @transform_2, window_bounds = array<i64: 2, 1, 8>}, {transform_indices = @transform_3, window_bounds = array<i64: 2, 1, 8>}, {transform_indices = @transform_4, window_bounds = array<i64: 1, 64, 192>}, {transform_indices = @transform_5, window_bounds = array<i64: 1, 64, 64>}, {transform_indices = @transform_6, window_bounds = array<i64: 1, 64, 64>}, {transform_indices = @transform_7, window_bounds = array<i64: 1, 64, 128>}, {transform_indices = @transform_8, window_bounds = array<i64: 1, 64, 64>}, {transform_indices = @transform_9, window_bounds = array<i64: 1, 64, 128>}, {transform_indices = @transform_10, window_bounds = array<i64: 1, 128, 64>}, {transform_indices = @transform_11, window_bounds = array<i64: 1, 13, 192>}, {transform_indices = @transform_12, window_bounds = array<i64: 2, 8, 64>}]} {
    %c0_i32 = arith.constant 0 : i32
    %0 = arith.cmpi eq, %arg1, %c0_i32 : i32
    %1 = arith.extui %0 : i1 to i32
    %c0_i32_0 = arith.constant 0 : i32
    %2 = arith.cmpi ne, %1, %c0_i32_0 : i32
    scf.if %2 {
      %c0_173 = arith.constant 0 : index
      %c0_174 = arith.constant 0 : index
      %c0_175 = arith.constant 0 : index
      %544 = vector.load %arg2[%c0_173, %c0_174, %c0_175] : memref<2x8x64xf32, #tpu.memory_space<vmem>>, vector<2x8x64xf32>
      %c0_176 = arith.constant 0 : index
      %c0_177 = arith.constant 0 : index
      %c0_178 = arith.constant 0 : index
      %545 = vector.load %arg14[%c0_176, %c0_177, %c0_178] : memref<2x8x64xf32, #tpu.memory_space<vmem>>, vector<2x8x64xf32>
      tpu.vector_store %arg14[%c0_176, %c0_177, %c0_178], %544 {strides = array<i32>} : memref<2x8x64xf32, #tpu.memory_space<vmem>>, vector<2x8x64xf32>,
      %546 = tpu.iota {dimensions = array<i32: 0>} : vector<8x8xi32>
      %547 = tpu.iota {dimensions = array<i32: 1>} : vector<8x8xi32>
      %548 = arith.cmpi sle, %547, %546 : vector<8x8xi32>
      %549 = vector.shape_cast %548 : vector<8x8xi1> to vector<1x8x8xi1>
      %c0_179 = arith.constant 0 : index
      %c0_180 = arith.constant 0 : index
      %c0_181 = arith.constant 0 : index
      %550 = vector.load %arg4[%c0_179, %c0_180, %c0_181] : memref<2x1x8xf32, #tpu.memory_space<vmem>>, vector<2x1x8xf32>
      %cst_182 = arith.constant 0.000000e+00 : f32
      %551 = vector.broadcast %cst_182 : f32 to vector<2x1x8xf32>
      %552 = arith.cmpf ogt, %550, %551 : vector<2x1x8xf32>
      %553 = vector.broadcast %549 : vector<1x8x8xi1> to vector<2x8x8xi1>
      %554 = vector.broadcast %552 : vector<2x1x8xi1> to vector<2x8x8xi1>
      %555 = arith.andi %553, %554 : vector<2x8x8xi1>
      %cst_183 = arith.constant 0.000000e+00 : f32
      %cst_184 = arith.constant -1.000000e+09 : f32
      %556 = vector.broadcast %cst_183 : f32 to vector<2x8x8xf32>
      %557 = vector.broadcast %cst_184 : f32 to vector<2x8x8xf32>
      %558 = arith.select %555, %556, %557 : vector<2x8x8xi1>, vector<2x8x8xf32>
      %c0_185 = arith.constant 0 : index
      %c0_186 = arith.constant 0 : index
      %c0_187 = arith.constant 0 : index
      %559 = vector.load %arg15[%c0_185, %c0_186, %c0_187] : memref<2x8x8xf32, #tpu.memory_space<vmem>>, vector<2x8x8xf32>
      tpu.vector_store %arg15[%c0_185, %c0_186, %c0_187], %558 {strides = array<i32>} : memref<2x8x8xf32, #tpu.memory_space<vmem>>, vector<2x8x8xf32>,
      %c0_188 = arith.constant 0 : index
      %c0_189 = arith.constant 0 : index
      %c0_190 = arith.constant 0 : index
      %560 = vector.load %arg5[%c0_188, %c0_189, %c0_190] : memref<2x1x8xf32, #tpu.memory_space<vmem>>, vector<2x1x8xf32>
      %cst_191 = arith.constant 0.000000e+00 : f32
      %561 = vector.broadcast %cst_191 : f32 to vector<2x1x8xf32>
      %562 = arith.cmpf ogt, %560, %561 : vector<2x1x8xf32>
      %cst_192 = arith.constant 0.000000e+00 : f32
      %cst_193 = arith.constant -1.000000e+09 : f32
      %563 = vector.broadcast %cst_192 : f32 to vector<2x1x8xf32>
      %564 = vector.broadcast %cst_193 : f32 to vector<2x1x8xf32>
      %565 = arith.select %562, %563, %564 : vector<2x1x8xi1>, vector<2x1x8xf32>
      %c0_194 = arith.constant 0 : index
      %c0_195 = arith.constant 0 : index
      %c0_196 = arith.constant 0 : index
      %566 = vector.load %arg16[%c0_194, %c0_195, %c0_196] : memref<2x1x8xf32, #tpu.memory_space<vmem>>, vector<2x1x8xf32>
      tpu.vector_store %arg16[%c0_194, %c0_195, %c0_196], %565 {strides = array<i32>} : memref<2x1x8xf32, #tpu.memory_space<vmem>>, vector<2x1x8xf32>,
    } else {
    }
    %c0 = arith.constant 0 : index
    %c0_1 = arith.constant 0 : index
    %c0_2 = arith.constant 0 : index
    %3 = vector.load %arg14[%c0, %c0_1, %c0_2] : memref<2x8x64xf32, #tpu.memory_space<vmem>>, vector<2x8x64xf32>
    %4 = vector.shape_cast %3 : vector<2x8x64xf32> to vector<16x64xf32>
    %c0_3 = arith.constant 0 : index
    %c0_4 = arith.constant 0 : index
    %c0_5 = arith.constant 0 : index
    %5 = vector.load %arg13[%c0_3, %c0_4, %c0_5] : memref<1x13x192xf32, #tpu.memory_space<vmem>>, vector<1x1x192xf32>
    %6 = vector.shape_cast %5 : vector<1x1x192xf32> to vector<1x192xf32>
    %c0_6 = arith.constant 0 : index
    %c0_7 = arith.constant 0 : index
    %c0_8 = arith.constant 0 : index
    %7 = vector.load %arg6[%c0_6, %c0_7, %c0_8] : memref<1x64x192xbf16, #tpu.memory_space<vmem>>, vector<1x64x192xbf16>
    %8 = vector.shape_cast %7 : vector<1x64x192xbf16> to vector<64x192xbf16>
    %9 = arith.truncf %4 : vector<16x64xf32> to vector<16x64xbf16>
    %cst = arith.constant dense<0.000000e+00> : vector<16x192xf32>
    %10 = tpu.matmul %9, %8, %cst {dimension_numbers = #tpu.dot_dimension_numbers<[1], [0], [0], [1], [0, 0, 1, 1], [], []>} : vector<16x64xbf16>, vector<64x192xbf16>, vector<16x192xf32> -> vector<16x192xf32>
    %11 = vector.broadcast %6 : vector<1x192xf32> to vector<16x192xf32>
    %12 = arith.addf %10, %11 : vector<16x192xf32>
    %13 = vector.extract_strided_slice %12 {offsets = [0, 0], sizes = [16, 64], strides = [1, 1]} : vector<16x192xf32> to vector<16x64xf32>
    %14 = vector.extract_strided_slice %12 {offsets = [0, 64], sizes = [16, 64], strides = [1, 1]} : vector<16x192xf32> to vector<16x64xf32>
    %15 = vector.extract_strided_slice %12 {offsets = [0, 128], sizes = [16, 64], strides = [1, 1]} : vector<16x192xf32> to vector<16x64xf32>
    %16 = vector.extract_strided_slice %13 {offsets = [0, 0], sizes = [8, 64], strides = [1, 1]} : vector<16x64xf32> to vector<8x64xf32>
    %17 = vector.extract_strided_slice %14 {offsets = [0, 0], sizes = [8, 64], strides = [1, 1]} : vector<16x64xf32> to vector<8x64xf32>
    %18 = vector.extract_strided_slice %15 {offsets = [0, 0], sizes = [8, 64], strides = [1, 1]} : vector<16x64xf32> to vector<8x64xf32>
    %c0_9 = arith.constant 0 : index
    %c0_10 = arith.constant 0 : index
    %c0_11 = arith.constant 0 : index
    %19 = vector.load %arg15[%c0_9, %c0_10, %c0_11] : memref<2x8x8xf32, #tpu.memory_space<vmem>>, vector<1x8x8xf32>
    %20 = vector.shape_cast %19 : vector<1x8x8xf32> to vector<8x8xf32>
    %21 = vector.extract_strided_slice %16 {offsets = [0, 0], sizes = [8, 16], strides = [1, 1]} : vector<8x64xf32> to vector<8x16xf32>
    %22 = arith.truncf %21 : vector<8x16xf32> to vector<8x16xbf16>
    %23 = vector.extract_strided_slice %17 {offsets = [0, 0], sizes = [8, 16], strides = [1, 1]} : vector<8x64xf32> to vector<8x16xf32>
    %24 = arith.truncf %23 : vector<8x16xf32> to vector<8x16xbf16>
    %cst_12 = arith.constant dense<0.000000e+00> : vector<8x8xf32>
    %25 = tpu.matmul %22, %24, %cst_12 {dimension_numbers = #tpu.dot_dimension_numbers<[1], [1], [0], [0], [0, 0, 1, 0], [], []>} : vector<8x16xbf16>, vector<8x16xbf16>, vector<8x8xf32> -> vector<8x8xf32>
    %cst_13 = arith.constant 2.500000e-01 : f32
    %26 = vector.broadcast %cst_13 : f32 to vector<8x8xf32>
    %27 = arith.mulf %25, %26 : vector<8x8xf32>
    %28 = arith.addf %27, %20 : vector<8x8xf32>
    %cst_14 = arith.constant dense<0xFF800000> : vector<8xf32>
    %29 = vector.multi_reduction <maximumf>, %28, %cst_14 [1] : vector<8x8xf32> to vector<8xf32>
    %30 = vector.shape_cast %29 : vector<8xf32> to vector<8x1xf32>
    %31 = vector.broadcast %30 : vector<8x1xf32> to vector<8x8xf32>
    %32 = arith.subf %28, %31 : vector<8x8xf32>
    %33 = math.exp %32 : vector<8x8xf32>
    %cst_15 = arith.constant dense<0.000000e+00> : vector<8xf32>
    %34 = vector.multi_reduction <add>, %33, %cst_15 [1] : vector<8x8xf32> to vector<8xf32>
    %35 = vector.shape_cast %34 : vector<8xf32> to vector<8x1xf32>
    %36 = tpu.reciprocal %35 {approx = true} : vector<8x1xf32> -> vector<8x1xf32>
    %37 = vector.broadcast %36 : vector<8x1xf32> to vector<8x8xf32>
    %38 = arith.mulf %33, %37 : vector<8x8xf32>
    %39 = arith.truncf %38 : vector<8x8xf32> to vector<8x8xbf16>
    %40 = vector.extract_strided_slice %18 {offsets = [0, 0], sizes = [8, 16], strides = [1, 1]} : vector<8x64xf32> to vector<8x16xf32>
    %41 = arith.truncf %40 : vector<8x16xf32> to vector<8x16xbf16>
    %cst_16 = arith.constant dense<0.000000e+00> : vector<8x16xf32>
    %42 = tpu.matmul %39, %41, %cst_16 {dimension_numbers = #tpu.dot_dimension_numbers<[1], [0], [0], [1], [0, 0, 1, 1], [], []>} : vector<8x8xbf16>, vector<8x16xbf16>, vector<8x16xf32> -> vector<8x16xf32>
    %43 = vector.extract_strided_slice %16 {offsets = [0, 16], sizes = [8, 16], strides = [1, 1]} : vector<8x64xf32> to vector<8x16xf32>
    %44 = arith.truncf %43 : vector<8x16xf32> to vector<8x16xbf16>
    %45 = vector.extract_strided_slice %17 {offsets = [0, 16], sizes = [8, 16], strides = [1, 1]} : vector<8x64xf32> to vector<8x16xf32>
    %46 = arith.truncf %45 : vector<8x16xf32> to vector<8x16xbf16>
    %cst_17 = arith.constant dense<0.000000e+00> : vector<8x8xf32>
    %47 = tpu.matmul %44, %46, %cst_17 {dimension_numbers = #tpu.dot_dimension_numbers<[1], [1], [0], [0], [0, 0, 1, 0], [], []>} : vector<8x16xbf16>, vector<8x16xbf16>, vector<8x8xf32> -> vector<8x8xf32>
    %cst_18 = arith.constant 2.500000e-01 : f32
    %48 = vector.broadcast %cst_18 : f32 to vector<8x8xf32>
    %49 = arith.mulf %47, %48 : vector<8x8xf32>
    %50 = arith.addf %49, %20 : vector<8x8xf32>
    %cst_19 = arith.constant dense<0xFF800000> : vector<8xf32>
    %51 = vector.multi_reduction <maximumf>, %50, %cst_19 [1] : vector<8x8xf32> to vector<8xf32>
    %52 = vector.shape_cast %51 : vector<8xf32> to vector<8x1xf32>
    %53 = vector.broadcast %52 : vector<8x1xf32> to vector<8x8xf32>
    %54 = arith.subf %50, %53 : vector<8x8xf32>
    %55 = math.exp %54 : vector<8x8xf32>
    %cst_20 = arith.constant dense<0.000000e+00> : vector<8xf32>
    %56 = vector.multi_reduction <add>, %55, %cst_20 [1] : vector<8x8xf32> to vector<8xf32>
    %57 = vector.shape_cast %56 : vector<8xf32> to vector<8x1xf32>
    %58 = tpu.reciprocal %57 {approx = true} : vector<8x1xf32> -> vector<8x1xf32>
    %59 = vector.broadcast %58 : vector<8x1xf32> to vector<8x8xf32>
    %60 = arith.mulf %55, %59 : vector<8x8xf32>
    %61 = arith.truncf %60 : vector<8x8xf32> to vector<8x8xbf16>
    %62 = vector.extract_strided_slice %18 {offsets = [0, 16], sizes = [8, 16], strides = [1, 1]} : vector<8x64xf32> to vector<8x16xf32>
    %63 = arith.truncf %62 : vector<8x16xf32> to vector<8x16xbf16>
    %cst_21 = arith.constant dense<0.000000e+00> : vector<8x16xf32>
    %64 = tpu.matmul %61, %63, %cst_21 {dimension_numbers = #tpu.dot_dimension_numbers<[1], [0], [0], [1], [0, 0, 1, 1], [], []>} : vector<8x8xbf16>, vector<8x16xbf16>, vector<8x16xf32> -> vector<8x16xf32>
    %65 = vector.extract_strided_slice %16 {offsets = [0, 32], sizes = [8, 16], strides = [1, 1]} : vector<8x64xf32> to vector<8x16xf32>
    %66 = arith.truncf %65 : vector<8x16xf32> to vector<8x16xbf16>
    %67 = vector.extract_strided_slice %17 {offsets = [0, 32], sizes = [8, 16], strides = [1, 1]} : vector<8x64xf32> to vector<8x16xf32>
    %68 = arith.truncf %67 : vector<8x16xf32> to vector<8x16xbf16>
    %cst_22 = arith.constant dense<0.000000e+00> : vector<8x8xf32>
    %69 = tpu.matmul %66, %68, %cst_22 {dimension_numbers = #tpu.dot_dimension_numbers<[1], [1], [0], [0], [0, 0, 1, 0], [], []>} : vector<8x16xbf16>, vector<8x16xbf16>, vector<8x8xf32> -> vector<8x8xf32>
    %cst_23 = arith.constant 2.500000e-01 : f32
    %70 = vector.broadcast %cst_23 : f32 to vector<8x8xf32>
    %71 = arith.mulf %69, %70 : vector<8x8xf32>
    %72 = arith.addf %71, %20 : vector<8x8xf32>
    %cst_24 = arith.constant dense<0xFF800000> : vector<8xf32>
    %73 = vector.multi_reduction <maximumf>, %72, %cst_24 [1] : vector<8x8xf32> to vector<8xf32>
    %74 = vector.shape_cast %73 : vector<8xf32> to vector<8x1xf32>
    %75 = vector.broadcast %74 : vector<8x1xf32> to vector<8x8xf32>
    %76 = arith.subf %72, %75 : vector<8x8xf32>
    %77 = math.exp %76 : vector<8x8xf32>
    %cst_25 = arith.constant dense<0.000000e+00> : vector<8xf32>
    %78 = vector.multi_reduction <add>, %77, %cst_25 [1] : vector<8x8xf32> to vector<8xf32>
    %79 = vector.shape_cast %78 : vector<8xf32> to vector<8x1xf32>
    %80 = tpu.reciprocal %79 {approx = true} : vector<8x1xf32> -> vector<8x1xf32>
    %81 = vector.broadcast %80 : vector<8x1xf32> to vector<8x8xf32>
    %82 = arith.mulf %77, %81 : vector<8x8xf32>
    %83 = arith.truncf %82 : vector<8x8xf32> to vector<8x8xbf16>
    %84 = vector.extract_strided_slice %18 {offsets = [0, 32], sizes = [8, 16], strides = [1, 1]} : vector<8x64xf32> to vector<8x16xf32>
    %85 = arith.truncf %84 : vector<8x16xf32> to vector<8x16xbf16>
    %cst_26 = arith.constant dense<0.000000e+00> : vector<8x16xf32>
    %86 = tpu.matmul %83, %85, %cst_26 {dimension_numbers = #tpu.dot_dimension_numbers<[1], [0], [0], [1], [0, 0, 1, 1], [], []>} : vector<8x8xbf16>, vector<8x16xbf16>, vector<8x16xf32> -> vector<8x16xf32>
    %87 = vector.extract_strided_slice %16 {offsets = [0, 48], sizes = [8, 16], strides = [1, 1]} : vector<8x64xf32> to vector<8x16xf32>
    %88 = arith.truncf %87 : vector<8x16xf32> to vector<8x16xbf16>
    %89 = vector.extract_strided_slice %17 {offsets = [0, 48], sizes = [8, 16], strides = [1, 1]} : vector<8x64xf32> to vector<8x16xf32>
    %90 = arith.truncf %89 : vector<8x16xf32> to vector<8x16xbf16>
    %cst_27 = arith.constant dense<0.000000e+00> : vector<8x8xf32>
    %91 = tpu.matmul %88, %90, %cst_27 {dimension_numbers = #tpu.dot_dimension_numbers<[1], [1], [0], [0], [0, 0, 1, 0], [], []>} : vector<8x16xbf16>, vector<8x16xbf16>, vector<8x8xf32> -> vector<8x8xf32>
    %cst_28 = arith.constant 2.500000e-01 : f32
    %92 = vector.broadcast %cst_28 : f32 to vector<8x8xf32>
    %93 = arith.mulf %91, %92 : vector<8x8xf32>
    %94 = arith.addf %93, %20 : vector<8x8xf32>
    %cst_29 = arith.constant dense<0xFF800000> : vector<8xf32>
    %95 = vector.multi_reduction <maximumf>, %94, %cst_29 [1] : vector<8x8xf32> to vector<8xf32>
    %96 = vector.shape_cast %95 : vector<8xf32> to vector<8x1xf32>
    %97 = vector.broadcast %96 : vector<8x1xf32> to vector<8x8xf32>
    %98 = arith.subf %94, %97 : vector<8x8xf32>
    %99 = math.exp %98 : vector<8x8xf32>
    %cst_30 = arith.constant dense<0.000000e+00> : vector<8xf32>
    %100 = vector.multi_reduction <add>, %99, %cst_30 [1] : vector<8x8xf32> to vector<8xf32>
    %101 = vector.shape_cast %100 : vector<8xf32> to vector<8x1xf32>
    %102 = tpu.reciprocal %101 {approx = true} : vector<8x1xf32> -> vector<8x1xf32>
    %103 = vector.broadcast %102 : vector<8x1xf32> to vector<8x8xf32>
    %104 = arith.mulf %99, %103 : vector<8x8xf32>
    %105 = arith.truncf %104 : vector<8x8xf32> to vector<8x8xbf16>
    %106 = vector.extract_strided_slice %18 {offsets = [0, 48], sizes = [8, 16], strides = [1, 1]} : vector<8x64xf32> to vector<8x16xf32>
    %107 = arith.truncf %106 : vector<8x16xf32> to vector<8x16xbf16>
    %cst_31 = arith.constant dense<0.000000e+00> : vector<8x16xf32>
    %108 = tpu.matmul %105, %107, %cst_31 {dimension_numbers = #tpu.dot_dimension_numbers<[1], [0], [0], [1], [0, 0, 1, 1], [], []>} : vector<8x8xbf16>, vector<8x16xbf16>, vector<8x16xf32> -> vector<8x16xf32>
    %109 = tpu.concatenate %42, %64, %86, %108 in 1 : vector<8x16xf32>, vector<8x16xf32>, vector<8x16xf32>, vector<8x16xf32> -> vector<8x64xf32>
    %110 = vector.extract_strided_slice %13 {offsets = [8, 0], sizes = [8, 64], strides = [1, 1]} : vector<16x64xf32> to vector<8x64xf32>
    %111 = vector.extract_strided_slice %14 {offsets = [8, 0], sizes = [8, 64], strides = [1, 1]} : vector<16x64xf32> to vector<8x64xf32>
    %112 = vector.extract_strided_slice %15 {offsets = [8, 0], sizes = [8, 64], strides = [1, 1]} : vector<16x64xf32> to vector<8x64xf32>
    %c1 = arith.constant 1 : index
    %c0_32 = arith.constant 0 : index
    %c0_33 = arith.constant 0 : index
    %113 = vector.load %arg15[%c1, %c0_32, %c0_33] : memref<2x8x8xf32, #tpu.memory_space<vmem>>, vector<1x8x8xf32>
    %114 = vector.shape_cast %113 : vector<1x8x8xf32> to vector<8x8xf32>
    %115 = vector.extract_strided_slice %110 {offsets = [0, 0], sizes = [8, 16], strides = [1, 1]} : vector<8x64xf32> to vector<8x16xf32>
    %116 = arith.truncf %115 : vector<8x16xf32> to vector<8x16xbf16>
    %117 = vector.extract_strided_slice %111 {offsets = [0, 0], sizes = [8, 16], strides = [1, 1]} : vector<8x64xf32> to vector<8x16xf32>
    %118 = arith.truncf %117 : vector<8x16xf32> to vector<8x16xbf16>
    %cst_34 = arith.constant dense<0.000000e+00> : vector<8x8xf32>
    %119 = tpu.matmul %116, %118, %cst_34 {dimension_numbers = #tpu.dot_dimension_numbers<[1], [1], [0], [0], [0, 0, 1, 0], [], []>} : vector<8x16xbf16>, vector<8x16xbf16>, vector<8x8xf32> -> vector<8x8xf32>
    %cst_35 = arith.constant 2.500000e-01 : f32
    %120 = vector.broadcast %cst_35 : f32 to vector<8x8xf32>
    %121 = arith.mulf %119, %120 : vector<8x8xf32>
    %122 = arith.addf %121, %114 : vector<8x8xf32>
    %cst_36 = arith.constant dense<0xFF800000> : vector<8xf32>
    %123 = vector.multi_reduction <maximumf>, %122, %cst_36 [1] : vector<8x8xf32> to vector<8xf32>
    %124 = vector.shape_cast %123 : vector<8xf32> to vector<8x1xf32>
    %125 = vector.broadcast %124 : vector<8x1xf32> to vector<8x8xf32>
    %126 = arith.subf %122, %125 : vector<8x8xf32>
    %127 = math.exp %126 : vector<8x8xf32>
    %cst_37 = arith.constant dense<0.000000e+00> : vector<8xf32>
    %128 = vector.multi_reduction <add>, %127, %cst_37 [1] : vector<8x8xf32> to vector<8xf32>
    %129 = vector.shape_cast %128 : vector<8xf32> to vector<8x1xf32>
    %130 = tpu.reciprocal %129 {approx = true} : vector<8x1xf32> -> vector<8x1xf32>
    %131 = vector.broadcast %130 : vector<8x1xf32> to vector<8x8xf32>
    %132 = arith.mulf %127, %131 : vector<8x8xf32>
    %133 = arith.truncf %132 : vector<8x8xf32> to vector<8x8xbf16>
    %134 = vector.extract_strided_slice %112 {offsets = [0, 0], sizes = [8, 16], strides = [1, 1]} : vector<8x64xf32> to vector<8x16xf32>
    %135 = arith.truncf %134 : vector<8x16xf32> to vector<8x16xbf16>
    %cst_38 = arith.constant dense<0.000000e+00> : vector<8x16xf32>
    %136 = tpu.matmul %133, %135, %cst_38 {dimension_numbers = #tpu.dot_dimension_numbers<[1], [0], [0], [1], [0, 0, 1, 1], [], []>} : vector<8x8xbf16>, vector<8x16xbf16>, vector<8x16xf32> -> vector<8x16xf32>
    %137 = vector.extract_strided_slice %110 {offsets = [0, 16], sizes = [8, 16], strides = [1, 1]} : vector<8x64xf32> to vector<8x16xf32>
    %138 = arith.truncf %137 : vector<8x16xf32> to vector<8x16xbf16>
    %139 = vector.extract_strided_slice %111 {offsets = [0, 16], sizes = [8, 16], strides = [1, 1]} : vector<8x64xf32> to vector<8x16xf32>
    %140 = arith.truncf %139 : vector<8x16xf32> to vector<8x16xbf16>
    %cst_39 = arith.constant dense<0.000000e+00> : vector<8x8xf32>
    %141 = tpu.matmul %138, %140, %cst_39 {dimension_numbers = #tpu.dot_dimension_numbers<[1], [1], [0], [0], [0, 0, 1, 0], [], []>} : vector<8x16xbf16>, vector<8x16xbf16>, vector<8x8xf32> -> vector<8x8xf32>
    %cst_40 = arith.constant 2.500000e-01 : f32
    %142 = vector.broadcast %cst_40 : f32 to vector<8x8xf32>
    %143 = arith.mulf %141, %142 : vector<8x8xf32>
    %144 = arith.addf %143, %114 : vector<8x8xf32>
    %cst_41 = arith.constant dense<0xFF800000> : vector<8xf32>
    %145 = vector.multi_reduction <maximumf>, %144, %cst_41 [1] : vector<8x8xf32> to vector<8xf32>
    %146 = vector.shape_cast %145 : vector<8xf32> to vector<8x1xf32>
    %147 = vector.broadcast %146 : vector<8x1xf32> to vector<8x8xf32>
    %148 = arith.subf %144, %147 : vector<8x8xf32>
    %149 = math.exp %148 : vector<8x8xf32>
    %cst_42 = arith.constant dense<0.000000e+00> : vector<8xf32>
    %150 = vector.multi_reduction <add>, %149, %cst_42 [1] : vector<8x8xf32> to vector<8xf32>
    %151 = vector.shape_cast %150 : vector<8xf32> to vector<8x1xf32>
    %152 = tpu.reciprocal %151 {approx = true} : vector<8x1xf32> -> vector<8x1xf32>
    %153 = vector.broadcast %152 : vector<8x1xf32> to vector<8x8xf32>
    %154 = arith.mulf %149, %153 : vector<8x8xf32>
    %155 = arith.truncf %154 : vector<8x8xf32> to vector<8x8xbf16>
    %156 = vector.extract_strided_slice %112 {offsets = [0, 16], sizes = [8, 16], strides = [1, 1]} : vector<8x64xf32> to vector<8x16xf32>
    %157 = arith.truncf %156 : vector<8x16xf32> to vector<8x16xbf16>
    %cst_43 = arith.constant dense<0.000000e+00> : vector<8x16xf32>
    %158 = tpu.matmul %155, %157, %cst_43 {dimension_numbers = #tpu.dot_dimension_numbers<[1], [0], [0], [1], [0, 0, 1, 1], [], []>} : vector<8x8xbf16>, vector<8x16xbf16>, vector<8x16xf32> -> vector<8x16xf32>
    %159 = vector.extract_strided_slice %110 {offsets = [0, 32], sizes = [8, 16], strides = [1, 1]} : vector<8x64xf32> to vector<8x16xf32>
    %160 = arith.truncf %159 : vector<8x16xf32> to vector<8x16xbf16>
    %161 = vector.extract_strided_slice %111 {offsets = [0, 32], sizes = [8, 16], strides = [1, 1]} : vector<8x64xf32> to vector<8x16xf32>
    %162 = arith.truncf %161 : vector<8x16xf32> to vector<8x16xbf16>
    %cst_44 = arith.constant dense<0.000000e+00> : vector<8x8xf32>
    %163 = tpu.matmul %160, %162, %cst_44 {dimension_numbers = #tpu.dot_dimension_numbers<[1], [1], [0], [0], [0, 0, 1, 0], [], []>} : vector<8x16xbf16>, vector<8x16xbf16>, vector<8x8xf32> -> vector<8x8xf32>
    %cst_45 = arith.constant 2.500000e-01 : f32
    %164 = vector.broadcast %cst_45 : f32 to vector<8x8xf32>
    %165 = arith.mulf %163, %164 : vector<8x8xf32>
    %166 = arith.addf %165, %114 : vector<8x8xf32>
    %cst_46 = arith.constant dense<0xFF800000> : vector<8xf32>
    %167 = vector.multi_reduction <maximumf>, %166, %cst_46 [1] : vector<8x8xf32> to vector<8xf32>
    %168 = vector.shape_cast %167 : vector<8xf32> to vector<8x1xf32>
    %169 = vector.broadcast %168 : vector<8x1xf32> to vector<8x8xf32>
    %170 = arith.subf %166, %169 : vector<8x8xf32>
    %171 = math.exp %170 : vector<8x8xf32>
    %cst_47 = arith.constant dense<0.000000e+00> : vector<8xf32>
    %172 = vector.multi_reduction <add>, %171, %cst_47 [1] : vector<8x8xf32> to vector<8xf32>
    %173 = vector.shape_cast %172 : vector<8xf32> to vector<8x1xf32>
    %174 = tpu.reciprocal %173 {approx = true} : vector<8x1xf32> -> vector<8x1xf32>
    %175 = vector.broadcast %174 : vector<8x1xf32> to vector<8x8xf32>
    %176 = arith.mulf %171, %175 : vector<8x8xf32>
    %177 = arith.truncf %176 : vector<8x8xf32> to vector<8x8xbf16>
    %178 = vector.extract_strided_slice %112 {offsets = [0, 32], sizes = [8, 16], strides = [1, 1]} : vector<8x64xf32> to vector<8x16xf32>
    %179 = arith.truncf %178 : vector<8x16xf32> to vector<8x16xbf16>
    %cst_48 = arith.constant dense<0.000000e+00> : vector<8x16xf32>
    %180 = tpu.matmul %177, %179, %cst_48 {dimension_numbers = #tpu.dot_dimension_numbers<[1], [0], [0], [1], [0, 0, 1, 1], [], []>} : vector<8x8xbf16>, vector<8x16xbf16>, vector<8x16xf32> -> vector<8x16xf32>
    %181 = vector.extract_strided_slice %110 {offsets = [0, 48], sizes = [8, 16], strides = [1, 1]} : vector<8x64xf32> to vector<8x16xf32>
    %182 = arith.truncf %181 : vector<8x16xf32> to vector<8x16xbf16>
    %183 = vector.extract_strided_slice %111 {offsets = [0, 48], sizes = [8, 16], strides = [1, 1]} : vector<8x64xf32> to vector<8x16xf32>
    %184 = arith.truncf %183 : vector<8x16xf32> to vector<8x16xbf16>
    %cst_49 = arith.constant dense<0.000000e+00> : vector<8x8xf32>
    %185 = tpu.matmul %182, %184, %cst_49 {dimension_numbers = #tpu.dot_dimension_numbers<[1], [1], [0], [0], [0, 0, 1, 0], [], []>} : vector<8x16xbf16>, vector<8x16xbf16>, vector<8x8xf32> -> vector<8x8xf32>
    %cst_50 = arith.constant 2.500000e-01 : f32
    %186 = vector.broadcast %cst_50 : f32 to vector<8x8xf32>
    %187 = arith.mulf %185, %186 : vector<8x8xf32>
    %188 = arith.addf %187, %114 : vector<8x8xf32>
    %cst_51 = arith.constant dense<0xFF800000> : vector<8xf32>
    %189 = vector.multi_reduction <maximumf>, %188, %cst_51 [1] : vector<8x8xf32> to vector<8xf32>
    %190 = vector.shape_cast %189 : vector<8xf32> to vector<8x1xf32>
    %191 = vector.broadcast %190 : vector<8x1xf32> to vector<8x8xf32>
    %192 = arith.subf %188, %191 : vector<8x8xf32>
    %193 = math.exp %192 : vector<8x8xf32>
    %cst_52 = arith.constant dense<0.000000e+00> : vector<8xf32>
    %194 = vector.multi_reduction <add>, %193, %cst_52 [1] : vector<8x8xf32> to vector<8xf32>
    %195 = vector.shape_cast %194 : vector<8xf32> to vector<8x1xf32>
    %196 = tpu.reciprocal %195 {approx = true} : vector<8x1xf32> -> vector<8x1xf32>
    %197 = vector.broadcast %196 : vector<8x1xf32> to vector<8x8xf32>
    %198 = arith.mulf %193, %197 : vector<8x8xf32>
    %199 = arith.truncf %198 : vector<8x8xf32> to vector<8x8xbf16>
    %200 = vector.extract_strided_slice %112 {offsets = [0, 48], sizes = [8, 16], strides = [1, 1]} : vector<8x64xf32> to vector<8x16xf32>
    %201 = arith.truncf %200 : vector<8x16xf32> to vector<8x16xbf16>
    %cst_53 = arith.constant dense<0.000000e+00> : vector<8x16xf32>
    %202 = tpu.matmul %199, %201, %cst_53 {dimension_numbers = #tpu.dot_dimension_numbers<[1], [0], [0], [1], [0, 0, 1, 1], [], []>} : vector<8x8xbf16>, vector<8x16xbf16>, vector<8x16xf32> -> vector<8x16xf32>
    %203 = tpu.concatenate %136, %158, %180, %202 in 1 : vector<8x16xf32>, vector<8x16xf32>, vector<8x16xf32>, vector<8x16xf32> -> vector<8x64xf32>
    %204 = tpu.concatenate %109, %203 in 0 : vector<8x64xf32>, vector<8x64xf32> -> vector<16x64xf32>
    %c0_54 = arith.constant 0 : index
    %c1_55 = arith.constant 1 : index
    %c0_56 = arith.constant 0 : index
    %205 = vector.load %arg13[%c0_54, %c1_55, %c0_56] : memref<1x13x192xf32, #tpu.memory_space<vmem>>, vector<1x1x64xf32>
    %206 = vector.shape_cast %205 : vector<1x1x64xf32> to vector<1x64xf32>
    %c0_57 = arith.constant 0 : index
    %c0_58 = arith.constant 0 : index
    %c0_59 = arith.constant 0 : index
    %207 = vector.load %arg7[%c0_57, %c0_58, %c0_59] : memref<1x64x64xbf16, #tpu.memory_space<vmem>>, vector<1x64x64xbf16>
    %208 = vector.shape_cast %207 : vector<1x64x64xbf16> to vector<64x64xbf16>
    %209 = arith.truncf %204 : vector<16x64xf32> to vector<16x64xbf16>
    %cst_60 = arith.constant dense<0.000000e+00> : vector<16x64xf32>
    %210 = tpu.matmul %209, %208, %cst_60 {dimension_numbers = #tpu.dot_dimension_numbers<[1], [0], [0], [1], [0, 0, 1, 1], [], []>} : vector<16x64xbf16>, vector<64x64xbf16>, vector<16x64xf32> -> vector<16x64xf32>
    %211 = vector.broadcast %206 : vector<1x64xf32> to vector<16x64xf32>
    %212 = arith.addf %210, %211 : vector<16x64xf32>
    %213 = arith.addf %4, %212 : vector<16x64xf32>
    %c0_61 = arith.constant 0 : index
    %c7 = arith.constant 7 : index
    %c0_62 = arith.constant 0 : index
    %214 = vector.load %arg13[%c0_61, %c7, %c0_62] : memref<1x13x192xf32, #tpu.memory_space<vmem>>, vector<1x1x64xf32>
    %215 = vector.shape_cast %214 : vector<1x1x64xf32> to vector<1x64xf32>
    %c0_63 = arith.constant 0 : index
    %c8 = arith.constant 8 : index
    %c0_64 = arith.constant 0 : index
    %216 = vector.load %arg13[%c0_63, %c8, %c0_64] : memref<1x13x192xf32, #tpu.memory_space<vmem>>, vector<1x1x64xf32>
    %217 = vector.shape_cast %216 : vector<1x1x64xf32> to vector<1x64xf32>
    %cst_65 = arith.constant dense<0.000000e+00> : vector<16xf32>
    %218 = vector.multi_reduction <add>, %213, %cst_65 [1] : vector<16x64xf32> to vector<16xf32>
    %219 = vector.shape_cast %218 : vector<16xf32> to vector<16x1xf32>
    %cst_66 = arith.constant 6.400000e+01 : f32
    %220 = vector.broadcast %cst_66 : f32 to vector<16x1xf32>
    %221 = arith.divf %219, %220 : vector<16x1xf32>
    %222 = vector.broadcast %221 : vector<16x1xf32> to vector<16x64xf32>
    %223 = arith.subf %213, %222 : vector<16x64xf32>
    %224 = arith.mulf %223, %223 : vector<16x64xf32>
    %cst_67 = arith.constant dense<0.000000e+00> : vector<16xf32>
    %225 = vector.multi_reduction <add>, %224, %cst_67 [1] : vector<16x64xf32> to vector<16xf32>
    %226 = vector.shape_cast %225 : vector<16xf32> to vector<16x1xf32>
    %cst_68 = arith.constant 6.400000e+01 : f32
    %227 = vector.broadcast %cst_68 : f32 to vector<16x1xf32>
    %228 = arith.divf %226, %227 : vector<16x1xf32>
    %229 = vector.broadcast %221 : vector<16x1xf32> to vector<16x64xf32>
    %230 = arith.subf %213, %229 : vector<16x64xf32>
    %cst_69 = arith.constant 9.99999974E-6 : f32
    %231 = vector.broadcast %cst_69 : f32 to vector<16x1xf32>
    %232 = arith.addf %228, %231 : vector<16x1xf32>
    %233 = math.rsqrt %232 : vector<16x1xf32>
    %234 = vector.broadcast %233 : vector<16x1xf32> to vector<16x64xf32>
    %235 = arith.mulf %230, %234 : vector<16x64xf32>
    %236 = vector.broadcast %215 : vector<1x64xf32> to vector<16x64xf32>
    %237 = arith.mulf %235, %236 : vector<16x64xf32>
    %238 = vector.broadcast %217 : vector<1x64xf32> to vector<16x64xf32>
    %239 = arith.addf %237, %238 : vector<16x64xf32>
    %c0_70 = arith.constant 0 : index
    %c2 = arith.constant 2 : index
    %c0_71 = arith.constant 0 : index
    %240 = vector.load %arg13[%c0_70, %c2, %c0_71] : memref<1x13x192xf32, #tpu.memory_space<vmem>>, vector<1x1x64xf32>
    %241 = vector.shape_cast %240 : vector<1x1x64xf32> to vector<1x64xf32>
    %c0_72 = arith.constant 0 : index
    %c0_73 = arith.constant 0 : index
    %c0_74 = arith.constant 0 : index
    %242 = vector.load %arg8[%c0_72, %c0_73, %c0_74] : memref<1x64x64xbf16, #tpu.memory_space<vmem>>, vector<1x64x64xbf16>
    %243 = vector.shape_cast %242 : vector<1x64x64xbf16> to vector<64x64xbf16>
    %244 = arith.truncf %239 : vector<16x64xf32> to vector<16x64xbf16>
    %cst_75 = arith.constant dense<0.000000e+00> : vector<16x64xf32>
    %245 = tpu.matmul %244, %243, %cst_75 {dimension_numbers = #tpu.dot_dimension_numbers<[1], [0], [0], [1], [0, 0, 1, 1], [], []>} : vector<16x64xbf16>, vector<64x64xbf16>, vector<16x64xf32> -> vector<16x64xf32>
    %246 = vector.broadcast %241 : vector<1x64xf32> to vector<16x64xf32>
    %247 = arith.addf %245, %246 : vector<16x64xf32>
    %c0_76 = arith.constant 0 : index
    %c0_77 = arith.constant 0 : index
    %c0_78 = arith.constant 0 : index
    %248 = vector.load %arg3[%c0_76, %c0_77, %c0_78] : memref<2x8x64xbf16, #tpu.memory_space<vmem>>, vector<2x8x64xbf16>
    %249 = vector.shape_cast %248 : vector<2x8x64xbf16> to vector<16x64xbf16>
    %c0_79 = arith.constant 0 : index
    %c3 = arith.constant 3 : index
    %c0_80 = arith.constant 0 : index
    %250 = vector.load %arg13[%c0_79, %c3, %c0_80] : memref<1x13x192xf32, #tpu.memory_space<vmem>>, vector<1x1x128xf32>
    %251 = vector.shape_cast %250 : vector<1x1x128xf32> to vector<1x128xf32>
    %c0_81 = arith.constant 0 : index
    %c0_82 = arith.constant 0 : index
    %c0_83 = arith.constant 0 : index
    %252 = vector.load %arg9[%c0_81, %c0_82, %c0_83] : memref<1x64x128xbf16, #tpu.memory_space<vmem>>, vector<1x64x128xbf16>
    %253 = vector.shape_cast %252 : vector<1x64x128xbf16> to vector<64x128xbf16>
    %cst_84 = arith.constant dense<0.000000e+00> : vector<16x128xf32>
    %254 = tpu.matmul %249, %253, %cst_84 {dimension_numbers = #tpu.dot_dimension_numbers<[1], [0], [0], [1], [0, 0, 1, 1], [], []>} : vector<16x64xbf16>, vector<64x128xbf16>, vector<16x128xf32> -> vector<16x128xf32>
    %255 = vector.broadcast %251 : vector<1x128xf32> to vector<16x128xf32>
    %256 = arith.addf %254, %255 : vector<16x128xf32>
    %257 = vector.extract_strided_slice %256 {offsets = [0, 0], sizes = [16, 64], strides = [1, 1]} : vector<16x128xf32> to vector<16x64xf32>
    %258 = vector.extract_strided_slice %256 {offsets = [0, 64], sizes = [16, 64], strides = [1, 1]} : vector<16x128xf32> to vector<16x64xf32>
    %259 = vector.extract_strided_slice %247 {offsets = [0, 0], sizes = [8, 64], strides = [1, 1]} : vector<16x64xf32> to vector<8x64xf32>
    %260 = vector.extract_strided_slice %257 {offsets = [0, 0], sizes = [8, 64], strides = [1, 1]} : vector<16x64xf32> to vector<8x64xf32>
    %261 = vector.extract_strided_slice %258 {offsets = [0, 0], sizes = [8, 64], strides = [1, 1]} : vector<16x64xf32> to vector<8x64xf32>
    %c0_85 = arith.constant 0 : index
    %c0_86 = arith.constant 0 : index
    %c0_87 = arith.constant 0 : index
    %262 = vector.load %arg16[%c0_85, %c0_86, %c0_87] : memref<2x1x8xf32, #tpu.memory_space<vmem>>, vector<1x1x8xf32>
    %263 = vector.shape_cast %262 : vector<1x1x8xf32> to vector<1x8xf32>
    %264 = vector.extract_strided_slice %259 {offsets = [0, 0], sizes = [8, 16], strides = [1, 1]} : vector<8x64xf32> to vector<8x16xf32>
    %265 = arith.truncf %264 : vector<8x16xf32> to vector<8x16xbf16>
    %266 = vector.extract_strided_slice %260 {offsets = [0, 0], sizes = [8, 16], strides = [1, 1]} : vector<8x64xf32> to vector<8x16xf32>
    %267 = arith.truncf %266 : vector<8x16xf32> to vector<8x16xbf16>
    %cst_88 = arith.constant dense<0.000000e+00> : vector<8x8xf32>
    %268 = tpu.matmul %265, %267, %cst_88 {dimension_numbers = #tpu.dot_dimension_numbers<[1], [1], [0], [0], [0, 0, 1, 0], [], []>} : vector<8x16xbf16>, vector<8x16xbf16>, vector<8x8xf32> -> vector<8x8xf32>
    %cst_89 = arith.constant 2.500000e-01 : f32
    %269 = vector.broadcast %cst_89 : f32 to vector<8x8xf32>
    %270 = arith.mulf %268, %269 : vector<8x8xf32>
    %271 = vector.broadcast %263 : vector<1x8xf32> to vector<8x8xf32>
    %272 = arith.addf %270, %271 : vector<8x8xf32>
    %cst_90 = arith.constant dense<0xFF800000> : vector<8xf32>
    %273 = vector.multi_reduction <maximumf>, %272, %cst_90 [1] : vector<8x8xf32> to vector<8xf32>
    %274 = vector.shape_cast %273 : vector<8xf32> to vector<8x1xf32>
    %275 = vector.broadcast %274 : vector<8x1xf32> to vector<8x8xf32>
    %276 = arith.subf %272, %275 : vector<8x8xf32>
    %277 = math.exp %276 : vector<8x8xf32>
    %cst_91 = arith.constant dense<0.000000e+00> : vector<8xf32>
    %278 = vector.multi_reduction <add>, %277, %cst_91 [1] : vector<8x8xf32> to vector<8xf32>
    %279 = vector.shape_cast %278 : vector<8xf32> to vector<8x1xf32>
    %280 = tpu.reciprocal %279 {approx = true} : vector<8x1xf32> -> vector<8x1xf32>
    %281 = vector.broadcast %280 : vector<8x1xf32> to vector<8x8xf32>
    %282 = arith.mulf %277, %281 : vector<8x8xf32>
    %283 = arith.truncf %282 : vector<8x8xf32> to vector<8x8xbf16>
    %284 = vector.extract_strided_slice %261 {offsets = [0, 0], sizes = [8, 16], strides = [1, 1]} : vector<8x64xf32> to vector<8x16xf32>
    %285 = arith.truncf %284 : vector<8x16xf32> to vector<8x16xbf16>
    %cst_92 = arith.constant dense<0.000000e+00> : vector<8x16xf32>
    %286 = tpu.matmul %283, %285, %cst_92 {dimension_numbers = #tpu.dot_dimension_numbers<[1], [0], [0], [1], [0, 0, 1, 1], [], []>} : vector<8x8xbf16>, vector<8x16xbf16>, vector<8x16xf32> -> vector<8x16xf32>
    %287 = vector.extract_strided_slice %259 {offsets = [0, 16], sizes = [8, 16], strides = [1, 1]} : vector<8x64xf32> to vector<8x16xf32>
    %288 = arith.truncf %287 : vector<8x16xf32> to vector<8x16xbf16>
    %289 = vector.extract_strided_slice %260 {offsets = [0, 16], sizes = [8, 16], strides = [1, 1]} : vector<8x64xf32> to vector<8x16xf32>
    %290 = arith.truncf %289 : vector<8x16xf32> to vector<8x16xbf16>
    %cst_93 = arith.constant dense<0.000000e+00> : vector<8x8xf32>
    %291 = tpu.matmul %288, %290, %cst_93 {dimension_numbers = #tpu.dot_dimension_numbers<[1], [1], [0], [0], [0, 0, 1, 0], [], []>} : vector<8x16xbf16>, vector<8x16xbf16>, vector<8x8xf32> -> vector<8x8xf32>
    %cst_94 = arith.constant 2.500000e-01 : f32
    %292 = vector.broadcast %cst_94 : f32 to vector<8x8xf32>
    %293 = arith.mulf %291, %292 : vector<8x8xf32>
    %294 = vector.broadcast %263 : vector<1x8xf32> to vector<8x8xf32>
    %295 = arith.addf %293, %294 : vector<8x8xf32>
    %cst_95 = arith.constant dense<0xFF800000> : vector<8xf32>
    %296 = vector.multi_reduction <maximumf>, %295, %cst_95 [1] : vector<8x8xf32> to vector<8xf32>
    %297 = vector.shape_cast %296 : vector<8xf32> to vector<8x1xf32>
    %298 = vector.broadcast %297 : vector<8x1xf32> to vector<8x8xf32>
    %299 = arith.subf %295, %298 : vector<8x8xf32>
    %300 = math.exp %299 : vector<8x8xf32>
    %cst_96 = arith.constant dense<0.000000e+00> : vector<8xf32>
    %301 = vector.multi_reduction <add>, %300, %cst_96 [1] : vector<8x8xf32> to vector<8xf32>
    %302 = vector.shape_cast %301 : vector<8xf32> to vector<8x1xf32>
    %303 = tpu.reciprocal %302 {approx = true} : vector<8x1xf32> -> vector<8x1xf32>
    %304 = vector.broadcast %303 : vector<8x1xf32> to vector<8x8xf32>
    %305 = arith.mulf %300, %304 : vector<8x8xf32>
    %306 = arith.truncf %305 : vector<8x8xf32> to vector<8x8xbf16>
    %307 = vector.extract_strided_slice %261 {offsets = [0, 16], sizes = [8, 16], strides = [1, 1]} : vector<8x64xf32> to vector<8x16xf32>
    %308 = arith.truncf %307 : vector<8x16xf32> to vector<8x16xbf16>
    %cst_97 = arith.constant dense<0.000000e+00> : vector<8x16xf32>
    %309 = tpu.matmul %306, %308, %cst_97 {dimension_numbers = #tpu.dot_dimension_numbers<[1], [0], [0], [1], [0, 0, 1, 1], [], []>} : vector<8x8xbf16>, vector<8x16xbf16>, vector<8x16xf32> -> vector<8x16xf32>
    %310 = vector.extract_strided_slice %259 {offsets = [0, 32], sizes = [8, 16], strides = [1, 1]} : vector<8x64xf32> to vector<8x16xf32>
    %311 = arith.truncf %310 : vector<8x16xf32> to vector<8x16xbf16>
    %312 = vector.extract_strided_slice %260 {offsets = [0, 32], sizes = [8, 16], strides = [1, 1]} : vector<8x64xf32> to vector<8x16xf32>
    %313 = arith.truncf %312 : vector<8x16xf32> to vector<8x16xbf16>
    %cst_98 = arith.constant dense<0.000000e+00> : vector<8x8xf32>
    %314 = tpu.matmul %311, %313, %cst_98 {dimension_numbers = #tpu.dot_dimension_numbers<[1], [1], [0], [0], [0, 0, 1, 0], [], []>} : vector<8x16xbf16>, vector<8x16xbf16>, vector<8x8xf32> -> vector<8x8xf32>
    %cst_99 = arith.constant 2.500000e-01 : f32
    %315 = vector.broadcast %cst_99 : f32 to vector<8x8xf32>
    %316 = arith.mulf %314, %315 : vector<8x8xf32>
    %317 = vector.broadcast %263 : vector<1x8xf32> to vector<8x8xf32>
    %318 = arith.addf %316, %317 : vector<8x8xf32>
    %cst_100 = arith.constant dense<0xFF800000> : vector<8xf32>
    %319 = vector.multi_reduction <maximumf>, %318, %cst_100 [1] : vector<8x8xf32> to vector<8xf32>
    %320 = vector.shape_cast %319 : vector<8xf32> to vector<8x1xf32>
    %321 = vector.broadcast %320 : vector<8x1xf32> to vector<8x8xf32>
    %322 = arith.subf %318, %321 : vector<8x8xf32>
    %323 = math.exp %322 : vector<8x8xf32>
    %cst_101 = arith.constant dense<0.000000e+00> : vector<8xf32>
    %324 = vector.multi_reduction <add>, %323, %cst_101 [1] : vector<8x8xf32> to vector<8xf32>
    %325 = vector.shape_cast %324 : vector<8xf32> to vector<8x1xf32>
    %326 = tpu.reciprocal %325 {approx = true} : vector<8x1xf32> -> vector<8x1xf32>
    %327 = vector.broadcast %326 : vector<8x1xf32> to vector<8x8xf32>
    %328 = arith.mulf %323, %327 : vector<8x8xf32>
    %329 = arith.truncf %328 : vector<8x8xf32> to vector<8x8xbf16>
    %330 = vector.extract_strided_slice %261 {offsets = [0, 32], sizes = [8, 16], strides = [1, 1]} : vector<8x64xf32> to vector<8x16xf32>
    %331 = arith.truncf %330 : vector<8x16xf32> to vector<8x16xbf16>
    %cst_102 = arith.constant dense<0.000000e+00> : vector<8x16xf32>
    %332 = tpu.matmul %329, %331, %cst_102 {dimension_numbers = #tpu.dot_dimension_numbers<[1], [0], [0], [1], [0, 0, 1, 1], [], []>} : vector<8x8xbf16>, vector<8x16xbf16>, vector<8x16xf32> -> vector<8x16xf32>
    %333 = vector.extract_strided_slice %259 {offsets = [0, 48], sizes = [8, 16], strides = [1, 1]} : vector<8x64xf32> to vector<8x16xf32>
    %334 = arith.truncf %333 : vector<8x16xf32> to vector<8x16xbf16>
    %335 = vector.extract_strided_slice %260 {offsets = [0, 48], sizes = [8, 16], strides = [1, 1]} : vector<8x64xf32> to vector<8x16xf32>
    %336 = arith.truncf %335 : vector<8x16xf32> to vector<8x16xbf16>
    %cst_103 = arith.constant dense<0.000000e+00> : vector<8x8xf32>
    %337 = tpu.matmul %334, %336, %cst_103 {dimension_numbers = #tpu.dot_dimension_numbers<[1], [1], [0], [0], [0, 0, 1, 0], [], []>} : vector<8x16xbf16>, vector<8x16xbf16>, vector<8x8xf32> -> vector<8x8xf32>
    %cst_104 = arith.constant 2.500000e-01 : f32
    %338 = vector.broadcast %cst_104 : f32 to vector<8x8xf32>
    %339 = arith.mulf %337, %338 : vector<8x8xf32>
    %340 = vector.broadcast %263 : vector<1x8xf32> to vector<8x8xf32>
    %341 = arith.addf %339, %340 : vector<8x8xf32>
    %cst_105 = arith.constant dense<0xFF800000> : vector<8xf32>
    %342 = vector.multi_reduction <maximumf>, %341, %cst_105 [1] : vector<8x8xf32> to vector<8xf32>
    %343 = vector.shape_cast %342 : vector<8xf32> to vector<8x1xf32>
    %344 = vector.broadcast %343 : vector<8x1xf32> to vector<8x8xf32>
    %345 = arith.subf %341, %344 : vector<8x8xf32>
    %346 = math.exp %345 : vector<8x8xf32>
    %cst_106 = arith.constant dense<0.000000e+00> : vector<8xf32>
    %347 = vector.multi_reduction <add>, %346, %cst_106 [1] : vector<8x8xf32> to vector<8xf32>
    %348 = vector.shape_cast %347 : vector<8xf32> to vector<8x1xf32>
    %349 = tpu.reciprocal %348 {approx = true} : vector<8x1xf32> -> vector<8x1xf32>
    %350 = vector.broadcast %349 : vector<8x1xf32> to vector<8x8xf32>
    %351 = arith.mulf %346, %350 : vector<8x8xf32>
    %352 = arith.truncf %351 : vector<8x8xf32> to vector<8x8xbf16>
    %353 = vector.extract_strided_slice %261 {offsets = [0, 48], sizes = [8, 16], strides = [1, 1]} : vector<8x64xf32> to vector<8x16xf32>
    %354 = arith.truncf %353 : vector<8x16xf32> to vector<8x16xbf16>
    %cst_107 = arith.constant dense<0.000000e+00> : vector<8x16xf32>
    %355 = tpu.matmul %352, %354, %cst_107 {dimension_numbers = #tpu.dot_dimension_numbers<[1], [0], [0], [1], [0, 0, 1, 1], [], []>} : vector<8x8xbf16>, vector<8x16xbf16>, vector<8x16xf32> -> vector<8x16xf32>
    %356 = tpu.concatenate %286, %309, %332, %355 in 1 : vector<8x16xf32>, vector<8x16xf32>, vector<8x16xf32>, vector<8x16xf32> -> vector<8x64xf32>
    %357 = vector.extract_strided_slice %247 {offsets = [8, 0], sizes = [8, 64], strides = [1, 1]} : vector<16x64xf32> to vector<8x64xf32>
    %358 = vector.extract_strided_slice %257 {offsets = [8, 0], sizes = [8, 64], strides = [1, 1]} : vector<16x64xf32> to vector<8x64xf32>
    %359 = vector.extract_strided_slice %258 {offsets = [8, 0], sizes = [8, 64], strides = [1, 1]} : vector<16x64xf32> to vector<8x64xf32>
    %c1_108 = arith.constant 1 : index
    %c0_109 = arith.constant 0 : index
    %c0_110 = arith.constant 0 : index
    %360 = vector.load %arg16[%c1_108, %c0_109, %c0_110] : memref<2x1x8xf32, #tpu.memory_space<vmem>>, vector<1x1x8xf32>
    %361 = vector.shape_cast %360 : vector<1x1x8xf32> to vector<1x8xf32>
    %362 = vector.extract_strided_slice %357 {offsets = [0, 0], sizes = [8, 16], strides = [1, 1]} : vector<8x64xf32> to vector<8x16xf32>
    %363 = arith.truncf %362 : vector<8x16xf32> to vector<8x16xbf16>
    %364 = vector.extract_strided_slice %358 {offsets = [0, 0], sizes = [8, 16], strides = [1, 1]} : vector<8x64xf32> to vector<8x16xf32>
    %365 = arith.truncf %364 : vector<8x16xf32> to vector<8x16xbf16>
    %cst_111 = arith.constant dense<0.000000e+00> : vector<8x8xf32>
    %366 = tpu.matmul %363, %365, %cst_111 {dimension_numbers = #tpu.dot_dimension_numbers<[1], [1], [0], [0], [0, 0, 1, 0], [], []>} : vector<8x16xbf16>, vector<8x16xbf16>, vector<8x8xf32> -> vector<8x8xf32>
    %cst_112 = arith.constant 2.500000e-01 : f32
    %367 = vector.broadcast %cst_112 : f32 to vector<8x8xf32>
    %368 = arith.mulf %366, %367 : vector<8x8xf32>
    %369 = vector.broadcast %361 : vector<1x8xf32> to vector<8x8xf32>
    %370 = arith.addf %368, %369 : vector<8x8xf32>
    %cst_113 = arith.constant dense<0xFF800000> : vector<8xf32>
    %371 = vector.multi_reduction <maximumf>, %370, %cst_113 [1] : vector<8x8xf32> to vector<8xf32>
    %372 = vector.shape_cast %371 : vector<8xf32> to vector<8x1xf32>
    %373 = vector.broadcast %372 : vector<8x1xf32> to vector<8x8xf32>
    %374 = arith.subf %370, %373 : vector<8x8xf32>
    %375 = math.exp %374 : vector<8x8xf32>
    %cst_114 = arith.constant dense<0.000000e+00> : vector<8xf32>
    %376 = vector.multi_reduction <add>, %375, %cst_114 [1] : vector<8x8xf32> to vector<8xf32>
    %377 = vector.shape_cast %376 : vector<8xf32> to vector<8x1xf32>
    %378 = tpu.reciprocal %377 {approx = true} : vector<8x1xf32> -> vector<8x1xf32>
    %379 = vector.broadcast %378 : vector<8x1xf32> to vector<8x8xf32>
    %380 = arith.mulf %375, %379 : vector<8x8xf32>
    %381 = arith.truncf %380 : vector<8x8xf32> to vector<8x8xbf16>
    %382 = vector.extract_strided_slice %359 {offsets = [0, 0], sizes = [8, 16], strides = [1, 1]} : vector<8x64xf32> to vector<8x16xf32>
    %383 = arith.truncf %382 : vector<8x16xf32> to vector<8x16xbf16>
    %cst_115 = arith.constant dense<0.000000e+00> : vector<8x16xf32>
    %384 = tpu.matmul %381, %383, %cst_115 {dimension_numbers = #tpu.dot_dimension_numbers<[1], [0], [0], [1], [0, 0, 1, 1], [], []>} : vector<8x8xbf16>, vector<8x16xbf16>, vector<8x16xf32> -> vector<8x16xf32>
    %385 = vector.extract_strided_slice %357 {offsets = [0, 16], sizes = [8, 16], strides = [1, 1]} : vector<8x64xf32> to vector<8x16xf32>
    %386 = arith.truncf %385 : vector<8x16xf32> to vector<8x16xbf16>
    %387 = vector.extract_strided_slice %358 {offsets = [0, 16], sizes = [8, 16], strides = [1, 1]} : vector<8x64xf32> to vector<8x16xf32>
    %388 = arith.truncf %387 : vector<8x16xf32> to vector<8x16xbf16>
    %cst_116 = arith.constant dense<0.000000e+00> : vector<8x8xf32>
    %389 = tpu.matmul %386, %388, %cst_116 {dimension_numbers = #tpu.dot_dimension_numbers<[1], [1], [0], [0], [0, 0, 1, 0], [], []>} : vector<8x16xbf16>, vector<8x16xbf16>, vector<8x8xf32> -> vector<8x8xf32>
    %cst_117 = arith.constant 2.500000e-01 : f32
    %390 = vector.broadcast %cst_117 : f32 to vector<8x8xf32>
    %391 = arith.mulf %389, %390 : vector<8x8xf32>
    %392 = vector.broadcast %361 : vector<1x8xf32> to vector<8x8xf32>
    %393 = arith.addf %391, %392 : vector<8x8xf32>
    %cst_118 = arith.constant dense<0xFF800000> : vector<8xf32>
    %394 = vector.multi_reduction <maximumf>, %393, %cst_118 [1] : vector<8x8xf32> to vector<8xf32>
    %395 = vector.shape_cast %394 : vector<8xf32> to vector<8x1xf32>
    %396 = vector.broadcast %395 : vector<8x1xf32> to vector<8x8xf32>
    %397 = arith.subf %393, %396 : vector<8x8xf32>
    %398 = math.exp %397 : vector<8x8xf32>
    %cst_119 = arith.constant dense<0.000000e+00> : vector<8xf32>
    %399 = vector.multi_reduction <add>, %398, %cst_119 [1] : vector<8x8xf32> to vector<8xf32>
    %400 = vector.shape_cast %399 : vector<8xf32> to vector<8x1xf32>
    %401 = tpu.reciprocal %400 {approx = true} : vector<8x1xf32> -> vector<8x1xf32>
    %402 = vector.broadcast %401 : vector<8x1xf32> to vector<8x8xf32>
    %403 = arith.mulf %398, %402 : vector<8x8xf32>
    %404 = arith.truncf %403 : vector<8x8xf32> to vector<8x8xbf16>
    %405 = vector.extract_strided_slice %359 {offsets = [0, 16], sizes = [8, 16], strides = [1, 1]} : vector<8x64xf32> to vector<8x16xf32>
    %406 = arith.truncf %405 : vector<8x16xf32> to vector<8x16xbf16>
    %cst_120 = arith.constant dense<0.000000e+00> : vector<8x16xf32>
    %407 = tpu.matmul %404, %406, %cst_120 {dimension_numbers = #tpu.dot_dimension_numbers<[1], [0], [0], [1], [0, 0, 1, 1], [], []>} : vector<8x8xbf16>, vector<8x16xbf16>, vector<8x16xf32> -> vector<8x16xf32>
    %408 = vector.extract_strided_slice %357 {offsets = [0, 32], sizes = [8, 16], strides = [1, 1]} : vector<8x64xf32> to vector<8x16xf32>
    %409 = arith.truncf %408 : vector<8x16xf32> to vector<8x16xbf16>
    %410 = vector.extract_strided_slice %358 {offsets = [0, 32], sizes = [8, 16], strides = [1, 1]} : vector<8x64xf32> to vector<8x16xf32>
    %411 = arith.truncf %410 : vector<8x16xf32> to vector<8x16xbf16>
    %cst_121 = arith.constant dense<0.000000e+00> : vector<8x8xf32>
    %412 = tpu.matmul %409, %411, %cst_121 {dimension_numbers = #tpu.dot_dimension_numbers<[1], [1], [0], [0], [0, 0, 1, 0], [], []>} : vector<8x16xbf16>, vector<8x16xbf16>, vector<8x8xf32> -> vector<8x8xf32>
    %cst_122 = arith.constant 2.500000e-01 : f32
    %413 = vector.broadcast %cst_122 : f32 to vector<8x8xf32>
    %414 = arith.mulf %412, %413 : vector<8x8xf32>
    %415 = vector.broadcast %361 : vector<1x8xf32> to vector<8x8xf32>
    %416 = arith.addf %414, %415 : vector<8x8xf32>
    %cst_123 = arith.constant dense<0xFF800000> : vector<8xf32>
    %417 = vector.multi_reduction <maximumf>, %416, %cst_123 [1] : vector<8x8xf32> to vector<8xf32>
    %418 = vector.shape_cast %417 : vector<8xf32> to vector<8x1xf32>
    %419 = vector.broadcast %418 : vector<8x1xf32> to vector<8x8xf32>
    %420 = arith.subf %416, %419 : vector<8x8xf32>
    %421 = math.exp %420 : vector<8x8xf32>
    %cst_124 = arith.constant dense<0.000000e+00> : vector<8xf32>
    %422 = vector.multi_reduction <add>, %421, %cst_124 [1] : vector<8x8xf32> to vector<8xf32>
    %423 = vector.shape_cast %422 : vector<8xf32> to vector<8x1xf32>
    %424 = tpu.reciprocal %423 {approx = true} : vector<8x1xf32> -> vector<8x1xf32>
    %425 = vector.broadcast %424 : vector<8x1xf32> to vector<8x8xf32>
    %426 = arith.mulf %421, %425 : vector<8x8xf32>
    %427 = arith.truncf %426 : vector<8x8xf32> to vector<8x8xbf16>
    %428 = vector.extract_strided_slice %359 {offsets = [0, 32], sizes = [8, 16], strides = [1, 1]} : vector<8x64xf32> to vector<8x16xf32>
    %429 = arith.truncf %428 : vector<8x16xf32> to vector<8x16xbf16>
    %cst_125 = arith.constant dense<0.000000e+00> : vector<8x16xf32>
    %430 = tpu.matmul %427, %429, %cst_125 {dimension_numbers = #tpu.dot_dimension_numbers<[1], [0], [0], [1], [0, 0, 1, 1], [], []>} : vector<8x8xbf16>, vector<8x16xbf16>, vector<8x16xf32> -> vector<8x16xf32>
    %431 = vector.extract_strided_slice %357 {offsets = [0, 48], sizes = [8, 16], strides = [1, 1]} : vector<8x64xf32> to vector<8x16xf32>
    %432 = arith.truncf %431 : vector<8x16xf32> to vector<8x16xbf16>
    %433 = vector.extract_strided_slice %358 {offsets = [0, 48], sizes = [8, 16], strides = [1, 1]} : vector<8x64xf32> to vector<8x16xf32>
    %434 = arith.truncf %433 : vector<8x16xf32> to vector<8x16xbf16>
    %cst_126 = arith.constant dense<0.000000e+00> : vector<8x8xf32>
    %435 = tpu.matmul %432, %434, %cst_126 {dimension_numbers = #tpu.dot_dimension_numbers<[1], [1], [0], [0], [0, 0, 1, 0], [], []>} : vector<8x16xbf16>, vector<8x16xbf16>, vector<8x8xf32> -> vector<8x8xf32>
    %cst_127 = arith.constant 2.500000e-01 : f32
    %436 = vector.broadcast %cst_127 : f32 to vector<8x8xf32>
    %437 = arith.mulf %435, %436 : vector<8x8xf32>
    %438 = vector.broadcast %361 : vector<1x8xf32> to vector<8x8xf32>
    %439 = arith.addf %437, %438 : vector<8x8xf32>
    %cst_128 = arith.constant dense<0xFF800000> : vector<8xf32>
    %440 = vector.multi_reduction <maximumf>, %439, %cst_128 [1] : vector<8x8xf32> to vector<8xf32>
    %441 = vector.shape_cast %440 : vector<8xf32> to vector<8x1xf32>
    %442 = vector.broadcast %441 : vector<8x1xf32> to vector<8x8xf32>
    %443 = arith.subf %439, %442 : vector<8x8xf32>
    %444 = math.exp %443 : vector<8x8xf32>
    %cst_129 = arith.constant dense<0.000000e+00> : vector<8xf32>
    %445 = vector.multi_reduction <add>, %444, %cst_129 [1] : vector<8x8xf32> to vector<8xf32>
    %446 = vector.shape_cast %445 : vector<8xf32> to vector<8x1xf32>
    %447 = tpu.reciprocal %446 {approx = true} : vector<8x1xf32> -> vector<8x1xf32>
    %448 = vector.broadcast %447 : vector<8x1xf32> to vector<8x8xf32>
    %449 = arith.mulf %444, %448 : vector<8x8xf32>
    %450 = arith.truncf %449 : vector<8x8xf32> to vector<8x8xbf16>
    %451 = vector.extract_strided_slice %359 {offsets = [0, 48], sizes = [8, 16], strides = [1, 1]} : vector<8x64xf32> to vector<8x16xf32>
    %452 = arith.truncf %451 : vector<8x16xf32> to vector<8x16xbf16>
    %cst_130 = arith.constant dense<0.000000e+00> : vector<8x16xf32>
    %453 = tpu.matmul %450, %452, %cst_130 {dimension_numbers = #tpu.dot_dimension_numbers<[1], [0], [0], [1], [0, 0, 1, 1], [], []>} : vector<8x8xbf16>, vector<8x16xbf16>, vector<8x16xf32> -> vector<8x16xf32>
    %454 = tpu.concatenate %384, %407, %430, %453 in 1 : vector<8x16xf32>, vector<8x16xf32>, vector<8x16xf32>, vector<8x16xf32> -> vector<8x64xf32>
    %455 = tpu.concatenate %356, %454 in 0 : vector<8x64xf32>, vector<8x64xf32> -> vector<16x64xf32>
    %c0_131 = arith.constant 0 : index
    %c4 = arith.constant 4 : index
    %c0_132 = arith.constant 0 : index
    %456 = vector.load %arg13[%c0_131, %c4, %c0_132] : memref<1x13x192xf32, #tpu.memory_space<vmem>>, vector<1x1x64xf32>
    %457 = vector.shape_cast %456 : vector<1x1x64xf32> to vector<1x64xf32>
    %c0_133 = arith.constant 0 : index
    %c0_134 = arith.constant 0 : index
    %c0_135 = arith.constant 0 : index
    %458 = vector.load %arg10[%c0_133, %c0_134, %c0_135] : memref<1x64x64xbf16, #tpu.memory_space<vmem>>, vector<1x64x64xbf16>
    %459 = vector.shape_cast %458 : vector<1x64x64xbf16> to vector<64x64xbf16>
    %460 = arith.truncf %455 : vector<16x64xf32> to vector<16x64xbf16>
    %cst_136 = arith.constant dense<0.000000e+00> : vector<16x64xf32>
    %461 = tpu.matmul %460, %459, %cst_136 {dimension_numbers = #tpu.dot_dimension_numbers<[1], [0], [0], [1], [0, 0, 1, 1], [], []>} : vector<16x64xbf16>, vector<64x64xbf16>, vector<16x64xf32> -> vector<16x64xf32>
    %462 = vector.broadcast %457 : vector<1x64xf32> to vector<16x64xf32>
    %463 = arith.addf %461, %462 : vector<16x64xf32>
    %464 = arith.addf %239, %463 : vector<16x64xf32>
    %c0_137 = arith.constant 0 : index
    %c9 = arith.constant 9 : index
    %c0_138 = arith.constant 0 : index
    %465 = vector.load %arg13[%c0_137, %c9, %c0_138] : memref<1x13x192xf32, #tpu.memory_space<vmem>>, vector<1x1x64xf32>
    %466 = vector.shape_cast %465 : vector<1x1x64xf32> to vector<1x64xf32>
    %c0_139 = arith.constant 0 : index
    %c10 = arith.constant 10 : index
    %c0_140 = arith.constant 0 : index
    %467 = vector.load %arg13[%c0_139, %c10, %c0_140] : memref<1x13x192xf32, #tpu.memory_space<vmem>>, vector<1x1x64xf32>
    %468 = vector.shape_cast %467 : vector<1x1x64xf32> to vector<1x64xf32>
    %cst_141 = arith.constant dense<0.000000e+00> : vector<16xf32>
    %469 = vector.multi_reduction <add>, %464, %cst_141 [1] : vector<16x64xf32> to vector<16xf32>
    %470 = vector.shape_cast %469 : vector<16xf32> to vector<16x1xf32>
    %cst_142 = arith.constant 6.400000e+01 : f32
    %471 = vector.broadcast %cst_142 : f32 to vector<16x1xf32>
    %472 = arith.divf %470, %471 : vector<16x1xf32>
    %473 = vector.broadcast %472 : vector<16x1xf32> to vector<16x64xf32>
    %474 = arith.subf %464, %473 : vector<16x64xf32>
    %475 = arith.mulf %474, %474 : vector<16x64xf32>
    %cst_143 = arith.constant dense<0.000000e+00> : vector<16xf32>
    %476 = vector.multi_reduction <add>, %475, %cst_143 [1] : vector<16x64xf32> to vector<16xf32>
    %477 = vector.shape_cast %476 : vector<16xf32> to vector<16x1xf32>
    %cst_144 = arith.constant 6.400000e+01 : f32
    %478 = vector.broadcast %cst_144 : f32 to vector<16x1xf32>
    %479 = arith.divf %477, %478 : vector<16x1xf32>
    %480 = vector.broadcast %472 : vector<16x1xf32> to vector<16x64xf32>
    %481 = arith.subf %464, %480 : vector<16x64xf32>
    %cst_145 = arith.constant 9.99999974E-6 : f32
    %482 = vector.broadcast %cst_145 : f32 to vector<16x1xf32>
    %483 = arith.addf %479, %482 : vector<16x1xf32>
    %484 = math.rsqrt %483 : vector<16x1xf32>
    %485 = vector.broadcast %484 : vector<16x1xf32> to vector<16x64xf32>
    %486 = arith.mulf %481, %485 : vector<16x64xf32>
    %487 = vector.broadcast %466 : vector<1x64xf32> to vector<16x64xf32>
    %488 = arith.mulf %486, %487 : vector<16x64xf32>
    %489 = vector.broadcast %468 : vector<1x64xf32> to vector<16x64xf32>
    %490 = arith.addf %488, %489 : vector<16x64xf32>
    %c0_146 = arith.constant 0 : index
    %c5 = arith.constant 5 : index
    %c0_147 = arith.constant 0 : index
    %491 = vector.load %arg13[%c0_146, %c5, %c0_147] : memref<1x13x192xf32, #tpu.memory_space<vmem>>, vector<1x1x128xf32>
    %492 = vector.shape_cast %491 : vector<1x1x128xf32> to vector<1x128xf32>
    %c0_148 = arith.constant 0 : index
    %c0_149 = arith.constant 0 : index
    %c0_150 = arith.constant 0 : index
    %493 = vector.load %arg11[%c0_148, %c0_149, %c0_150] : memref<1x64x128xbf16, #tpu.memory_space<vmem>>, vector<1x64x128xbf16>
    %494 = vector.shape_cast %493 : vector<1x64x128xbf16> to vector<64x128xbf16>
    %495 = arith.truncf %490 : vector<16x64xf32> to vector<16x64xbf16>
    %cst_151 = arith.constant dense<0.000000e+00> : vector<16x128xf32>
    %496 = tpu.matmul %495, %494, %cst_151 {dimension_numbers = #tpu.dot_dimension_numbers<[1], [0], [0], [1], [0, 0, 1, 1], [], []>} : vector<16x64xbf16>, vector<64x128xbf16>, vector<16x128xf32> -> vector<16x128xf32>
    %497 = vector.broadcast %492 : vector<1x128xf32> to vector<16x128xf32>
    %498 = arith.addf %496, %497 : vector<16x128xf32>
    %cst_152 = arith.constant 5.000000e-01 : f32
    %499 = vector.broadcast %cst_152 : f32 to vector<16x128xf32>
    %500 = arith.mulf %499, %498 : vector<16x128xf32>
    %cst_153 = arith.constant 0.707106769 : f32
    %501 = vector.broadcast %cst_153 : f32 to vector<16x128xf32>
    %502 = arith.mulf %498, %501 : vector<16x128xf32>
    %503 = math.erf %502 : vector<16x128xf32>
    %cst_154 = arith.constant 1.000000e+00 : f32
    %504 = vector.broadcast %cst_154 : f32 to vector<16x128xf32>
    %505 = arith.addf %504, %503 : vector<16x128xf32>
    %506 = arith.mulf %500, %505 : vector<16x128xf32>
    %c0_155 = arith.constant 0 : index
    %c6 = arith.constant 6 : index
    %c0_156 = arith.constant 0 : index
    %507 = vector.load %arg13[%c0_155, %c6, %c0_156] : memref<1x13x192xf32, #tpu.memory_space<vmem>>, vector<1x1x64xf32>
    %508 = vector.shape_cast %507 : vector<1x1x64xf32> to vector<1x64xf32>
    %c0_157 = arith.constant 0 : index
    %c0_158 = arith.constant 0 : index
    %c0_159 = arith.constant 0 : index
    %509 = vector.load %arg12[%c0_157, %c0_158, %c0_159] : memref<1x128x64xbf16, #tpu.memory_space<vmem>>, vector<1x128x64xbf16>
    %510 = vector.shape_cast %509 : vector<1x128x64xbf16> to vector<128x64xbf16>
    %511 = arith.truncf %506 : vector<16x128xf32> to vector<16x128xbf16>
    %cst_160 = arith.constant dense<0.000000e+00> : vector<16x64xf32>
    %512 = tpu.matmul %511, %510, %cst_160 {dimension_numbers = #tpu.dot_dimension_numbers<[1], [0], [0], [1], [0, 0, 1, 1], [], []>} : vector<16x128xbf16>, vector<128x64xbf16>, vector<16x64xf32> -> vector<16x64xf32>
    %513 = vector.broadcast %508 : vector<1x64xf32> to vector<16x64xf32>
    %514 = arith.addf %512, %513 : vector<16x64xf32>
    %515 = arith.addf %490, %514 : vector<16x64xf32>
    %c0_161 = arith.constant 0 : index
    %c11 = arith.constant 11 : index
    %c0_162 = arith.constant 0 : index
    %516 = vector.load %arg13[%c0_161, %c11, %c0_162] : memref<1x13x192xf32, #tpu.memory_space<vmem>>, vector<1x1x64xf32>
    %517 = vector.shape_cast %516 : vector<1x1x64xf32> to vector<1x64xf32>
    %c0_163 = arith.constant 0 : index
    %c12 = arith.constant 12 : index
    %c0_164 = arith.constant 0 : index
    %518 = vector.load %arg13[%c0_163, %c12, %c0_164] : memref<1x13x192xf32, #tpu.memory_space<vmem>>, vector<1x1x64xf32>
    %519 = vector.shape_cast %518 : vector<1x1x64xf32> to vector<1x64xf32>
    %cst_165 = arith.constant dense<0.000000e+00> : vector<16xf32>
    %520 = vector.multi_reduction <add>, %515, %cst_165 [1] : vector<16x64xf32> to vector<16xf32>
    %521 = vector.shape_cast %520 : vector<16xf32> to vector<16x1xf32>
    %cst_166 = arith.constant 6.400000e+01 : f32
    %522 = vector.broadcast %cst_166 : f32 to vector<16x1xf32>
    %523 = arith.divf %521, %522 : vector<16x1xf32>
    %524 = vector.broadcast %523 : vector<16x1xf32> to vector<16x64xf32>
    %525 = arith.subf %515, %524 : vector<16x64xf32>
    %526 = arith.mulf %525, %525 : vector<16x64xf32>
    %cst_167 = arith.constant dense<0.000000e+00> : vector<16xf32>
    %527 = vector.multi_reduction <add>, %526, %cst_167 [1] : vector<16x64xf32> to vector<16xf32>
    %528 = vector.shape_cast %527 : vector<16xf32> to vector<16x1xf32>
    %cst_168 = arith.constant 6.400000e+01 : f32
    %529 = vector.broadcast %cst_168 : f32 to vector<16x1xf32>
    %530 = arith.divf %528, %529 : vector<16x1xf32>
    %531 = vector.broadcast %523 : vector<16x1xf32> to vector<16x64xf32>
    %532 = arith.subf %515, %531 : vector<16x64xf32>
    %cst_169 = arith.constant 9.99999974E-6 : f32
    %533 = vector.broadcast %cst_169 : f32 to vector<16x1xf32>
    %534 = arith.addf %530, %533 : vector<16x1xf32>
    %535 = math.rsqrt %534 : vector<16x1xf32>
    %536 = vector.broadcast %535 : vector<16x1xf32> to vector<16x64xf32>
    %537 = arith.mulf %532, %536 : vector<16x64xf32>
    %538 = vector.broadcast %517 : vector<1x64xf32> to vector<16x64xf32>
    %539 = arith.mulf %537, %538 : vector<16x64xf32>
    %540 = vector.broadcast %519 : vector<1x64xf32> to vector<16x64xf32>
    %541 = arith.addf %539, %540 : vector<16x64xf32>
    %542 = vector.shape_cast %541 : vector<16x64xf32> to vector<2x8x64xf32>
    %c0_170 = arith.constant 0 : index
    %c0_171 = arith.constant 0 : index
    %c0_172 = arith.constant 0 : index
    %543 = vector.load %arg14[%c0_170, %c0_171, %c0_172] : memref<2x8x64xf32, #tpu.memory_space<vmem>>, vector<2x8x64xf32>
    tpu.vector_store %arg14[%c0_170, %c0_171, %c0_172], %542 {strides = array<i32>} : memref<2x8x64xf32, #tpu.memory_space<vmem>>, vector<2x8x64xf32>,
    return
  }
  func.func @transform_0(%arg0: i32, %arg1: i32) -> (i32, i32, i32) {
    %c0_i32 = arith.constant 0 : i32
    %c0_i32_0 = arith.constant 0 : i32
    %c0_i32_1 = arith.constant 0 : i32
    return %arg0, %c0_i32, %c0_i32_0 : i32, i32, i32
  }
  func.func @transform_1(%arg0: i32, %arg1: i32) -> (i32, i32, i32) {
    %c0_i32 = arith.constant 0 : i32
    %c0_i32_0 = arith.constant 0 : i32
    %c0_i32_1 = arith.constant 0 : i32
    return %arg0, %c0_i32, %c0_i32_0 : i32, i32, i32
  }
  func.func @transform_2(%arg0: i32, %arg1: i32) -> (i32, i32, i32) {
    %c0_i32 = arith.constant 0 : i32
    %c0_i32_0 = arith.constant 0 : i32
    %c0_i32_1 = arith.constant 0 : i32
    return %arg0, %c0_i32, %c0_i32_0 : i32, i32, i32
  }
  func.func @transform_3(%arg0: i32, %arg1: i32) -> (i32, i32, i32) {
    %c0_i32 = arith.constant 0 : i32
    %c0_i32_0 = arith.constant 0 : i32
    %c0_i32_1 = arith.constant 0 : i32
    return %arg0, %c0_i32, %c0_i32_0 : i32, i32, i32
  }
  func.func @transform_4(%arg0: i32, %arg1: i32) -> (i32, i32, i32) {
    %c0_i32 = arith.constant 0 : i32
    %c0_i32_0 = arith.constant 0 : i32
    %c0_i32_1 = arith.constant 0 : i32
    return %arg1, %c0_i32, %c0_i32_0 : i32, i32, i32
  }
  func.func @transform_5(%arg0: i32, %arg1: i32) -> (i32, i32, i32) {
    %c0_i32 = arith.constant 0 : i32
    %c0_i32_0 = arith.constant 0 : i32
    %c0_i32_1 = arith.constant 0 : i32
    return %arg1, %c0_i32, %c0_i32_0 : i32, i32, i32
  }
  func.func @transform_6(%arg0: i32, %arg1: i32) -> (i32, i32, i32) {
    %c0_i32 = arith.constant 0 : i32
    %c0_i32_0 = arith.constant 0 : i32
    %c0_i32_1 = arith.constant 0 : i32
    return %arg1, %c0_i32, %c0_i32_0 : i32, i32, i32
  }
  func.func @transform_7(%arg0: i32, %arg1: i32) -> (i32, i32, i32) {
    %c0_i32 = arith.constant 0 : i32
    %c0_i32_0 = arith.constant 0 : i32
    %c0_i32_1 = arith.constant 0 : i32
    return %arg1, %c0_i32, %c0_i32_0 : i32, i32, i32
  }
  func.func @transform_8(%arg0: i32, %arg1: i32) -> (i32, i32, i32) {
    %c0_i32 = arith.constant 0 : i32
    %c0_i32_0 = arith.constant 0 : i32
    %c0_i32_1 = arith.constant 0 : i32
    return %arg1, %c0_i32, %c0_i32_0 : i32, i32, i32
  }
  func.func @transform_9(%arg0: i32, %arg1: i32) -> (i32, i32, i32) {
    %c0_i32 = arith.constant 0 : i32
    %c0_i32_0 = arith.constant 0 : i32
    %c0_i32_1 = arith.constant 0 : i32
    return %arg1, %c0_i32, %c0_i32_0 : i32, i32, i32
  }
  func.func @transform_10(%arg0: i32, %arg1: i32) -> (i32, i32, i32) {
    %c0_i32 = arith.constant 0 : i32
    %c0_i32_0 = arith.constant 0 : i32
    %c0_i32_1 = arith.constant 0 : i32
    return %arg1, %c0_i32, %c0_i32_0 : i32, i32, i32
  }
  func.func @transform_11(%arg0: i32, %arg1: i32) -> (i32, i32, i32) {
    %c0_i32 = arith.constant 0 : i32
    %c0_i32_0 = arith.constant 0 : i32
    %c0_i32_1 = arith.constant 0 : i32
    return %arg1, %c0_i32, %c0_i32_0 : i32, i32, i32
  }
  func.func @transform_12(%arg0: i32, %arg1: i32) -> (i32, i32, i32) {
    %c0_i32 = arith.constant 0 : i32
    %c0_i32_0 = arith.constant 0 : i32
    %c0_i32_1 = arith.constant 0 : i32
    return %arg0, %c0_i32, %c0_i32_0 : i32, i32, i32
  }
}

module attributes {stable_mosaic.version = 11 : i64} {
  func.func @_decoder_kernel(%arg0: i32, %arg1: i32, %arg2: memref<2x8x64xf32, #tpu.memory_space<vmem>>, %arg3: memref<2x8x64xf32, #tpu.memory_space<vmem>>, %arg4: memref<2x1x8xf32, #tpu.memory_space<vmem>>, %arg5: memref<2x1x8xf32, #tpu.memory_space<vmem>>, %arg6: memref<1x64x192xf32, #tpu.memory_space<vmem>>, %arg7: memref<1x64x64xf32, #tpu.memory_space<vmem>>, %arg8: memref<1x64x64xf32, #tpu.memory_space<vmem>>, %arg9: memref<1x64x128xf32, #tpu.memory_space<vmem>>, %arg10: memref<1x64x64xf32, #tpu.memory_space<vmem>>, %arg11: memref<1x64x128xf32, #tpu.memory_space<vmem>>, %arg12: memref<1x128x64xf32, #tpu.memory_space<vmem>>, %arg13: memref<1x13x192xf32, #tpu.memory_space<vmem>>, %arg14: memref<2x8x64xf32, #tpu.memory_space<vmem>>, %arg15: memref<2x8x8xf32, #tpu.memory_space<vmem>>, %arg16: memref<2x1x8xf32, #tpu.memory_space<vmem>>) attributes {dimension_semantics = [#tpu.dimension_semantics<parallel>, #tpu.dimension_semantics<arbitrary>], iteration_bounds = array<i64: 1, 2>, scalar_prefetch = 0 : i64, scratch_operands = 2 : i64, tpu.core_type = #tpu.core_type<tc>, window_params = [{transform_indices = @transform_0, window_bounds = array<i64: 2, 8, 64>}, {transform_indices = @transform_1, window_bounds = array<i64: 2, 8, 64>}, {transform_indices = @transform_2, window_bounds = array<i64: 2, 1, 8>}, {transform_indices = @transform_3, window_bounds = array<i64: 2, 1, 8>}, {transform_indices = @transform_4, window_bounds = array<i64: 1, 64, 192>}, {transform_indices = @transform_5, window_bounds = array<i64: 1, 64, 64>}, {transform_indices = @transform_6, window_bounds = array<i64: 1, 64, 64>}, {transform_indices = @transform_7, window_bounds = array<i64: 1, 64, 128>}, {transform_indices = @transform_8, window_bounds = array<i64: 1, 64, 64>}, {transform_indices = @transform_9, window_bounds = array<i64: 1, 64, 128>}, {transform_indices = @transform_10, window_bounds = array<i64: 1, 128, 64>}, {transform_indices = @transform_11, window_bounds = array<i64: 1, 13, 192>}, {transform_indices = @transform_12, window_bounds = array<i64: 2, 8, 64>}]} {
    %c0_i32 = arith.constant 0 : i32
    %0 = arith.cmpi eq, %arg1, %c0_i32 : i32
    %1 = arith.extui %0 : i1 to i32
    %c0_i32_0 = arith.constant 0 : i32
    %2 = arith.cmpi ne, %1, %c0_i32_0 : i32
    scf.if %2 {
      %c0_173 = arith.constant 0 : index
      %c0_174 = arith.constant 0 : index
      %c0_175 = arith.constant 0 : index
      %474 = vector.load %arg2[%c0_173, %c0_174, %c0_175] : memref<2x8x64xf32, #tpu.memory_space<vmem>>, vector<2x8x64xf32>
      %c0_176 = arith.constant 0 : index
      %c0_177 = arith.constant 0 : index
      %c0_178 = arith.constant 0 : index
      %475 = vector.load %arg14[%c0_176, %c0_177, %c0_178] : memref<2x8x64xf32, #tpu.memory_space<vmem>>, vector<2x8x64xf32>
      tpu.vector_store %arg14[%c0_176, %c0_177, %c0_178], %474 {strides = array<i32>} : memref<2x8x64xf32, #tpu.memory_space<vmem>>, vector<2x8x64xf32>,
      %476 = tpu.iota {dimensions = array<i32: 0>} : vector<8x8xi32>
      %477 = tpu.iota {dimensions = array<i32: 1>} : vector<8x8xi32>
      %478 = arith.cmpi sle, %477, %476 : vector<8x8xi32>
      %479 = vector.shape_cast %478 : vector<8x8xi1> to vector<1x8x8xi1>
      %c0_179 = arith.constant 0 : index
      %c0_180 = arith.constant 0 : index
      %c0_181 = arith.constant 0 : index
      %480 = vector.load %arg4[%c0_179, %c0_180, %c0_181] : memref<2x1x8xf32, #tpu.memory_space<vmem>>, vector<2x1x8xf32>
      %cst_182 = arith.constant 0.000000e+00 : f32
      %481 = vector.broadcast %cst_182 : f32 to vector<2x1x8xf32>
      %482 = arith.cmpf ogt, %480, %481 : vector<2x1x8xf32>
      %483 = vector.broadcast %479 : vector<1x8x8xi1> to vector<2x8x8xi1>
      %484 = vector.broadcast %482 : vector<2x1x8xi1> to vector<2x8x8xi1>
      %485 = arith.andi %483, %484 : vector<2x8x8xi1>
      %cst_183 = arith.constant 0.000000e+00 : f32
      %cst_184 = arith.constant -1.000000e+09 : f32
      %486 = vector.broadcast %cst_183 : f32 to vector<2x8x8xf32>
      %487 = vector.broadcast %cst_184 : f32 to vector<2x8x8xf32>
      %488 = arith.select %485, %486, %487 : vector<2x8x8xi1>, vector<2x8x8xf32>
      %c0_185 = arith.constant 0 : index
      %c0_186 = arith.constant 0 : index
      %c0_187 = arith.constant 0 : index
      %489 = vector.load %arg15[%c0_185, %c0_186, %c0_187] : memref<2x8x8xf32, #tpu.memory_space<vmem>>, vector<2x8x8xf32>
      tpu.vector_store %arg15[%c0_185, %c0_186, %c0_187], %488 {strides = array<i32>} : memref<2x8x8xf32, #tpu.memory_space<vmem>>, vector<2x8x8xf32>,
      %c0_188 = arith.constant 0 : index
      %c0_189 = arith.constant 0 : index
      %c0_190 = arith.constant 0 : index
      %490 = vector.load %arg5[%c0_188, %c0_189, %c0_190] : memref<2x1x8xf32, #tpu.memory_space<vmem>>, vector<2x1x8xf32>
      %cst_191 = arith.constant 0.000000e+00 : f32
      %491 = vector.broadcast %cst_191 : f32 to vector<2x1x8xf32>
      %492 = arith.cmpf ogt, %490, %491 : vector<2x1x8xf32>
      %cst_192 = arith.constant 0.000000e+00 : f32
      %cst_193 = arith.constant -1.000000e+09 : f32
      %493 = vector.broadcast %cst_192 : f32 to vector<2x1x8xf32>
      %494 = vector.broadcast %cst_193 : f32 to vector<2x1x8xf32>
      %495 = arith.select %492, %493, %494 : vector<2x1x8xi1>, vector<2x1x8xf32>
      %c0_194 = arith.constant 0 : index
      %c0_195 = arith.constant 0 : index
      %c0_196 = arith.constant 0 : index
      %496 = vector.load %arg16[%c0_194, %c0_195, %c0_196] : memref<2x1x8xf32, #tpu.memory_space<vmem>>, vector<2x1x8xf32>
      tpu.vector_store %arg16[%c0_194, %c0_195, %c0_196], %495 {strides = array<i32>} : memref<2x1x8xf32, #tpu.memory_space<vmem>>, vector<2x1x8xf32>,
    } else {
    }
    %c0 = arith.constant 0 : index
    %c0_1 = arith.constant 0 : index
    %c0_2 = arith.constant 0 : index
    %3 = vector.load %arg14[%c0, %c0_1, %c0_2] : memref<2x8x64xf32, #tpu.memory_space<vmem>>, vector<2x8x64xf32>
    %4 = vector.shape_cast %3 : vector<2x8x64xf32> to vector<16x64xf32>
    %c0_3 = arith.constant 0 : index
    %c0_4 = arith.constant 0 : index
    %c0_5 = arith.constant 0 : index
    %5 = vector.load %arg13[%c0_3, %c0_4, %c0_5] : memref<1x13x192xf32, #tpu.memory_space<vmem>>, vector<1x1x192xf32>
    %6 = vector.shape_cast %5 : vector<1x1x192xf32> to vector<1x192xf32>
    %c0_6 = arith.constant 0 : index
    %c0_7 = arith.constant 0 : index
    %c0_8 = arith.constant 0 : index
    %7 = vector.load %arg6[%c0_6, %c0_7, %c0_8] : memref<1x64x192xf32, #tpu.memory_space<vmem>>, vector<1x64x192xf32>
    %8 = vector.shape_cast %7 : vector<1x64x192xf32> to vector<64x192xf32>
    %cst = arith.constant dense<0.000000e+00> : vector<16x192xf32>
    %9 = tpu.matmul %4, %8, %cst {dimension_numbers = #tpu.dot_dimension_numbers<[1], [0], [0], [1], [0, 0, 1, 1], [], []>} : vector<16x64xf32>, vector<64x192xf32>, vector<16x192xf32> -> vector<16x192xf32>
    %10 = vector.broadcast %6 : vector<1x192xf32> to vector<16x192xf32>
    %11 = arith.addf %9, %10 : vector<16x192xf32>
    %12 = vector.extract_strided_slice %11 {offsets = [0, 0], sizes = [16, 64], strides = [1, 1]} : vector<16x192xf32> to vector<16x64xf32>
    %13 = vector.extract_strided_slice %11 {offsets = [0, 64], sizes = [16, 64], strides = [1, 1]} : vector<16x192xf32> to vector<16x64xf32>
    %14 = vector.extract_strided_slice %11 {offsets = [0, 128], sizes = [16, 64], strides = [1, 1]} : vector<16x192xf32> to vector<16x64xf32>
    %15 = vector.extract_strided_slice %12 {offsets = [0, 0], sizes = [8, 64], strides = [1, 1]} : vector<16x64xf32> to vector<8x64xf32>
    %16 = vector.extract_strided_slice %13 {offsets = [0, 0], sizes = [8, 64], strides = [1, 1]} : vector<16x64xf32> to vector<8x64xf32>
    %17 = vector.extract_strided_slice %14 {offsets = [0, 0], sizes = [8, 64], strides = [1, 1]} : vector<16x64xf32> to vector<8x64xf32>
    %c0_9 = arith.constant 0 : index
    %c0_10 = arith.constant 0 : index
    %c0_11 = arith.constant 0 : index
    %18 = vector.load %arg15[%c0_9, %c0_10, %c0_11] : memref<2x8x8xf32, #tpu.memory_space<vmem>>, vector<1x8x8xf32>
    %19 = vector.shape_cast %18 : vector<1x8x8xf32> to vector<8x8xf32>
    %20 = vector.extract_strided_slice %15 {offsets = [0, 0], sizes = [8, 16], strides = [1, 1]} : vector<8x64xf32> to vector<8x16xf32>
    %21 = vector.extract_strided_slice %16 {offsets = [0, 0], sizes = [8, 16], strides = [1, 1]} : vector<8x64xf32> to vector<8x16xf32>
    %cst_12 = arith.constant dense<0.000000e+00> : vector<8x8xf32>
    %22 = tpu.matmul %20, %21, %cst_12 {dimension_numbers = #tpu.dot_dimension_numbers<[1], [1], [0], [0], [0, 0, 1, 0], [], []>} : vector<8x16xf32>, vector<8x16xf32>, vector<8x8xf32> -> vector<8x8xf32>
    %cst_13 = arith.constant 2.500000e-01 : f32
    %23 = vector.broadcast %cst_13 : f32 to vector<8x8xf32>
    %24 = arith.mulf %22, %23 : vector<8x8xf32>
    %25 = arith.addf %24, %19 : vector<8x8xf32>
    %cst_14 = arith.constant dense<0xFF800000> : vector<8xf32>
    %26 = vector.multi_reduction <maximumf>, %25, %cst_14 [1] : vector<8x8xf32> to vector<8xf32>
    %27 = vector.shape_cast %26 : vector<8xf32> to vector<8x1xf32>
    %28 = vector.broadcast %27 : vector<8x1xf32> to vector<8x8xf32>
    %29 = arith.subf %25, %28 : vector<8x8xf32>
    %30 = math.exp %29 : vector<8x8xf32>
    %cst_15 = arith.constant dense<0.000000e+00> : vector<8xf32>
    %31 = vector.multi_reduction <add>, %30, %cst_15 [1] : vector<8x8xf32> to vector<8xf32>
    %32 = vector.shape_cast %31 : vector<8xf32> to vector<8x1xf32>
    %33 = tpu.reciprocal %32 {approx = true} : vector<8x1xf32> -> vector<8x1xf32>
    %34 = vector.broadcast %33 : vector<8x1xf32> to vector<8x8xf32>
    %35 = arith.mulf %30, %34 : vector<8x8xf32>
    %36 = vector.extract_strided_slice %17 {offsets = [0, 0], sizes = [8, 16], strides = [1, 1]} : vector<8x64xf32> to vector<8x16xf32>
    %cst_16 = arith.constant dense<0.000000e+00> : vector<8x16xf32>
    %37 = tpu.matmul %35, %36, %cst_16 {dimension_numbers = #tpu.dot_dimension_numbers<[1], [0], [0], [1], [0, 0, 1, 1], [], []>} : vector<8x8xf32>, vector<8x16xf32>, vector<8x16xf32> -> vector<8x16xf32>
    %38 = vector.extract_strided_slice %15 {offsets = [0, 16], sizes = [8, 16], strides = [1, 1]} : vector<8x64xf32> to vector<8x16xf32>
    %39 = vector.extract_strided_slice %16 {offsets = [0, 16], sizes = [8, 16], strides = [1, 1]} : vector<8x64xf32> to vector<8x16xf32>
    %cst_17 = arith.constant dense<0.000000e+00> : vector<8x8xf32>
    %40 = tpu.matmul %38, %39, %cst_17 {dimension_numbers = #tpu.dot_dimension_numbers<[1], [1], [0], [0], [0, 0, 1, 0], [], []>} : vector<8x16xf32>, vector<8x16xf32>, vector<8x8xf32> -> vector<8x8xf32>
    %cst_18 = arith.constant 2.500000e-01 : f32
    %41 = vector.broadcast %cst_18 : f32 to vector<8x8xf32>
    %42 = arith.mulf %40, %41 : vector<8x8xf32>
    %43 = arith.addf %42, %19 : vector<8x8xf32>
    %cst_19 = arith.constant dense<0xFF800000> : vector<8xf32>
    %44 = vector.multi_reduction <maximumf>, %43, %cst_19 [1] : vector<8x8xf32> to vector<8xf32>
    %45 = vector.shape_cast %44 : vector<8xf32> to vector<8x1xf32>
    %46 = vector.broadcast %45 : vector<8x1xf32> to vector<8x8xf32>
    %47 = arith.subf %43, %46 : vector<8x8xf32>
    %48 = math.exp %47 : vector<8x8xf32>
    %cst_20 = arith.constant dense<0.000000e+00> : vector<8xf32>
    %49 = vector.multi_reduction <add>, %48, %cst_20 [1] : vector<8x8xf32> to vector<8xf32>
    %50 = vector.shape_cast %49 : vector<8xf32> to vector<8x1xf32>
    %51 = tpu.reciprocal %50 {approx = true} : vector<8x1xf32> -> vector<8x1xf32>
    %52 = vector.broadcast %51 : vector<8x1xf32> to vector<8x8xf32>
    %53 = arith.mulf %48, %52 : vector<8x8xf32>
    %54 = vector.extract_strided_slice %17 {offsets = [0, 16], sizes = [8, 16], strides = [1, 1]} : vector<8x64xf32> to vector<8x16xf32>
    %cst_21 = arith.constant dense<0.000000e+00> : vector<8x16xf32>
    %55 = tpu.matmul %53, %54, %cst_21 {dimension_numbers = #tpu.dot_dimension_numbers<[1], [0], [0], [1], [0, 0, 1, 1], [], []>} : vector<8x8xf32>, vector<8x16xf32>, vector<8x16xf32> -> vector<8x16xf32>
    %56 = vector.extract_strided_slice %15 {offsets = [0, 32], sizes = [8, 16], strides = [1, 1]} : vector<8x64xf32> to vector<8x16xf32>
    %57 = vector.extract_strided_slice %16 {offsets = [0, 32], sizes = [8, 16], strides = [1, 1]} : vector<8x64xf32> to vector<8x16xf32>
    %cst_22 = arith.constant dense<0.000000e+00> : vector<8x8xf32>
    %58 = tpu.matmul %56, %57, %cst_22 {dimension_numbers = #tpu.dot_dimension_numbers<[1], [1], [0], [0], [0, 0, 1, 0], [], []>} : vector<8x16xf32>, vector<8x16xf32>, vector<8x8xf32> -> vector<8x8xf32>
    %cst_23 = arith.constant 2.500000e-01 : f32
    %59 = vector.broadcast %cst_23 : f32 to vector<8x8xf32>
    %60 = arith.mulf %58, %59 : vector<8x8xf32>
    %61 = arith.addf %60, %19 : vector<8x8xf32>
    %cst_24 = arith.constant dense<0xFF800000> : vector<8xf32>
    %62 = vector.multi_reduction <maximumf>, %61, %cst_24 [1] : vector<8x8xf32> to vector<8xf32>
    %63 = vector.shape_cast %62 : vector<8xf32> to vector<8x1xf32>
    %64 = vector.broadcast %63 : vector<8x1xf32> to vector<8x8xf32>
    %65 = arith.subf %61, %64 : vector<8x8xf32>
    %66 = math.exp %65 : vector<8x8xf32>
    %cst_25 = arith.constant dense<0.000000e+00> : vector<8xf32>
    %67 = vector.multi_reduction <add>, %66, %cst_25 [1] : vector<8x8xf32> to vector<8xf32>
    %68 = vector.shape_cast %67 : vector<8xf32> to vector<8x1xf32>
    %69 = tpu.reciprocal %68 {approx = true} : vector<8x1xf32> -> vector<8x1xf32>
    %70 = vector.broadcast %69 : vector<8x1xf32> to vector<8x8xf32>
    %71 = arith.mulf %66, %70 : vector<8x8xf32>
    %72 = vector.extract_strided_slice %17 {offsets = [0, 32], sizes = [8, 16], strides = [1, 1]} : vector<8x64xf32> to vector<8x16xf32>
    %cst_26 = arith.constant dense<0.000000e+00> : vector<8x16xf32>
    %73 = tpu.matmul %71, %72, %cst_26 {dimension_numbers = #tpu.dot_dimension_numbers<[1], [0], [0], [1], [0, 0, 1, 1], [], []>} : vector<8x8xf32>, vector<8x16xf32>, vector<8x16xf32> -> vector<8x16xf32>
    %74 = vector.extract_strided_slice %15 {offsets = [0, 48], sizes = [8, 16], strides = [1, 1]} : vector<8x64xf32> to vector<8x16xf32>
    %75 = vector.extract_strided_slice %16 {offsets = [0, 48], sizes = [8, 16], strides = [1, 1]} : vector<8x64xf32> to vector<8x16xf32>
    %cst_27 = arith.constant dense<0.000000e+00> : vector<8x8xf32>
    %76 = tpu.matmul %74, %75, %cst_27 {dimension_numbers = #tpu.dot_dimension_numbers<[1], [1], [0], [0], [0, 0, 1, 0], [], []>} : vector<8x16xf32>, vector<8x16xf32>, vector<8x8xf32> -> vector<8x8xf32>
    %cst_28 = arith.constant 2.500000e-01 : f32
    %77 = vector.broadcast %cst_28 : f32 to vector<8x8xf32>
    %78 = arith.mulf %76, %77 : vector<8x8xf32>
    %79 = arith.addf %78, %19 : vector<8x8xf32>
    %cst_29 = arith.constant dense<0xFF800000> : vector<8xf32>
    %80 = vector.multi_reduction <maximumf>, %79, %cst_29 [1] : vector<8x8xf32> to vector<8xf32>
    %81 = vector.shape_cast %80 : vector<8xf32> to vector<8x1xf32>
    %82 = vector.broadcast %81 : vector<8x1xf32> to vector<8x8xf32>
    %83 = arith.subf %79, %82 : vector<8x8xf32>
    %84 = math.exp %83 : vector<8x8xf32>
    %cst_30 = arith.constant dense<0.000000e+00> : vector<8xf32>
    %85 = vector.multi_reduction <add>, %84, %cst_30 [1] : vector<8x8xf32> to vector<8xf32>
    %86 = vector.shape_cast %85 : vector<8xf32> to vector<8x1xf32>
    %87 = tpu.reciprocal %86 {approx = true} : vector<8x1xf32> -> vector<8x1xf32>
    %88 = vector.broadcast %87 : vector<8x1xf32> to vector<8x8xf32>
    %89 = arith.mulf %84, %88 : vector<8x8xf32>
    %90 = vector.extract_strided_slice %17 {offsets = [0, 48], sizes = [8, 16], strides = [1, 1]} : vector<8x64xf32> to vector<8x16xf32>
    %cst_31 = arith.constant dense<0.000000e+00> : vector<8x16xf32>
    %91 = tpu.matmul %89, %90, %cst_31 {dimension_numbers = #tpu.dot_dimension_numbers<[1], [0], [0], [1], [0, 0, 1, 1], [], []>} : vector<8x8xf32>, vector<8x16xf32>, vector<8x16xf32> -> vector<8x16xf32>
    %92 = tpu.concatenate %37, %55, %73, %91 in 1 : vector<8x16xf32>, vector<8x16xf32>, vector<8x16xf32>, vector<8x16xf32> -> vector<8x64xf32>
    %93 = vector.extract_strided_slice %12 {offsets = [8, 0], sizes = [8, 64], strides = [1, 1]} : vector<16x64xf32> to vector<8x64xf32>
    %94 = vector.extract_strided_slice %13 {offsets = [8, 0], sizes = [8, 64], strides = [1, 1]} : vector<16x64xf32> to vector<8x64xf32>
    %95 = vector.extract_strided_slice %14 {offsets = [8, 0], sizes = [8, 64], strides = [1, 1]} : vector<16x64xf32> to vector<8x64xf32>
    %c1 = arith.constant 1 : index
    %c0_32 = arith.constant 0 : index
    %c0_33 = arith.constant 0 : index
    %96 = vector.load %arg15[%c1, %c0_32, %c0_33] : memref<2x8x8xf32, #tpu.memory_space<vmem>>, vector<1x8x8xf32>
    %97 = vector.shape_cast %96 : vector<1x8x8xf32> to vector<8x8xf32>
    %98 = vector.extract_strided_slice %93 {offsets = [0, 0], sizes = [8, 16], strides = [1, 1]} : vector<8x64xf32> to vector<8x16xf32>
    %99 = vector.extract_strided_slice %94 {offsets = [0, 0], sizes = [8, 16], strides = [1, 1]} : vector<8x64xf32> to vector<8x16xf32>
    %cst_34 = arith.constant dense<0.000000e+00> : vector<8x8xf32>
    %100 = tpu.matmul %98, %99, %cst_34 {dimension_numbers = #tpu.dot_dimension_numbers<[1], [1], [0], [0], [0, 0, 1, 0], [], []>} : vector<8x16xf32>, vector<8x16xf32>, vector<8x8xf32> -> vector<8x8xf32>
    %cst_35 = arith.constant 2.500000e-01 : f32
    %101 = vector.broadcast %cst_35 : f32 to vector<8x8xf32>
    %102 = arith.mulf %100, %101 : vector<8x8xf32>
    %103 = arith.addf %102, %97 : vector<8x8xf32>
    %cst_36 = arith.constant dense<0xFF800000> : vector<8xf32>
    %104 = vector.multi_reduction <maximumf>, %103, %cst_36 [1] : vector<8x8xf32> to vector<8xf32>
    %105 = vector.shape_cast %104 : vector<8xf32> to vector<8x1xf32>
    %106 = vector.broadcast %105 : vector<8x1xf32> to vector<8x8xf32>
    %107 = arith.subf %103, %106 : vector<8x8xf32>
    %108 = math.exp %107 : vector<8x8xf32>
    %cst_37 = arith.constant dense<0.000000e+00> : vector<8xf32>
    %109 = vector.multi_reduction <add>, %108, %cst_37 [1] : vector<8x8xf32> to vector<8xf32>
    %110 = vector.shape_cast %109 : vector<8xf32> to vector<8x1xf32>
    %111 = tpu.reciprocal %110 {approx = true} : vector<8x1xf32> -> vector<8x1xf32>
    %112 = vector.broadcast %111 : vector<8x1xf32> to vector<8x8xf32>
    %113 = arith.mulf %108, %112 : vector<8x8xf32>
    %114 = vector.extract_strided_slice %95 {offsets = [0, 0], sizes = [8, 16], strides = [1, 1]} : vector<8x64xf32> to vector<8x16xf32>
    %cst_38 = arith.constant dense<0.000000e+00> : vector<8x16xf32>
    %115 = tpu.matmul %113, %114, %cst_38 {dimension_numbers = #tpu.dot_dimension_numbers<[1], [0], [0], [1], [0, 0, 1, 1], [], []>} : vector<8x8xf32>, vector<8x16xf32>, vector<8x16xf32> -> vector<8x16xf32>
    %116 = vector.extract_strided_slice %93 {offsets = [0, 16], sizes = [8, 16], strides = [1, 1]} : vector<8x64xf32> to vector<8x16xf32>
    %117 = vector.extract_strided_slice %94 {offsets = [0, 16], sizes = [8, 16], strides = [1, 1]} : vector<8x64xf32> to vector<8x16xf32>
    %cst_39 = arith.constant dense<0.000000e+00> : vector<8x8xf32>
    %118 = tpu.matmul %116, %117, %cst_39 {dimension_numbers = #tpu.dot_dimension_numbers<[1], [1], [0], [0], [0, 0, 1, 0], [], []>} : vector<8x16xf32>, vector<8x16xf32>, vector<8x8xf32> -> vector<8x8xf32>
    %cst_40 = arith.constant 2.500000e-01 : f32
    %119 = vector.broadcast %cst_40 : f32 to vector<8x8xf32>
    %120 = arith.mulf %118, %119 : vector<8x8xf32>
    %121 = arith.addf %120, %97 : vector<8x8xf32>
    %cst_41 = arith.constant dense<0xFF800000> : vector<8xf32>
    %122 = vector.multi_reduction <maximumf>, %121, %cst_41 [1] : vector<8x8xf32> to vector<8xf32>
    %123 = vector.shape_cast %122 : vector<8xf32> to vector<8x1xf32>
    %124 = vector.broadcast %123 : vector<8x1xf32> to vector<8x8xf32>
    %125 = arith.subf %121, %124 : vector<8x8xf32>
    %126 = math.exp %125 : vector<8x8xf32>
    %cst_42 = arith.constant dense<0.000000e+00> : vector<8xf32>
    %127 = vector.multi_reduction <add>, %126, %cst_42 [1] : vector<8x8xf32> to vector<8xf32>
    %128 = vector.shape_cast %127 : vector<8xf32> to vector<8x1xf32>
    %129 = tpu.reciprocal %128 {approx = true} : vector<8x1xf32> -> vector<8x1xf32>
    %130 = vector.broadcast %129 : vector<8x1xf32> to vector<8x8xf32>
    %131 = arith.mulf %126, %130 : vector<8x8xf32>
    %132 = vector.extract_strided_slice %95 {offsets = [0, 16], sizes = [8, 16], strides = [1, 1]} : vector<8x64xf32> to vector<8x16xf32>
    %cst_43 = arith.constant dense<0.000000e+00> : vector<8x16xf32>
    %133 = tpu.matmul %131, %132, %cst_43 {dimension_numbers = #tpu.dot_dimension_numbers<[1], [0], [0], [1], [0, 0, 1, 1], [], []>} : vector<8x8xf32>, vector<8x16xf32>, vector<8x16xf32> -> vector<8x16xf32>
    %134 = vector.extract_strided_slice %93 {offsets = [0, 32], sizes = [8, 16], strides = [1, 1]} : vector<8x64xf32> to vector<8x16xf32>
    %135 = vector.extract_strided_slice %94 {offsets = [0, 32], sizes = [8, 16], strides = [1, 1]} : vector<8x64xf32> to vector<8x16xf32>
    %cst_44 = arith.constant dense<0.000000e+00> : vector<8x8xf32>
    %136 = tpu.matmul %134, %135, %cst_44 {dimension_numbers = #tpu.dot_dimension_numbers<[1], [1], [0], [0], [0, 0, 1, 0], [], []>} : vector<8x16xf32>, vector<8x16xf32>, vector<8x8xf32> -> vector<8x8xf32>
    %cst_45 = arith.constant 2.500000e-01 : f32
    %137 = vector.broadcast %cst_45 : f32 to vector<8x8xf32>
    %138 = arith.mulf %136, %137 : vector<8x8xf32>
    %139 = arith.addf %138, %97 : vector<8x8xf32>
    %cst_46 = arith.constant dense<0xFF800000> : vector<8xf32>
    %140 = vector.multi_reduction <maximumf>, %139, %cst_46 [1] : vector<8x8xf32> to vector<8xf32>
    %141 = vector.shape_cast %140 : vector<8xf32> to vector<8x1xf32>
    %142 = vector.broadcast %141 : vector<8x1xf32> to vector<8x8xf32>
    %143 = arith.subf %139, %142 : vector<8x8xf32>
    %144 = math.exp %143 : vector<8x8xf32>
    %cst_47 = arith.constant dense<0.000000e+00> : vector<8xf32>
    %145 = vector.multi_reduction <add>, %144, %cst_47 [1] : vector<8x8xf32> to vector<8xf32>
    %146 = vector.shape_cast %145 : vector<8xf32> to vector<8x1xf32>
    %147 = tpu.reciprocal %146 {approx = true} : vector<8x1xf32> -> vector<8x1xf32>
    %148 = vector.broadcast %147 : vector<8x1xf32> to vector<8x8xf32>
    %149 = arith.mulf %144, %148 : vector<8x8xf32>
    %150 = vector.extract_strided_slice %95 {offsets = [0, 32], sizes = [8, 16], strides = [1, 1]} : vector<8x64xf32> to vector<8x16xf32>
    %cst_48 = arith.constant dense<0.000000e+00> : vector<8x16xf32>
    %151 = tpu.matmul %149, %150, %cst_48 {dimension_numbers = #tpu.dot_dimension_numbers<[1], [0], [0], [1], [0, 0, 1, 1], [], []>} : vector<8x8xf32>, vector<8x16xf32>, vector<8x16xf32> -> vector<8x16xf32>
    %152 = vector.extract_strided_slice %93 {offsets = [0, 48], sizes = [8, 16], strides = [1, 1]} : vector<8x64xf32> to vector<8x16xf32>
    %153 = vector.extract_strided_slice %94 {offsets = [0, 48], sizes = [8, 16], strides = [1, 1]} : vector<8x64xf32> to vector<8x16xf32>
    %cst_49 = arith.constant dense<0.000000e+00> : vector<8x8xf32>
    %154 = tpu.matmul %152, %153, %cst_49 {dimension_numbers = #tpu.dot_dimension_numbers<[1], [1], [0], [0], [0, 0, 1, 0], [], []>} : vector<8x16xf32>, vector<8x16xf32>, vector<8x8xf32> -> vector<8x8xf32>
    %cst_50 = arith.constant 2.500000e-01 : f32
    %155 = vector.broadcast %cst_50 : f32 to vector<8x8xf32>
    %156 = arith.mulf %154, %155 : vector<8x8xf32>
    %157 = arith.addf %156, %97 : vector<8x8xf32>
    %cst_51 = arith.constant dense<0xFF800000> : vector<8xf32>
    %158 = vector.multi_reduction <maximumf>, %157, %cst_51 [1] : vector<8x8xf32> to vector<8xf32>
    %159 = vector.shape_cast %158 : vector<8xf32> to vector<8x1xf32>
    %160 = vector.broadcast %159 : vector<8x1xf32> to vector<8x8xf32>
    %161 = arith.subf %157, %160 : vector<8x8xf32>
    %162 = math.exp %161 : vector<8x8xf32>
    %cst_52 = arith.constant dense<0.000000e+00> : vector<8xf32>
    %163 = vector.multi_reduction <add>, %162, %cst_52 [1] : vector<8x8xf32> to vector<8xf32>
    %164 = vector.shape_cast %163 : vector<8xf32> to vector<8x1xf32>
    %165 = tpu.reciprocal %164 {approx = true} : vector<8x1xf32> -> vector<8x1xf32>
    %166 = vector.broadcast %165 : vector<8x1xf32> to vector<8x8xf32>
    %167 = arith.mulf %162, %166 : vector<8x8xf32>
    %168 = vector.extract_strided_slice %95 {offsets = [0, 48], sizes = [8, 16], strides = [1, 1]} : vector<8x64xf32> to vector<8x16xf32>
    %cst_53 = arith.constant dense<0.000000e+00> : vector<8x16xf32>
    %169 = tpu.matmul %167, %168, %cst_53 {dimension_numbers = #tpu.dot_dimension_numbers<[1], [0], [0], [1], [0, 0, 1, 1], [], []>} : vector<8x8xf32>, vector<8x16xf32>, vector<8x16xf32> -> vector<8x16xf32>
    %170 = tpu.concatenate %115, %133, %151, %169 in 1 : vector<8x16xf32>, vector<8x16xf32>, vector<8x16xf32>, vector<8x16xf32> -> vector<8x64xf32>
    %171 = tpu.concatenate %92, %170 in 0 : vector<8x64xf32>, vector<8x64xf32> -> vector<16x64xf32>
    %c0_54 = arith.constant 0 : index
    %c1_55 = arith.constant 1 : index
    %c0_56 = arith.constant 0 : index
    %172 = vector.load %arg13[%c0_54, %c1_55, %c0_56] : memref<1x13x192xf32, #tpu.memory_space<vmem>>, vector<1x1x64xf32>
    %173 = vector.shape_cast %172 : vector<1x1x64xf32> to vector<1x64xf32>
    %c0_57 = arith.constant 0 : index
    %c0_58 = arith.constant 0 : index
    %c0_59 = arith.constant 0 : index
    %174 = vector.load %arg7[%c0_57, %c0_58, %c0_59] : memref<1x64x64xf32, #tpu.memory_space<vmem>>, vector<1x64x64xf32>
    %175 = vector.shape_cast %174 : vector<1x64x64xf32> to vector<64x64xf32>
    %cst_60 = arith.constant dense<0.000000e+00> : vector<16x64xf32>
    %176 = tpu.matmul %171, %175, %cst_60 {dimension_numbers = #tpu.dot_dimension_numbers<[1], [0], [0], [1], [0, 0, 1, 1], [], []>} : vector<16x64xf32>, vector<64x64xf32>, vector<16x64xf32> -> vector<16x64xf32>
    %177 = vector.broadcast %173 : vector<1x64xf32> to vector<16x64xf32>
    %178 = arith.addf %176, %177 : vector<16x64xf32>
    %179 = arith.addf %4, %178 : vector<16x64xf32>
    %c0_61 = arith.constant 0 : index
    %c7 = arith.constant 7 : index
    %c0_62 = arith.constant 0 : index
    %180 = vector.load %arg13[%c0_61, %c7, %c0_62] : memref<1x13x192xf32, #tpu.memory_space<vmem>>, vector<1x1x64xf32>
    %181 = vector.shape_cast %180 : vector<1x1x64xf32> to vector<1x64xf32>
    %c0_63 = arith.constant 0 : index
    %c8 = arith.constant 8 : index
    %c0_64 = arith.constant 0 : index
    %182 = vector.load %arg13[%c0_63, %c8, %c0_64] : memref<1x13x192xf32, #tpu.memory_space<vmem>>, vector<1x1x64xf32>
    %183 = vector.shape_cast %182 : vector<1x1x64xf32> to vector<1x64xf32>
    %cst_65 = arith.constant dense<0.000000e+00> : vector<16xf32>
    %184 = vector.multi_reduction <add>, %179, %cst_65 [1] : vector<16x64xf32> to vector<16xf32>
    %185 = vector.shape_cast %184 : vector<16xf32> to vector<16x1xf32>
    %cst_66 = arith.constant 6.400000e+01 : f32
    %186 = vector.broadcast %cst_66 : f32 to vector<16x1xf32>
    %187 = arith.divf %185, %186 : vector<16x1xf32>
    %188 = vector.broadcast %187 : vector<16x1xf32> to vector<16x64xf32>
    %189 = arith.subf %179, %188 : vector<16x64xf32>
    %190 = arith.mulf %189, %189 : vector<16x64xf32>
    %cst_67 = arith.constant dense<0.000000e+00> : vector<16xf32>
    %191 = vector.multi_reduction <add>, %190, %cst_67 [1] : vector<16x64xf32> to vector<16xf32>
    %192 = vector.shape_cast %191 : vector<16xf32> to vector<16x1xf32>
    %cst_68 = arith.constant 6.400000e+01 : f32
    %193 = vector.broadcast %cst_68 : f32 to vector<16x1xf32>
    %194 = arith.divf %192, %193 : vector<16x1xf32>
    %195 = vector.broadcast %187 : vector<16x1xf32> to vector<16x64xf32>
    %196 = arith.subf %179, %195 : vector<16x64xf32>
    %cst_69 = arith.constant 9.99999974E-6 : f32
    %197 = vector.broadcast %cst_69 : f32 to vector<16x1xf32>
    %198 = arith.addf %194, %197 : vector<16x1xf32>
    %199 = math.rsqrt %198 : vector<16x1xf32>
    %200 = vector.broadcast %199 : vector<16x1xf32> to vector<16x64xf32>
    %201 = arith.mulf %196, %200 : vector<16x64xf32>
    %202 = vector.broadcast %181 : vector<1x64xf32> to vector<16x64xf32>
    %203 = arith.mulf %201, %202 : vector<16x64xf32>
    %204 = vector.broadcast %183 : vector<1x64xf32> to vector<16x64xf32>
    %205 = arith.addf %203, %204 : vector<16x64xf32>
    %c0_70 = arith.constant 0 : index
    %c2 = arith.constant 2 : index
    %c0_71 = arith.constant 0 : index
    %206 = vector.load %arg13[%c0_70, %c2, %c0_71] : memref<1x13x192xf32, #tpu.memory_space<vmem>>, vector<1x1x64xf32>
    %207 = vector.shape_cast %206 : vector<1x1x64xf32> to vector<1x64xf32>
    %c0_72 = arith.constant 0 : index
    %c0_73 = arith.constant 0 : index
    %c0_74 = arith.constant 0 : index
    %208 = vector.load %arg8[%c0_72, %c0_73, %c0_74] : memref<1x64x64xf32, #tpu.memory_space<vmem>>, vector<1x64x64xf32>
    %209 = vector.shape_cast %208 : vector<1x64x64xf32> to vector<64x64xf32>
    %cst_75 = arith.constant dense<0.000000e+00> : vector<16x64xf32>
    %210 = tpu.matmul %205, %209, %cst_75 {dimension_numbers = #tpu.dot_dimension_numbers<[1], [0], [0], [1], [0, 0, 1, 1], [], []>} : vector<16x64xf32>, vector<64x64xf32>, vector<16x64xf32> -> vector<16x64xf32>
    %211 = vector.broadcast %207 : vector<1x64xf32> to vector<16x64xf32>
    %212 = arith.addf %210, %211 : vector<16x64xf32>
    %c0_76 = arith.constant 0 : index
    %c0_77 = arith.constant 0 : index
    %c0_78 = arith.constant 0 : index
    %213 = vector.load %arg3[%c0_76, %c0_77, %c0_78] : memref<2x8x64xf32, #tpu.memory_space<vmem>>, vector<2x8x64xf32>
    %214 = vector.shape_cast %213 : vector<2x8x64xf32> to vector<16x64xf32>
    %c0_79 = arith.constant 0 : index
    %c3 = arith.constant 3 : index
    %c0_80 = arith.constant 0 : index
    %215 = vector.load %arg13[%c0_79, %c3, %c0_80] : memref<1x13x192xf32, #tpu.memory_space<vmem>>, vector<1x1x128xf32>
    %216 = vector.shape_cast %215 : vector<1x1x128xf32> to vector<1x128xf32>
    %c0_81 = arith.constant 0 : index
    %c0_82 = arith.constant 0 : index
    %c0_83 = arith.constant 0 : index
    %217 = vector.load %arg9[%c0_81, %c0_82, %c0_83] : memref<1x64x128xf32, #tpu.memory_space<vmem>>, vector<1x64x128xf32>
    %218 = vector.shape_cast %217 : vector<1x64x128xf32> to vector<64x128xf32>
    %cst_84 = arith.constant dense<0.000000e+00> : vector<16x128xf32>
    %219 = tpu.matmul %214, %218, %cst_84 {dimension_numbers = #tpu.dot_dimension_numbers<[1], [0], [0], [1], [0, 0, 1, 1], [], []>} : vector<16x64xf32>, vector<64x128xf32>, vector<16x128xf32> -> vector<16x128xf32>
    %220 = vector.broadcast %216 : vector<1x128xf32> to vector<16x128xf32>
    %221 = arith.addf %219, %220 : vector<16x128xf32>
    %222 = vector.extract_strided_slice %221 {offsets = [0, 0], sizes = [16, 64], strides = [1, 1]} : vector<16x128xf32> to vector<16x64xf32>
    %223 = vector.extract_strided_slice %221 {offsets = [0, 64], sizes = [16, 64], strides = [1, 1]} : vector<16x128xf32> to vector<16x64xf32>
    %224 = vector.extract_strided_slice %212 {offsets = [0, 0], sizes = [8, 64], strides = [1, 1]} : vector<16x64xf32> to vector<8x64xf32>
    %225 = vector.extract_strided_slice %222 {offsets = [0, 0], sizes = [8, 64], strides = [1, 1]} : vector<16x64xf32> to vector<8x64xf32>
    %226 = vector.extract_strided_slice %223 {offsets = [0, 0], sizes = [8, 64], strides = [1, 1]} : vector<16x64xf32> to vector<8x64xf32>
    %c0_85 = arith.constant 0 : index
    %c0_86 = arith.constant 0 : index
    %c0_87 = arith.constant 0 : index
    %227 = vector.load %arg16[%c0_85, %c0_86, %c0_87] : memref<2x1x8xf32, #tpu.memory_space<vmem>>, vector<1x1x8xf32>
    %228 = vector.shape_cast %227 : vector<1x1x8xf32> to vector<1x8xf32>
    %229 = vector.extract_strided_slice %224 {offsets = [0, 0], sizes = [8, 16], strides = [1, 1]} : vector<8x64xf32> to vector<8x16xf32>
    %230 = vector.extract_strided_slice %225 {offsets = [0, 0], sizes = [8, 16], strides = [1, 1]} : vector<8x64xf32> to vector<8x16xf32>
    %cst_88 = arith.constant dense<0.000000e+00> : vector<8x8xf32>
    %231 = tpu.matmul %229, %230, %cst_88 {dimension_numbers = #tpu.dot_dimension_numbers<[1], [1], [0], [0], [0, 0, 1, 0], [], []>} : vector<8x16xf32>, vector<8x16xf32>, vector<8x8xf32> -> vector<8x8xf32>
    %cst_89 = arith.constant 2.500000e-01 : f32
    %232 = vector.broadcast %cst_89 : f32 to vector<8x8xf32>
    %233 = arith.mulf %231, %232 : vector<8x8xf32>
    %234 = vector.broadcast %228 : vector<1x8xf32> to vector<8x8xf32>
    %235 = arith.addf %233, %234 : vector<8x8xf32>
    %cst_90 = arith.constant dense<0xFF800000> : vector<8xf32>
    %236 = vector.multi_reduction <maximumf>, %235, %cst_90 [1] : vector<8x8xf32> to vector<8xf32>
    %237 = vector.shape_cast %236 : vector<8xf32> to vector<8x1xf32>
    %238 = vector.broadcast %237 : vector<8x1xf32> to vector<8x8xf32>
    %239 = arith.subf %235, %238 : vector<8x8xf32>
    %240 = math.exp %239 : vector<8x8xf32>
    %cst_91 = arith.constant dense<0.000000e+00> : vector<8xf32>
    %241 = vector.multi_reduction <add>, %240, %cst_91 [1] : vector<8x8xf32> to vector<8xf32>
    %242 = vector.shape_cast %241 : vector<8xf32> to vector<8x1xf32>
    %243 = tpu.reciprocal %242 {approx = true} : vector<8x1xf32> -> vector<8x1xf32>
    %244 = vector.broadcast %243 : vector<8x1xf32> to vector<8x8xf32>
    %245 = arith.mulf %240, %244 : vector<8x8xf32>
    %246 = vector.extract_strided_slice %226 {offsets = [0, 0], sizes = [8, 16], strides = [1, 1]} : vector<8x64xf32> to vector<8x16xf32>
    %cst_92 = arith.constant dense<0.000000e+00> : vector<8x16xf32>
    %247 = tpu.matmul %245, %246, %cst_92 {dimension_numbers = #tpu.dot_dimension_numbers<[1], [0], [0], [1], [0, 0, 1, 1], [], []>} : vector<8x8xf32>, vector<8x16xf32>, vector<8x16xf32> -> vector<8x16xf32>
    %248 = vector.extract_strided_slice %224 {offsets = [0, 16], sizes = [8, 16], strides = [1, 1]} : vector<8x64xf32> to vector<8x16xf32>
    %249 = vector.extract_strided_slice %225 {offsets = [0, 16], sizes = [8, 16], strides = [1, 1]} : vector<8x64xf32> to vector<8x16xf32>
    %cst_93 = arith.constant dense<0.000000e+00> : vector<8x8xf32>
    %250 = tpu.matmul %248, %249, %cst_93 {dimension_numbers = #tpu.dot_dimension_numbers<[1], [1], [0], [0], [0, 0, 1, 0], [], []>} : vector<8x16xf32>, vector<8x16xf32>, vector<8x8xf32> -> vector<8x8xf32>
    %cst_94 = arith.constant 2.500000e-01 : f32
    %251 = vector.broadcast %cst_94 : f32 to vector<8x8xf32>
    %252 = arith.mulf %250, %251 : vector<8x8xf32>
    %253 = vector.broadcast %228 : vector<1x8xf32> to vector<8x8xf32>
    %254 = arith.addf %252, %253 : vector<8x8xf32>
    %cst_95 = arith.constant dense<0xFF800000> : vector<8xf32>
    %255 = vector.multi_reduction <maximumf>, %254, %cst_95 [1] : vector<8x8xf32> to vector<8xf32>
    %256 = vector.shape_cast %255 : vector<8xf32> to vector<8x1xf32>
    %257 = vector.broadcast %256 : vector<8x1xf32> to vector<8x8xf32>
    %258 = arith.subf %254, %257 : vector<8x8xf32>
    %259 = math.exp %258 : vector<8x8xf32>
    %cst_96 = arith.constant dense<0.000000e+00> : vector<8xf32>
    %260 = vector.multi_reduction <add>, %259, %cst_96 [1] : vector<8x8xf32> to vector<8xf32>
    %261 = vector.shape_cast %260 : vector<8xf32> to vector<8x1xf32>
    %262 = tpu.reciprocal %261 {approx = true} : vector<8x1xf32> -> vector<8x1xf32>
    %263 = vector.broadcast %262 : vector<8x1xf32> to vector<8x8xf32>
    %264 = arith.mulf %259, %263 : vector<8x8xf32>
    %265 = vector.extract_strided_slice %226 {offsets = [0, 16], sizes = [8, 16], strides = [1, 1]} : vector<8x64xf32> to vector<8x16xf32>
    %cst_97 = arith.constant dense<0.000000e+00> : vector<8x16xf32>
    %266 = tpu.matmul %264, %265, %cst_97 {dimension_numbers = #tpu.dot_dimension_numbers<[1], [0], [0], [1], [0, 0, 1, 1], [], []>} : vector<8x8xf32>, vector<8x16xf32>, vector<8x16xf32> -> vector<8x16xf32>
    %267 = vector.extract_strided_slice %224 {offsets = [0, 32], sizes = [8, 16], strides = [1, 1]} : vector<8x64xf32> to vector<8x16xf32>
    %268 = vector.extract_strided_slice %225 {offsets = [0, 32], sizes = [8, 16], strides = [1, 1]} : vector<8x64xf32> to vector<8x16xf32>
    %cst_98 = arith.constant dense<0.000000e+00> : vector<8x8xf32>
    %269 = tpu.matmul %267, %268, %cst_98 {dimension_numbers = #tpu.dot_dimension_numbers<[1], [1], [0], [0], [0, 0, 1, 0], [], []>} : vector<8x16xf32>, vector<8x16xf32>, vector<8x8xf32> -> vector<8x8xf32>
    %cst_99 = arith.constant 2.500000e-01 : f32
    %270 = vector.broadcast %cst_99 : f32 to vector<8x8xf32>
    %271 = arith.mulf %269, %270 : vector<8x8xf32>
    %272 = vector.broadcast %228 : vector<1x8xf32> to vector<8x8xf32>
    %273 = arith.addf %271, %272 : vector<8x8xf32>
    %cst_100 = arith.constant dense<0xFF800000> : vector<8xf32>
    %274 = vector.multi_reduction <maximumf>, %273, %cst_100 [1] : vector<8x8xf32> to vector<8xf32>
    %275 = vector.shape_cast %274 : vector<8xf32> to vector<8x1xf32>
    %276 = vector.broadcast %275 : vector<8x1xf32> to vector<8x8xf32>
    %277 = arith.subf %273, %276 : vector<8x8xf32>
    %278 = math.exp %277 : vector<8x8xf32>
    %cst_101 = arith.constant dense<0.000000e+00> : vector<8xf32>
    %279 = vector.multi_reduction <add>, %278, %cst_101 [1] : vector<8x8xf32> to vector<8xf32>
    %280 = vector.shape_cast %279 : vector<8xf32> to vector<8x1xf32>
    %281 = tpu.reciprocal %280 {approx = true} : vector<8x1xf32> -> vector<8x1xf32>
    %282 = vector.broadcast %281 : vector<8x1xf32> to vector<8x8xf32>
    %283 = arith.mulf %278, %282 : vector<8x8xf32>
    %284 = vector.extract_strided_slice %226 {offsets = [0, 32], sizes = [8, 16], strides = [1, 1]} : vector<8x64xf32> to vector<8x16xf32>
    %cst_102 = arith.constant dense<0.000000e+00> : vector<8x16xf32>
    %285 = tpu.matmul %283, %284, %cst_102 {dimension_numbers = #tpu.dot_dimension_numbers<[1], [0], [0], [1], [0, 0, 1, 1], [], []>} : vector<8x8xf32>, vector<8x16xf32>, vector<8x16xf32> -> vector<8x16xf32>
    %286 = vector.extract_strided_slice %224 {offsets = [0, 48], sizes = [8, 16], strides = [1, 1]} : vector<8x64xf32> to vector<8x16xf32>
    %287 = vector.extract_strided_slice %225 {offsets = [0, 48], sizes = [8, 16], strides = [1, 1]} : vector<8x64xf32> to vector<8x16xf32>
    %cst_103 = arith.constant dense<0.000000e+00> : vector<8x8xf32>
    %288 = tpu.matmul %286, %287, %cst_103 {dimension_numbers = #tpu.dot_dimension_numbers<[1], [1], [0], [0], [0, 0, 1, 0], [], []>} : vector<8x16xf32>, vector<8x16xf32>, vector<8x8xf32> -> vector<8x8xf32>
    %cst_104 = arith.constant 2.500000e-01 : f32
    %289 = vector.broadcast %cst_104 : f32 to vector<8x8xf32>
    %290 = arith.mulf %288, %289 : vector<8x8xf32>
    %291 = vector.broadcast %228 : vector<1x8xf32> to vector<8x8xf32>
    %292 = arith.addf %290, %291 : vector<8x8xf32>
    %cst_105 = arith.constant dense<0xFF800000> : vector<8xf32>
    %293 = vector.multi_reduction <maximumf>, %292, %cst_105 [1] : vector<8x8xf32> to vector<8xf32>
    %294 = vector.shape_cast %293 : vector<8xf32> to vector<8x1xf32>
    %295 = vector.broadcast %294 : vector<8x1xf32> to vector<8x8xf32>
    %296 = arith.subf %292, %295 : vector<8x8xf32>
    %297 = math.exp %296 : vector<8x8xf32>
    %cst_106 = arith.constant dense<0.000000e+00> : vector<8xf32>
    %298 = vector.multi_reduction <add>, %297, %cst_106 [1] : vector<8x8xf32> to vector<8xf32>
    %299 = vector.shape_cast %298 : vector<8xf32> to vector<8x1xf32>
    %300 = tpu.reciprocal %299 {approx = true} : vector<8x1xf32> -> vector<8x1xf32>
    %301 = vector.broadcast %300 : vector<8x1xf32> to vector<8x8xf32>
    %302 = arith.mulf %297, %301 : vector<8x8xf32>
    %303 = vector.extract_strided_slice %226 {offsets = [0, 48], sizes = [8, 16], strides = [1, 1]} : vector<8x64xf32> to vector<8x16xf32>
    %cst_107 = arith.constant dense<0.000000e+00> : vector<8x16xf32>
    %304 = tpu.matmul %302, %303, %cst_107 {dimension_numbers = #tpu.dot_dimension_numbers<[1], [0], [0], [1], [0, 0, 1, 1], [], []>} : vector<8x8xf32>, vector<8x16xf32>, vector<8x16xf32> -> vector<8x16xf32>
    %305 = tpu.concatenate %247, %266, %285, %304 in 1 : vector<8x16xf32>, vector<8x16xf32>, vector<8x16xf32>, vector<8x16xf32> -> vector<8x64xf32>
    %306 = vector.extract_strided_slice %212 {offsets = [8, 0], sizes = [8, 64], strides = [1, 1]} : vector<16x64xf32> to vector<8x64xf32>
    %307 = vector.extract_strided_slice %222 {offsets = [8, 0], sizes = [8, 64], strides = [1, 1]} : vector<16x64xf32> to vector<8x64xf32>
    %308 = vector.extract_strided_slice %223 {offsets = [8, 0], sizes = [8, 64], strides = [1, 1]} : vector<16x64xf32> to vector<8x64xf32>
    %c1_108 = arith.constant 1 : index
    %c0_109 = arith.constant 0 : index
    %c0_110 = arith.constant 0 : index
    %309 = vector.load %arg16[%c1_108, %c0_109, %c0_110] : memref<2x1x8xf32, #tpu.memory_space<vmem>>, vector<1x1x8xf32>
    %310 = vector.shape_cast %309 : vector<1x1x8xf32> to vector<1x8xf32>
    %311 = vector.extract_strided_slice %306 {offsets = [0, 0], sizes = [8, 16], strides = [1, 1]} : vector<8x64xf32> to vector<8x16xf32>
    %312 = vector.extract_strided_slice %307 {offsets = [0, 0], sizes = [8, 16], strides = [1, 1]} : vector<8x64xf32> to vector<8x16xf32>
    %cst_111 = arith.constant dense<0.000000e+00> : vector<8x8xf32>
    %313 = tpu.matmul %311, %312, %cst_111 {dimension_numbers = #tpu.dot_dimension_numbers<[1], [1], [0], [0], [0, 0, 1, 0], [], []>} : vector<8x16xf32>, vector<8x16xf32>, vector<8x8xf32> -> vector<8x8xf32>
    %cst_112 = arith.constant 2.500000e-01 : f32
    %314 = vector.broadcast %cst_112 : f32 to vector<8x8xf32>
    %315 = arith.mulf %313, %314 : vector<8x8xf32>
    %316 = vector.broadcast %310 : vector<1x8xf32> to vector<8x8xf32>
    %317 = arith.addf %315, %316 : vector<8x8xf32>
    %cst_113 = arith.constant dense<0xFF800000> : vector<8xf32>
    %318 = vector.multi_reduction <maximumf>, %317, %cst_113 [1] : vector<8x8xf32> to vector<8xf32>
    %319 = vector.shape_cast %318 : vector<8xf32> to vector<8x1xf32>
    %320 = vector.broadcast %319 : vector<8x1xf32> to vector<8x8xf32>
    %321 = arith.subf %317, %320 : vector<8x8xf32>
    %322 = math.exp %321 : vector<8x8xf32>
    %cst_114 = arith.constant dense<0.000000e+00> : vector<8xf32>
    %323 = vector.multi_reduction <add>, %322, %cst_114 [1] : vector<8x8xf32> to vector<8xf32>
    %324 = vector.shape_cast %323 : vector<8xf32> to vector<8x1xf32>
    %325 = tpu.reciprocal %324 {approx = true} : vector<8x1xf32> -> vector<8x1xf32>
    %326 = vector.broadcast %325 : vector<8x1xf32> to vector<8x8xf32>
    %327 = arith.mulf %322, %326 : vector<8x8xf32>
    %328 = vector.extract_strided_slice %308 {offsets = [0, 0], sizes = [8, 16], strides = [1, 1]} : vector<8x64xf32> to vector<8x16xf32>
    %cst_115 = arith.constant dense<0.000000e+00> : vector<8x16xf32>
    %329 = tpu.matmul %327, %328, %cst_115 {dimension_numbers = #tpu.dot_dimension_numbers<[1], [0], [0], [1], [0, 0, 1, 1], [], []>} : vector<8x8xf32>, vector<8x16xf32>, vector<8x16xf32> -> vector<8x16xf32>
    %330 = vector.extract_strided_slice %306 {offsets = [0, 16], sizes = [8, 16], strides = [1, 1]} : vector<8x64xf32> to vector<8x16xf32>
    %331 = vector.extract_strided_slice %307 {offsets = [0, 16], sizes = [8, 16], strides = [1, 1]} : vector<8x64xf32> to vector<8x16xf32>
    %cst_116 = arith.constant dense<0.000000e+00> : vector<8x8xf32>
    %332 = tpu.matmul %330, %331, %cst_116 {dimension_numbers = #tpu.dot_dimension_numbers<[1], [1], [0], [0], [0, 0, 1, 0], [], []>} : vector<8x16xf32>, vector<8x16xf32>, vector<8x8xf32> -> vector<8x8xf32>
    %cst_117 = arith.constant 2.500000e-01 : f32
    %333 = vector.broadcast %cst_117 : f32 to vector<8x8xf32>
    %334 = arith.mulf %332, %333 : vector<8x8xf32>
    %335 = vector.broadcast %310 : vector<1x8xf32> to vector<8x8xf32>
    %336 = arith.addf %334, %335 : vector<8x8xf32>
    %cst_118 = arith.constant dense<0xFF800000> : vector<8xf32>
    %337 = vector.multi_reduction <maximumf>, %336, %cst_118 [1] : vector<8x8xf32> to vector<8xf32>
    %338 = vector.shape_cast %337 : vector<8xf32> to vector<8x1xf32>
    %339 = vector.broadcast %338 : vector<8x1xf32> to vector<8x8xf32>
    %340 = arith.subf %336, %339 : vector<8x8xf32>
    %341 = math.exp %340 : vector<8x8xf32>
    %cst_119 = arith.constant dense<0.000000e+00> : vector<8xf32>
    %342 = vector.multi_reduction <add>, %341, %cst_119 [1] : vector<8x8xf32> to vector<8xf32>
    %343 = vector.shape_cast %342 : vector<8xf32> to vector<8x1xf32>
    %344 = tpu.reciprocal %343 {approx = true} : vector<8x1xf32> -> vector<8x1xf32>
    %345 = vector.broadcast %344 : vector<8x1xf32> to vector<8x8xf32>
    %346 = arith.mulf %341, %345 : vector<8x8xf32>
    %347 = vector.extract_strided_slice %308 {offsets = [0, 16], sizes = [8, 16], strides = [1, 1]} : vector<8x64xf32> to vector<8x16xf32>
    %cst_120 = arith.constant dense<0.000000e+00> : vector<8x16xf32>
    %348 = tpu.matmul %346, %347, %cst_120 {dimension_numbers = #tpu.dot_dimension_numbers<[1], [0], [0], [1], [0, 0, 1, 1], [], []>} : vector<8x8xf32>, vector<8x16xf32>, vector<8x16xf32> -> vector<8x16xf32>
    %349 = vector.extract_strided_slice %306 {offsets = [0, 32], sizes = [8, 16], strides = [1, 1]} : vector<8x64xf32> to vector<8x16xf32>
    %350 = vector.extract_strided_slice %307 {offsets = [0, 32], sizes = [8, 16], strides = [1, 1]} : vector<8x64xf32> to vector<8x16xf32>
    %cst_121 = arith.constant dense<0.000000e+00> : vector<8x8xf32>
    %351 = tpu.matmul %349, %350, %cst_121 {dimension_numbers = #tpu.dot_dimension_numbers<[1], [1], [0], [0], [0, 0, 1, 0], [], []>} : vector<8x16xf32>, vector<8x16xf32>, vector<8x8xf32> -> vector<8x8xf32>
    %cst_122 = arith.constant 2.500000e-01 : f32
    %352 = vector.broadcast %cst_122 : f32 to vector<8x8xf32>
    %353 = arith.mulf %351, %352 : vector<8x8xf32>
    %354 = vector.broadcast %310 : vector<1x8xf32> to vector<8x8xf32>
    %355 = arith.addf %353, %354 : vector<8x8xf32>
    %cst_123 = arith.constant dense<0xFF800000> : vector<8xf32>
    %356 = vector.multi_reduction <maximumf>, %355, %cst_123 [1] : vector<8x8xf32> to vector<8xf32>
    %357 = vector.shape_cast %356 : vector<8xf32> to vector<8x1xf32>
    %358 = vector.broadcast %357 : vector<8x1xf32> to vector<8x8xf32>
    %359 = arith.subf %355, %358 : vector<8x8xf32>
    %360 = math.exp %359 : vector<8x8xf32>
    %cst_124 = arith.constant dense<0.000000e+00> : vector<8xf32>
    %361 = vector.multi_reduction <add>, %360, %cst_124 [1] : vector<8x8xf32> to vector<8xf32>
    %362 = vector.shape_cast %361 : vector<8xf32> to vector<8x1xf32>
    %363 = tpu.reciprocal %362 {approx = true} : vector<8x1xf32> -> vector<8x1xf32>
    %364 = vector.broadcast %363 : vector<8x1xf32> to vector<8x8xf32>
    %365 = arith.mulf %360, %364 : vector<8x8xf32>
    %366 = vector.extract_strided_slice %308 {offsets = [0, 32], sizes = [8, 16], strides = [1, 1]} : vector<8x64xf32> to vector<8x16xf32>
    %cst_125 = arith.constant dense<0.000000e+00> : vector<8x16xf32>
    %367 = tpu.matmul %365, %366, %cst_125 {dimension_numbers = #tpu.dot_dimension_numbers<[1], [0], [0], [1], [0, 0, 1, 1], [], []>} : vector<8x8xf32>, vector<8x16xf32>, vector<8x16xf32> -> vector<8x16xf32>
    %368 = vector.extract_strided_slice %306 {offsets = [0, 48], sizes = [8, 16], strides = [1, 1]} : vector<8x64xf32> to vector<8x16xf32>
    %369 = vector.extract_strided_slice %307 {offsets = [0, 48], sizes = [8, 16], strides = [1, 1]} : vector<8x64xf32> to vector<8x16xf32>
    %cst_126 = arith.constant dense<0.000000e+00> : vector<8x8xf32>
    %370 = tpu.matmul %368, %369, %cst_126 {dimension_numbers = #tpu.dot_dimension_numbers<[1], [1], [0], [0], [0, 0, 1, 0], [], []>} : vector<8x16xf32>, vector<8x16xf32>, vector<8x8xf32> -> vector<8x8xf32>
    %cst_127 = arith.constant 2.500000e-01 : f32
    %371 = vector.broadcast %cst_127 : f32 to vector<8x8xf32>
    %372 = arith.mulf %370, %371 : vector<8x8xf32>
    %373 = vector.broadcast %310 : vector<1x8xf32> to vector<8x8xf32>
    %374 = arith.addf %372, %373 : vector<8x8xf32>
    %cst_128 = arith.constant dense<0xFF800000> : vector<8xf32>
    %375 = vector.multi_reduction <maximumf>, %374, %cst_128 [1] : vector<8x8xf32> to vector<8xf32>
    %376 = vector.shape_cast %375 : vector<8xf32> to vector<8x1xf32>
    %377 = vector.broadcast %376 : vector<8x1xf32> to vector<8x8xf32>
    %378 = arith.subf %374, %377 : vector<8x8xf32>
    %379 = math.exp %378 : vector<8x8xf32>
    %cst_129 = arith.constant dense<0.000000e+00> : vector<8xf32>
    %380 = vector.multi_reduction <add>, %379, %cst_129 [1] : vector<8x8xf32> to vector<8xf32>
    %381 = vector.shape_cast %380 : vector<8xf32> to vector<8x1xf32>
    %382 = tpu.reciprocal %381 {approx = true} : vector<8x1xf32> -> vector<8x1xf32>
    %383 = vector.broadcast %382 : vector<8x1xf32> to vector<8x8xf32>
    %384 = arith.mulf %379, %383 : vector<8x8xf32>
    %385 = vector.extract_strided_slice %308 {offsets = [0, 48], sizes = [8, 16], strides = [1, 1]} : vector<8x64xf32> to vector<8x16xf32>
    %cst_130 = arith.constant dense<0.000000e+00> : vector<8x16xf32>
    %386 = tpu.matmul %384, %385, %cst_130 {dimension_numbers = #tpu.dot_dimension_numbers<[1], [0], [0], [1], [0, 0, 1, 1], [], []>} : vector<8x8xf32>, vector<8x16xf32>, vector<8x16xf32> -> vector<8x16xf32>
    %387 = tpu.concatenate %329, %348, %367, %386 in 1 : vector<8x16xf32>, vector<8x16xf32>, vector<8x16xf32>, vector<8x16xf32> -> vector<8x64xf32>
    %388 = tpu.concatenate %305, %387 in 0 : vector<8x64xf32>, vector<8x64xf32> -> vector<16x64xf32>
    %c0_131 = arith.constant 0 : index
    %c4 = arith.constant 4 : index
    %c0_132 = arith.constant 0 : index
    %389 = vector.load %arg13[%c0_131, %c4, %c0_132] : memref<1x13x192xf32, #tpu.memory_space<vmem>>, vector<1x1x64xf32>
    %390 = vector.shape_cast %389 : vector<1x1x64xf32> to vector<1x64xf32>
    %c0_133 = arith.constant 0 : index
    %c0_134 = arith.constant 0 : index
    %c0_135 = arith.constant 0 : index
    %391 = vector.load %arg10[%c0_133, %c0_134, %c0_135] : memref<1x64x64xf32, #tpu.memory_space<vmem>>, vector<1x64x64xf32>
    %392 = vector.shape_cast %391 : vector<1x64x64xf32> to vector<64x64xf32>
    %cst_136 = arith.constant dense<0.000000e+00> : vector<16x64xf32>
    %393 = tpu.matmul %388, %392, %cst_136 {dimension_numbers = #tpu.dot_dimension_numbers<[1], [0], [0], [1], [0, 0, 1, 1], [], []>} : vector<16x64xf32>, vector<64x64xf32>, vector<16x64xf32> -> vector<16x64xf32>
    %394 = vector.broadcast %390 : vector<1x64xf32> to vector<16x64xf32>
    %395 = arith.addf %393, %394 : vector<16x64xf32>
    %396 = arith.addf %205, %395 : vector<16x64xf32>
    %c0_137 = arith.constant 0 : index
    %c9 = arith.constant 9 : index
    %c0_138 = arith.constant 0 : index
    %397 = vector.load %arg13[%c0_137, %c9, %c0_138] : memref<1x13x192xf32, #tpu.memory_space<vmem>>, vector<1x1x64xf32>
    %398 = vector.shape_cast %397 : vector<1x1x64xf32> to vector<1x64xf32>
    %c0_139 = arith.constant 0 : index
    %c10 = arith.constant 10 : index
    %c0_140 = arith.constant 0 : index
    %399 = vector.load %arg13[%c0_139, %c10, %c0_140] : memref<1x13x192xf32, #tpu.memory_space<vmem>>, vector<1x1x64xf32>
    %400 = vector.shape_cast %399 : vector<1x1x64xf32> to vector<1x64xf32>
    %cst_141 = arith.constant dense<0.000000e+00> : vector<16xf32>
    %401 = vector.multi_reduction <add>, %396, %cst_141 [1] : vector<16x64xf32> to vector<16xf32>
    %402 = vector.shape_cast %401 : vector<16xf32> to vector<16x1xf32>
    %cst_142 = arith.constant 6.400000e+01 : f32
    %403 = vector.broadcast %cst_142 : f32 to vector<16x1xf32>
    %404 = arith.divf %402, %403 : vector<16x1xf32>
    %405 = vector.broadcast %404 : vector<16x1xf32> to vector<16x64xf32>
    %406 = arith.subf %396, %405 : vector<16x64xf32>
    %407 = arith.mulf %406, %406 : vector<16x64xf32>
    %cst_143 = arith.constant dense<0.000000e+00> : vector<16xf32>
    %408 = vector.multi_reduction <add>, %407, %cst_143 [1] : vector<16x64xf32> to vector<16xf32>
    %409 = vector.shape_cast %408 : vector<16xf32> to vector<16x1xf32>
    %cst_144 = arith.constant 6.400000e+01 : f32
    %410 = vector.broadcast %cst_144 : f32 to vector<16x1xf32>
    %411 = arith.divf %409, %410 : vector<16x1xf32>
    %412 = vector.broadcast %404 : vector<16x1xf32> to vector<16x64xf32>
    %413 = arith.subf %396, %412 : vector<16x64xf32>
    %cst_145 = arith.constant 9.99999974E-6 : f32
    %414 = vector.broadcast %cst_145 : f32 to vector<16x1xf32>
    %415 = arith.addf %411, %414 : vector<16x1xf32>
    %416 = math.rsqrt %415 : vector<16x1xf32>
    %417 = vector.broadcast %416 : vector<16x1xf32> to vector<16x64xf32>
    %418 = arith.mulf %413, %417 : vector<16x64xf32>
    %419 = vector.broadcast %398 : vector<1x64xf32> to vector<16x64xf32>
    %420 = arith.mulf %418, %419 : vector<16x64xf32>
    %421 = vector.broadcast %400 : vector<1x64xf32> to vector<16x64xf32>
    %422 = arith.addf %420, %421 : vector<16x64xf32>
    %c0_146 = arith.constant 0 : index
    %c5 = arith.constant 5 : index
    %c0_147 = arith.constant 0 : index
    %423 = vector.load %arg13[%c0_146, %c5, %c0_147] : memref<1x13x192xf32, #tpu.memory_space<vmem>>, vector<1x1x128xf32>
    %424 = vector.shape_cast %423 : vector<1x1x128xf32> to vector<1x128xf32>
    %c0_148 = arith.constant 0 : index
    %c0_149 = arith.constant 0 : index
    %c0_150 = arith.constant 0 : index
    %425 = vector.load %arg11[%c0_148, %c0_149, %c0_150] : memref<1x64x128xf32, #tpu.memory_space<vmem>>, vector<1x64x128xf32>
    %426 = vector.shape_cast %425 : vector<1x64x128xf32> to vector<64x128xf32>
    %cst_151 = arith.constant dense<0.000000e+00> : vector<16x128xf32>
    %427 = tpu.matmul %422, %426, %cst_151 {dimension_numbers = #tpu.dot_dimension_numbers<[1], [0], [0], [1], [0, 0, 1, 1], [], []>} : vector<16x64xf32>, vector<64x128xf32>, vector<16x128xf32> -> vector<16x128xf32>
    %428 = vector.broadcast %424 : vector<1x128xf32> to vector<16x128xf32>
    %429 = arith.addf %427, %428 : vector<16x128xf32>
    %cst_152 = arith.constant 5.000000e-01 : f32
    %430 = vector.broadcast %cst_152 : f32 to vector<16x128xf32>
    %431 = arith.mulf %430, %429 : vector<16x128xf32>
    %cst_153 = arith.constant 0.707106769 : f32
    %432 = vector.broadcast %cst_153 : f32 to vector<16x128xf32>
    %433 = arith.mulf %429, %432 : vector<16x128xf32>
    %434 = math.erf %433 : vector<16x128xf32>
    %cst_154 = arith.constant 1.000000e+00 : f32
    %435 = vector.broadcast %cst_154 : f32 to vector<16x128xf32>
    %436 = arith.addf %435, %434 : vector<16x128xf32>
    %437 = arith.mulf %431, %436 : vector<16x128xf32>
    %c0_155 = arith.constant 0 : index
    %c6 = arith.constant 6 : index
    %c0_156 = arith.constant 0 : index
    %438 = vector.load %arg13[%c0_155, %c6, %c0_156] : memref<1x13x192xf32, #tpu.memory_space<vmem>>, vector<1x1x64xf32>
    %439 = vector.shape_cast %438 : vector<1x1x64xf32> to vector<1x64xf32>
    %c0_157 = arith.constant 0 : index
    %c0_158 = arith.constant 0 : index
    %c0_159 = arith.constant 0 : index
    %440 = vector.load %arg12[%c0_157, %c0_158, %c0_159] : memref<1x128x64xf32, #tpu.memory_space<vmem>>, vector<1x128x64xf32>
    %441 = vector.shape_cast %440 : vector<1x128x64xf32> to vector<128x64xf32>
    %cst_160 = arith.constant dense<0.000000e+00> : vector<16x64xf32>
    %442 = tpu.matmul %437, %441, %cst_160 {dimension_numbers = #tpu.dot_dimension_numbers<[1], [0], [0], [1], [0, 0, 1, 1], [], []>} : vector<16x128xf32>, vector<128x64xf32>, vector<16x64xf32> -> vector<16x64xf32>
    %443 = vector.broadcast %439 : vector<1x64xf32> to vector<16x64xf32>
    %444 = arith.addf %442, %443 : vector<16x64xf32>
    %445 = arith.addf %422, %444 : vector<16x64xf32>
    %c0_161 = arith.constant 0 : index
    %c11 = arith.constant 11 : index
    %c0_162 = arith.constant 0 : index
    %446 = vector.load %arg13[%c0_161, %c11, %c0_162] : memref<1x13x192xf32, #tpu.memory_space<vmem>>, vector<1x1x64xf32>
    %447 = vector.shape_cast %446 : vector<1x1x64xf32> to vector<1x64xf32>
    %c0_163 = arith.constant 0 : index
    %c12 = arith.constant 12 : index
    %c0_164 = arith.constant 0 : index
    %448 = vector.load %arg13[%c0_163, %c12, %c0_164] : memref<1x13x192xf32, #tpu.memory_space<vmem>>, vector<1x1x64xf32>
    %449 = vector.shape_cast %448 : vector<1x1x64xf32> to vector<1x64xf32>
    %cst_165 = arith.constant dense<0.000000e+00> : vector<16xf32>
    %450 = vector.multi_reduction <add>, %445, %cst_165 [1] : vector<16x64xf32> to vector<16xf32>
    %451 = vector.shape_cast %450 : vector<16xf32> to vector<16x1xf32>
    %cst_166 = arith.constant 6.400000e+01 : f32
    %452 = vector.broadcast %cst_166 : f32 to vector<16x1xf32>
    %453 = arith.divf %451, %452 : vector<16x1xf32>
    %454 = vector.broadcast %453 : vector<16x1xf32> to vector<16x64xf32>
    %455 = arith.subf %445, %454 : vector<16x64xf32>
    %456 = arith.mulf %455, %455 : vector<16x64xf32>
    %cst_167 = arith.constant dense<0.000000e+00> : vector<16xf32>
    %457 = vector.multi_reduction <add>, %456, %cst_167 [1] : vector<16x64xf32> to vector<16xf32>
    %458 = vector.shape_cast %457 : vector<16xf32> to vector<16x1xf32>
    %cst_168 = arith.constant 6.400000e+01 : f32
    %459 = vector.broadcast %cst_168 : f32 to vector<16x1xf32>
    %460 = arith.divf %458, %459 : vector<16x1xf32>
    %461 = vector.broadcast %453 : vector<16x1xf32> to vector<16x64xf32>
    %462 = arith.subf %445, %461 : vector<16x64xf32>
    %cst_169 = arith.constant 9.99999974E-6 : f32
    %463 = vector.broadcast %cst_169 : f32 to vector<16x1xf32>
    %464 = arith.addf %460, %463 : vector<16x1xf32>
    %465 = math.rsqrt %464 : vector<16x1xf32>
    %466 = vector.broadcast %465 : vector<16x1xf32> to vector<16x64xf32>
    %467 = arith.mulf %462, %466 : vector<16x64xf32>
    %468 = vector.broadcast %447 : vector<1x64xf32> to vector<16x64xf32>
    %469 = arith.mulf %467, %468 : vector<16x64xf32>
    %470 = vector.broadcast %449 : vector<1x64xf32> to vector<16x64xf32>
    %471 = arith.addf %469, %470 : vector<16x64xf32>
    %472 = vector.shape_cast %471 : vector<16x64xf32> to vector<2x8x64xf32>
    %c0_170 = arith.constant 0 : index
    %c0_171 = arith.constant 0 : index
    %c0_172 = arith.constant 0 : index
    %473 = vector.load %arg14[%c0_170, %c0_171, %c0_172] : memref<2x8x64xf32, #tpu.memory_space<vmem>>, vector<2x8x64xf32>
    tpu.vector_store %arg14[%c0_170, %c0_171, %c0_172], %472 {strides = array<i32>} : memref<2x8x64xf32, #tpu.memory_space<vmem>>, vector<2x8x64xf32>,
    return
  }
  func.func @transform_0(%arg0: i32, %arg1: i32) -> (i32, i32, i32) {
    %c0_i32 = arith.constant 0 : i32
    %c0_i32_0 = arith.constant 0 : i32
    %c0_i32_1 = arith.constant 0 : i32
    return %arg0, %c0_i32, %c0_i32_0 : i32, i32, i32
  }
  func.func @transform_1(%arg0: i32, %arg1: i32) -> (i32, i32, i32) {
    %c0_i32 = arith.constant 0 : i32
    %c0_i32_0 = arith.constant 0 : i32
    %c0_i32_1 = arith.constant 0 : i32
    return %arg0, %c0_i32, %c0_i32_0 : i32, i32, i32
  }
  func.func @transform_2(%arg0: i32, %arg1: i32) -> (i32, i32, i32) {
    %c0_i32 = arith.constant 0 : i32
    %c0_i32_0 = arith.constant 0 : i32
    %c0_i32_1 = arith.constant 0 : i32
    return %arg0, %c0_i32, %c0_i32_0 : i32, i32, i32
  }
  func.func @transform_3(%arg0: i32, %arg1: i32) -> (i32, i32, i32) {
    %c0_i32 = arith.constant 0 : i32
    %c0_i32_0 = arith.constant 0 : i32
    %c0_i32_1 = arith.constant 0 : i32
    return %arg0, %c0_i32, %c0_i32_0 : i32, i32, i32
  }
  func.func @transform_4(%arg0: i32, %arg1: i32) -> (i32, i32, i32) {
    %c0_i32 = arith.constant 0 : i32
    %c0_i32_0 = arith.constant 0 : i32
    %c0_i32_1 = arith.constant 0 : i32
    return %arg1, %c0_i32, %c0_i32_0 : i32, i32, i32
  }
  func.func @transform_5(%arg0: i32, %arg1: i32) -> (i32, i32, i32) {
    %c0_i32 = arith.constant 0 : i32
    %c0_i32_0 = arith.constant 0 : i32
    %c0_i32_1 = arith.constant 0 : i32
    return %arg1, %c0_i32, %c0_i32_0 : i32, i32, i32
  }
  func.func @transform_6(%arg0: i32, %arg1: i32) -> (i32, i32, i32) {
    %c0_i32 = arith.constant 0 : i32
    %c0_i32_0 = arith.constant 0 : i32
    %c0_i32_1 = arith.constant 0 : i32
    return %arg1, %c0_i32, %c0_i32_0 : i32, i32, i32
  }
  func.func @transform_7(%arg0: i32, %arg1: i32) -> (i32, i32, i32) {
    %c0_i32 = arith.constant 0 : i32
    %c0_i32_0 = arith.constant 0 : i32
    %c0_i32_1 = arith.constant 0 : i32
    return %arg1, %c0_i32, %c0_i32_0 : i32, i32, i32
  }
  func.func @transform_8(%arg0: i32, %arg1: i32) -> (i32, i32, i32) {
    %c0_i32 = arith.constant 0 : i32
    %c0_i32_0 = arith.constant 0 : i32
    %c0_i32_1 = arith.constant 0 : i32
    return %arg1, %c0_i32, %c0_i32_0 : i32, i32, i32
  }
  func.func @transform_9(%arg0: i32, %arg1: i32) -> (i32, i32, i32) {
    %c0_i32 = arith.constant 0 : i32
    %c0_i32_0 = arith.constant 0 : i32
    %c0_i32_1 = arith.constant 0 : i32
    return %arg1, %c0_i32, %c0_i32_0 : i32, i32, i32
  }
  func.func @transform_10(%arg0: i32, %arg1: i32) -> (i32, i32, i32) {
    %c0_i32 = arith.constant 0 : i32
    %c0_i32_0 = arith.constant 0 : i32
    %c0_i32_1 = arith.constant 0 : i32
    return %arg1, %c0_i32, %c0_i32_0 : i32, i32, i32
  }
  func.func @transform_11(%arg0: i32, %arg1: i32) -> (i32, i32, i32) {
    %c0_i32 = arith.constant 0 : i32
    %c0_i32_0 = arith.constant 0 : i32
    %c0_i32_1 = arith.constant 0 : i32
    return %arg1, %c0_i32, %c0_i32_0 : i32, i32, i32
  }
  func.func @transform_12(%arg0: i32, %arg1: i32) -> (i32, i32, i32) {
    %c0_i32 = arith.constant 0 : i32
    %c0_i32_0 = arith.constant 0 : i32
    %c0_i32_1 = arith.constant 0 : i32
    return %arg0, %c0_i32, %c0_i32_0 : i32, i32, i32
  }
}

</mosaic_0001>

<llo_original>
// kernel: modified_decoder_forward.1
$region0: #{modified_decoder_forward.1}
  #allocation0 [shape = 'u32[]', space=smem, size = 0x4, offset = 0x4, fixed_abs, tag = 'smem constant byte address 0x4 - core index']
  #allocation1 [shape = 'u32[144,128]{1,0:T(1,128)}', space=vmem, size = 0x12000, scoped, tag = 'internal scratch']
  #allocation2 [shape = 'f32[2,8,8]{2,1,0:T(8,128)}', space=vmem, size = 0x2000, scoped, tag = 'scratch operand']
  #allocation3 [shape = 'f32[2,1,8]{2,1,0:T(1,128)}', space=vmem, size = 0x400, scoped, tag = 'scratch operand']
  %s0 = inlined_call_operand.hbm [shape: f32[2,8,64], index: 0, kind: input, shape index: {}]
  %s1 = inlined_call_operand.hbm [shape: bf16[2,8,64], index: 1, kind: input, shape index: {}]
  %s2 = inlined_call_operand.hbm [shape: f32[2,1,8], index: 2, kind: input, shape index: {}]
  %s3 = inlined_call_operand.hbm [shape: f32[2,1,8], index: 3, kind: input, shape index: {}]
  %s4 = inlined_call_operand.hbm [shape: bf16[2,64,192], index: 4, kind: input, shape index: {}]
  %s5 = inlined_call_operand.hbm [shape: bf16[2,64,64], index: 5, kind: input, shape index: {}]
  %s6 = inlined_call_operand.hbm [shape: bf16[2,64,64], index: 6, kind: input, shape index: {}]
  %s7 = inlined_call_operand.hbm [shape: bf16[2,64,128], index: 7, kind: input, shape index: {}]
  %s8 = inlined_call_operand.hbm [shape: bf16[2,64,64], index: 8, kind: input, shape index: {}]
  %s9 = inlined_call_operand.hbm [shape: bf16[2,64,128], index: 9, kind: input, shape index: {}]
  %s10 = inlined_call_operand.hbm [shape: bf16[2,128,64], index: 10, kind: input, shape index: {}]
  %s11 = inlined_call_operand.hbm [shape: f32[2,13,192], index: 11, kind: input, shape index: {}]
  %s12 = inlined_call_operand.hbm [shape: f32[2,8,64], index: 12, kind: output, shape index: {}]
  %s13 = sld [smem:[#allocation0]]
  $region133: #{modified_decoder_forward.1} parent=0
    _
  %s15 = ssub.s32 1, %s13
  %s16 = scalar_select 0, %s15, %s13
  $region1: #{modified_decoder_forward.1} parent=0
    #allocation4 [shape = 'u8[8192]{0}', space=vmem, size = 0x2000, scoped, tag = 'input window, operand 0, single buffered']
    #allocation5 [shape = 's32[2]{0}', space=sflag, size = 0x8, scoped, tag = 'scoped memory for modified_decoder_forward.1']
    #allocation6 [shape = 's32[2]{0}', space=sflag, size = 0x8, scoped, tag = 'scoped memory for modified_decoder_forward.1']
    #allocation7 [shape = 'u8[4096]{0}', space=vmem, size = 0x1000, scoped, tag = 'input window, operand 1, single buffered']
    #allocation8 [shape = 's32[1]{0}', space=sflag, size = 0x4, scoped, tag = 'scoped memory for modified_decoder_forward.1']
    #allocation9 [shape = 'u8[1024]{0}', space=vmem, size = 0x400, scoped, tag = 'input window, operand 2, single buffered']
    #allocation10 [shape = 'u8[1024]{0}', space=vmem, size = 0x400, scoped, tag = 'input window, operand 3, single buffered']
    #allocation11 [shape = 's32[1]{0}', space=sflag, size = 0x4, scoped, tag = 'scoped memory for modified_decoder_forward.1']
    #allocation12 [shape = 'u8[65536]{0}', space=vmem, size = 0x10000, scoped, tag = 'input window, operand 4']
    #allocation13 [shape = 'u8[32768]{0}', space=vmem, size = 0x8000, scoped, tag = 'input window, operand 5']
    #allocation14 [shape = 'u8[32768]{0}', space=vmem, size = 0x8000, scoped, tag = 'input window, operand 6']
    #allocation15 [shape = 'u8[32768]{0}', space=vmem, size = 0x8000, scoped, tag = 'input window, operand 7']
    #allocation16 [shape = 'u8[32768]{0}', space=vmem, size = 0x8000, scoped, tag = 'input window, operand 8']
    #allocation17 [shape = 'u8[32768]{0}', space=vmem, size = 0x8000, scoped, tag = 'input window, operand 9']
    #allocation18 [shape = 'u8[65536]{0}', space=vmem, size = 0x10000, scoped, tag = 'input window, operand 10']
    #allocation19 [shape = 'u8[32768]{0}', space=vmem, size = 0x8000, scoped, tag = 'input window, operand 11']
    #allocation20 [shape = 'u8[8192]{0}', space=vmem, size = 0x2000, scoped, tag = 'output window, operand 0, single buffered']
    %17 = vsyncpa [#allocation5], 0
    %18 = vsyncpa [#allocation8], 0
    %19 = vsyncpa [#allocation11], 0
    %20 = vsyncpa [#allocation6], 0
    loop: start=0, step=1, limit=4
    $region2: #{modified_decoder_forward.1} parent=1 // loop_pre_header
      _
    $region3: #{modified_decoder_forward.1} parent=1 // loop_header
      %s22 = sphi 0, %s26
      %p23 = scmp.ge.s32.totalorder %s22, 4
      %s29 = sphi 0, %s41
      %s30 = sphi 0, %s37
      %s31 = sphi 0, %s29
      %s32 = sphi 0, %s30
      %s33 = sphi 0, %s31
      %s34 = sphi 0, %s32
      %s44 = sphi 0, %s46
      %s47 = sphi 0, %s44
      %s48 = sphi 0, %s47
      %s64 = sphi 0, %s48
      %s70 = sphi 0, %s72
      %s73 = sphi 0, %s70
      %s74 = sphi 0, %s73
      %s90 = sphi 0, %s74
      %s96 = sphi 0, %s98
      %s99 = sphi 0, %s96
      %s100 = sphi 0, %s99
      %s116 = sphi 0, %s100
      %s122 = sphi 0, %s124
      %s125 = sphi 0, %s122
      %s126 = sphi 0, %s125
      %s142 = sphi 0, %s126
      %s148 = sphi 0, %s150
      %s151 = sphi 0, %s148
      %s152 = sphi 0, %s151
      %s168 = sphi 0, %s152
      %s174 = sphi 0, %s176
      %s177 = sphi 0, %s174
      %s178 = sphi 0, %s177
      %s194 = sphi 0, %s178
      %s200 = sphi 0, %s202
      %s203 = sphi 0, %s200
      %s204 = sphi 0, %s203
      %s220 = sphi 0, %s204
      %s226 = sphi 0, %s228
      %s229 = sphi 0, %s226
      %s230 = sphi 0, %s229
      %s246 = sphi 0, %s230
      %s252 = sphi 0, %s254
      %s255 = sphi 0, %s252
      %s256 = sphi 0, %s255
      %s272 = sphi 0, %s256
      %s278 = sphi 0, %s280
      %s281 = sphi 0, %s278
      %s282 = sphi 0, %s281
      %s298 = sphi 0, %s282
      %s304 = sphi 0, %s306
      %s307 = sphi 0, %s304
      %s308 = sphi 0, %s307
      %s324 = sphi 0, %s308
      %s330 = sphi 0, %s332
      %s333 = sphi 0, %s330
      %s334 = sphi 0, %s333
      %s350 = sphi 0, %s334
      %s356 = sphi 0, %s358
      %s359 = sphi 0, %s356
      %s360 = sphi 0, %s359
      %s376 = sphi 0, %s360
    $region4: #{modified_decoder_forward.1} parent=1 // loop_header_branch
      %25 = sbr.rel (%p23) target = $region8
    $region5: #{modified_decoder_forward.1} parent=1 // loop_body
      %s27 = ssub.s32 %s22, 1
      %s28 = ssub.s32 %s22, 2
      %s35 = sadd.s32 1, %s30
      %p36 = scmp.ge.s32.totalorder %s35, 2
      %s37 = scalar_select %p36, 0, %s35
      %s38 = sadd.s32 1, %s29
      %s39 = scalar_select %p36, %s38, %s29
      %p40 = scmp.ge.s32.totalorder %s39, 1
      %s41 = scalar_select %p40, 0, %s39
      %s42 = ssub.s32 %s29, %s41
      %p43 = scmp.eq.s32.totalorder %s42, 0
      %s45 = sadd.s32 %s44, 1
      %s46 = scalar_select %p43, %s44, %s45
      %p49 = pneg %p43
      %p50 = scmp.eq.s32.totalorder %s22, 1
      %p51 = por %p49, %p50
      %p52 = scmp.ne.s32.totalorder %s44, %s47
      %p53 = scmp.eq.s32.totalorder %s22, 0
      %p54 = por %p52, %p53
      %p55 = scmp.ne.s32.totalorder %s44, %s47
      %p56 = scmp.eq.s32.totalorder %s27, 1
      %p57 = por %p55, %p56
      %p58 = scmp.ne.s32.totalorder %s47, %s48
      %p59 = scmp.eq.s32.totalorder %s27, 0
      %p60 = por %p58, %p59
      %p61 = scmp.ne.s32.totalorder %s47, %s48
      %p62 = scmp.eq.s32.totalorder %s28, 1
      %p63 = por %p61, %p62
      %p65 = scmp.ne.s32.totalorder %s48, %s64
      %p66 = scmp.eq.s32.totalorder %s28, 0
      %p67 = por %p65, %p66
      %s68 = ssub.s32 %s29, %s41
      %p69 = scmp.eq.s32.totalorder %s68, 0
      %s71 = sadd.s32 %s70, 1
      %s72 = scalar_select %p69, %s70, %s71
      %p75 = pneg %p69
      %p76 = scmp.eq.s32.totalorder %s22, 1
      %p77 = por %p75, %p76
      %p78 = scmp.ne.s32.totalorder %s70, %s73
      %p79 = scmp.eq.s32.totalorder %s22, 0
      %p80 = por %p78, %p79
      %p81 = scmp.ne.s32.totalorder %s70, %s73
      %p82 = scmp.eq.s32.totalorder %s27, 1
      %p83 = por %p81, %p82
      %p84 = scmp.ne.s32.totalorder %s73, %s74
      %p85 = scmp.eq.s32.totalorder %s27, 0
      %p86 = por %p84, %p85
      %p87 = scmp.ne.s32.totalorder %s73, %s74
      %p88 = scmp.eq.s32.totalorder %s28, 1
      %p89 = por %p87, %p88
      %p91 = scmp.ne.s32.totalorder %s74, %s90
      %p92 = scmp.eq.s32.totalorder %s28, 0
      %p93 = por %p91, %p92
      %s94 = ssub.s32 %s29, %s41
      %p95 = scmp.eq.s32.totalorder %s94, 0
      %s97 = sadd.s32 %s96, 1
      %s98 = scalar_select %p95, %s96, %s97
      %p101 = pneg %p95
      %p102 = scmp.eq.s32.totalorder %s22, 1
      %p103 = por %p101, %p102
      %p104 = scmp.ne.s32.totalorder %s96, %s99
      %p105 = scmp.eq.s32.totalorder %s22, 0
      %p106 = por %p104, %p105
      %p107 = scmp.ne.s32.totalorder %s96, %s99
      %p108 = scmp.eq.s32.totalorder %s27, 1
      %p109 = por %p107, %p108
      %p110 = scmp.ne.s32.totalorder %s99, %s100
      %p111 = scmp.eq.s32.totalorder %s27, 0
      %p112 = por %p110, %p111
      %p113 = scmp.ne.s32.totalorder %s99, %s100
      %p114 = scmp.eq.s32.totalorder %s28, 1
      %p115 = por %p113, %p114
      %p117 = scmp.ne.s32.totalorder %s100, %s116
      %p118 = scmp.eq.s32.totalorder %s28, 0
      %p119 = por %p117, %p118
      %s120 = ssub.s32 %s29, %s41
      %p121 = scmp.eq.s32.totalorder %s120, 0
      %s123 = sadd.s32 %s122, 1
      %s124 = scalar_select %p121, %s122, %s123
      %p127 = pneg %p121
      %p128 = scmp.eq.s32.totalorder %s22, 1
      %p129 = por %p127, %p128
      %p130 = scmp.ne.s32.totalorder %s122, %s125
      %p131 = scmp.eq.s32.totalorder %s22, 0
      %p132 = por %p130, %p131
      %p133 = scmp.ne.s32.totalorder %s122, %s125
      %p134 = scmp.eq.s32.totalorder %s27, 1
      %p135 = por %p133, %p134
      %p136 = scmp.ne.s32.totalorder %s125, %s126
      %p137 = scmp.eq.s32.totalorder %s27, 0
      %p138 = por %p136, %p137
      %p139 = scmp.ne.s32.totalorder %s125, %s126
      %p140 = scmp.eq.s32.totalorder %s28, 1
      %p141 = por %p139, %p140
      %p143 = scmp.ne.s32.totalorder %s126, %s142
      %p144 = scmp.eq.s32.totalorder %s28, 0
      %p145 = por %p143, %p144
      %s146 = ssub.s32 %s30, %s37
      %p147 = scmp.eq.s32.totalorder %s146, 0
      %s149 = sadd.s32 %s148, 1
      %s150 = scalar_select %p147, %s148, %s149
      %p153 = pneg %p147
      %p154 = scmp.eq.s32.totalorder %s22, 1
      %p155 = por %p153, %p154
      %p156 = scmp.ne.s32.totalorder %s148, %s151
      %p157 = scmp.eq.s32.totalorder %s22, 0
      %p158 = por %p156, %p157
      %p159 = scmp.ne.s32.totalorder %s148, %s151
      %p160 = scmp.eq.s32.totalorder %s27, 1
      %p161 = por %p159, %p160
      %p162 = scmp.ne.s32.totalorder %s151, %s152
      %p163 = scmp.eq.s32.totalorder %s27, 0
      %p164 = por %p162, %p163
      %p165 = scmp.ne.s32.totalorder %s151, %s152
      %p166 = scmp.eq.s32.totalorder %s28, 1
      %p167 = por %p165, %p166
      %p169 = scmp.ne.s32.totalorder %s152, %s168
      %p170 = scmp.eq.s32.totalorder %s28, 0
      %p171 = por %p169, %p170
      %s172 = ssub.s32 %s30, %s37
      %p173 = scmp.eq.s32.totalorder %s172, 0
      %s175 = sadd.s32 %s174, 1
      %s176 = scalar_select %p173, %s174, %s175
      %p179 = pneg %p173
      %p180 = scmp.eq.s32.totalorder %s22, 1
      %p181 = por %p179, %p180
      %p182 = scmp.ne.s32.totalorder %s174, %s177
      %p183 = scmp.eq.s32.totalorder %s22, 0
      %p184 = por %p182, %p183
      %p185 = scmp.ne.s32.totalorder %s174, %s177
      %p186 = scmp.eq.s32.totalorder %s27, 1
      %p187 = por %p185, %p186
      %p188 = scmp.ne.s32.totalorder %s177, %s178
      %p189 = scmp.eq.s32.totalorder %s27, 0
      %p190 = por %p188, %p189
      %p191 = scmp.ne.s32.totalorder %s177, %s178
      %p192 = scmp.eq.s32.totalorder %s28, 1
      %p193 = por %p191, %p192
      %p195 = scmp.ne.s32.totalorder %s178, %s194
      %p196 = scmp.eq.s32.totalorder %s28, 0
      %p197 = por %p195, %p196
      %s198 = ssub.s32 %s30, %s37
      %p199 = scmp.eq.s32.totalorder %s198, 0
      %s201 = sadd.s32 %s200, 1
      %s202 = scalar_select %p199, %s200, %s201
      %p205 = pneg %p199
      %p206 = scmp.eq.s32.totalorder %s22, 1
      %p207 = por %p205, %p206
      %p208 = scmp.ne.s32.totalorder %s200, %s203
      %p209 = scmp.eq.s32.totalorder %s22, 0
      %p210 = por %p208, %p209
      %p211 = scmp.ne.s32.totalorder %s200, %s203
      %p212 = scmp.eq.s32.totalorder %s27, 1
      %p213 = por %p211, %p212
      %p214 = scmp.ne.s32.totalorder %s203, %s204
      %p215 = scmp.eq.s32.totalorder %s27, 0
      %p216 = por %p214, %p215
      %p217 = scmp.ne.s32.totalorder %s203, %s204
      %p218 = scmp.eq.s32.totalorder %s28, 1
      %p219 = por %p217, %p218
      %p221 = scmp.ne.s32.totalorder %s204, %s220
      %p222 = scmp.eq.s32.totalorder %s28, 0
      %p223 = por %p221, %p222
      %s224 = ssub.s32 %s30, %s37
      %p225 = scmp.eq.s32.totalorder %s224, 0
      %s227 = sadd.s32 %s226, 1
      %s228 = scalar_select %p225, %s226, %s227
      %p231 = pneg %p225
      %p232 = scmp.eq.s32.totalorder %s22, 1
      %p233 = por %p231, %p232
      %p234 = scmp.ne.s32.totalorder %s226, %s229
      %p235 = scmp.eq.s32.totalorder %s22, 0
      %p236 = por %p234, %p235
      %p237 = scmp.ne.s32.totalorder %s226, %s229
      %p238 = scmp.eq.s32.totalorder %s27, 1
      %p239 = por %p237, %p238
      %p240 = scmp.ne.s32.totalorder %s229, %s230
      %p241 = scmp.eq.s32.totalorder %s27, 0
      %p242 = por %p240, %p241
      %p243 = scmp.ne.s32.totalorder %s229, %s230
      %p244 = scmp.eq.s32.totalorder %s28, 1
      %p245 = por %p243, %p244
      %p247 = scmp.ne.s32.totalorder %s230, %s246
      %p248 = scmp.eq.s32.totalorder %s28, 0
      %p249 = por %p247, %p248
      %s250 = ssub.s32 %s30, %s37
      %p251 = scmp.eq.s32.totalorder %s250, 0
      %s253 = sadd.s32 %s252, 1
      %s254 = scalar_select %p251, %s252, %s253
      %p257 = pneg %p251
      %p258 = scmp.eq.s32.totalorder %s22, 1
      %p259 = por %p257, %p258
      %p260 = scmp.ne.s32.totalorder %s252, %s255
      %p261 = scmp.eq.s32.totalorder %s22, 0
      %p262 = por %p260, %p261
      %p263 = scmp.ne.s32.totalorder %s252, %s255
      %p264 = scmp.eq.s32.totalorder %s27, 1
      %p265 = por %p263, %p264
      %p266 = scmp.ne.s32.totalorder %s255, %s256
      %p267 = scmp.eq.s32.totalorder %s27, 0
      %p268 = por %p266, %p267
      %p269 = scmp.ne.s32.totalorder %s255, %s256
      %p270 = scmp.eq.s32.totalorder %s28, 1
      %p271 = por %p269, %p270
      %p273 = scmp.ne.s32.totalorder %s256, %s272
      %p274 = scmp.eq.s32.totalorder %s28, 0
      %p275 = por %p273, %p274
      %s276 = ssub.s32 %s30, %s37
      %p277 = scmp.eq.s32.totalorder %s276, 0
      %s279 = sadd.s32 %s278, 1
      %s280 = scalar_select %p277, %s278, %s279
      %p283 = pneg %p277
      %p284 = scmp.eq.s32.totalorder %s22, 1
      %p285 = por %p283, %p284
      %p286 = scmp.ne.s32.totalorder %s278, %s281
      %p287 = scmp.eq.s32.totalorder %s22, 0
      %p288 = por %p286, %p287
      %p289 = scmp.ne.s32.totalorder %s278, %s281
      %p290 = scmp.eq.s32.totalorder %s27, 1
      %p291 = por %p289, %p290
      %p292 = scmp.ne.s32.totalorder %s281, %s282
      %p293 = scmp.eq.s32.totalorder %s27, 0
      %p294 = por %p292, %p293
      %p295 = scmp.ne.s32.totalorder %s281, %s282
      %p296 = scmp.eq.s32.totalorder %s28, 1
      %p297 = por %p295, %p296
      %p299 = scmp.ne.s32.totalorder %s282, %s298
      %p300 = scmp.eq.s32.totalorder %s28, 0
      %p301 = por %p299, %p300
      %s302 = ssub.s32 %s30, %s37
      %p303 = scmp.eq.s32.totalorder %s302, 0
      %s305 = sadd.s32 %s304, 1
      %s306 = scalar_select %p303, %s304, %s305
      %p309 = pneg %p303
      %p310 = scmp.eq.s32.totalorder %s22, 1
      %p311 = por %p309, %p310
      %p312 = scmp.ne.s32.totalorder %s304, %s307
      %p313 = scmp.eq.s32.totalorder %s22, 0
      %p314 = por %p312, %p313
      %p315 = scmp.ne.s32.totalorder %s304, %s307
      %p316 = scmp.eq.s32.totalorder %s27, 1
      %p317 = por %p315, %p316
      %p318 = scmp.ne.s32.totalorder %s307, %s308
      %p319 = scmp.eq.s32.totalorder %s27, 0
      %p320 = por %p318, %p319
      %p321 = scmp.ne.s32.totalorder %s307, %s308
      %p322 = scmp.eq.s32.totalorder %s28, 1
      %p323 = por %p321, %p322
      %p325 = scmp.ne.s32.totalorder %s308, %s324
      %p326 = scmp.eq.s32.totalorder %s28, 0
      %p327 = por %p325, %p326
      %s328 = ssub.s32 %s30, %s37
      %p329 = scmp.eq.s32.totalorder %s328, 0
      %s331 = sadd.s32 %s330, 1
      %s332 = scalar_select %p329, %s330, %s331
      %p335 = pneg %p329
      %p336 = scmp.eq.s32.totalorder %s22, 1
      %p337 = por %p335, %p336
      %p338 = scmp.ne.s32.totalorder %s330, %s333
      %p339 = scmp.eq.s32.totalorder %s22, 0
      %p340 = por %p338, %p339
      %p341 = scmp.ne.s32.totalorder %s330, %s333
      %p342 = scmp.eq.s32.totalorder %s27, 1
      %p343 = por %p341, %p342
      %p344 = scmp.ne.s32.totalorder %s333, %s334
      %p345 = scmp.eq.s32.totalorder %s27, 0
      %p346 = por %p344, %p345
      %p347 = scmp.ne.s32.totalorder %s333, %s334
      %p348 = scmp.eq.s32.totalorder %s28, 1
      %p349 = por %p347, %p348
      %p351 = scmp.ne.s32.totalorder %s334, %s350
      %p352 = scmp.eq.s32.totalorder %s28, 0
      %p353 = por %p351, %p352
      %s354 = ssub.s32 %s29, %s41
      %p355 = scmp.eq.s32.totalorder %s354, 0
      %s357 = sadd.s32 %s356, 1
      %s358 = scalar_select %p355, %s356, %s357
      %p361 = pneg %p355
      %p362 = scmp.eq.s32.totalorder %s22, 1
      %p363 = por %p361, %p362
      %p364 = scmp.ne.s32.totalorder %s356, %s359
      %p365 = scmp.eq.s32.totalorder %s22, 0
      %p366 = por %p364, %p365
      %p367 = scmp.ne.s32.totalorder %s356, %s359
      %p368 = scmp.eq.s32.totalorder %s27, 1
      %p369 = por %p367, %p368
      %p370 = scmp.ne.s32.totalorder %s359, %s360
      %p371 = scmp.eq.s32.totalorder %s27, 0
      %p372 = por %p370, %p371
      %p373 = scmp.ne.s32.totalorder %s359, %s360
      %p374 = scmp.eq.s32.totalorder %s28, 1
      %p375 = por %p373, %p374
      %p377 = scmp.ne.s32.totalorder %s360, %s376
      %p378 = scmp.eq.s32.totalorder %s28, 0
      %p379 = por %p377, %p378
      %p380 = scmp.le.s32.totalorder 1, %s22
      %p381 = scmp.lt.s32.totalorder %s22, 3
      %p382 = pnand %p380, %p381
      %p383 = pneg %p382
      // Predicated region
      $region9: #{modified_decoder_forward.1} parent=5 // pred_check
        _
      $region10: #{modified_decoder_forward.1} parent=5 // pred_check_branch
        %385 = sbr.rel (%p382) target = $region12
      $region11: #{modified_decoder_forward.1} parent=5 // pred_region
        %s386 = ssub.s32 %s22, 1
        // Predicated region
        $region13: #{modified_decoder_forward.1} parent=11 // pred_check
          %p387 = pneg %p60
        $region14: #{modified_decoder_forward.1} parent=11 // pred_check_branch
          %389 = sbr.rel (%p387) target = $region16
        $region15: #{modified_decoder_forward.1} parent=11 // pred_region
          %s390 = smul.u32 2, %s31
          %s392 = ssub.s32 256, 256
          %393 = vsyncadd [#allocation5], %s392
          %s394 = smul.addr %s390, 128
          %s395 = scalar_lea.hbm %s0, %s394
          %s396 = sshll.u32 [#allocation4], 4
          %s397 = int_to_ptr.vmem [resolvable:$true] %s396
          %402 = dma.hbm_to_vmem [thread:$0]  %s395, 256, %s397, [#allocation5], 128, 128, 8
        $region16: #{modified_decoder_forward.1} parent=11 // pred_fallthru
          _
        // Predicated region
        $region17: #{modified_decoder_forward.1} parent=11 // pred_check
          %p403 = pneg %p86
        $region18: #{modified_decoder_forward.1} parent=11 // pred_check_branch
          %405 = sbr.rel (%p403) target = $region20
        $region19: #{modified_decoder_forward.1} parent=11 // pred_region
          %s406 = smul.u32 2, %s31
          %s408 = ssub.s32 128, 128
          %409 = vsyncadd [#allocation8], %s408
          %s410 = smul.addr %s406, 64
          %s411 = scalar_lea.hbm %s1, %s410
          %s412 = sshll.u32 [#allocation7], 4
          %s413 = int_to_ptr.vmem [resolvable:$true] %s412
          %418 = dma.hbm_to_vmem [thread:$0]  %s411, 128, %s413, [#allocation8], 64, 64, 4
        $region20: #{modified_decoder_forward.1} parent=11 // pred_fallthru
          _
        // Predicated region
        $region21: #{modified_decoder_forward.1} parent=11 // pred_check
          %p419 = pneg %p112
        $region22: #{modified_decoder_forward.1} parent=11 // pred_check_branch
          %421 = sbr.rel (%p419) target = $region24
        $region23: #{modified_decoder_forward.1} parent=11 // pred_region
          %s422 = smul.u32 2, %s31
          %s424 = ssub.s32 32, 32
          %425 = vsyncadd [#allocation8], %s424
          %s426 = smul.addr %s422, 16
          %s427 = scalar_lea.hbm %s2, %s426
          %s428 = sshll.u32 [#allocation9], 4
          %s429 = int_to_ptr.vmem [resolvable:$true] %s428
          %434 = dma.hbm_to_vmem [thread:$0]  %s427, 32, %s429, [#allocation8], 16, 16, 1
        $region24: #{modified_decoder_forward.1} parent=11 // pred_fallthru
          _
        // Predicated region
        $region25: #{modified_decoder_forward.1} parent=11 // pred_check
          %p435 = pneg %p138
        $region26: #{modified_decoder_forward.1} parent=11 // pred_check_branch
          %437 = sbr.rel (%p435) target = $region28
        $region27: #{modified_decoder_forward.1} parent=11 // pred_region
          %s438 = smul.u32 2, %s31
          %s440 = ssub.s32 32, 32
          %441 = vsyncadd [#allocation11], %s440
          %s442 = smul.addr %s438, 16
          %s443 = scalar_lea.hbm %s3, %s442
          %s444 = sshll.u32 [#allocation10], 4
          %s445 = int_to_ptr.vmem [resolvable:$true] %s444
          %450 = dma.hbm_to_vmem [thread:$0]  %s443, 32, %s445, [#allocation11], 16, 16, 1
        $region28: #{modified_decoder_forward.1} parent=11 // pred_fallthru
          _
      $region12: #{modified_decoder_forward.1} parent=5 // pred_fallthru
        _
      %p451 = scmp.lt.s32.totalorder %s22, 2
      // Predicated region
      $region29: #{modified_decoder_forward.1} parent=5 // pred_check
        %p452 = pneg %p451
      $region30: #{modified_decoder_forward.1} parent=5 // pred_check_branch
        %454 = sbr.rel (%p452) target = $region32
      $region31: #{modified_decoder_forward.1} parent=5 // pred_region
        // Predicated region
        $region33: #{modified_decoder_forward.1} parent=31 // pred_check
          %p455 = pneg %p158
        $region34: #{modified_decoder_forward.1} parent=31 // pred_check_branch
          %457 = sbr.rel (%p455) target = $region36
        $region35: #{modified_decoder_forward.1} parent=31 // pred_region
          %s458 = sand.u32 %s22, 1
          %s459 = scalar_lea.sflag [#allocation5], %s458
          %s460 = sand.u32 %s148, 1
          %s461 = smul.addr %s460, 64
          %s462 = scalar_lea.vmem [#allocation12], %s461
          %s464 = ssub.s32 1024, 1024
          %465 = vsyncadd %s459, %s464
          %s466 = smul.addr %s30, 16
          %s467 = smul.addr %s466, 64
          %s468 = scalar_lea.hbm %s4, %s467
          %s469 = sshll.u32 %s462, 4
          %s470 = int_to_ptr.vmem [resolvable:$true] %s469
          %475 = dma.hbm_to_vmem [thread:$0]  %s468, 1024, %s470, %s459, 128, 128, 8
        $region36: #{modified_decoder_forward.1} parent=31 // pred_fallthru
          _
        // Predicated region
        $region37: #{modified_decoder_forward.1} parent=31 // pred_check
          %p476 = pneg %p184
        $region38: #{modified_decoder_forward.1} parent=31 // pred_check_branch
          %478 = sbr.rel (%p476) target = $region40
        $region39: #{modified_decoder_forward.1} parent=31 // pred_region
          %s479 = sand.u32 %s22, 1
          %s480 = scalar_lea.sflag [#allocation5], %s479
          %s481 = sand.u32 %s174, 1
          %s482 = smul.addr %s481, 32
          %s483 = scalar_lea.vmem [#allocation13], %s482
          %s485 = ssub.s32 512, 512
          %486 = vsyncadd %s480, %s485
          %s487 = smul.addr %s30, 8
          %s488 = smul.addr %s487, 64
          %s489 = scalar_lea.hbm %s5, %s488
          %s490 = sshll.u32 %s483, 4
          %s491 = int_to_ptr.vmem [resolvable:$true] %s490
          %496 = dma.hbm_to_vmem [thread:$0]  %s489, 512, %s491, %s480, 64, 64, 4
        $region40: #{modified_decoder_forward.1} parent=31 // pred_fallthru
          _
        // Predicated region
        $region41: #{modified_decoder_forward.1} parent=31 // pred_check
          %p497 = pneg %p210
        $region42: #{modified_decoder_forward.1} parent=31 // pred_check_branch
          %499 = sbr.rel (%p497) target = $region44
        $region43: #{modified_decoder_forward.1} parent=31 // pred_region
          %s500 = sand.u32 %s22, 1
          %s501 = scalar_lea.sflag [#allocation5], %s500
          %s502 = sand.u32 %s200, 1
          %s503 = smul.addr %s502, 32
          %s504 = scalar_lea.vmem [#allocation14], %s503
          %s506 = ssub.s32 512, 512
          %507 = vsyncadd %s501, %s506
          %s508 = smul.addr %s30, 8
          %s509 = smul.addr %s508, 64
          %s510 = scalar_lea.hbm %s6, %s509
          %s511 = sshll.u32 %s504, 4
          %s512 = int_to_ptr.vmem [resolvable:$true] %s511
          %517 = dma.hbm_to_vmem [thread:$0]  %s510, 512, %s512, %s501, 64, 64, 4
        $region44: #{modified_decoder_forward.1} parent=31 // pred_fallthru
          _
        // Predicated region
        $region45: #{modified_decoder_forward.1} parent=31 // pred_check
          %p518 = pneg %p236
        $region46: #{modified_decoder_forward.1} parent=31 // pred_check_branch
          %520 = sbr.rel (%p518) target = $region48
        $region47: #{modified_decoder_forward.1} parent=31 // pred_region
          %s521 = sand.u32 %s22, 1
          %s522 = scalar_lea.sflag [#allocation5], %s521
          %s523 = sand.u32 %s226, 1
          %s524 = smul.addr %s523, 32
          %s525 = scalar_lea.vmem [#allocation15], %s524
          %s527 = ssub.s32 512, 512
          %528 = vsyncadd %s522, %s527
          %s529 = smul.addr %s30, 8
          %s530 = smul.addr %s529, 64
          %s531 = scalar_lea.hbm %s7, %s530
          %s532 = sshll.u32 %s525, 4
          %s533 = int_to_ptr.vmem [resolvable:$true] %s532
          %538 = dma.hbm_to_vmem [thread:$0]  %s531, 512, %s533, %s522, 64, 64, 4
        $region48: #{modified_decoder_forward.1} parent=31 // pred_fallthru
          _
        // Predicated region
        $region49: #{modified_decoder_forward.1} parent=31 // pred_check
          %p539 = pneg %p262
        $region50: #{modified_decoder_forward.1} parent=31 // pred_check_branch
          %541 = sbr.rel (%p539) target = $region52
        $region51: #{modified_decoder_forward.1} parent=31 // pred_region
          %s542 = sand.u32 %s22, 1
          %s543 = scalar_lea.sflag [#allocation5], %s542
          %s544 = sand.u32 %s252, 1
          %s545 = smul.addr %s544, 32
          %s546 = scalar_lea.vmem [#allocation16], %s545
          %s548 = ssub.s32 512, 512
          %549 = vsyncadd %s543, %s548
          %s550 = smul.addr %s30, 8
          %s551 = smul.addr %s550, 64
          %s552 = scalar_lea.hbm %s8, %s551
          %s553 = sshll.u32 %s546, 4
          %s554 = int_to_ptr.vmem [resolvable:$true] %s553
          %559 = dma.hbm_to_vmem [thread:$0]  %s552, 512, %s554, %s543, 64, 64, 4
        $region52: #{modified_decoder_forward.1} parent=31 // pred_fallthru
          _
        // Predicated region
        $region53: #{modified_decoder_forward.1} parent=31 // pred_check
          %p560 = pneg %p288
        $region54: #{modified_decoder_forward.1} parent=31 // pred_check_branch
          %562 = sbr.rel (%p560) target = $region56
        $region55: #{modified_decoder_forward.1} parent=31 // pred_region
          %s563 = sand.u32 %s22, 1
          %s564 = scalar_lea.sflag [#allocation5], %s563
          %s565 = sand.u32 %s278, 1
          %s566 = smul.addr %s565, 32
          %s567 = scalar_lea.vmem [#allocation17], %s566
          %s569 = ssub.s32 512, 512
          %570 = vsyncadd %s564, %s569
          %s571 = smul.addr %s30, 8
          %s572 = smul.addr %s571, 64
          %s573 = scalar_lea.hbm %s9, %s572
          %s574 = sshll.u32 %s567, 4
          %s575 = int_to_ptr.vmem [resolvable:$true] %s574
          %580 = dma.hbm_to_vmem [thread:$0]  %s573, 512, %s575, %s564, 64, 64, 4
        $region56: #{modified_decoder_forward.1} parent=31 // pred_fallthru
          _
        // Predicated region
        $region57: #{modified_decoder_forward.1} parent=31 // pred_check
          %p581 = pneg %p314
        $region58: #{modified_decoder_forward.1} parent=31 // pred_check_branch
          %583 = sbr.rel (%p581) target = $region60
        $region59: #{modified_decoder_forward.1} parent=31 // pred_region
          %s584 = sand.u32 %s22, 1
          %s585 = scalar_lea.sflag [#allocation5], %s584
          %s586 = sand.u32 %s304, 1
          %s587 = smul.addr %s586, 64
          %s588 = scalar_lea.vmem [#allocation18], %s587
          %s590 = ssub.s32 1024, 1024
          %591 = vsyncadd %s585, %s590
          %s592 = smul.addr %s30, 16
          %s593 = smul.addr %s592, 64
          %s594 = scalar_lea.hbm %s10, %s593
          %s595 = sshll.u32 %s588, 4
          %s596 = int_to_ptr.vmem [resolvable:$true] %s595
          %601 = dma.hbm_to_vmem [thread:$0]  %s594, 1024, %s596, %s585, 64, 64, 4
        $region60: #{modified_decoder_forward.1} parent=31 // pred_fallthru
          _
        // Predicated region
        $region61: #{modified_decoder_forward.1} parent=31 // pred_check
          %p602 = pneg %p340
        $region62: #{modified_decoder_forward.1} parent=31 // pred_check_branch
          %604 = sbr.rel (%p602) target = $region64
        $region63: #{modified_decoder_forward.1} parent=31 // pred_region
          %s605 = sand.u32 %s22, 1
          %s606 = scalar_lea.sflag [#allocation5], %s605
          %s607 = sand.u32 %s330, 1
          %s608 = smul.addr %s607, 32
          %s609 = scalar_lea.vmem [#allocation19], %s608
          %s611 = ssub.s32 512, 512
          %612 = vsyncadd %s606, %s611
          %s613 = smul.addr %s30, 4
          %s614 = smul.addr %s613, 128
          %s615 = scalar_lea.hbm %s11, %s614
          %s616 = sshll.u32 %s609, 4
          %s617 = int_to_ptr.vmem [resolvable:$true] %s616
          %622 = dma.hbm_to_vmem [thread:$0]  %s615, 512, %s617, %s606, 256, 256, 16
        $region64: #{modified_decoder_forward.1} parent=31 // pred_fallthru
          _
      $region32: #{modified_decoder_forward.1} parent=5 // pred_fallthru
        _
      %p623 = scmp.le.s32.totalorder 1, %s22
      %p624 = scmp.lt.s32.totalorder %s22, 3
      %p625 = pnand %p623, %p624
      %p626 = pneg %p625
      // Predicated region
      $region65: #{modified_decoder_forward.1} parent=5 // pred_check
        _
      $region66: #{modified_decoder_forward.1} parent=5 // pred_check_branch
        %628 = sbr.rel (%p625) target = $region68
      $region67: #{modified_decoder_forward.1} parent=5 // pred_region
        %s629 = ssub.s32 %s22, 1
        // Predicated region
        $region69: #{modified_decoder_forward.1} parent=67 // pred_check
          %p630 = pneg %p60
        $region70: #{modified_decoder_forward.1} parent=67 // pred_check_branch
          %632 = sbr.rel (%p630) target = $region72
        $region71: #{modified_decoder_forward.1} parent=67 // pred_region
          %633 = dma.done [#allocation5], 256
        $region72: #{modified_decoder_forward.1} parent=67 // pred_fallthru
          _
        // Predicated region
        $region73: #{modified_decoder_forward.1} parent=67 // pred_check
          %p634 = pneg %p86
        $region74: #{modified_decoder_forward.1} parent=67 // pred_check_branch
          %636 = sbr.rel (%p634) target = $region76
        $region75: #{modified_decoder_forward.1} parent=67 // pred_region
          %637 = dma.done [#allocation8], 128
        $region76: #{modified_decoder_forward.1} parent=67 // pred_fallthru
          _
        // Predicated region
        $region77: #{modified_decoder_forward.1} parent=67 // pred_check
          %p638 = pneg %p112
        $region78: #{modified_decoder_forward.1} parent=67 // pred_check_branch
          %640 = sbr.rel (%p638) target = $region80
        $region79: #{modified_decoder_forward.1} parent=67 // pred_region
          %641 = dma.done [#allocation8], 32
        $region80: #{modified_decoder_forward.1} parent=67 // pred_fallthru
          _
        // Predicated region
        $region81: #{modified_decoder_forward.1} parent=67 // pred_check
          %p642 = pneg %p138
        $region82: #{modified_decoder_forward.1} parent=67 // pred_check_branch
          %644 = sbr.rel (%p642) target = $region84
        $region83: #{modified_decoder_forward.1} parent=67 // pred_region
          %645 = dma.done [#allocation11], 32
        $region84: #{modified_decoder_forward.1} parent=67 // pred_fallthru
          _
        %s646 = sand.u32 %s27, 1
        %s647 = scalar_lea.sflag [#allocation5], %s646
        %s648 = sand.u32 %s151, 1
        %s649 = smul.addr %s648, 64
        %s650 = scalar_lea.vmem [#allocation12], %s649
        // Predicated region
        $region85: #{modified_decoder_forward.1} parent=67 // pred_check
          %p651 = pneg %p164
        $region86: #{modified_decoder_forward.1} parent=67 // pred_check_branch
          %653 = sbr.rel (%p651) target = $region88
        $region87: #{modified_decoder_forward.1} parent=67 // pred_region
          %654 = dma.done %s647, 1024
        $region88: #{modified_decoder_forward.1} parent=67 // pred_fallthru
          _
        %s655 = sand.u32 %s27, 1
        %s656 = scalar_lea.sflag [#allocation5], %s655
        %s657 = sand.u32 %s177, 1
        %s658 = smul.addr %s657, 32
        %s659 = scalar_lea.vmem [#allocation13], %s658
        // Predicated region
        $region89: #{modified_decoder_forward.1} parent=67 // pred_check
          %p660 = pneg %p190
        $region90: #{modified_decoder_forward.1} parent=67 // pred_check_branch
          %662 = sbr.rel (%p660) target = $region92
        $region91: #{modified_decoder_forward.1} parent=67 // pred_region
          %663 = dma.done %s656, 512
        $region92: #{modified_decoder_forward.1} parent=67 // pred_fallthru
          _
        %s664 = sand.u32 %s27, 1
        %s665 = scalar_lea.sflag [#allocation5], %s664
        %s666 = sand.u32 %s203, 1
        %s667 = smul.addr %s666, 32
        %s668 = scalar_lea.vmem [#allocation14], %s667
        // Predicated region
        $region93: #{modified_decoder_forward.1} parent=67 // pred_check
          %p669 = pneg %p216
        $region94: #{modified_decoder_forward.1} parent=67 // pred_check_branch
          %671 = sbr.rel (%p669) target = $region96
        $region95: #{modified_decoder_forward.1} parent=67 // pred_region
          %672 = dma.done %s665, 512
        $region96: #{modified_decoder_forward.1} parent=67 // pred_fallthru
          _
        %s673 = sand.u32 %s27, 1
        %s674 = scalar_lea.sflag [#allocation5], %s673
        %s675 = sand.u32 %s229, 1
        %s676 = smul.addr %s675, 32
        %s677 = scalar_lea.vmem [#allocation15], %s676
        // Predicated region
        $region97: #{modified_decoder_forward.1} parent=67 // pred_check
          %p678 = pneg %p242
        $region98: #{modified_decoder_forward.1} parent=67 // pred_check_branch
          %680 = sbr.rel (%p678) target = $region100
        $region99: #{modified_decoder_forward.1} parent=67 // pred_region
          %681 = dma.done %s674, 512
        $region100: #{modified_decoder_forward.1} parent=67 // pred_fallthru
          _
        %s682 = sand.u32 %s27, 1
        %s683 = scalar_lea.sflag [#allocation5], %s682
        %s684 = sand.u32 %s255, 1
        %s685 = smul.addr %s684, 32
        %s686 = scalar_lea.vmem [#allocation16], %s685
        // Predicated region
        $region101: #{modified_decoder_forward.1} parent=67 // pred_check
          %p687 = pneg %p268
        $region102: #{modified_decoder_forward.1} parent=67 // pred_check_branch
          %689 = sbr.rel (%p687) target = $region104
        $region103: #{modified_decoder_forward.1} parent=67 // pred_region
          %690 = dma.done %s683, 512
        $region104: #{modified_decoder_forward.1} parent=67 // pred_fallthru
          _
        %s691 = sand.u32 %s27, 1
        %s692 = scalar_lea.sflag [#allocation5], %s691
        %s693 = sand.u32 %s281, 1
        %s694 = smul.addr %s693, 32
        %s695 = scalar_lea.vmem [#allocation17], %s694
        // Predicated region
        $region105: #{modified_decoder_forward.1} parent=67 // pred_check
          %p696 = pneg %p294
        $region106: #{modified_decoder_forward.1} parent=67 // pred_check_branch
          %698 = sbr.rel (%p696) target = $region108
        $region107: #{modified_decoder_forward.1} parent=67 // pred_region
          %699 = dma.done %s692, 512
        $region108: #{modified_decoder_forward.1} parent=67 // pred_fallthru
          _
        %s700 = sand.u32 %s27, 1
        %s701 = scalar_lea.sflag [#allocation5], %s700
        %s702 = sand.u32 %s307, 1
        %s703 = smul.addr %s702, 64
        %s704 = scalar_lea.vmem [#allocation18], %s703
        // Predicated region
        $region109: #{modified_decoder_forward.1} parent=67 // pred_check
          %p705 = pneg %p320
        $region110: #{modified_decoder_forward.1} parent=67 // pred_check_branch
          %707 = sbr.rel (%p705) target = $region112
        $region111: #{modified_decoder_forward.1} parent=67 // pred_region
          %708 = dma.done %s701, 1024
        $region112: #{modified_decoder_forward.1} parent=67 // pred_fallthru
          _
        %s709 = sand.u32 %s27, 1
        %s710 = scalar_lea.sflag [#allocation5], %s709
        %s711 = sand.u32 %s333, 1
        %s712 = smul.addr %s711, 32
        %s713 = scalar_lea.vmem [#allocation19], %s712
        // Predicated region
        $region113: #{modified_decoder_forward.1} parent=67 // pred_check
          %p714 = pneg %p346
        $region114: #{modified_decoder_forward.1} parent=67 // pred_check_branch
          %716 = sbr.rel (%p714) target = $region116
        $region115: #{modified_decoder_forward.1} parent=67 // pred_region
          %717 = dma.done %s710, 512
        $region116: #{modified_decoder_forward.1} parent=67 // pred_fallthru
          _
        %p718 = pneg %p60
        %p719 = pneg %p57
        %p720 = pneg %p86
        %p721 = pneg %p83
        %p722 = pneg %p112
        %p723 = pneg %p109
        %p724 = pneg %p138
        %p725 = pneg %p135
        %s726 = sand.u32 %s27, 1
        %s727 = scalar_lea.sflag [#allocation5], %s726
        %s728 = sand.u32 %s151, 1
        %s729 = smul.addr %s728, 64
        %s730 = scalar_lea.vmem [#allocation12], %s729
        %p731 = pneg %p164
        %p732 = pneg %p161
        %s733 = sand.u32 %s27, 1
        %s734 = scalar_lea.sflag [#allocation5], %s733
        %s735 = sand.u32 %s177, 1
        %s736 = smul.addr %s735, 32
        %s737 = scalar_lea.vmem [#allocation13], %s736
        %p738 = pneg %p190
        %p739 = pneg %p187
        %s740 = sand.u32 %s27, 1
        %s741 = scalar_lea.sflag [#allocation5], %s740
        %s742 = sand.u32 %s203, 1
        %s743 = smul.addr %s742, 32
        %s744 = scalar_lea.vmem [#allocation14], %s743
        %p745 = pneg %p216
        %p746 = pneg %p213
        %s747 = sand.u32 %s27, 1
        %s748 = scalar_lea.sflag [#allocation5], %s747
        %s749 = sand.u32 %s229, 1
        %s750 = smul.addr %s749, 32
        %s751 = scalar_lea.vmem [#allocation15], %s750
        %p752 = pneg %p242
        %p753 = pneg %p239
        %s754 = sand.u32 %s27, 1
        %s755 = scalar_lea.sflag [#allocation5], %s754
        %s756 = sand.u32 %s255, 1
        %s757 = smul.addr %s756, 32
        %s758 = scalar_lea.vmem [#allocation16], %s757
        %p759 = pneg %p268
        %p760 = pneg %p265
        %s761 = sand.u32 %s27, 1
        %s762 = scalar_lea.sflag [#allocation5], %s761
        %s763 = sand.u32 %s281, 1
        %s764 = smul.addr %s763, 32
        %s765 = scalar_lea.vmem [#allocation17], %s764
        %p766 = pneg %p294
        %p767 = pneg %p291
        %s768 = sand.u32 %s27, 1
        %s769 = scalar_lea.sflag [#allocation5], %s768
        %s770 = sand.u32 %s307, 1
        %s771 = smul.addr %s770, 64
        %s772 = scalar_lea.vmem [#allocation18], %s771
        %p773 = pneg %p320
        %p774 = pneg %p317
        %s775 = sand.u32 %s27, 1
        %s776 = scalar_lea.sflag [#allocation5], %s775
        %s777 = sand.u32 %s333, 1
        %s778 = smul.addr %s777, 32
        %s779 = scalar_lea.vmem [#allocation19], %s778
        %p780 = pneg %p346
        %p781 = pneg %p343
        %p782 = pneg %p372
        %p783 = pneg %p369
        %s784 = smul.u32 2, %s31
        %s785 = smul.u32 2, %s31
        %s786 = smul.u32 2, %s31
        %s787 = smul.u32 2, %s31
        %s788 = smul.u32 2, %s31
        %p790 = scmp.eq.s32.totalorder %s32, 0
        // Predicated region
        $region117: #{modified_decoder_forward.1} parent=67 // pred_check
          %p791 = pneg %p790
        $region118: #{modified_decoder_forward.1} parent=67 // pred_check_branch
          %793 = sbr.rel (%p791) target = $region120
        $region119: #{modified_decoder_forward.1} parent=67 // pred_region
          %v794 = vld [vmem:[#allocation4] sm:$0xff]
          %v795 = vld [vmem:[#allocation4 + $0x8] sm:$0xff]
          %vm796 = vcmask 523264
          %797 = vst.msk [vmem:[#allocation20] sm:$0xff] %vm796, %v794
          %798 = vst.msk [vmem:[#allocation20 + $0x8] sm:$0xff] %vm796, %v795
          %v799 = vlaneseq
          %v800 = vshrl.u32 %v799, 7
          %v801 = vlaneseq
          %v802 = vand.u32 %v801, 127
          %vm803 = vcmp.le.s32.totalorder %v802, %v800
          %v804 = vld [vmem:[#allocation9] sm:$0x1]
          %v805 = vld [vmem:[#allocation9 + $0x1] sm:$0x1]
          %vm806 = vcmp.gt.f32.partialorder %v804, 0.0
          %vm807 = vcmp.gt.f32.partialorder %v805, 0.0
          %v808 = vsel %vm803, 1, 0
          %vm809 = vcmp.eq.s32.totalorder %v808, 1
          %v810 = vsel %vm806, 1, 0
          %v811 = vsel %vm807, 1, 0
          %v812 = vlaneseq
          %v813 = vshrl.u32 %v812, 7
          %v814 = vsub.s32 0, %v813
          %v815 = vrot.slane %v810, %v814
          %v816 = vlaneseq
          %v817 = vshrl.u32 %v816, 7
          %v818 = vsub.s32 0, %v817
          %v819 = vrot.slane %v811, %v818
          %vm820 = vcmp.eq.s32.totalorder %v815, 1
          %vm821 = vcmp.eq.s32.totalorder %v819, 1
          %vm822 = vmand %vm809, %vm820
          %vm823 = vmand %vm809, %vm821
          %v824 = vsel %vm822, 0.0, -1e+09
          %v825 = vsel %vm823, 0.0, -1e+09
          %vm826 = vcmask 64512
          %827 = vst.msk [vmem:[#allocation2] sm:$0xff] %vm826, %v824
          %828 = vst.msk [vmem:[#allocation2 + $0x8] sm:$0xff] %vm826, %v825
          %v829 = vld [vmem:[#allocation10] sm:$0x1]
          %v830 = vld [vmem:[#allocation10 + $0x1] sm:$0x1]
          %vm831 = vcmp.gt.f32.partialorder %v829, 0.0
          %vm832 = vcmp.gt.f32.partialorder %v830, 0.0
          %v833 = vsel %vm831, 0.0, -1e+09
          %v834 = vsel %vm832, 0.0, -1e+09
          %vm835 = vcmask 57344
          %836 = vst.msk [vmem:[#allocation3] sm:$0x1] %vm835, %v833
          %837 = vst.msk [vmem:[#allocation3 + $0x1] sm:$0x1] %vm835, %v834
        $region120: #{modified_decoder_forward.1} parent=67 // pred_fallthru
          _
        %v838 = vld [vmem:[#allocation20] sm:$0xff]
        %v839 = vld [vmem:[#allocation20 + $0x8] sm:$0xff]
        %v840 = vld [vmem:[%s713] ss:$8 sm:$0x3]
        %v841 = vld [vmem:[%s650] sm:$0xff]
        %v842 = vld [vmem:[%s650 + $0x8] sm:$0xff]
        %v843 = vld [vmem:[%s650 + $0x10] sm:$0xff]
        %v844 = vld [vmem:[%s650 + $0x18] sm:$0xff]
        %v845 = vld [vmem:[%s650 + $0x20] sm:$0xff]
        %v846 = vld [vmem:[%s650 + $0x28] sm:$0xff]
        %v847 = vld [vmem:[%s650 + $0x30] sm:$0xff]
        %v848 = vld [vmem:[%s650 + $0x38] sm:$0xff]
        %v849 = vpack.c.bf16 %v839, %v838
        %v851 = vlaneseq
        %v852 = vshrl.u32 %v851, 7
        %v853 = vsub.s32 0, %v852
        %v854 = vrot.slane %v840, %v853
        %v855 = vlaneseq
        %v856 = vshrl.u32 %v855, 7
        %v857 = vsub.s32 1, %v856
        %v858 = vrot.slane %v840, %v857
        %v869 = vunpack.c.l.b16 %v841
        %v870 = vunpack.c.h.b16 %v841
        %v871 = vunpack.c.l.b16 %v842
        %v872 = vunpack.c.h.b16 %v842
        %v873 = vunpack.c.l.b16 %v843
        %v874 = vunpack.c.h.b16 %v843
        %v875 = vunpack.c.l.b16 %v844
        %v876 = vunpack.c.h.b16 %v844
        %v877 = vunpack.c.l.b16 %v845
        %v878 = vunpack.c.h.b16 %v845
        %v879 = vunpack.c.l.b16 %v846
        %v880 = vunpack.c.h.b16 %v846
        %v881 = vunpack.c.l.b16 %v847
        %v882 = vunpack.c.h.b16 %v847
        %v883 = vunpack.c.l.b16 %v848
        %v884 = vunpack.c.h.b16 %v848
        %v885 = vpack.c.b16 %v871, %v869
        %v886 = vpack.c.b16 %v872, %v870
        %v887 = vpack.c.b16 %v875, %v873
        %v888 = vpack.c.b16 %v876, %v874
        %v889 = vpack.c.b16 %v879, %v877
        %v890 = vpack.c.b16 %v880, %v878
        %v891 = vpack.c.b16 %v883, %v881
        %v892 = vpack.c.b16 %v884, %v882
        %vm901 = vcmask 523264
        %v903 = vsel %vm901, %v849, 0
        %905 = vmatprep.subr.bf16.mxu0 %v886
        %906 = vmatpush1.bf16.msra.mxu0 %v885
        %907 = vmatprep.subr.bf16.mxu0 %v888
        %908 = vmatpush1.bf16.msra.mxu0 %v887
        %909 = vmatprep.subr.bf16.mxu0 %v890
        %910 = vmatpush1.bf16.msra.mxu0 %v889
        %911 = vmatprep.subr.bf16.mxu0 %v892
        %912 = vmatpush1.bf16.msra.mxu0 %v891
        %913 = vmatprep.subr.bf16.mxu0 0
        %914 = vmatpush1.bf16.msra.mxu0 0
        %915 = vmatprep.subr.bf16.mxu0 0
        %916 = vmatpush1.bf16.msra.mxu0 0
        %917 = vmatprep.subr.bf16.mxu0 0
        %918 = vmatpush1.bf16.msra.mxu0 0
        %919 = vmatprep.subr.bf16.mxu0 0
        %920 = vmatpush1.bf16.msra.mxu0 0
        %921 = vmatprep.subr.bf16.mxu0 0
        %922 = vmatpush1.bf16.msra.mxu0 0
        %923 = vmatprep.subr.bf16.mxu0 0
        %924 = vmatpush1.bf16.msra.mxu0 0
        %925 = vmatprep.subr.bf16.mxu0 0
        %926 = vmatpush1.bf16.msra.mxu0 0
        %927 = vmatprep.subr.bf16.mxu0 0
        %928 = vmatpush1.bf16.msra.mxu0 0
        %929 = vmatprep.subr.bf16.mxu0 0
        %930 = vmatpush1.bf16.msra.mxu0 0
        %931 = vmatprep.subr.bf16.mxu0 0
        %932 = vmatpush1.bf16.msra.mxu0 0
        %933 = vmatprep.subr.bf16.mxu0 0
        %934 = vmatpush1.bf16.msra.mxu0 0
        %935 = vmatprep.subr.bf16.mxu0 0
        %936 = vmatpush1.bf16.msra.mxu0 0
        %937 = vmatprep.mubr.bf16.mxu0 0
        %938 = vmatmul.mubr.bf16.gmra.mrb[0].mxu0 %v903
        %v939 = vpop.f32.mrb[0].mxu0
        %v940 = vadd.f32 %v854, %v939
        %v941 = vpop.f32.mrb[0].mxu0
        %v942 = vadd.f32 %v858, %v941
        %v943 = vpop.f32.mrb[0].mxu0
        %v944 = vadd.f32 %v854, %v943
        %v945 = vpop.f32.mrb[0].mxu0
        %v946 = vadd.f32 %v858, %v945
        %947 = vdwg.mxu0
        %v948 = vld [vmem:[#allocation2] sm:$0xff]
        %v949 = vpack.c.bf16 %v940, %v940
        %951 = vrot.lane.b32.xlu0 %v949, 64
        %v952 = vpop.permute.xlu0 %951
        %vm953 = vcmask 130048
        %v955 = vsel %vm953, %v949, 0
        %v958 = vsel %vm953, %v952, 0
        %960 = vmatprep.subr.bf16.mxu0 0
        %961 = vmatpush1.bf16.xpose.msra.mxu0 %v958
        %962 = vmatprep.subr.bf16.mxu0 0
        %963 = vmatpush1.bf16.xpose.msra.mxu0 0
        %964 = vmatprep.subr.bf16.mxu0 0
        %965 = vmatpush1.bf16.xpose.msra.mxu0 0
        %966 = vmatprep.subr.bf16.mxu0 0
        %967 = vmatpush1.bf16.xpose.msra.mxu0 0
        %968 = vmatprep.subr.bf16.mxu0 0
        %969 = vmatpush1.bf16.xpose.msra.mxu0 0
        %970 = vmatprep.subr.bf16.mxu0 0
        %971 = vmatpush1.bf16.xpose.msra.mxu0 0
        %972 = vmatprep.subr.bf16.mxu0 0
        %973 = vmatpush1.bf16.xpose.msra.mxu0 0
        %974 = vmatprep.subr.bf16.mxu0 0
        %975 = vmatpush1.bf16.xpose.msra.mxu0 0
        %976 = vmatprep.subr.bf16.mxu0 0
        %977 = vmatpush1.bf16.xpose.msra.mxu0 0
        %978 = vmatprep.subr.bf16.mxu0 0
        %979 = vmatpush1.bf16.xpose.msra.mxu0 0
        %980 = vmatprep.subr.bf16.mxu0 0
        %981 = vmatpush1.bf16.xpose.msra.mxu0 0
        %982 = vmatprep.subr.bf16.mxu0 0
        %983 = vmatpush1.bf16.xpose.msra.mxu0 0
        %984 = vmatprep.subr.bf16.mxu0 0
        %985 = vmatpush1.bf16.xpose.msra.mxu0 0
        %986 = vmatprep.subr.bf16.mxu0 0
        %987 = vmatpush1.bf16.xpose.msra.mxu0 0
        %988 = vmatprep.subr.bf16.mxu0 0
        %989 = vmatpush1.bf16.xpose.msra.mxu0 0
        %990 = vmatprep.subr.bf16.mxu0 0
        %991 = vmatpush1.bf16.xpose.msra.mxu0 0
        %992 = vmatprep.mubr.bf16.mxu0 0
        %993 = vmatmul.mubr.bf16.gmra.mrb[0].mxu0 %v955
        %v994 = vpop.f32.mrb[0].mxu0
        %v995 = vadd.f32 0.0, %v994
        %v996 = vpop.f32.mrb[0].mxu0
        %v997 = vpop.f32.mrb[0].mxu0
        %v998 = vpop.f32.mrb[0].mxu0
        %999 = vdwg.mxu0
        %v1000 = vmul.f32 %v995, 0.25
        %v1001 = vadd.f32 %v1000, %v948
        %vm1002 = vcmask 64512
        %v1003 = vsel %vm1002, %v1001, -inf
        %1004 = vmax.xlane.f32.xlu0 %v1003
        %v1005 = vpop.xlane.xlu0 %1004
        %v1006 = vsub.f32 %v1001, %v1005
        %v1007 = vmul.f32 %v1006, 1.442695
        %v1008 = vpow.pop %v1007
        %v1009 = vsel %vm1002, %v1008, 0.0
        %1010 = vadd.xlane.f32.xlu0 %v1009
        %v1011 = vpop.xlane.xlu0 %1010
        %v1012 = vrcp.pop %v1011
        %v1013 = vmul.f32 %v1008, %v1012
        %v1014 = vpack.c.bf16 %v1013, %v1013
        %v1015 = vpack.c.bf16 %v942, %v942
        %v1017 = vsel %vm1002, %v1014, 0
        %vm1019 = vcmask 1043456
        %v1021 = vsel %vm1019, %v1015, 0
        %1023 = vmatprep.subr.bf16.mxu0 0
        %1024 = vmatpush1.bf16.msra.mxu0 %v1021
        %1025 = vmatprep.subr.bf16.mxu0 0
        %1026 = vmatpush1.bf16.msra.mxu0 0
        %1027 = vmatprep.subr.bf16.mxu0 0
        %1028 = vmatpush1.bf16.msra.mxu0 0
        %1029 = vmatprep.subr.bf16.mxu0 0
        %1030 = vmatpush1.bf16.msra.mxu0 0
        %1031 = vmatprep.subr.bf16.mxu0 0
        %1032 = vmatpush1.bf16.msra.mxu0 0
        %1033 = vmatprep.subr.bf16.mxu0 0
        %1034 = vmatpush1.bf16.msra.mxu0 0
        %1035 = vmatprep.subr.bf16.mxu0 0
        %1036 = vmatpush1.bf16.msra.mxu0 0
        %1037 = vmatprep.subr.bf16.mxu0 0
        %1038 = vmatpush1.bf16.msra.mxu0 0
        %1039 = vmatprep.subr.bf16.mxu0 0
        %1040 = vmatpush1.bf16.msra.mxu0 0
        %1041 = vmatprep.subr.bf16.mxu0 0
        %1042 = vmatpush1.bf16.msra.mxu0 0
        %1043 = vmatprep.subr.bf16.mxu0 0
        %1044 = vmatpush1.bf16.msra.mxu0 0
        %1045 = vmatprep.subr.bf16.mxu0 0
        %1046 = vmatpush1.bf16.msra.mxu0 0
        %1047 = vmatprep.subr.bf16.mxu0 0
        %1048 = vmatpush1.bf16.msra.mxu0 0
        %1049 = vmatprep.subr.bf16.mxu0 0
        %1050 = vmatpush1.bf16.msra.mxu0 0
        %1051 = vmatprep.subr.bf16.mxu0 0
        %1052 = vmatpush1.bf16.msra.mxu0 0
        %1053 = vmatprep.subr.bf16.mxu0 0
        %1054 = vmatpush1.bf16.msra.mxu0 0
        %1055 = vmatprep.mubr.bf16.mxu0 0
        %1056 = vmatmul.mubr.bf16.gmra.mrb[0].mxu0 %v1017
        %v1057 = vpop.f32.mrb[0].mxu0
        %v1058 = vadd.f32 0.0, %v1057
        %v1059 = vpop.f32.mrb[0].mxu0
        %v1060 = vpop.f32.mrb[0].mxu0
        %v1061 = vpop.f32.mrb[0].mxu0
        %1062 = vdwg.mxu0
        %1063 = vrot.lane.b32.xlu0 %v949, 112
        %v1064 = vpop.permute.xlu0 %1063
        %1065 = vrot.lane.b32.xlu0 %v949, 48
        %v1066 = vpop.permute.xlu0 %1065
        %v1068 = vsel %vm953, %v1064, 0
        %v1071 = vsel %vm953, %v1066, 0
        %1073 = vmatprep.subr.bf16.mxu0 0
        %1074 = vmatpush1.bf16.xpose.msra.mxu0 %v1071
        %1075 = vmatprep.subr.bf16.mxu0 0
        %1076 = vmatpush1.bf16.xpose.msra.mxu0 0
        %1077 = vmatprep.subr.bf16.mxu0 0
        %1078 = vmatpush1.bf16.xpose.msra.mxu0 0
        %1079 = vmatprep.subr.bf16.mxu0 0
        %1080 = vmatpush1.bf16.xpose.msra.mxu0 0
        %1081 = vmatprep.subr.bf16.mxu0 0
        %1082 = vmatpush1.bf16.xpose.msra.mxu0 0
        %1083 = vmatprep.subr.bf16.mxu0 0
        %1084 = vmatpush1.bf16.xpose.msra.mxu0 0
        %1085 = vmatprep.subr.bf16.mxu0 0
        %1086 = vmatpush1.bf16.xpose.msra.mxu0 0
        %1087 = vmatprep.subr.bf16.mxu0 0
        %1088 = vmatpush1.bf16.xpose.msra.mxu0 0
        %1089 = vmatprep.subr.bf16.mxu0 0
        %1090 = vmatpush1.bf16.xpose.msra.mxu0 0
        %1091 = vmatprep.subr.bf16.mxu0 0
        %1092 = vmatpush1.bf16.xpose.msra.mxu0 0
        %1093 = vmatprep.subr.bf16.mxu0 0
        %1094 = vmatpush1.bf16.xpose.msra.mxu0 0
        %1095 = vmatprep.subr.bf16.mxu0 0
        %1096 = vmatpush1.bf16.xpose.msra.mxu0 0
        %1097 = vmatprep.subr.bf16.mxu0 0
        %1098 = vmatpush1.bf16.xpose.msra.mxu0 0
        %1099 = vmatprep.subr.bf16.mxu0 0
        %1100 = vmatpush1.bf16.xpose.msra.mxu0 0
        %1101 = vmatprep.subr.bf16.mxu0 0
        %1102 = vmatpush1.bf16.xpose.msra.mxu0 0
        %1103 = vmatprep.subr.bf16.mxu0 0
        %1104 = vmatpush1.bf16.xpose.msra.mxu0 0
        %1105 = vmatprep.mubr.bf16.mxu0 0
        %1106 = vmatmul.mubr.bf16.gmra.mrb[0].mxu0 %v1068
        %v1107 = vpop.f32.mrb[0].mxu0
        %v1108 = vadd.f32 0.0, %v1107
        %v1109 = vpop.f32.mrb[0].mxu0
        %v1110 = vpop.f32.mrb[0].mxu0
        %v1111 = vpop.f32.mrb[0].mxu0
        %1112 = vdwg.mxu0
        %v1113 = vmul.f32 %v1108, 0.25
        %v1114 = vadd.f32 %v1113, %v948
        %v1115 = vsel %vm1002, %v1114, -inf
        %1116 = vmax.xlane.f32.xlu0 %v1115
        %v1117 = vpop.xlane.xlu0 %1116
        %v1118 = vsub.f32 %v1114, %v1117
        %v1119 = vmul.f32 %v1118, 1.442695
        %v1120 = vpow.pop %v1119
        %v1121 = vsel %vm1002, %v1120, 0.0
        %1122 = vadd.xlane.f32.xlu0 %v1121
        %v1123 = vpop.xlane.xlu0 %1122
        %v1124 = vrcp.pop %v1123
        %v1125 = vmul.f32 %v1120, %v1124
        %v1126 = vpack.c.bf16 %v1125, %v1125
        %1128 = vrot.lane.b32.xlu0 %v1015, 112
        %v1129 = vpop.permute.xlu0 %1128
        %v1131 = vsel %vm1002, %v1126, 0
        %v1134 = vsel %vm1019, %v1129, 0
        %1136 = vmatprep.subr.bf16.mxu0 0
        %1137 = vmatpush1.bf16.msra.mxu0 %v1134
        %1138 = vmatprep.subr.bf16.mxu0 0
        %1139 = vmatpush1.bf16.msra.mxu0 0
        %1140 = vmatprep.subr.bf16.mxu0 0
        %1141 = vmatpush1.bf16.msra.mxu0 0
        %1142 = vmatprep.subr.bf16.mxu0 0
        %1143 = vmatpush1.bf16.msra.mxu0 0
        %1144 = vmatprep.subr.bf16.mxu0 0
        %1145 = vmatpush1.bf16.msra.mxu0 0
        %1146 = vmatprep.subr.bf16.mxu0 0
        %1147 = vmatpush1.bf16.msra.mxu0 0
        %1148 = vmatprep.subr.bf16.mxu0 0
        %1149 = vmatpush1.bf16.msra.mxu0 0
        %1150 = vmatprep.subr.bf16.mxu0 0
        %1151 = vmatpush1.bf16.msra.mxu0 0
        %1152 = vmatprep.subr.bf16.mxu0 0
        %1153 = vmatpush1.bf16.msra.mxu0 0
        %1154 = vmatprep.subr.bf16.mxu0 0
        %1155 = vmatpush1.bf16.msra.mxu0 0
        %1156 = vmatprep.subr.bf16.mxu0 0
        %1157 = vmatpush1.bf16.msra.mxu0 0
        %1158 = vmatprep.subr.bf16.mxu0 0
        %1159 = vmatpush1.bf16.msra.mxu0 0
        %1160 = vmatprep.subr.bf16.mxu0 0
        %1161 = vmatpush1.bf16.msra.mxu0 0
        %1162 = vmatprep.subr.bf16.mxu0 0
        %1163 = vmatpush1.bf16.msra.mxu0 0
        %1164 = vmatprep.subr.bf16.mxu0 0
        %1165 = vmatpush1.bf16.msra.mxu0 0
        %1166 = vmatprep.subr.bf16.mxu0 0
        %1167 = vmatpush1.bf16.msra.mxu0 0
        %1168 = vmatprep.mubr.bf16.mxu0 0
        %1169 = vmatmul.mubr.bf16.gmra.mrb[0].mxu0 %v1131
        %v1170 = vpop.f32.mrb[0].mxu0
        %v1171 = vadd.f32 0.0, %v1170
        %v1172 = vpop.f32.mrb[0].mxu0
        %v1173 = vpop.f32.mrb[0].mxu0
        %v1174 = vpop.f32.mrb[0].mxu0
        %1175 = vdwg.mxu0
        %1176 = vrot.lane.b32.xlu0 %v949, 96
        %v1177 = vpop.permute.xlu0 %1176
        %1178 = vrot.lane.b32.xlu0 %v949, 32
        %v1179 = vpop.permute.xlu0 %1178
        %v1181 = vsel %vm953, %v1177, 0
        %v1184 = vsel %vm953, %v1179, 0
        %1186 = vmatprep.subr.bf16.mxu0 0
        %1187 = vmatpush1.bf16.xpose.msra.mxu0 %v1184
        %1188 = vmatprep.subr.bf16.mxu0 0
        %1189 = vmatpush1.bf16.xpose.msra.mxu0 0
        %1190 = vmatprep.subr.bf16.mxu0 0
        %1191 = vmatpush1.bf16.xpose.msra.mxu0 0
        %1192 = vmatprep.subr.bf16.mxu0 0
        %1193 = vmatpush1.bf16.xpose.msra.mxu0 0
        %1194 = vmatprep.subr.bf16.mxu0 0
        %1195 = vmatpush1.bf16.xpose.msra.mxu0 0
        %1196 = vmatprep.subr.bf16.mxu0 0
        %1197 = vmatpush1.bf16.xpose.msra.mxu0 0
        %1198 = vmatprep.subr.bf16.mxu0 0
        %1199 = vmatpush1.bf16.xpose.msra.mxu0 0
        %1200 = vmatprep.subr.bf16.mxu0 0
        %1201 = vmatpush1.bf16.xpose.msra.mxu0 0
        %1202 = vmatprep.subr.bf16.mxu0 0
        %1203 = vmatpush1.bf16.xpose.msra.mxu0 0
        %1204 = vmatprep.subr.bf16.mxu0 0
        %1205 = vmatpush1.bf16.xpose.msra.mxu0 0
        %1206 = vmatprep.subr.bf16.mxu0 0
        %1207 = vmatpush1.bf16.xpose.msra.mxu0 0
        %1208 = vmatprep.subr.bf16.mxu0 0
        %1209 = vmatpush1.bf16.xpose.msra.mxu0 0
        %1210 = vmatprep.subr.bf16.mxu0 0
        %1211 = vmatpush1.bf16.xpose.msra.mxu0 0
        %1212 = vmatprep.subr.bf16.mxu0 0
        %1213 = vmatpush1.bf16.xpose.msra.mxu0 0
        %1214 = vmatprep.subr.bf16.mxu0 0
        %1215 = vmatpush1.bf16.xpose.msra.mxu0 0
        %1216 = vmatprep.subr.bf16.mxu0 0
        %1217 = vmatpush1.bf16.xpose.msra.mxu0 0
        %1218 = vmatprep.mubr.bf16.mxu0 0
        %1219 = vmatmul.mubr.bf16.gmra.mrb[0].mxu0 %v1181
        %v1220 = vpop.f32.mrb[0].mxu0
        %v1221 = vadd.f32 0.0, %v1220
        %v1222 = vpop.f32.mrb[0].mxu0
        %v1223 = vpop.f32.mrb[0].mxu0
        %v1224 = vpop.f32.mrb[0].mxu0
        %1225 = vdwg.mxu0
        %v1226 = vmul.f32 %v1221, 0.25
        %v1227 = vadd.f32 %v1226, %v948
        %v1228 = vsel %vm1002, %v1227, -inf
        %1229 = vmax.xlane.f32.xlu0 %v1228
        %v1230 = vpop.xlane.xlu0 %1229
        %v1231 = vsub.f32 %v1227, %v1230
        %v1232 = vmul.f32 %v1231, 1.442695
        %v1233 = vpow.pop %v1232
        %v1234 = vsel %vm1002, %v1233, 0.0
        %1235 = vadd.xlane.f32.xlu0 %v1234
        %v1236 = vpop.xlane.xlu0 %1235
        %v1237 = vrcp.pop %v1236
        %v1238 = vmul.f32 %v1233, %v1237
        %v1239 = vpack.c.bf16 %v1238, %v1238
        %1240 = vrot.lane.b32.xlu0 %v1015, 96
        %v1241 = vpop.permute.xlu0 %1240
        %v1243 = vsel %vm1002, %v1239, 0
        %v1246 = vsel %vm1019, %v1241, 0
        %1248 = vmatprep.subr.bf16.mxu0 0
        %1249 = vmatpush1.bf16.msra.mxu0 %v1246
        %1250 = vmatprep.subr.bf16.mxu0 0
        %1251 = vmatpush1.bf16.msra.mxu0 0
        %1252 = vmatprep.subr.bf16.mxu0 0
        %1253 = vmatpush1.bf16.msra.mxu0 0
        %1254 = vmatprep.subr.bf16.mxu0 0
        %1255 = vmatpush1.bf16.msra.mxu0 0
        %1256 = vmatprep.subr.bf16.mxu0 0
        %1257 = vmatpush1.bf16.msra.mxu0 0
        %1258 = vmatprep.subr.bf16.mxu0 0
        %1259 = vmatpush1.bf16.msra.mxu0 0
        %1260 = vmatprep.subr.bf16.mxu0 0
        %1261 = vmatpush1.bf16.msra.mxu0 0
        %1262 = vmatprep.subr.bf16.mxu0 0
        %1263 = vmatpush1.bf16.msra.mxu0 0
        %1264 = vmatprep.subr.bf16.mxu0 0
        %1265 = vmatpush1.bf16.msra.mxu0 0
        %1266 = vmatprep.subr.bf16.mxu0 0
        %1267 = vmatpush1.bf16.msra.mxu0 0
        %1268 = vmatprep.subr.bf16.mxu0 0
        %1269 = vmatpush1.bf16.msra.mxu0 0
        %1270 = vmatprep.subr.bf16.mxu0 0
        %1271 = vmatpush1.bf16.msra.mxu0 0
        %1272 = vmatprep.subr.bf16.mxu0 0
        %1273 = vmatpush1.bf16.msra.mxu0 0
        %1274 = vmatprep.subr.bf16.mxu0 0
        %1275 = vmatpush1.bf16.msra.mxu0 0
        %1276 = vmatprep.subr.bf16.mxu0 0
        %1277 = vmatpush1.bf16.msra.mxu0 0
        %1278 = vmatprep.subr.bf16.mxu0 0
        %1279 = vmatpush1.bf16.msra.mxu0 0
        %1280 = vmatprep.mubr.bf16.mxu0 0
        %1281 = vmatmul.mubr.bf16.gmra.mrb[0].mxu0 %v1243
        %v1282 = vpop.f32.mrb[0].mxu0
        %v1283 = vadd.f32 0.0, %v1282
        %v1284 = vpop.f32.mrb[0].mxu0
        %v1285 = vpop.f32.mrb[0].mxu0
        %v1286 = vpop.f32.mrb[0].mxu0
        %1287 = vdwg.mxu0
        %1288 = vrot.lane.b32.xlu0 %v949, 80
        %v1289 = vpop.permute.xlu0 %1288
        %1290 = vrot.lane.b32.xlu0 %v949, 16
        %v1291 = vpop.permute.xlu0 %1290
        %v1293 = vsel %vm953, %v1289, 0
        %v1296 = vsel %vm953, %v1291, 0
        %1298 = vmatprep.subr.bf16.mxu0 0
        %1299 = vmatpush1.bf16.xpose.msra.mxu0 %v1296
        %1300 = vmatprep.subr.bf16.mxu0 0
        %1301 = vmatpush1.bf16.xpose.msra.mxu0 0
        %1302 = vmatprep.subr.bf16.mxu0 0
        %1303 = vmatpush1.bf16.xpose.msra.mxu0 0
        %1304 = vmatprep.subr.bf16.mxu0 0
        %1305 = vmatpush1.bf16.xpose.msra.mxu0 0
        %1306 = vmatprep.subr.bf16.mxu0 0
        %1307 = vmatpush1.bf16.xpose.msra.mxu0 0
        %1308 = vmatprep.subr.bf16.mxu0 0
        %1309 = vmatpush1.bf16.xpose.msra.mxu0 0
        %1310 = vmatprep.subr.bf16.mxu0 0
        %1311 = vmatpush1.bf16.xpose.msra.mxu0 0
        %1312 = vmatprep.subr.bf16.mxu0 0
        %1313 = vmatpush1.bf16.xpose.msra.mxu0 0
        %1314 = vmatprep.subr.bf16.mxu0 0
        %1315 = vmatpush1.bf16.xpose.msra.mxu0 0
        %1316 = vmatprep.subr.bf16.mxu0 0
        %1317 = vmatpush1.bf16.xpose.msra.mxu0 0
        %1318 = vmatprep.subr.bf16.mxu0 0
        %1319 = vmatpush1.bf16.xpose.msra.mxu0 0
        %1320 = vmatprep.subr.bf16.mxu0 0
        %1321 = vmatpush1.bf16.xpose.msra.mxu0 0
        %1322 = vmatprep.subr.bf16.mxu0 0
        %1323 = vmatpush1.bf16.xpose.msra.mxu0 0
        %1324 = vmatprep.subr.bf16.mxu0 0
        %1325 = vmatpush1.bf16.xpose.msra.mxu0 0
        %1326 = vmatprep.subr.bf16.mxu0 0
        %1327 = vmatpush1.bf16.xpose.msra.mxu0 0
        %1328 = vmatprep.subr.bf16.mxu0 0
        %1329 = vmatpush1.bf16.xpose.msra.mxu0 0
        %1330 = vmatprep.mubr.bf16.mxu0 0
        %1331 = vmatmul.mubr.bf16.gmra.mrb[0].mxu0 %v1293
        %v1332 = vpop.f32.mrb[0].mxu0
        %v1333 = vadd.f32 0.0, %v1332
        %v1334 = vpop.f32.mrb[0].mxu0
        %v1335 = vpop.f32.mrb[0].mxu0
        %v1336 = vpop.f32.mrb[0].mxu0
        %1337 = vdwg.mxu0
        %v1338 = vmul.f32 %v1333, 0.25
        %v1339 = vadd.f32 %v1338, %v948
        %v1340 = vsel %vm1002, %v1339, -inf
        %1341 = vmax.xlane.f32.xlu0 %v1340
        %v1342 = vpop.xlane.xlu0 %1341
        %v1343 = vsub.f32 %v1339, %v1342
        %v1344 = vmul.f32 %v1343, 1.442695
        %v1345 = vpow.pop %v1344
        %v1346 = vsel %vm1002, %v1345, 0.0
        %1347 = vadd.xlane.f32.xlu0 %v1346
        %v1348 = vpop.xlane.xlu0 %1347
        %v1349 = vrcp.pop %v1348
        %v1350 = vmul.f32 %v1345, %v1349
        %v1351 = vpack.c.bf16 %v1350, %v1350
        %1352 = vrot.lane.b32.xlu0 %v1015, 80
        %v1353 = vpop.permute.xlu0 %1352
        %v1355 = vsel %vm1002, %v1351, 0
        %v1358 = vsel %vm1019, %v1353, 0
        %1360 = vmatprep.subr.bf16.mxu0 0
        %1361 = vmatpush1.bf16.msra.mxu0 %v1358
        %1362 = vmatprep.subr.bf16.mxu0 0
        %1363 = vmatpush1.bf16.msra.mxu0 0
        %1364 = vmatprep.subr.bf16.mxu0 0
        %1365 = vmatpush1.bf16.msra.mxu0 0
        %1366 = vmatprep.subr.bf16.mxu0 0
        %1367 = vmatpush1.bf16.msra.mxu0 0
        %1368 = vmatprep.subr.bf16.mxu0 0
        %1369 = vmatpush1.bf16.msra.mxu0 0
        %1370 = vmatprep.subr.bf16.mxu0 0
        %1371 = vmatpush1.bf16.msra.mxu0 0
        %1372 = vmatprep.subr.bf16.mxu0 0
        %1373 = vmatpush1.bf16.msra.mxu0 0
        %1374 = vmatprep.subr.bf16.mxu0 0
        %1375 = vmatpush1.bf16.msra.mxu0 0
        %1376 = vmatprep.subr.bf16.mxu0 0
        %1377 = vmatpush1.bf16.msra.mxu0 0
        %1378 = vmatprep.subr.bf16.mxu0 0
        %1379 = vmatpush1.bf16.msra.mxu0 0
        %1380 = vmatprep.subr.bf16.mxu0 0
        %1381 = vmatpush1.bf16.msra.mxu0 0
        %1382 = vmatprep.subr.bf16.mxu0 0
        %1383 = vmatpush1.bf16.msra.mxu0 0
        %1384 = vmatprep.subr.bf16.mxu0 0
        %1385 = vmatpush1.bf16.msra.mxu0 0
        %1386 = vmatprep.subr.bf16.mxu0 0
        %1387 = vmatpush1.bf16.msra.mxu0 0
        %1388 = vmatprep.subr.bf16.mxu0 0
        %1389 = vmatpush1.bf16.msra.mxu0 0
        %1390 = vmatprep.subr.bf16.mxu0 0
        %1391 = vmatpush1.bf16.msra.mxu0 0
        %1392 = vmatprep.mubr.bf16.mxu0 0
        %1393 = vmatmul.mubr.bf16.gmra.mrb[0].mxu0 %v1355
        %v1394 = vpop.f32.mrb[0].mxu0
        %v1395 = vadd.f32 0.0, %v1394
        %v1396 = vpop.f32.mrb[0].mxu0
        %v1397 = vpop.f32.mrb[0].mxu0
        %v1398 = vpop.f32.mrb[0].mxu0
        %1399 = vdwg.mxu0
        %1401 = vrot.lane.b32.xlu0 %v1171, 16
        %v1402 = vpop.permute.xlu0 %1401
        %1405 = vrot.lane.b32.xlu0 %v1283, 32
        %v1406 = vpop.permute.xlu0 %1405
        %1409 = vrot.lane.b32.xlu0 %v1395, 48
        %v1410 = vpop.permute.xlu0 %1409
        %v1412 = vsel %vm953, %v1058, %v1402
        %vm1413 = vcmask 261120
        %v1414 = vsel %vm1413, %v1412, %v1406
        %vm1415 = vcmask 392192
        %v1416 = vsel %vm1415, %v1414, %v1410
        %s1417 = scalar_lea.vmem [#allocation2], 8
        %v1418 = vld [vmem:[%s1417] sm:$0xff]
        %v1419 = vpack.c.bf16 %v944, %v944
        %1421 = vrot.lane.b32.xlu0 %v1419, 64
        %v1422 = vpop.permute.xlu0 %1421
        %v1424 = vsel %vm953, %v1419, 0
        %v1427 = vsel %vm953, %v1422, 0
        %1429 = vmatprep.subr.bf16.mxu0 0
        %1430 = vmatpush1.bf16.xpose.msra.mxu0 %v1427
        %1431 = vmatprep.subr.bf16.mxu0 0
        %1432 = vmatpush1.bf16.xpose.msra.mxu0 0
        %1433 = vmatprep.subr.bf16.mxu0 0
        %1434 = vmatpush1.bf16.xpose.msra.mxu0 0
        %1435 = vmatprep.subr.bf16.mxu0 0
        %1436 = vmatpush1.bf16.xpose.msra.mxu0 0
        %1437 = vmatprep.subr.bf16.mxu0 0
        %1438 = vmatpush1.bf16.xpose.msra.mxu0 0
        %1439 = vmatprep.subr.bf16.mxu0 0
        %1440 = vmatpush1.bf16.xpose.msra.mxu0 0
        %1441 = vmatprep.subr.bf16.mxu0 0
        %1442 = vmatpush1.bf16.xpose.msra.mxu0 0
        %1443 = vmatprep.subr.bf16.mxu0 0
        %1444 = vmatpush1.bf16.xpose.msra.mxu0 0
        %1445 = vmatprep.subr.bf16.mxu0 0
        %1446 = vmatpush1.bf16.xpose.msra.mxu0 0
        %1447 = vmatprep.subr.bf16.mxu0 0
        %1448 = vmatpush1.bf16.xpose.msra.mxu0 0
        %1449 = vmatprep.subr.bf16.mxu0 0
        %1450 = vmatpush1.bf16.xpose.msra.mxu0 0
        %1451 = vmatprep.subr.bf16.mxu0 0
        %1452 = vmatpush1.bf16.xpose.msra.mxu0 0
        %1453 = vmatprep.subr.bf16.mxu0 0
        %1454 = vmatpush1.bf16.xpose.msra.mxu0 0
        %1455 = vmatprep.subr.bf16.mxu0 0
        %1456 = vmatpush1.bf16.xpose.msra.mxu0 0
        %1457 = vmatprep.subr.bf16.mxu0 0
        %1458 = vmatpush1.bf16.xpose.msra.mxu0 0
        %1459 = vmatprep.subr.bf16.mxu0 0
        %1460 = vmatpush1.bf16.xpose.msra.mxu0 0
        %1461 = vmatprep.mubr.bf16.mxu0 0
        %1462 = vmatmul.mubr.bf16.gmra.mrb[0].mxu0 %v1424
        %v1463 = vpop.f32.mrb[0].mxu0
        %v1464 = vadd.f32 0.0, %v1463
        %v1465 = vpop.f32.mrb[0].mxu0
        %v1466 = vpop.f32.mrb[0].mxu0
        %v1467 = vpop.f32.mrb[0].mxu0
        %1468 = vdwg.mxu0
        %v1469 = vmul.f32 %v1464, 0.25
        %v1470 = vadd.f32 %v1469, %v1418
        %v1471 = vsel %vm1002, %v1470, -inf
        %1472 = vmax.xlane.f32.xlu0 %v1471
        %v1473 = vpop.xlane.xlu0 %1472
        %v1474 = vsub.f32 %v1470, %v1473
        %v1475 = vmul.f32 %v1474, 1.442695
        %v1476 = vpow.pop %v1475
        %v1477 = vsel %vm1002, %v1476, 0.0
        %1478 = vadd.xlane.f32.xlu0 %v1477
        %v1479 = vpop.xlane.xlu0 %1478
        %v1480 = vrcp.pop %v1479
        %v1481 = vmul.f32 %v1476, %v1480
        %v1482 = vpack.c.bf16 %v1481, %v1481
        %v1483 = vpack.c.bf16 %v946, %v946
        %v1485 = vsel %vm1002, %v1482, 0
        %v1488 = vsel %vm1019, %v1483, 0
        %1490 = vmatprep.subr.bf16.mxu0 0
        %1491 = vmatpush1.bf16.msra.mxu0 %v1488
        %1492 = vmatprep.subr.bf16.mxu0 0
        %1493 = vmatpush1.bf16.msra.mxu0 0
        %1494 = vmatprep.subr.bf16.mxu0 0
        %1495 = vmatpush1.bf16.msra.mxu0 0
        %1496 = vmatprep.subr.bf16.mxu0 0
        %1497 = vmatpush1.bf16.msra.mxu0 0
        %1498 = vmatprep.subr.bf16.mxu0 0
        %1499 = vmatpush1.bf16.msra.mxu0 0
        %1500 = vmatprep.subr.bf16.mxu0 0
        %1501 = vmatpush1.bf16.msra.mxu0 0
        %1502 = vmatprep.subr.bf16.mxu0 0
        %1503 = vmatpush1.bf16.msra.mxu0 0
        %1504 = vmatprep.subr.bf16.mxu0 0
        %1505 = vmatpush1.bf16.msra.mxu0 0
        %1506 = vmatprep.subr.bf16.mxu0 0
        %1507 = vmatpush1.bf16.msra.mxu0 0
        %1508 = vmatprep.subr.bf16.mxu0 0
        %1509 = vmatpush1.bf16.msra.mxu0 0
        %1510 = vmatprep.subr.bf16.mxu0 0
        %1511 = vmatpush1.bf16.msra.mxu0 0
        %1512 = vmatprep.subr.bf16.mxu0 0
        %1513 = vmatpush1.bf16.msra.mxu0 0
        %1514 = vmatprep.subr.bf16.mxu0 0
        %1515 = vmatpush1.bf16.msra.mxu0 0
        %1516 = vmatprep.subr.bf16.mxu0 0
        %1517 = vmatpush1.bf16.msra.mxu0 0
        %1518 = vmatprep.subr.bf16.mxu0 0
        %1519 = vmatpush1.bf16.msra.mxu0 0
        %1520 = vmatprep.subr.bf16.mxu0 0
        %1521 = vmatpush1.bf16.msra.mxu0 0
        %1522 = vmatprep.mubr.bf16.mxu0 0
        %1523 = vmatmul.mubr.bf16.gmra.mrb[0].mxu0 %v1485
        %v1524 = vpop.f32.mrb[0].mxu0
        %v1525 = vadd.f32 0.0, %v1524
        %v1526 = vpop.f32.mrb[0].mxu0
        %v1527 = vpop.f32.mrb[0].mxu0
        %v1528 = vpop.f32.mrb[0].mxu0
        %1529 = vdwg.mxu0
        %1530 = vrot.lane.b32.xlu0 %v1419, 112
        %v1531 = vpop.permute.xlu0 %1530
        %1532 = vrot.lane.b32.xlu0 %v1419, 48
        %v1533 = vpop.permute.xlu0 %1532
        %v1535 = vsel %vm953, %v1531, 0
        %v1538 = vsel %vm953, %v1533, 0
        %1540 = vmatprep.subr.bf16.mxu0 0
        %1541 = vmatpush1.bf16.xpose.msra.mxu0 %v1538
        %1542 = vmatprep.subr.bf16.mxu0 0
        %1543 = vmatpush1.bf16.xpose.msra.mxu0 0
        %1544 = vmatprep.subr.bf16.mxu0 0
        %1545 = vmatpush1.bf16.xpose.msra.mxu0 0
        %1546 = vmatprep.subr.bf16.mxu0 0
        %1547 = vmatpush1.bf16.xpose.msra.mxu0 0
        %1548 = vmatprep.subr.bf16.mxu0 0
        %1549 = vmatpush1.bf16.xpose.msra.mxu0 0
        %1550 = vmatprep.subr.bf16.mxu0 0
        %1551 = vmatpush1.bf16.xpose.msra.mxu0 0
        %1552 = vmatprep.subr.bf16.mxu0 0
        %1553 = vmatpush1.bf16.xpose.msra.mxu0 0
        %1554 = vmatprep.subr.bf16.mxu0 0
        %1555 = vmatpush1.bf16.xpose.msra.mxu0 0
        %1556 = vmatprep.subr.bf16.mxu0 0
        %1557 = vmatpush1.bf16.xpose.msra.mxu0 0
        %1558 = vmatprep.subr.bf16.mxu0 0
        %1559 = vmatpush1.bf16.xpose.msra.mxu0 0
        %1560 = vmatprep.subr.bf16.mxu0 0
        %1561 = vmatpush1.bf16.xpose.msra.mxu0 0
        %1562 = vmatprep.subr.bf16.mxu0 0
        %1563 = vmatpush1.bf16.xpose.msra.mxu0 0
        %1564 = vmatprep.subr.bf16.mxu0 0
        %1565 = vmatpush1.bf16.xpose.msra.mxu0 0
        %1566 = vmatprep.subr.bf16.mxu0 0
        %1567 = vmatpush1.bf16.xpose.msra.mxu0 0
        %1568 = vmatprep.subr.bf16.mxu0 0
        %1569 = vmatpush1.bf16.xpose.msra.mxu0 0
        %1570 = vmatprep.subr.bf16.mxu0 0
        %1571 = vmatpush1.bf16.xpose.msra.mxu0 0
        %1572 = vmatprep.mubr.bf16.mxu0 0
        %1573 = vmatmul.mubr.bf16.gmra.mrb[0].mxu0 %v1535
        %v1574 = vpop.f32.mrb[0].mxu0
        %v1575 = vadd.f32 0.0, %v1574
        %v1576 = vpop.f32.mrb[0].mxu0
        %v1577 = vpop.f32.mrb[0].mxu0
        %v1578 = vpop.f32.mrb[0].mxu0
        %1579 = vdwg.mxu0
        %v1580 = vmul.f32 %v1575, 0.25
        %v1581 = vadd.f32 %v1580, %v1418
        %v1582 = vsel %vm1002, %v1581, -inf
        %1583 = vmax.xlane.f32.xlu0 %v1582
        %v1584 = vpop.xlane.xlu0 %1583
        %v1585 = vsub.f32 %v1581, %v1584
        %v1586 = vmul.f32 %v1585, 1.442695
        %v1587 = vpow.pop %v1586
        %v1588 = vsel %vm1002, %v1587, 0.0
        %1589 = vadd.xlane.f32.xlu0 %v1588
        %v1590 = vpop.xlane.xlu0 %1589
        %v1591 = vrcp.pop %v1590
        %v1592 = vmul.f32 %v1587, %v1591
        %v1593 = vpack.c.bf16 %v1592, %v1592
        %1595 = vrot.lane.b32.xlu0 %v1483, 112
        %v1596 = vpop.permute.xlu0 %1595
        %v1598 = vsel %vm1002, %v1593, 0
        %v1601 = vsel %vm1019, %v1596, 0
        %1603 = vmatprep.subr.bf16.mxu0 0
        %1604 = vmatpush1.bf16.msra.mxu0 %v1601
        %1605 = vmatprep.subr.bf16.mxu0 0
        %1606 = vmatpush1.bf16.msra.mxu0 0
        %1607 = vmatprep.subr.bf16.mxu0 0
        %1608 = vmatpush1.bf16.msra.mxu0 0
        %1609 = vmatprep.subr.bf16.mxu0 0
        %1610 = vmatpush1.bf16.msra.mxu0 0
        %1611 = vmatprep.subr.bf16.mxu0 0
        %1612 = vmatpush1.bf16.msra.mxu0 0
        %1613 = vmatprep.subr.bf16.mxu0 0
        %1614 = vmatpush1.bf16.msra.mxu0 0
        %1615 = vmatprep.subr.bf16.mxu0 0
        %1616 = vmatpush1.bf16.msra.mxu0 0
        %1617 = vmatprep.subr.bf16.mxu0 0
        %1618 = vmatpush1.bf16.msra.mxu0 0
        %1619 = vmatprep.subr.bf16.mxu0 0
        %1620 = vmatpush1.bf16.msra.mxu0 0
        %1621 = vmatprep.subr.bf16.mxu0 0
        %1622 = vmatpush1.bf16.msra.mxu0 0
        %1623 = vmatprep.subr.bf16.mxu0 0
        %1624 = vmatpush1.bf16.msra.mxu0 0
        %1625 = vmatprep.subr.bf16.mxu0 0
        %1626 = vmatpush1.bf16.msra.mxu0 0
        %1627 = vmatprep.subr.bf16.mxu0 0
        %1628 = vmatpush1.bf16.msra.mxu0 0
        %1629 = vmatprep.subr.bf16.mxu0 0
        %1630 = vmatpush1.bf16.msra.mxu0 0
        %1631 = vmatprep.subr.bf16.mxu0 0
        %1632 = vmatpush1.bf16.msra.mxu0 0
        %1633 = vmatprep.subr.bf16.mxu0 0
        %1634 = vmatpush1.bf16.msra.mxu0 0
        %1635 = vmatprep.mubr.bf16.mxu0 0
        %1636 = vmatmul.mubr.bf16.gmra.mrb[0].mxu0 %v1598
        %v1637 = vpop.f32.mrb[0].mxu0
        %v1638 = vadd.f32 0.0, %v1637
        %v1639 = vpop.f32.mrb[0].mxu0
        %v1640 = vpop.f32.mrb[0].mxu0
        %v1641 = vpop.f32.mrb[0].mxu0
        %1642 = vdwg.mxu0
        %1643 = vrot.lane.b32.xlu0 %v1419, 96
        %v1644 = vpop.permute.xlu0 %1643
        %1645 = vrot.lane.b32.xlu0 %v1419, 32
        %v1646 = vpop.permute.xlu0 %1645
        %v1648 = vsel %vm953, %v1644, 0
        %v1651 = vsel %vm953, %v1646, 0
        %1653 = vmatprep.subr.bf16.mxu0 0
        %1654 = vmatpush1.bf16.xpose.msra.mxu0 %v1651
        %1655 = vmatprep.subr.bf16.mxu0 0
        %1656 = vmatpush1.bf16.xpose.msra.mxu0 0
        %1657 = vmatprep.subr.bf16.mxu0 0
        %1658 = vmatpush1.bf16.xpose.msra.mxu0 0
        %1659 = vmatprep.subr.bf16.mxu0 0
        %1660 = vmatpush1.bf16.xpose.msra.mxu0 0
        %1661 = vmatprep.subr.bf16.mxu0 0
        %1662 = vmatpush1.bf16.xpose.msra.mxu0 0
        %1663 = vmatprep.subr.bf16.mxu0 0
        %1664 = vmatpush1.bf16.xpose.msra.mxu0 0
        %1665 = vmatprep.subr.bf16.mxu0 0
        %1666 = vmatpush1.bf16.xpose.msra.mxu0 0
        %1667 = vmatprep.subr.bf16.mxu0 0
        %1668 = vmatpush1.bf16.xpose.msra.mxu0 0
        %1669 = vmatprep.subr.bf16.mxu0 0
        %1670 = vmatpush1.bf16.xpose.msra.mxu0 0
        %1671 = vmatprep.subr.bf16.mxu0 0
        %1672 = vmatpush1.bf16.xpose.msra.mxu0 0
        %1673 = vmatprep.subr.bf16.mxu0 0
        %1674 = vmatpush1.bf16.xpose.msra.mxu0 0
        %1675 = vmatprep.subr.bf16.mxu0 0
        %1676 = vmatpush1.bf16.xpose.msra.mxu0 0
        %1677 = vmatprep.subr.bf16.mxu0 0
        %1678 = vmatpush1.bf16.xpose.msra.mxu0 0
        %1679 = vmatprep.subr.bf16.mxu0 0
        %1680 = vmatpush1.bf16.xpose.msra.mxu0 0
        %1681 = vmatprep.subr.bf16.mxu0 0
        %1682 = vmatpush1.bf16.xpose.msra.mxu0 0
        %1683 = vmatprep.subr.bf16.mxu0 0
        %1684 = vmatpush1.bf16.xpose.msra.mxu0 0
        %1685 = vmatprep.mubr.bf16.mxu0 0
        %1686 = vmatmul.mubr.bf16.gmra.mrb[0].mxu0 %v1648
        %v1687 = vpop.f32.mrb[0].mxu0
        %v1688 = vadd.f32 0.0, %v1687
        %v1689 = vpop.f32.mrb[0].mxu0
        %v1690 = vpop.f32.mrb[0].mxu0
        %v1691 = vpop.f32.mrb[0].mxu0
        %1692 = vdwg.mxu0
        %v1693 = vmul.f32 %v1688, 0.25
        %v1694 = vadd.f32 %v1693, %v1418
        %v1695 = vsel %vm1002, %v1694, -inf
        %1696 = vmax.xlane.f32.xlu0 %v1695
        %v1697 = vpop.xlane.xlu0 %1696
        %v1698 = vsub.f32 %v1694, %v1697
        %v1699 = vmul.f32 %v1698, 1.442695
        %v1700 = vpow.pop %v1699
        %v1701 = vsel %vm1002, %v1700, 0.0
        %1702 = vadd.xlane.f32.xlu0 %v1701
        %v1703 = vpop.xlane.xlu0 %1702
        %v1704 = vrcp.pop %v1703
        %v1705 = vmul.f32 %v1700, %v1704
        %v1706 = vpack.c.bf16 %v1705, %v1705
        %1707 = vrot.lane.b32.xlu0 %v1483, 96
        %v1708 = vpop.permute.xlu0 %1707
        %v1710 = vsel %vm1002, %v1706, 0
        %v1713 = vsel %vm1019, %v1708, 0
        %1715 = vmatprep.subr.bf16.mxu0 0
        %1716 = vmatpush1.bf16.msra.mxu0 %v1713
        %1717 = vmatprep.subr.bf16.mxu0 0
        %1718 = vmatpush1.bf16.msra.mxu0 0
        %1719 = vmatprep.subr.bf16.mxu0 0
        %1720 = vmatpush1.bf16.msra.mxu0 0
        %1721 = vmatprep.subr.bf16.mxu0 0
        %1722 = vmatpush1.bf16.msra.mxu0 0
        %1723 = vmatprep.subr.bf16.mxu0 0
        %1724 = vmatpush1.bf16.msra.mxu0 0
        %1725 = vmatprep.subr.bf16.mxu0 0
        %1726 = vmatpush1.bf16.msra.mxu0 0
        %1727 = vmatprep.subr.bf16.mxu0 0
        %1728 = vmatpush1.bf16.msra.mxu0 0
        %1729 = vmatprep.subr.bf16.mxu0 0
        %1730 = vmatpush1.bf16.msra.mxu0 0
        %1731 = vmatprep.subr.bf16.mxu0 0
        %1732 = vmatpush1.bf16.msra.mxu0 0
        %1733 = vmatprep.subr.bf16.mxu0 0
        %1734 = vmatpush1.bf16.msra.mxu0 0
        %1735 = vmatprep.subr.bf16.mxu0 0
        %1736 = vmatpush1.bf16.msra.mxu0 0
        %1737 = vmatprep.subr.bf16.mxu0 0
        %1738 = vmatpush1.bf16.msra.mxu0 0
        %1739 = vmatprep.subr.bf16.mxu0 0
        %1740 = vmatpush1.bf16.msra.mxu0 0
        %1741 = vmatprep.subr.bf16.mxu0 0
        %1742 = vmatpush1.bf16.msra.mxu0 0
        %1743 = vmatprep.subr.bf16.mxu0 0
        %1744 = vmatpush1.bf16.msra.mxu0 0
        %1745 = vmatprep.subr.bf16.mxu0 0
        %1746 = vmatpush1.bf16.msra.mxu0 0
        %1747 = vmatprep.mubr.bf16.mxu0 0
        %1748 = vmatmul.mubr.bf16.gmra.mrb[0].mxu0 %v1710
        %v1749 = vpop.f32.mrb[0].mxu0
        %v1750 = vadd.f32 0.0, %v1749
        %v1751 = vpop.f32.mrb[0].mxu0
        %v1752 = vpop.f32.mrb[0].mxu0
        %v1753 = vpop.f32.mrb[0].mxu0
        %1754 = vdwg.mxu0
        %1755 = vrot.lane.b32.xlu0 %v1419, 80
        %v1756 = vpop.permute.xlu0 %1755
        %1757 = vrot.lane.b32.xlu0 %v1419, 16
        %v1758 = vpop.permute.xlu0 %1757
        %v1760 = vsel %vm953, %v1756, 0
        %v1763 = vsel %vm953, %v1758, 0
        %1765 = vmatprep.subr.bf16.mxu0 0
        %1766 = vmatpush1.bf16.xpose.msra.mxu0 %v1763
        %1767 = vmatprep.subr.bf16.mxu0 0
        %1768 = vmatpush1.bf16.xpose.msra.mxu0 0
        %1769 = vmatprep.subr.bf16.mxu0 0
        %1770 = vmatpush1.bf16.xpose.msra.mxu0 0
        %1771 = vmatprep.subr.bf16.mxu0 0
        %1772 = vmatpush1.bf16.xpose.msra.mxu0 0
        %1773 = vmatprep.subr.bf16.mxu0 0
        %1774 = vmatpush1.bf16.xpose.msra.mxu0 0
        %1775 = vmatprep.subr.bf16.mxu0 0
        %1776 = vmatpush1.bf16.xpose.msra.mxu0 0
        %1777 = vmatprep.subr.bf16.mxu0 0
        %1778 = vmatpush1.bf16.xpose.msra.mxu0 0
        %1779 = vmatprep.subr.bf16.mxu0 0
        %1780 = vmatpush1.bf16.xpose.msra.mxu0 0
        %1781 = vmatprep.subr.bf16.mxu0 0
        %1782 = vmatpush1.bf16.xpose.msra.mxu0 0
        %1783 = vmatprep.subr.bf16.mxu0 0
        %1784 = vmatpush1.bf16.xpose.msra.mxu0 0
        %1785 = vmatprep.subr.bf16.mxu0 0
        %1786 = vmatpush1.bf16.xpose.msra.mxu0 0
        %1787 = vmatprep.subr.bf16.mxu0 0
        %1788 = vmatpush1.bf16.xpose.msra.mxu0 0
        %1789 = vmatprep.subr.bf16.mxu0 0
        %1790 = vmatpush1.bf16.xpose.msra.mxu0 0
        %1791 = vmatprep.subr.bf16.mxu0 0
        %1792 = vmatpush1.bf16.xpose.msra.mxu0 0
        %1793 = vmatprep.subr.bf16.mxu0 0
        %1794 = vmatpush1.bf16.xpose.msra.mxu0 0
        %1795 = vmatprep.subr.bf16.mxu0 0
        %1796 = vmatpush1.bf16.xpose.msra.mxu0 0
        %1797 = vmatprep.mubr.bf16.mxu0 0
        %1798 = vmatmul.mubr.bf16.gmra.mrb[0].mxu0 %v1760
        %v1799 = vpop.f32.mrb[0].mxu0
        %v1800 = vadd.f32 0.0, %v1799
        %v1801 = vpop.f32.mrb[0].mxu0
        %v1802 = vpop.f32.mrb[0].mxu0
        %v1803 = vpop.f32.mrb[0].mxu0
        %1804 = vdwg.mxu0
        %v1805 = vmul.f32 %v1800, 0.25
        %v1806 = vadd.f32 %v1805, %v1418
        %v1807 = vsel %vm1002, %v1806, -inf
        %1808 = vmax.xlane.f32.xlu0 %v1807
        %v1809 = vpop.xlane.xlu0 %1808
        %v1810 = vsub.f32 %v1806, %v1809
        %v1811 = vmul.f32 %v1810, 1.442695
        %v1812 = vpow.pop %v1811
        %v1813 = vsel %vm1002, %v1812, 0.0
        %1814 = vadd.xlane.f32.xlu0 %v1813
        %v1815 = vpop.xlane.xlu0 %1814
        %v1816 = vrcp.pop %v1815
        %v1817 = vmul.f32 %v1812, %v1816
        %v1818 = vpack.c.bf16 %v1817, %v1817
        %1819 = vrot.lane.b32.xlu0 %v1483, 80
        %v1820 = vpop.permute.xlu0 %1819
        %v1822 = vsel %vm1002, %v1818, 0
        %v1825 = vsel %vm1019, %v1820, 0
        %1827 = vmatprep.subr.bf16.mxu0 0
        %1828 = vmatpush1.bf16.msra.mxu0 %v1825
        %1829 = vmatprep.subr.bf16.mxu0 0
        %1830 = vmatpush1.bf16.msra.mxu0 0
        %1831 = vmatprep.subr.bf16.mxu0 0
        %1832 = vmatpush1.bf16.msra.mxu0 0
        %1833 = vmatprep.subr.bf16.mxu0 0
        %1834 = vmatpush1.bf16.msra.mxu0 0
        %1835 = vmatprep.subr.bf16.mxu0 0
        %1836 = vmatpush1.bf16.msra.mxu0 0
        %1837 = vmatprep.subr.bf16.mxu0 0
        %1838 = vmatpush1.bf16.msra.mxu0 0
        %1839 = vmatprep.subr.bf16.mxu0 0
        %1840 = vmatpush1.bf16.msra.mxu0 0
        %1841 = vmatprep.subr.bf16.mxu0 0
        %1842 = vmatpush1.bf16.msra.mxu0 0
        %1843 = vmatprep.subr.bf16.mxu0 0
        %1844 = vmatpush1.bf16.msra.mxu0 0
        %1845 = vmatprep.subr.bf16.mxu0 0
        %1846 = vmatpush1.bf16.msra.mxu0 0
        %1847 = vmatprep.subr.bf16.mxu0 0
        %1848 = vmatpush1.bf16.msra.mxu0 0
        %1849 = vmatprep.subr.bf16.mxu0 0
        %1850 = vmatpush1.bf16.msra.mxu0 0
        %1851 = vmatprep.subr.bf16.mxu0 0
        %1852 = vmatpush1.bf16.msra.mxu0 0
        %1853 = vmatprep.subr.bf16.mxu0 0
        %1854 = vmatpush1.bf16.msra.mxu0 0
        %1855 = vmatprep.subr.bf16.mxu0 0
        %1856 = vmatpush1.bf16.msra.mxu0 0
        %1857 = vmatprep.subr.bf16.mxu0 0
        %1858 = vmatpush1.bf16.msra.mxu0 0
        %1859 = vmatprep.mubr.bf16.mxu0 0
        %1860 = vmatmul.mubr.bf16.gmra.mrb[0].mxu0 %v1822
        %v1861 = vpop.f32.mrb[0].mxu0
        %v1862 = vadd.f32 0.0, %v1861
        %v1863 = vpop.f32.mrb[0].mxu0
        %v1864 = vpop.f32.mrb[0].mxu0
        %v1865 = vpop.f32.mrb[0].mxu0
        %1866 = vdwg.mxu0
        %1868 = vrot.lane.b32.xlu0 %v1638, 16
        %v1869 = vpop.permute.xlu0 %1868
        %1872 = vrot.lane.b32.xlu0 %v1750, 32
        %v1873 = vpop.permute.xlu0 %1872
        %1876 = vrot.lane.b32.xlu0 %v1862, 48
        %v1877 = vpop.permute.xlu0 %1876
        %v1879 = vsel %vm953, %v1525, %v1869
        %v1880 = vsel %vm1413, %v1879, %v1873
        %v1881 = vsel %vm1415, %v1880, %v1877
        %v1882 = vld [vmem:[%s713 + $0x1] ss:$0 sm:$0xff]
        %v1883 = vld [vmem:[%s659] sm:$0xf]
        %v1884 = vld [vmem:[%s659 + $0x4] sm:$0xf]
        %v1885 = vld [vmem:[%s659 + $0x8] sm:$0xf]
        %v1886 = vld [vmem:[%s659 + $0xc] sm:$0xf]
        %v1887 = vld [vmem:[%s659 + $0x10] sm:$0xf]
        %v1888 = vld [vmem:[%s659 + $0x14] sm:$0xf]
        %v1889 = vld [vmem:[%s659 + $0x18] sm:$0xf]
        %v1890 = vld [vmem:[%s659 + $0x1c] sm:$0xf]
        %v1891 = vpack.c.bf16 %v1881, %v1416
        %v1900 = vunpack.c.l.b16 %v1883
        %v1901 = vunpack.c.l.b16 %v1884
        %v1902 = vunpack.c.l.b16 %v1885
        %v1903 = vunpack.c.l.b16 %v1886
        %v1904 = vunpack.c.l.b16 %v1887
        %v1905 = vunpack.c.l.b16 %v1888
        %v1906 = vunpack.c.l.b16 %v1889
        %v1907 = vunpack.c.l.b16 %v1890
        %v1908 = vpack.c.b16 %v1901, %v1900
        %v1909 = vpack.c.b16 %v1903, %v1902
        %v1910 = vpack.c.b16 %v1905, %v1904
        %v1911 = vpack.c.b16 %v1907, %v1906
        %v1917 = vsel %vm901, %v1891, 0
        %1919 = vmatprep.subr.bf16.mxu0 0
        %1920 = vmatpush1.bf16.msra.mxu0 %v1908
        %1921 = vmatprep.subr.bf16.mxu0 0
        %1922 = vmatpush1.bf16.msra.mxu0 %v1909
        %1923 = vmatprep.subr.bf16.mxu0 0
        %1924 = vmatpush1.bf16.msra.mxu0 %v1910
        %1925 = vmatprep.subr.bf16.mxu0 0
        %1926 = vmatpush1.bf16.msra.mxu0 %v1911
        %1927 = vmatprep.subr.bf16.mxu0 0
        %1928 = vmatpush1.bf16.msra.mxu0 0
        %1929 = vmatprep.subr.bf16.mxu0 0
        %1930 = vmatpush1.bf16.msra.mxu0 0
        %1931 = vmatprep.subr.bf16.mxu0 0
        %1932 = vmatpush1.bf16.msra.mxu0 0
        %1933 = vmatprep.subr.bf16.mxu0 0
        %1934 = vmatpush1.bf16.msra.mxu0 0
        %1935 = vmatprep.subr.bf16.mxu0 0
        %1936 = vmatpush1.bf16.msra.mxu0 0
        %1937 = vmatprep.subr.bf16.mxu0 0
        %1938 = vmatpush1.bf16.msra.mxu0 0
        %1939 = vmatprep.subr.bf16.mxu0 0
        %1940 = vmatpush1.bf16.msra.mxu0 0
        %1941 = vmatprep.subr.bf16.mxu0 0
        %1942 = vmatpush1.bf16.msra.mxu0 0
        %1943 = vmatprep.subr.bf16.mxu0 0
        %1944 = vmatpush1.bf16.msra.mxu0 0
        %1945 = vmatprep.subr.bf16.mxu0 0
        %1946 = vmatpush1.bf16.msra.mxu0 0
        %1947 = vmatprep.subr.bf16.mxu0 0
        %1948 = vmatpush1.bf16.msra.mxu0 0
        %1949 = vmatprep.subr.bf16.mxu0 0
        %1950 = vmatpush1.bf16.msra.mxu0 0
        %1951 = vmatprep.mubr.bf16.mxu0 0
        %1952 = vmatmul.mubr.bf16.gmra.mrb[0].mxu0 %v1917
        %v1953 = vpop.f32.mrb[0].mxu0
        %v1954 = vadd.f32 %v1882, %v1953
        %v1955 = vpop.f32.mrb[0].mxu0
        %v1956 = vpop.f32.mrb[0].mxu0
        %v1957 = vadd.f32 %v1882, %v1956
        %v1958 = vpop.f32.mrb[0].mxu0
        %1959 = vdwg.mxu0
        %v1960 = vadd.f32 %v838, %v1954
        %v1961 = vadd.f32 %v839, %v1957
        %v1962 = vld [vmem:[%s713 + $0x7] ss:$0 sm:$0xff]
        %v1963 = vld [vmem:[%s713 + $0x10] ss:$0 sm:$0xff]
        %v1964 = vsel %vm901, %v1960, 0.0
        %1965 = vadd.xlane.f32.xlu0 %v1964
        %v1966 = vpop.xlane.xlu0 %1965
        %v1967 = vsel %vm901, %v1961, 0.0
        %1968 = vadd.xlane.f32.xlu0 %v1967
        %v1969 = vpop.xlane.xlu0 %1968
        %v1970 = vrcp.pop 64.0
        %v1971 = vmul.f32 %v1966, %v1970
        %v1972 = vmul.f32 %v1969, %v1970
        %v1973 = vsub.f32 %v1960, %v1971
        %v1974 = vsub.f32 %v1961, %v1972
        %v1975 = vmul.f32 %v1973, %v1973
        %v1976 = vmul.f32 %v1974, %v1974
        %v1977 = vsel %vm901, %v1975, 0.0
        %1978 = vadd.xlane.f32.xlu0 %v1977
        %v1979 = vpop.xlane.xlu0 %1978
        %v1980 = vsel %vm901, %v1976, 0.0
        %1981 = vadd.xlane.f32.xlu0 %v1980
        %v1982 = vpop.xlane.xlu0 %1981
        %v1983 = vmul.f32 %v1979, %v1970
        %v1984 = vmul.f32 %v1982, %v1970
        %v1985 = vadd.f32 %v1983, 1e-05
        %v1986 = vadd.f32 %v1984, 1e-05
        %v1987 = vrsqrt.pop %v1985
        %v1988 = vrsqrt.pop %v1986
        %v1989 = vmul.f32 %v1973, %v1987
        %v1990 = vmul.f32 %v1974, %v1988
        %v1991 = vmul.f32 %v1989, %v1962
        %v1992 = vmul.f32 %v1990, %v1962
        %v1993 = vadd.f32 %v1991, %v1963
        %v1994 = vadd.f32 %v1992, %v1963
        %v1995 = vld [vmem:[%s713 + $0x2] ss:$0 sm:$0xff]
        %v1996 = vld [vmem:[%s668] sm:$0xf]
        %v1997 = vld [vmem:[%s668 + $0x4] sm:$0xf]
        %v1998 = vld [vmem:[%s668 + $0x8] sm:$0xf]
        %v1999 = vld [vmem:[%s668 + $0xc] sm:$0xf]
        %v2000 = vld [vmem:[%s668 + $0x10] sm:$0xf]
        %v2001 = vld [vmem:[%s668 + $0x14] sm:$0xf]
        %v2002 = vld [vmem:[%s668 + $0x18] sm:$0xf]
        %v2003 = vld [vmem:[%s668 + $0x1c] sm:$0xf]
        %v2004 = vpack.c.bf16 %v1994, %v1993
        %v2013 = vunpack.c.l.b16 %v1996
        %v2014 = vunpack.c.l.b16 %v1997
        %v2015 = vunpack.c.l.b16 %v1998
        %v2016 = vunpack.c.l.b16 %v1999
        %v2017 = vunpack.c.l.b16 %v2000
        %v2018 = vunpack.c.l.b16 %v2001
        %v2019 = vunpack.c.l.b16 %v2002
        %v2020 = vunpack.c.l.b16 %v2003
        %v2021 = vpack.c.b16 %v2014, %v2013
        %v2022 = vpack.c.b16 %v2016, %v2015
        %v2023 = vpack.c.b16 %v2018, %v2017
        %v2024 = vpack.c.b16 %v2020, %v2019
        %v2030 = vsel %vm901, %v2004, 0
        %2032 = vmatprep.subr.bf16.mxu0 0
        %2033 = vmatpush1.bf16.msra.mxu0 %v2021
        %2034 = vmatprep.subr.bf16.mxu0 0
        %2035 = vmatpush1.bf16.msra.mxu0 %v2022
        %2036 = vmatprep.subr.bf16.mxu0 0
        %2037 = vmatpush1.bf16.msra.mxu0 %v2023
        %2038 = vmatprep.subr.bf16.mxu0 0
        %2039 = vmatpush1.bf16.msra.mxu0 %v2024
        %2040 = vmatprep.subr.bf16.mxu0 0
        %2041 = vmatpush1.bf16.msra.mxu0 0
        %2042 = vmatprep.subr.bf16.mxu0 0
        %2043 = vmatpush1.bf16.msra.mxu0 0
        %2044 = vmatprep.subr.bf16.mxu0 0
        %2045 = vmatpush1.bf16.msra.mxu0 0
        %2046 = vmatprep.subr.bf16.mxu0 0
        %2047 = vmatpush1.bf16.msra.mxu0 0
        %2048 = vmatprep.subr.bf16.mxu0 0
        %2049 = vmatpush1.bf16.msra.mxu0 0
        %2050 = vmatprep.subr.bf16.mxu0 0
        %2051 = vmatpush1.bf16.msra.mxu0 0
        %2052 = vmatprep.subr.bf16.mxu0 0
        %2053 = vmatpush1.bf16.msra.mxu0 0
        %2054 = vmatprep.subr.bf16.mxu0 0
        %2055 = vmatpush1.bf16.msra.mxu0 0
        %2056 = vmatprep.subr.bf16.mxu0 0
        %2057 = vmatpush1.bf16.msra.mxu0 0
        %2058 = vmatprep.subr.bf16.mxu0 0
        %2059 = vmatpush1.bf16.msra.mxu0 0
        %2060 = vmatprep.subr.bf16.mxu0 0
        %2061 = vmatpush1.bf16.msra.mxu0 0
        %2062 = vmatprep.subr.bf16.mxu0 0
        %2063 = vmatpush1.bf16.msra.mxu0 0
        %2064 = vmatprep.mubr.bf16.mxu0 0
        %2065 = vmatmul.mubr.bf16.gmra.mrb[0].mxu0 %v2030
        %v2066 = vpop.f32.mrb[0].mxu0
        %v2067 = vadd.f32 %v1995, %v2066
        %v2068 = vpop.f32.mrb[0].mxu0
        %v2069 = vpop.f32.mrb[0].mxu0
        %v2070 = vadd.f32 %v1995, %v2069
        %v2071 = vpop.f32.mrb[0].mxu0
        %2072 = vdwg.mxu0
        %v2073 = vld [vmem:[#allocation7] sm:$0xf]
        %v2074 = vld [vmem:[#allocation7 + $0x4] sm:$0xf]
        %v2075 = vld [vmem:[%s713 + $0x3] ss:$0 sm:$0xff]
        %v2076 = vld [vmem:[%s677] sm:$0xf]
        %v2077 = vld [vmem:[%s677 + $0x4] sm:$0xf]
        %v2078 = vld [vmem:[%s677 + $0x8] sm:$0xf]
        %v2079 = vld [vmem:[%s677 + $0xc] sm:$0xf]
        %v2080 = vld [vmem:[%s677 + $0x10] sm:$0xf]
        %v2081 = vld [vmem:[%s677 + $0x14] sm:$0xf]
        %v2082 = vld [vmem:[%s677 + $0x18] sm:$0xf]
        %v2083 = vld [vmem:[%s677 + $0x1c] sm:$0xf]
        %v2086 = vunpack.c.l.b16 %v2073
        %v2087 = vunpack.c.l.b16 %v2074
        %v2088 = vpack.c.b16 %v2087, %v2086
        %v2097 = vunpack.c.l.b16 %v2076
        %v2098 = vunpack.c.l.b16 %v2077
        %v2099 = vunpack.c.l.b16 %v2078
        %v2100 = vunpack.c.l.b16 %v2079
        %v2101 = vunpack.c.l.b16 %v2080
        %v2102 = vunpack.c.l.b16 %v2081
        %v2103 = vunpack.c.l.b16 %v2082
        %v2104 = vunpack.c.l.b16 %v2083
        %v2105 = vpack.c.b16 %v2098, %v2097
        %v2106 = vpack.c.b16 %v2100, %v2099
        %v2107 = vpack.c.b16 %v2102, %v2101
        %v2108 = vpack.c.b16 %v2104, %v2103
        %v2114 = vsel %vm901, %v2088, 0
        %2116 = vmatprep.subr.bf16.mxu0 0
        %2117 = vmatpush1.bf16.msra.mxu0 %v2105
        %2118 = vmatprep.subr.bf16.mxu0 0
        %2119 = vmatpush1.bf16.msra.mxu0 %v2106
        %2120 = vmatprep.subr.bf16.mxu0 0
        %2121 = vmatpush1.bf16.msra.mxu0 %v2107
        %2122 = vmatprep.subr.bf16.mxu0 0
        %2123 = vmatpush1.bf16.msra.mxu0 %v2108
        %2124 = vmatprep.subr.bf16.mxu0 0
        %2125 = vmatpush1.bf16.msra.mxu0 0
        %2126 = vmatprep.subr.bf16.mxu0 0
        %2127 = vmatpush1.bf16.msra.mxu0 0
        %2128 = vmatprep.subr.bf16.mxu0 0
        %2129 = vmatpush1.bf16.msra.mxu0 0
        %2130 = vmatprep.subr.bf16.mxu0 0
        %2131 = vmatpush1.bf16.msra.mxu0 0
        %2132 = vmatprep.subr.bf16.mxu0 0
        %2133 = vmatpush1.bf16.msra.mxu0 0
        %2134 = vmatprep.subr.bf16.mxu0 0
        %2135 = vmatpush1.bf16.msra.mxu0 0
        %2136 = vmatprep.subr.bf16.mxu0 0
        %2137 = vmatpush1.bf16.msra.mxu0 0
        %2138 = vmatprep.subr.bf16.mxu0 0
        %2139 = vmatpush1.bf16.msra.mxu0 0
        %2140 = vmatprep.subr.bf16.mxu0 0
        %2141 = vmatpush1.bf16.msra.mxu0 0
        %2142 = vmatprep.subr.bf16.mxu0 0
        %2143 = vmatpush1.bf16.msra.mxu0 0
        %2144 = vmatprep.subr.bf16.mxu0 0
        %2145 = vmatpush1.bf16.msra.mxu0 0
        %2146 = vmatprep.subr.bf16.mxu0 0
        %2147 = vmatpush1.bf16.msra.mxu0 0
        %2148 = vmatprep.mubr.bf16.mxu0 0
        %2149 = vmatmul.mubr.bf16.gmra.mrb[0].mxu0 %v2114
        %v2150 = vpop.f32.mrb[0].mxu0
        %v2151 = vadd.f32 %v2075, %v2150
        %v2152 = vpop.f32.mrb[0].mxu0
        %v2153 = vpop.f32.mrb[0].mxu0
        %v2154 = vadd.f32 %v2075, %v2153
        %v2155 = vpop.f32.mrb[0].mxu0
        %2156 = vdwg.mxu0
        %v2157 = vld [vmem:[#allocation3] sm:$0x1]
        %v2158 = vpack.c.bf16 %v2067, %v2067
        %v2159 = vpack.c.bf16 %v2151, %v2151
        %v2161 = vsel %vm953, %v2158, 0
        %v2164 = vsel %vm953, %v2159, 0
        %2166 = vmatprep.subr.bf16.mxu0 0
        %2167 = vmatpush1.bf16.xpose.msra.mxu0 %v2164
        %2168 = vmatprep.subr.bf16.mxu0 0
        %2169 = vmatpush1.bf16.xpose.msra.mxu0 0
        %2170 = vmatprep.subr.bf16.mxu0 0
        %2171 = vmatpush1.bf16.xpose.msra.mxu0 0
        %2172 = vmatprep.subr.bf16.mxu0 0
        %2173 = vmatpush1.bf16.xpose.msra.mxu0 0
        %2174 = vmatprep.subr.bf16.mxu0 0
        %2175 = vmatpush1.bf16.xpose.msra.mxu0 0
        %2176 = vmatprep.subr.bf16.mxu0 0
        %2177 = vmatpush1.bf16.xpose.msra.mxu0 0
        %2178 = vmatprep.subr.bf16.mxu0 0
        %2179 = vmatpush1.bf16.xpose.msra.mxu0 0
        %2180 = vmatprep.subr.bf16.mxu0 0
        %2181 = vmatpush1.bf16.xpose.msra.mxu0 0
        %2182 = vmatprep.subr.bf16.mxu0 0
        %2183 = vmatpush1.bf16.xpose.msra.mxu0 0
        %2184 = vmatprep.subr.bf16.mxu0 0
        %2185 = vmatpush1.bf16.xpose.msra.mxu0 0
        %2186 = vmatprep.subr.bf16.mxu0 0
        %2187 = vmatpush1.bf16.xpose.msra.mxu0 0
        %2188 = vmatprep.subr.bf16.mxu0 0
        %2189 = vmatpush1.bf16.xpose.msra.mxu0 0
        %2190 = vmatprep.subr.bf16.mxu0 0
        %2191 = vmatpush1.bf16.xpose.msra.mxu0 0
        %2192 = vmatprep.subr.bf16.mxu0 0
        %2193 = vmatpush1.bf16.xpose.msra.mxu0 0
        %2194 = vmatprep.subr.bf16.mxu0 0
        %2195 = vmatpush1.bf16.xpose.msra.mxu0 0
        %2196 = vmatprep.subr.bf16.mxu0 0
        %2197 = vmatpush1.bf16.xpose.msra.mxu0 0
        %2198 = vmatprep.mubr.bf16.mxu0 0
        %2199 = vmatmul.mubr.bf16.gmra.mrb[0].mxu0 %v2161
        %v2200 = vpop.f32.mrb[0].mxu0
        %v2201 = vadd.f32 0.0, %v2200
        %v2202 = vpop.f32.mrb[0].mxu0
        %v2203 = vpop.f32.mrb[0].mxu0
        %v2204 = vpop.f32.mrb[0].mxu0
        %2205 = vdwg.mxu0
        %v2206 = vmul.f32 %v2201, 0.25
        %v2208 = vlaneseq
        %v2209 = vshrl.u32 %v2208, 7
        %v2210 = vsub.s32 0, %v2209
        %v2211 = vrot.slane %v2157, %v2210
        %v2213 = vadd.f32 %v2206, %v2211
        %v2214 = vsel %vm1002, %v2213, -inf
        %2215 = vmax.xlane.f32.xlu0 %v2214
        %v2216 = vpop.xlane.xlu0 %2215
        %v2217 = vsub.f32 %v2213, %v2216
        %v2218 = vmul.f32 %v2217, 1.442695
        %v2219 = vpow.pop %v2218
        %v2220 = vsel %vm1002, %v2219, 0.0
        %2221 = vadd.xlane.f32.xlu0 %v2220
        %v2222 = vpop.xlane.xlu0 %2221
        %v2223 = vrcp.pop %v2222
        %v2224 = vmul.f32 %v2219, %v2223
        %v2225 = vpack.c.bf16 %v2224, %v2224
        %2227 = vrot.lane.b32.xlu0 %v2159, 64
        %v2228 = vpop.permute.xlu0 %2227
        %v2230 = vsel %vm1002, %v2225, 0
        %v2233 = vsel %vm1019, %v2228, 0
        %2235 = vmatprep.subr.bf16.mxu0 0
        %2236 = vmatpush1.bf16.msra.mxu0 %v2233
        %2237 = vmatprep.subr.bf16.mxu0 0
        %2238 = vmatpush1.bf16.msra.mxu0 0
        %2239 = vmatprep.subr.bf16.mxu0 0
        %2240 = vmatpush1.bf16.msra.mxu0 0
        %2241 = vmatprep.subr.bf16.mxu0 0
        %2242 = vmatpush1.bf16.msra.mxu0 0
        %2243 = vmatprep.subr.bf16.mxu0 0
        %2244 = vmatpush1.bf16.msra.mxu0 0
        %2245 = vmatprep.subr.bf16.mxu0 0
        %2246 = vmatpush1.bf16.msra.mxu0 0
        %2247 = vmatprep.subr.bf16.mxu0 0
        %2248 = vmatpush1.bf16.msra.mxu0 0
        %2249 = vmatprep.subr.bf16.mxu0 0
        %2250 = vmatpush1.bf16.msra.mxu0 0
        %2251 = vmatprep.subr.bf16.mxu0 0
        %2252 = vmatpush1.bf16.msra.mxu0 0
        %2253 = vmatprep.subr.bf16.mxu0 0
        %2254 = vmatpush1.bf16.msra.mxu0 0
        %2255 = vmatprep.subr.bf16.mxu0 0
        %2256 = vmatpush1.bf16.msra.mxu0 0
        %2257 = vmatprep.subr.bf16.mxu0 0
        %2258 = vmatpush1.bf16.msra.mxu0 0
        %2259 = vmatprep.subr.bf16.mxu0 0
        %2260 = vmatpush1.bf16.msra.mxu0 0
        %2261 = vmatprep.subr.bf16.mxu0 0
        %2262 = vmatpush1.bf16.msra.mxu0 0
        %2263 = vmatprep.subr.bf16.mxu0 0
        %2264 = vmatpush1.bf16.msra.mxu0 0
        %2265 = vmatprep.subr.bf16.mxu0 0
        %2266 = vmatpush1.bf16.msra.mxu0 0
        %2267 = vmatprep.mubr.bf16.mxu0 0
        %2268 = vmatmul.mubr.bf16.gmra.mrb[0].mxu0 %v2230
        %v2269 = vpop.f32.mrb[0].mxu0
        %v2270 = vadd.f32 0.0, %v2269
        %v2271 = vpop.f32.mrb[0].mxu0
        %v2272 = vpop.f32.mrb[0].mxu0
        %v2273 = vpop.f32.mrb[0].mxu0
        %2274 = vdwg.mxu0
        %2276 = vrot.lane.b32.xlu0 %v2158, 112
        %v2277 = vpop.permute.xlu0 %2276
        %2278 = vrot.lane.b32.xlu0 %v2159, 112
        %v2279 = vpop.permute.xlu0 %2278
        %v2281 = vsel %vm953, %v2277, 0
        %v2284 = vsel %vm953, %v2279, 0
        %2286 = vmatprep.subr.bf16.mxu0 0
        %2287 = vmatpush1.bf16.xpose.msra.mxu0 %v2284
        %2288 = vmatprep.subr.bf16.mxu0 0
        %2289 = vmatpush1.bf16.xpose.msra.mxu0 0
        %2290 = vmatprep.subr.bf16.mxu0 0
        %2291 = vmatpush1.bf16.xpose.msra.mxu0 0
        %2292 = vmatprep.subr.bf16.mxu0 0
        %2293 = vmatpush1.bf16.xpose.msra.mxu0 0
        %2294 = vmatprep.subr.bf16.mxu0 0
        %2295 = vmatpush1.bf16.xpose.msra.mxu0 0
        %2296 = vmatprep.subr.bf16.mxu0 0
        %2297 = vmatpush1.bf16.xpose.msra.mxu0 0
        %2298 = vmatprep.subr.bf16.mxu0 0
        %2299 = vmatpush1.bf16.xpose.msra.mxu0 0
        %2300 = vmatprep.subr.bf16.mxu0 0
        %2301 = vmatpush1.bf16.xpose.msra.mxu0 0
        %2302 = vmatprep.subr.bf16.mxu0 0
        %2303 = vmatpush1.bf16.xpose.msra.mxu0 0
        %2304 = vmatprep.subr.bf16.mxu0 0
        %2305 = vmatpush1.bf16.xpose.msra.mxu0 0
        %2306 = vmatprep.subr.bf16.mxu0 0
        %2307 = vmatpush1.bf16.xpose.msra.mxu0 0
        %2308 = vmatprep.subr.bf16.mxu0 0
        %2309 = vmatpush1.bf16.xpose.msra.mxu0 0
        %2310 = vmatprep.subr.bf16.mxu0 0
        %2311 = vmatpush1.bf16.xpose.msra.mxu0 0
        %2312 = vmatprep.subr.bf16.mxu0 0
        %2313 = vmatpush1.bf16.xpose.msra.mxu0 0
        %2314 = vmatprep.subr.bf16.mxu0 0
        %2315 = vmatpush1.bf16.xpose.msra.mxu0 0
        %2316 = vmatprep.subr.bf16.mxu0 0
        %2317 = vmatpush1.bf16.xpose.msra.mxu0 0
        %2318 = vmatprep.mubr.bf16.mxu0 0
        %2319 = vmatmul.mubr.bf16.gmra.mrb[0].mxu0 %v2281
        %v2320 = vpop.f32.mrb[0].mxu0
        %v2321 = vadd.f32 0.0, %v2320
        %v2322 = vpop.f32.mrb[0].mxu0
        %v2323 = vpop.f32.mrb[0].mxu0
        %v2324 = vpop.f32.mrb[0].mxu0
        %2325 = vdwg.mxu0
        %v2326 = vmul.f32 %v2321, 0.25
        %v2327 = vadd.f32 %v2326, %v2211
        %v2328 = vsel %vm1002, %v2327, -inf
        %2329 = vmax.xlane.f32.xlu0 %v2328
        %v2330 = vpop.xlane.xlu0 %2329
        %v2331 = vsub.f32 %v2327, %v2330
        %v2332 = vmul.f32 %v2331, 1.442695
        %v2333 = vpow.pop %v2332
        %v2334 = vsel %vm1002, %v2333, 0.0
        %2335 = vadd.xlane.f32.xlu0 %v2334
        %v2336 = vpop.xlane.xlu0 %2335
        %v2337 = vrcp.pop %v2336
        %v2338 = vmul.f32 %v2333, %v2337
        %v2339 = vpack.c.bf16 %v2338, %v2338
        %2340 = vrot.lane.b32.xlu0 %v2159, 48
        %v2341 = vpop.permute.xlu0 %2340
        %v2343 = vsel %vm1002, %v2339, 0
        %v2346 = vsel %vm1019, %v2341, 0
        %2348 = vmatprep.subr.bf16.mxu0 0
        %2349 = vmatpush1.bf16.msra.mxu0 %v2346
        %2350 = vmatprep.subr.bf16.mxu0 0
        %2351 = vmatpush1.bf16.msra.mxu0 0
        %2352 = vmatprep.subr.bf16.mxu0 0
        %2353 = vmatpush1.bf16.msra.mxu0 0
        %2354 = vmatprep.subr.bf16.mxu0 0
        %2355 = vmatpush1.bf16.msra.mxu0 0
        %2356 = vmatprep.subr.bf16.mxu0 0
        %2357 = vmatpush1.bf16.msra.mxu0 0
        %2358 = vmatprep.subr.bf16.mxu0 0
        %2359 = vmatpush1.bf16.msra.mxu0 0
        %2360 = vmatprep.subr.bf16.mxu0 0
        %2361 = vmatpush1.bf16.msra.mxu0 0
        %2362 = vmatprep.subr.bf16.mxu0 0
        %2363 = vmatpush1.bf16.msra.mxu0 0
        %2364 = vmatprep.subr.bf16.mxu0 0
        %2365 = vmatpush1.bf16.msra.mxu0 0
        %2366 = vmatprep.subr.bf16.mxu0 0
        %2367 = vmatpush1.bf16.msra.mxu0 0
        %2368 = vmatprep.subr.bf16.mxu0 0
        %2369 = vmatpush1.bf16.msra.mxu0 0
        %2370 = vmatprep.subr.bf16.mxu0 0
        %2371 = vmatpush1.bf16.msra.mxu0 0
        %2372 = vmatprep.subr.bf16.mxu0 0
        %2373 = vmatpush1.bf16.msra.mxu0 0
        %2374 = vmatprep.subr.bf16.mxu0 0
        %2375 = vmatpush1.bf16.msra.mxu0 0
        %2376 = vmatprep.subr.bf16.mxu0 0
        %2377 = vmatpush1.bf16.msra.mxu0 0
        %2378 = vmatprep.subr.bf16.mxu0 0
        %2379 = vmatpush1.bf16.msra.mxu0 0
        %2380 = vmatprep.mubr.bf16.mxu0 0
        %2381 = vmatmul.mubr.bf16.gmra.mrb[0].mxu0 %v2343
        %v2382 = vpop.f32.mrb[0].mxu0
        %v2383 = vadd.f32 0.0, %v2382
        %v2384 = vpop.f32.mrb[0].mxu0
        %v2385 = vpop.f32.mrb[0].mxu0
        %v2386 = vpop.f32.mrb[0].mxu0
        %2387 = vdwg.mxu0
        %2388 = vrot.lane.b32.xlu0 %v2158, 96
        %v2389 = vpop.permute.xlu0 %2388
        %2390 = vrot.lane.b32.xlu0 %v2159, 96
        %v2391 = vpop.permute.xlu0 %2390
        %v2393 = vsel %vm953, %v2389, 0
        %v2396 = vsel %vm953, %v2391, 0
        %2398 = vmatprep.subr.bf16.mxu0 0
        %2399 = vmatpush1.bf16.xpose.msra.mxu0 %v2396
        %2400 = vmatprep.subr.bf16.mxu0 0
        %2401 = vmatpush1.bf16.xpose.msra.mxu0 0
        %2402 = vmatprep.subr.bf16.mxu0 0
        %2403 = vmatpush1.bf16.xpose.msra.mxu0 0
        %2404 = vmatprep.subr.bf16.mxu0 0
        %2405 = vmatpush1.bf16.xpose.msra.mxu0 0
        %2406 = vmatprep.subr.bf16.mxu0 0
        %2407 = vmatpush1.bf16.xpose.msra.mxu0 0
        %2408 = vmatprep.subr.bf16.mxu0 0
        %2409 = vmatpush1.bf16.xpose.msra.mxu0 0
        %2410 = vmatprep.subr.bf16.mxu0 0
        %2411 = vmatpush1.bf16.xpose.msra.mxu0 0
        %2412 = vmatprep.subr.bf16.mxu0 0
        %2413 = vmatpush1.bf16.xpose.msra.mxu0 0
        %2414 = vmatprep.subr.bf16.mxu0 0
        %2415 = vmatpush1.bf16.xpose.msra.mxu0 0
        %2416 = vmatprep.subr.bf16.mxu0 0
        %2417 = vmatpush1.bf16.xpose.msra.mxu0 0
        %2418 = vmatprep.subr.bf16.mxu0 0
        %2419 = vmatpush1.bf16.xpose.msra.mxu0 0
        %2420 = vmatprep.subr.bf16.mxu0 0
        %2421 = vmatpush1.bf16.xpose.msra.mxu0 0
        %2422 = vmatprep.subr.bf16.mxu0 0
        %2423 = vmatpush1.bf16.xpose.msra.mxu0 0
        %2424 = vmatprep.subr.bf16.mxu0 0
        %2425 = vmatpush1.bf16.xpose.msra.mxu0 0
        %2426 = vmatprep.subr.bf16.mxu0 0
        %2427 = vmatpush1.bf16.xpose.msra.mxu0 0
        %2428 = vmatprep.subr.bf16.mxu0 0
        %2429 = vmatpush1.bf16.xpose.msra.mxu0 0
        %2430 = vmatprep.mubr.bf16.mxu0 0
        %2431 = vmatmul.mubr.bf16.gmra.mrb[0].mxu0 %v2393
        %v2432 = vpop.f32.mrb[0].mxu0
        %v2433 = vadd.f32 0.0, %v2432
        %v2434 = vpop.f32.mrb[0].mxu0
        %v2435 = vpop.f32.mrb[0].mxu0
        %v2436 = vpop.f32.mrb[0].mxu0
        %2437 = vdwg.mxu0
        %v2438 = vmul.f32 %v2433, 0.25
        %v2439 = vadd.f32 %v2438, %v2211
        %v2440 = vsel %vm1002, %v2439, -inf
        %2441 = vmax.xlane.f32.xlu0 %v2440
        %v2442 = vpop.xlane.xlu0 %2441
        %v2443 = vsub.f32 %v2439, %v2442
        %v2444 = vmul.f32 %v2443, 1.442695
        %v2445 = vpow.pop %v2444
        %v2446 = vsel %vm1002, %v2445, 0.0
        %2447 = vadd.xlane.f32.xlu0 %v2446
        %v2448 = vpop.xlane.xlu0 %2447
        %v2449 = vrcp.pop %v2448
        %v2450 = vmul.f32 %v2445, %v2449
        %v2451 = vpack.c.bf16 %v2450, %v2450
        %2452 = vrot.lane.b32.xlu0 %v2159, 32
        %v2453 = vpop.permute.xlu0 %2452
        %v2455 = vsel %vm1002, %v2451, 0
        %v2458 = vsel %vm1019, %v2453, 0
        %2460 = vmatprep.subr.bf16.mxu0 0
        %2461 = vmatpush1.bf16.msra.mxu0 %v2458
        %2462 = vmatprep.subr.bf16.mxu0 0
        %2463 = vmatpush1.bf16.msra.mxu0 0
        %2464 = vmatprep.subr.bf16.mxu0 0
        %2465 = vmatpush1.bf16.msra.mxu0 0
        %2466 = vmatprep.subr.bf16.mxu0 0
        %2467 = vmatpush1.bf16.msra.mxu0 0
        %2468 = vmatprep.subr.bf16.mxu0 0
        %2469 = vmatpush1.bf16.msra.mxu0 0
        %2470 = vmatprep.subr.bf16.mxu0 0
        %2471 = vmatpush1.bf16.msra.mxu0 0
        %2472 = vmatprep.subr.bf16.mxu0 0
        %2473 = vmatpush1.bf16.msra.mxu0 0
        %2474 = vmatprep.subr.bf16.mxu0 0
        %2475 = vmatpush1.bf16.msra.mxu0 0
        %2476 = vmatprep.subr.bf16.mxu0 0
        %2477 = vmatpush1.bf16.msra.mxu0 0
        %2478 = vmatprep.subr.bf16.mxu0 0
        %2479 = vmatpush1.bf16.msra.mxu0 0
        %2480 = vmatprep.subr.bf16.mxu0 0
        %2481 = vmatpush1.bf16.msra.mxu0 0
        %2482 = vmatprep.subr.bf16.mxu0 0
        %2483 = vmatpush1.bf16.msra.mxu0 0
        %2484 = vmatprep.subr.bf16.mxu0 0
        %2485 = vmatpush1.bf16.msra.mxu0 0
        %2486 = vmatprep.subr.bf16.mxu0 0
        %2487 = vmatpush1.bf16.msra.mxu0 0
        %2488 = vmatprep.subr.bf16.mxu0 0
        %2489 = vmatpush1.bf16.msra.mxu0 0
        %2490 = vmatprep.subr.bf16.mxu0 0
        %2491 = vmatpush1.bf16.msra.mxu0 0
        %2492 = vmatprep.mubr.bf16.mxu0 0
        %2493 = vmatmul.mubr.bf16.gmra.mrb[0].mxu0 %v2455
        %v2494 = vpop.f32.mrb[0].mxu0
        %v2495 = vadd.f32 0.0, %v2494
        %v2496 = vpop.f32.mrb[0].mxu0
        %v2497 = vpop.f32.mrb[0].mxu0
        %v2498 = vpop.f32.mrb[0].mxu0
        %2499 = vdwg.mxu0
        %2500 = vrot.lane.b32.xlu0 %v2158, 80
        %v2501 = vpop.permute.xlu0 %2500
        %2502 = vrot.lane.b32.xlu0 %v2159, 80
        %v2503 = vpop.permute.xlu0 %2502
        %v2505 = vsel %vm953, %v2501, 0
        %v2508 = vsel %vm953, %v2503, 0
        %2510 = vmatprep.subr.bf16.mxu0 0
        %2511 = vmatpush1.bf16.xpose.msra.mxu0 %v2508
        %2512 = vmatprep.subr.bf16.mxu0 0
        %2513 = vmatpush1.bf16.xpose.msra.mxu0 0
        %2514 = vmatprep.subr.bf16.mxu0 0
        %2515 = vmatpush1.bf16.xpose.msra.mxu0 0
        %2516 = vmatprep.subr.bf16.mxu0 0
        %2517 = vmatpush1.bf16.xpose.msra.mxu0 0
        %2518 = vmatprep.subr.bf16.mxu0 0
        %2519 = vmatpush1.bf16.xpose.msra.mxu0 0
        %2520 = vmatprep.subr.bf16.mxu0 0
        %2521 = vmatpush1.bf16.xpose.msra.mxu0 0
        %2522 = vmatprep.subr.bf16.mxu0 0
        %2523 = vmatpush1.bf16.xpose.msra.mxu0 0
        %2524 = vmatprep.subr.bf16.mxu0 0
        %2525 = vmatpush1.bf16.xpose.msra.mxu0 0
        %2526 = vmatprep.subr.bf16.mxu0 0
        %2527 = vmatpush1.bf16.xpose.msra.mxu0 0
        %2528 = vmatprep.subr.bf16.mxu0 0
        %2529 = vmatpush1.bf16.xpose.msra.mxu0 0
        %2530 = vmatprep.subr.bf16.mxu0 0
        %2531 = vmatpush1.bf16.xpose.msra.mxu0 0
        %2532 = vmatprep.subr.bf16.mxu0 0
        %2533 = vmatpush1.bf16.xpose.msra.mxu0 0
        %2534 = vmatprep.subr.bf16.mxu0 0
        %2535 = vmatpush1.bf16.xpose.msra.mxu0 0
        %2536 = vmatprep.subr.bf16.mxu0 0
        %2537 = vmatpush1.bf16.xpose.msra.mxu0 0
        %2538 = vmatprep.subr.bf16.mxu0 0
        %2539 = vmatpush1.bf16.xpose.msra.mxu0 0
        %2540 = vmatprep.subr.bf16.mxu0 0
        %2541 = vmatpush1.bf16.xpose.msra.mxu0 0
        %2542 = vmatprep.mubr.bf16.mxu0 0
        %2543 = vmatmul.mubr.bf16.gmra.mrb[0].mxu0 %v2505
        %v2544 = vpop.f32.mrb[0].mxu0
        %v2545 = vadd.f32 0.0, %v2544
        %v2546 = vpop.f32.mrb[0].mxu0
        %v2547 = vpop.f32.mrb[0].mxu0
        %v2548 = vpop.f32.mrb[0].mxu0
        %2549 = vdwg.mxu0
        %v2550 = vmul.f32 %v2545, 0.25
        %v2551 = vadd.f32 %v2550, %v2211
        %v2552 = vsel %vm1002, %v2551, -inf
        %2553 = vmax.xlane.f32.xlu0 %v2552
        %v2554 = vpop.xlane.xlu0 %2553
        %v2555 = vsub.f32 %v2551, %v2554
        %v2556 = vmul.f32 %v2555, 1.442695
        %v2557 = vpow.pop %v2556
        %v2558 = vsel %vm1002, %v2557, 0.0
        %2559 = vadd.xlane.f32.xlu0 %v2558
        %v2560 = vpop.xlane.xlu0 %2559
        %v2561 = vrcp.pop %v2560
        %v2562 = vmul.f32 %v2557, %v2561
        %v2563 = vpack.c.bf16 %v2562, %v2562
        %2564 = vrot.lane.b32.xlu0 %v2159, 16
        %v2565 = vpop.permute.xlu0 %2564
        %v2567 = vsel %vm1002, %v2563, 0
        %v2570 = vsel %vm1019, %v2565, 0
        %2572 = vmatprep.subr.bf16.mxu0 0
        %2573 = vmatpush1.bf16.msra.mxu0 %v2570
        %2574 = vmatprep.subr.bf16.mxu0 0
        %2575 = vmatpush1.bf16.msra.mxu0 0
        %2576 = vmatprep.subr.bf16.mxu0 0
        %2577 = vmatpush1.bf16.msra.mxu0 0
        %2578 = vmatprep.subr.bf16.mxu0 0
        %2579 = vmatpush1.bf16.msra.mxu0 0
        %2580 = vmatprep.subr.bf16.mxu0 0
        %2581 = vmatpush1.bf16.msra.mxu0 0
        %2582 = vmatprep.subr.bf16.mxu0 0
        %2583 = vmatpush1.bf16.msra.mxu0 0
        %2584 = vmatprep.subr.bf16.mxu0 0
        %2585 = vmatpush1.bf16.msra.mxu0 0
        %2586 = vmatprep.subr.bf16.mxu0 0
        %2587 = vmatpush1.bf16.msra.mxu0 0
        %2588 = vmatprep.subr.bf16.mxu0 0
        %2589 = vmatpush1.bf16.msra.mxu0 0
        %2590 = vmatprep.subr.bf16.mxu0 0
        %2591 = vmatpush1.bf16.msra.mxu0 0
        %2592 = vmatprep.subr.bf16.mxu0 0
        %2593 = vmatpush1.bf16.msra.mxu0 0
        %2594 = vmatprep.subr.bf16.mxu0 0
        %2595 = vmatpush1.bf16.msra.mxu0 0
        %2596 = vmatprep.subr.bf16.mxu0 0
        %2597 = vmatpush1.bf16.msra.mxu0 0
        %2598 = vmatprep.subr.bf16.mxu0 0
        %2599 = vmatpush1.bf16.msra.mxu0 0
        %2600 = vmatprep.subr.bf16.mxu0 0
        %2601 = vmatpush1.bf16.msra.mxu0 0
        %2602 = vmatprep.subr.bf16.mxu0 0
        %2603 = vmatpush1.bf16.msra.mxu0 0
        %2604 = vmatprep.mubr.bf16.mxu0 0
        %2605 = vmatmul.mubr.bf16.gmra.mrb[0].mxu0 %v2567
        %v2606 = vpop.f32.mrb[0].mxu0
        %v2607 = vadd.f32 0.0, %v2606
        %v2608 = vpop.f32.mrb[0].mxu0
        %v2609 = vpop.f32.mrb[0].mxu0
        %v2610 = vpop.f32.mrb[0].mxu0
        %2611 = vdwg.mxu0
        %2613 = vrot.lane.b32.xlu0 %v2383, 16
        %v2614 = vpop.permute.xlu0 %2613
        %2617 = vrot.lane.b32.xlu0 %v2495, 32
        %v2618 = vpop.permute.xlu0 %2617
        %2621 = vrot.lane.b32.xlu0 %v2607, 48
        %v2622 = vpop.permute.xlu0 %2621
        %v2624 = vsel %vm953, %v2270, %v2614
        %v2625 = vsel %vm1413, %v2624, %v2618
        %v2626 = vsel %vm1415, %v2625, %v2622
        %s2627 = scalar_lea.vmem [#allocation3], 1
        %v2628 = vld [vmem:[%s2627] sm:$0x1]
        %v2629 = vpack.c.bf16 %v2070, %v2070
        %v2630 = vpack.c.bf16 %v2154, %v2154
        %v2632 = vsel %vm953, %v2629, 0
        %v2635 = vsel %vm953, %v2630, 0
        %2637 = vmatprep.subr.bf16.mxu0 0
        %2638 = vmatpush1.bf16.xpose.msra.mxu0 %v2635
        %2639 = vmatprep.subr.bf16.mxu0 0
        %2640 = vmatpush1.bf16.xpose.msra.mxu0 0
        %2641 = vmatprep.subr.bf16.mxu0 0
        %2642 = vmatpush1.bf16.xpose.msra.mxu0 0
        %2643 = vmatprep.subr.bf16.mxu0 0
        %2644 = vmatpush1.bf16.xpose.msra.mxu0 0
        %2645 = vmatprep.subr.bf16.mxu0 0
        %2646 = vmatpush1.bf16.xpose.msra.mxu0 0
        %2647 = vmatprep.subr.bf16.mxu0 0
        %2648 = vmatpush1.bf16.xpose.msra.mxu0 0
        %2649 = vmatprep.subr.bf16.mxu0 0
        %2650 = vmatpush1.bf16.xpose.msra.mxu0 0
        %2651 = vmatprep.subr.bf16.mxu0 0
        %2652 = vmatpush1.bf16.xpose.msra.mxu0 0
        %2653 = vmatprep.subr.bf16.mxu0 0
        %2654 = vmatpush1.bf16.xpose.msra.mxu0 0
        %2655 = vmatprep.subr.bf16.mxu0 0
        %2656 = vmatpush1.bf16.xpose.msra.mxu0 0
        %2657 = vmatprep.subr.bf16.mxu0 0
        %2658 = vmatpush1.bf16.xpose.msra.mxu0 0
        %2659 = vmatprep.subr.bf16.mxu0 0
        %2660 = vmatpush1.bf16.xpose.msra.mxu0 0
        %2661 = vmatprep.subr.bf16.mxu0 0
        %2662 = vmatpush1.bf16.xpose.msra.mxu0 0
        %2663 = vmatprep.subr.bf16.mxu0 0
        %2664 = vmatpush1.bf16.xpose.msra.mxu0 0
        %2665 = vmatprep.subr.bf16.mxu0 0
        %2666 = vmatpush1.bf16.xpose.msra.mxu0 0
        %2667 = vmatprep.subr.bf16.mxu0 0
        %2668 = vmatpush1.bf16.xpose.msra.mxu0 0
        %2669 = vmatprep.mubr.bf16.mxu0 0
        %2670 = vmatmul.mubr.bf16.gmra.mrb[0].mxu0 %v2632
        %v2671 = vpop.f32.mrb[0].mxu0
        %v2672 = vadd.f32 0.0, %v2671
        %v2673 = vpop.f32.mrb[0].mxu0
        %v2674 = vpop.f32.mrb[0].mxu0
        %v2675 = vpop.f32.mrb[0].mxu0
        %2676 = vdwg.mxu0
        %v2677 = vmul.f32 %v2672, 0.25
        %v2679 = vlaneseq
        %v2680 = vshrl.u32 %v2679, 7
        %v2681 = vsub.s32 0, %v2680
        %v2682 = vrot.slane %v2628, %v2681
        %v2684 = vadd.f32 %v2677, %v2682
        %v2685 = vsel %vm1002, %v2684, -inf
        %2686 = vmax.xlane.f32.xlu0 %v2685
        %v2687 = vpop.xlane.xlu0 %2686
        %v2688 = vsub.f32 %v2684, %v2687
        %v2689 = vmul.f32 %v2688, 1.442695
        %v2690 = vpow.pop %v2689
        %v2691 = vsel %vm1002, %v2690, 0.0
        %2692 = vadd.xlane.f32.xlu0 %v2691
        %v2693 = vpop.xlane.xlu0 %2692
        %v2694 = vrcp.pop %v2693
        %v2695 = vmul.f32 %v2690, %v2694
        %v2696 = vpack.c.bf16 %v2695, %v2695
        %2698 = vrot.lane.b32.xlu0 %v2630, 64
        %v2699 = vpop.permute.xlu0 %2698
        %v2701 = vsel %vm1002, %v2696, 0
        %v2704 = vsel %vm1019, %v2699, 0
        %2706 = vmatprep.subr.bf16.mxu0 0
        %2707 = vmatpush1.bf16.msra.mxu0 %v2704
        %2708 = vmatprep.subr.bf16.mxu0 0
        %2709 = vmatpush1.bf16.msra.mxu0 0
        %2710 = vmatprep.subr.bf16.mxu0 0
        %2711 = vmatpush1.bf16.msra.mxu0 0
        %2712 = vmatprep.subr.bf16.mxu0 0
        %2713 = vmatpush1.bf16.msra.mxu0 0
        %2714 = vmatprep.subr.bf16.mxu0 0
        %2715 = vmatpush1.bf16.msra.mxu0 0
        %2716 = vmatprep.subr.bf16.mxu0 0
        %2717 = vmatpush1.bf16.msra.mxu0 0
        %2718 = vmatprep.subr.bf16.mxu0 0
        %2719 = vmatpush1.bf16.msra.mxu0 0
        %2720 = vmatprep.subr.bf16.mxu0 0
        %2721 = vmatpush1.bf16.msra.mxu0 0
        %2722 = vmatprep.subr.bf16.mxu0 0
        %2723 = vmatpush1.bf16.msra.mxu0 0
        %2724 = vmatprep.subr.bf16.mxu0 0
        %2725 = vmatpush1.bf16.msra.mxu0 0
        %2726 = vmatprep.subr.bf16.mxu0 0
        %2727 = vmatpush1.bf16.msra.mxu0 0
        %2728 = vmatprep.subr.bf16.mxu0 0
        %2729 = vmatpush1.bf16.msra.mxu0 0
        %2730 = vmatprep.subr.bf16.mxu0 0
        %2731 = vmatpush1.bf16.msra.mxu0 0
        %2732 = vmatprep.subr.bf16.mxu0 0
        %2733 = vmatpush1.bf16.msra.mxu0 0
        %2734 = vmatprep.subr.bf16.mxu0 0
        %2735 = vmatpush1.bf16.msra.mxu0 0
        %2736 = vmatprep.subr.bf16.mxu0 0
        %2737 = vmatpush1.bf16.msra.mxu0 0
        %2738 = vmatprep.mubr.bf16.mxu0 0
        %2739 = vmatmul.mubr.bf16.gmra.mrb[0].mxu0 %v2701
        %v2740 = vpop.f32.mrb[0].mxu0
        %v2741 = vadd.f32 0.0, %v2740
        %v2742 = vpop.f32.mrb[0].mxu0
        %v2743 = vpop.f32.mrb[0].mxu0
        %v2744 = vpop.f32.mrb[0].mxu0
        %2745 = vdwg.mxu0
        %2747 = vrot.lane.b32.xlu0 %v2629, 112
        %v2748 = vpop.permute.xlu0 %2747
        %2749 = vrot.lane.b32.xlu0 %v2630, 112
        %v2750 = vpop.permute.xlu0 %2749
        %v2752 = vsel %vm953, %v2748, 0
        %v2755 = vsel %vm953, %v2750, 0
        %2757 = vmatprep.subr.bf16.mxu0 0
        %2758 = vmatpush1.bf16.xpose.msra.mxu0 %v2755
        %2759 = vmatprep.subr.bf16.mxu0 0
        %2760 = vmatpush1.bf16.xpose.msra.mxu0 0
        %2761 = vmatprep.subr.bf16.mxu0 0
        %2762 = vmatpush1.bf16.xpose.msra.mxu0 0
        %2763 = vmatprep.subr.bf16.mxu0 0
        %2764 = vmatpush1.bf16.xpose.msra.mxu0 0
        %2765 = vmatprep.subr.bf16.mxu0 0
        %2766 = vmatpush1.bf16.xpose.msra.mxu0 0
        %2767 = vmatprep.subr.bf16.mxu0 0
        %2768 = vmatpush1.bf16.xpose.msra.mxu0 0
        %2769 = vmatprep.subr.bf16.mxu0 0
        %2770 = vmatpush1.bf16.xpose.msra.mxu0 0
        %2771 = vmatprep.subr.bf16.mxu0 0
        %2772 = vmatpush1.bf16.xpose.msra.mxu0 0
        %2773 = vmatprep.subr.bf16.mxu0 0
        %2774 = vmatpush1.bf16.xpose.msra.mxu0 0
        %2775 = vmatprep.subr.bf16.mxu0 0
        %2776 = vmatpush1.bf16.xpose.msra.mxu0 0
        %2777 = vmatprep.subr.bf16.mxu0 0
        %2778 = vmatpush1.bf16.xpose.msra.mxu0 0
        %2779 = vmatprep.subr.bf16.mxu0 0
        %2780 = vmatpush1.bf16.xpose.msra.mxu0 0
        %2781 = vmatprep.subr.bf16.mxu0 0
        %2782 = vmatpush1.bf16.xpose.msra.mxu0 0
        %2783 = vmatprep.subr.bf16.mxu0 0
        %2784 = vmatpush1.bf16.xpose.msra.mxu0 0
        %2785 = vmatprep.subr.bf16.mxu0 0
        %2786 = vmatpush1.bf16.xpose.msra.mxu0 0
        %2787 = vmatprep.subr.bf16.mxu0 0
        %2788 = vmatpush1.bf16.xpose.msra.mxu0 0
        %2789 = vmatprep.mubr.bf16.mxu0 0
        %2790 = vmatmul.mubr.bf16.gmra.mrb[0].mxu0 %v2752
        %v2791 = vpop.f32.mrb[0].mxu0
        %v2792 = vadd.f32 0.0, %v2791
        %v2793 = vpop.f32.mrb[0].mxu0
        %v2794 = vpop.f32.mrb[0].mxu0
        %v2795 = vpop.f32.mrb[0].mxu0
        %2796 = vdwg.mxu0
        %v2797 = vmul.f32 %v2792, 0.25
        %v2798 = vadd.f32 %v2797, %v2682
        %v2799 = vsel %vm1002, %v2798, -inf
        %2800 = vmax.xlane.f32.xlu0 %v2799
        %v2801 = vpop.xlane.xlu0 %2800
        %v2802 = vsub.f32 %v2798, %v2801
        %v2803 = vmul.f32 %v2802, 1.442695
        %v2804 = vpow.pop %v2803
        %v2805 = vsel %vm1002, %v2804, 0.0
        %2806 = vadd.xlane.f32.xlu0 %v2805
        %v2807 = vpop.xlane.xlu0 %2806
        %v2808 = vrcp.pop %v2807
        %v2809 = vmul.f32 %v2804, %v2808
        %v2810 = vpack.c.bf16 %v2809, %v2809
        %2811 = vrot.lane.b32.xlu0 %v2630, 48
        %v2812 = vpop.permute.xlu0 %2811
        %v2814 = vsel %vm1002, %v2810, 0
        %v2817 = vsel %vm1019, %v2812, 0
        %2819 = vmatprep.subr.bf16.mxu0 0
        %2820 = vmatpush1.bf16.msra.mxu0 %v2817
        %2821 = vmatprep.subr.bf16.mxu0 0
        %2822 = vmatpush1.bf16.msra.mxu0 0
        %2823 = vmatprep.subr.bf16.mxu0 0
        %2824 = vmatpush1.bf16.msra.mxu0 0
        %2825 = vmatprep.subr.bf16.mxu0 0
        %2826 = vmatpush1.bf16.msra.mxu0 0
        %2827 = vmatprep.subr.bf16.mxu0 0
        %2828 = vmatpush1.bf16.msra.mxu0 0
        %2829 = vmatprep.subr.bf16.mxu0 0
        %2830 = vmatpush1.bf16.msra.mxu0 0
        %2831 = vmatprep.subr.bf16.mxu0 0
        %2832 = vmatpush1.bf16.msra.mxu0 0
        %2833 = vmatprep.subr.bf16.mxu0 0
        %2834 = vmatpush1.bf16.msra.mxu0 0
        %2835 = vmatprep.subr.bf16.mxu0 0
        %2836 = vmatpush1.bf16.msra.mxu0 0
        %2837 = vmatprep.subr.bf16.mxu0 0
        %2838 = vmatpush1.bf16.msra.mxu0 0
        %2839 = vmatprep.subr.bf16.mxu0 0
        %2840 = vmatpush1.bf16.msra.mxu0 0
        %2841 = vmatprep.subr.bf16.mxu0 0
        %2842 = vmatpush1.bf16.msra.mxu0 0
        %2843 = vmatprep.subr.bf16.mxu0 0
        %2844 = vmatpush1.bf16.msra.mxu0 0
        %2845 = vmatprep.subr.bf16.mxu0 0
        %2846 = vmatpush1.bf16.msra.mxu0 0
        %2847 = vmatprep.subr.bf16.mxu0 0
        %2848 = vmatpush1.bf16.msra.mxu0 0
        %2849 = vmatprep.subr.bf16.mxu0 0
        %2850 = vmatpush1.bf16.msra.mxu0 0
        %2851 = vmatprep.mubr.bf16.mxu0 0
        %2852 = vmatmul.mubr.bf16.gmra.mrb[0].mxu0 %v2814
        %v2853 = vpop.f32.mrb[0].mxu0
        %v2854 = vadd.f32 0.0, %v2853
        %v2855 = vpop.f32.mrb[0].mxu0
        %v2856 = vpop.f32.mrb[0].mxu0
        %v2857 = vpop.f32.mrb[0].mxu0
        %2858 = vdwg.mxu0
        %2859 = vrot.lane.b32.xlu0 %v2629, 96
        %v2860 = vpop.permute.xlu0 %2859
        %2861 = vrot.lane.b32.xlu0 %v2630, 96
        %v2862 = vpop.permute.xlu0 %2861
        %v2864 = vsel %vm953, %v2860, 0
        %v2867 = vsel %vm953, %v2862, 0
        %2869 = vmatprep.subr.bf16.mxu0 0
        %2870 = vmatpush1.bf16.xpose.msra.mxu0 %v2867
        %2871 = vmatprep.subr.bf16.mxu0 0
        %2872 = vmatpush1.bf16.xpose.msra.mxu0 0
        %2873 = vmatprep.subr.bf16.mxu0 0
        %2874 = vmatpush1.bf16.xpose.msra.mxu0 0
        %2875 = vmatprep.subr.bf16.mxu0 0
        %2876 = vmatpush1.bf16.xpose.msra.mxu0 0
        %2877 = vmatprep.subr.bf16.mxu0 0
        %2878 = vmatpush1.bf16.xpose.msra.mxu0 0
        %2879 = vmatprep.subr.bf16.mxu0 0
        %2880 = vmatpush1.bf16.xpose.msra.mxu0 0
        %2881 = vmatprep.subr.bf16.mxu0 0
        %2882 = vmatpush1.bf16.xpose.msra.mxu0 0
        %2883 = vmatprep.subr.bf16.mxu0 0
        %2884 = vmatpush1.bf16.xpose.msra.mxu0 0
        %2885 = vmatprep.subr.bf16.mxu0 0
        %2886 = vmatpush1.bf16.xpose.msra.mxu0 0
        %2887 = vmatprep.subr.bf16.mxu0 0
        %2888 = vmatpush1.bf16.xpose.msra.mxu0 0
        %2889 = vmatprep.subr.bf16.mxu0 0
        %2890 = vmatpush1.bf16.xpose.msra.mxu0 0
        %2891 = vmatprep.subr.bf16.mxu0 0
        %2892 = vmatpush1.bf16.xpose.msra.mxu0 0
        %2893 = vmatprep.subr.bf16.mxu0 0
        %2894 = vmatpush1.bf16.xpose.msra.mxu0 0
        %2895 = vmatprep.subr.bf16.mxu0 0
        %2896 = vmatpush1.bf16.xpose.msra.mxu0 0
        %2897 = vmatprep.subr.bf16.mxu0 0
        %2898 = vmatpush1.bf16.xpose.msra.mxu0 0
        %2899 = vmatprep.subr.bf16.mxu0 0
        %2900 = vmatpush1.bf16.xpose.msra.mxu0 0
        %2901 = vmatprep.mubr.bf16.mxu0 0
        %2902 = vmatmul.mubr.bf16.gmra.mrb[0].mxu0 %v2864
        %v2903 = vpop.f32.mrb[0].mxu0
        %v2904 = vadd.f32 0.0, %v2903
        %v2905 = vpop.f32.mrb[0].mxu0
        %v2906 = vpop.f32.mrb[0].mxu0
        %v2907 = vpop.f32.mrb[0].mxu0
        %2908 = vdwg.mxu0
        %v2909 = vmul.f32 %v2904, 0.25
        %v2910 = vadd.f32 %v2909, %v2682
        %v2911 = vsel %vm1002, %v2910, -inf
        %2912 = vmax.xlane.f32.xlu0 %v2911
        %v2913 = vpop.xlane.xlu0 %2912
        %v2914 = vsub.f32 %v2910, %v2913
        %v2915 = vmul.f32 %v2914, 1.442695
        %v2916 = vpow.pop %v2915
        %v2917 = vsel %vm1002, %v2916, 0.0
        %2918 = vadd.xlane.f32.xlu0 %v2917
        %v2919 = vpop.xlane.xlu0 %2918
        %v2920 = vrcp.pop %v2919
        %v2921 = vmul.f32 %v2916, %v2920
        %v2922 = vpack.c.bf16 %v2921, %v2921
        %2923 = vrot.lane.b32.xlu0 %v2630, 32
        %v2924 = vpop.permute.xlu0 %2923
        %v2926 = vsel %vm1002, %v2922, 0
        %v2929 = vsel %vm1019, %v2924, 0
        %2931 = vmatprep.subr.bf16.mxu0 0
        %2932 = vmatpush1.bf16.msra.mxu0 %v2929
        %2933 = vmatprep.subr.bf16.mxu0 0
        %2934 = vmatpush1.bf16.msra.mxu0 0
        %2935 = vmatprep.subr.bf16.mxu0 0
        %2936 = vmatpush1.bf16.msra.mxu0 0
        %2937 = vmatprep.subr.bf16.mxu0 0
        %2938 = vmatpush1.bf16.msra.mxu0 0
        %2939 = vmatprep.subr.bf16.mxu0 0
        %2940 = vmatpush1.bf16.msra.mxu0 0
        %2941 = vmatprep.subr.bf16.mxu0 0
        %2942 = vmatpush1.bf16.msra.mxu0 0
        %2943 = vmatprep.subr.bf16.mxu0 0
        %2944 = vmatpush1.bf16.msra.mxu0 0
        %2945 = vmatprep.subr.bf16.mxu0 0
        %2946 = vmatpush1.bf16.msra.mxu0 0
        %2947 = vmatprep.subr.bf16.mxu0 0
        %2948 = vmatpush1.bf16.msra.mxu0 0
        %2949 = vmatprep.subr.bf16.mxu0 0
        %2950 = vmatpush1.bf16.msra.mxu0 0
        %2951 = vmatprep.subr.bf16.mxu0 0
        %2952 = vmatpush1.bf16.msra.mxu0 0
        %2953 = vmatprep.subr.bf16.mxu0 0
        %2954 = vmatpush1.bf16.msra.mxu0 0
        %2955 = vmatprep.subr.bf16.mxu0 0
        %2956 = vmatpush1.bf16.msra.mxu0 0
        %2957 = vmatprep.subr.bf16.mxu0 0
        %2958 = vmatpush1.bf16.msra.mxu0 0
        %2959 = vmatprep.subr.bf16.mxu0 0
        %2960 = vmatpush1.bf16.msra.mxu0 0
        %2961 = vmatprep.subr.bf16.mxu0 0
        %2962 = vmatpush1.bf16.msra.mxu0 0
        %2963 = vmatprep.mubr.bf16.mxu0 0
        %2964 = vmatmul.mubr.bf16.gmra.mrb[0].mxu0 %v2926
        %v2965 = vpop.f32.mrb[0].mxu0
        %v2966 = vadd.f32 0.0, %v2965
        %v2967 = vpop.f32.mrb[0].mxu0
        %v2968 = vpop.f32.mrb[0].mxu0
        %v2969 = vpop.f32.mrb[0].mxu0
        %2970 = vdwg.mxu0
        %2971 = vrot.lane.b32.xlu0 %v2629, 80
        %v2972 = vpop.permute.xlu0 %2971
        %2973 = vrot.lane.b32.xlu0 %v2630, 80
        %v2974 = vpop.permute.xlu0 %2973
        %v2976 = vsel %vm953, %v2972, 0
        %v2979 = vsel %vm953, %v2974, 0
        %2981 = vmatprep.subr.bf16.mxu0 0
        %2982 = vmatpush1.bf16.xpose.msra.mxu0 %v2979
        %2983 = vmatprep.subr.bf16.mxu0 0
        %2984 = vmatpush1.bf16.xpose.msra.mxu0 0
        %2985 = vmatprep.subr.bf16.mxu0 0
        %2986 = vmatpush1.bf16.xpose.msra.mxu0 0
        %2987 = vmatprep.subr.bf16.mxu0 0
        %2988 = vmatpush1.bf16.xpose.msra.mxu0 0
        %2989 = vmatprep.subr.bf16.mxu0 0
        %2990 = vmatpush1.bf16.xpose.msra.mxu0 0
        %2991 = vmatprep.subr.bf16.mxu0 0
        %2992 = vmatpush1.bf16.xpose.msra.mxu0 0
        %2993 = vmatprep.subr.bf16.mxu0 0
        %2994 = vmatpush1.bf16.xpose.msra.mxu0 0
        %2995 = vmatprep.subr.bf16.mxu0 0
        %2996 = vmatpush1.bf16.xpose.msra.mxu0 0
        %2997 = vmatprep.subr.bf16.mxu0 0
        %2998 = vmatpush1.bf16.xpose.msra.mxu0 0
        %2999 = vmatprep.subr.bf16.mxu0 0
        %3000 = vmatpush1.bf16.xpose.msra.mxu0 0
        %3001 = vmatprep.subr.bf16.mxu0 0
        %3002 = vmatpush1.bf16.xpose.msra.mxu0 0
        %3003 = vmatprep.subr.bf16.mxu0 0
        %3004 = vmatpush1.bf16.xpose.msra.mxu0 0
        %3005 = vmatprep.subr.bf16.mxu0 0
        %3006 = vmatpush1.bf16.xpose.msra.mxu0 0
        %3007 = vmatprep.subr.bf16.mxu0 0
        %3008 = vmatpush1.bf16.xpose.msra.mxu0 0
        %3009 = vmatprep.subr.bf16.mxu0 0
        %3010 = vmatpush1.bf16.xpose.msra.mxu0 0
        %3011 = vmatprep.subr.bf16.mxu0 0
        %3012 = vmatpush1.bf16.xpose.msra.mxu0 0
        %3013 = vmatprep.mubr.bf16.mxu0 0
        %3014 = vmatmul.mubr.bf16.gmra.mrb[0].mxu0 %v2976
        %v3015 = vpop.f32.mrb[0].mxu0
        %v3016 = vadd.f32 0.0, %v3015
        %v3017 = vpop.f32.mrb[0].mxu0
        %v3018 = vpop.f32.mrb[0].mxu0
        %v3019 = vpop.f32.mrb[0].mxu0
        %3020 = vdwg.mxu0
        %v3021 = vmul.f32 %v3016, 0.25
        %v3022 = vadd.f32 %v3021, %v2682
        %v3023 = vsel %vm1002, %v3022, -inf
        %3024 = vmax.xlane.f32.xlu0 %v3023
        %v3025 = vpop.xlane.xlu0 %3024
        %v3026 = vsub.f32 %v3022, %v3025
        %v3027 = vmul.f32 %v3026, 1.442695
        %v3028 = vpow.pop %v3027
        %v3029 = vsel %vm1002, %v3028, 0.0
        %3030 = vadd.xlane.f32.xlu0 %v3029
        %v3031 = vpop.xlane.xlu0 %3030
        %v3032 = vrcp.pop %v3031
        %v3033 = vmul.f32 %v3028, %v3032
        %v3034 = vpack.c.bf16 %v3033, %v3033
        %3035 = vrot.lane.b32.xlu0 %v2630, 16
        %v3036 = vpop.permute.xlu0 %3035
        %v3038 = vsel %vm1002, %v3034, 0
        %v3041 = vsel %vm1019, %v3036, 0
        %3043 = vmatprep.subr.bf16.mxu0 0
        %3044 = vmatpush1.bf16.msra.mxu0 %v3041
        %3045 = vmatprep.subr.bf16.mxu0 0
        %3046 = vmatpush1.bf16.msra.mxu0 0
        %3047 = vmatprep.subr.bf16.mxu0 0
        %3048 = vmatpush1.bf16.msra.mxu0 0
        %3049 = vmatprep.subr.bf16.mxu0 0
        %3050 = vmatpush1.bf16.msra.mxu0 0
        %3051 = vmatprep.subr.bf16.mxu0 0
        %3052 = vmatpush1.bf16.msra.mxu0 0
        %3053 = vmatprep.subr.bf16.mxu0 0
        %3054 = vmatpush1.bf16.msra.mxu0 0
        %3055 = vmatprep.subr.bf16.mxu0 0
        %3056 = vmatpush1.bf16.msra.mxu0 0
        %3057 = vmatprep.subr.bf16.mxu0 0
        %3058 = vmatpush1.bf16.msra.mxu0 0
        %3059 = vmatprep.subr.bf16.mxu0 0
        %3060 = vmatpush1.bf16.msra.mxu0 0
        %3061 = vmatprep.subr.bf16.mxu0 0
        %3062 = vmatpush1.bf16.msra.mxu0 0
        %3063 = vmatprep.subr.bf16.mxu0 0
        %3064 = vmatpush1.bf16.msra.mxu0 0
        %3065 = vmatprep.subr.bf16.mxu0 0
        %3066 = vmatpush1.bf16.msra.mxu0 0
        %3067 = vmatprep.subr.bf16.mxu0 0
        %3068 = vmatpush1.bf16.msra.mxu0 0
        %3069 = vmatprep.subr.bf16.mxu0 0
        %3070 = vmatpush1.bf16.msra.mxu0 0
        %3071 = vmatprep.subr.bf16.mxu0 0
        %3072 = vmatpush1.bf16.msra.mxu0 0
        %3073 = vmatprep.subr.bf16.mxu0 0
        %3074 = vmatpush1.bf16.msra.mxu0 0
        %3075 = vmatprep.mubr.bf16.mxu0 0
        %3076 = vmatmul.mubr.bf16.gmra.mrb[0].mxu0 %v3038
        %v3077 = vpop.f32.mrb[0].mxu0
        %v3078 = vadd.f32 0.0, %v3077
        %v3079 = vpop.f32.mrb[0].mxu0
        %v3080 = vpop.f32.mrb[0].mxu0
        %v3081 = vpop.f32.mrb[0].mxu0
        %3082 = vdwg.mxu0
        %3084 = vrot.lane.b32.xlu0 %v2854, 16
        %v3085 = vpop.permute.xlu0 %3084
        %3088 = vrot.lane.b32.xlu0 %v2966, 32
        %v3089 = vpop.permute.xlu0 %3088
        %3092 = vrot.lane.b32.xlu0 %v3078, 48
        %v3093 = vpop.permute.xlu0 %3092
        %v3095 = vsel %vm953, %v2741, %v3085
        %v3096 = vsel %vm1413, %v3095, %v3089
        %v3097 = vsel %vm1415, %v3096, %v3093
        %v3098 = vld [vmem:[%s713 + $0x4] ss:$0 sm:$0xff]
        %v3099 = vld [vmem:[%s686] sm:$0xf]
        %v3100 = vld [vmem:[%s686 + $0x4] sm:$0xf]
        %v3101 = vld [vmem:[%s686 + $0x8] sm:$0xf]
        %v3102 = vld [vmem:[%s686 + $0xc] sm:$0xf]
        %v3103 = vld [vmem:[%s686 + $0x10] sm:$0xf]
        %v3104 = vld [vmem:[%s686 + $0x14] sm:$0xf]
        %v3105 = vld [vmem:[%s686 + $0x18] sm:$0xf]
        %v3106 = vld [vmem:[%s686 + $0x1c] sm:$0xf]
        %v3107 = vpack.c.bf16 %v3097, %v2626
        %v3116 = vunpack.c.l.b16 %v3099
        %v3117 = vunpack.c.l.b16 %v3100
        %v3118 = vunpack.c.l.b16 %v3101
        %v3119 = vunpack.c.l.b16 %v3102
        %v3120 = vunpack.c.l.b16 %v3103
        %v3121 = vunpack.c.l.b16 %v3104
        %v3122 = vunpack.c.l.b16 %v3105
        %v3123 = vunpack.c.l.b16 %v3106
        %v3124 = vpack.c.b16 %v3117, %v3116
        %v3125 = vpack.c.b16 %v3119, %v3118
        %v3126 = vpack.c.b16 %v3121, %v3120
        %v3127 = vpack.c.b16 %v3123, %v3122
        %v3133 = vsel %vm901, %v3107, 0
        %3135 = vmatprep.subr.bf16.mxu0 0
        %3136 = vmatpush1.bf16.msra.mxu0 %v3124
        %3137 = vmatprep.subr.bf16.mxu0 0
        %3138 = vmatpush1.bf16.msra.mxu0 %v3125
        %3139 = vmatprep.subr.bf16.mxu0 0
        %3140 = vmatpush1.bf16.msra.mxu0 %v3126
        %3141 = vmatprep.subr.bf16.mxu0 0
        %3142 = vmatpush1.bf16.msra.mxu0 %v3127
        %3143 = vmatprep.subr.bf16.mxu0 0
        %3144 = vmatpush1.bf16.msra.mxu0 0
        %3145 = vmatprep.subr.bf16.mxu0 0
        %3146 = vmatpush1.bf16.msra.mxu0 0
        %3147 = vmatprep.subr.bf16.mxu0 0
        %3148 = vmatpush1.bf16.msra.mxu0 0
        %3149 = vmatprep.subr.bf16.mxu0 0
        %3150 = vmatpush1.bf16.msra.mxu0 0
        %3151 = vmatprep.subr.bf16.mxu0 0
        %3152 = vmatpush1.bf16.msra.mxu0 0
        %3153 = vmatprep.subr.bf16.mxu0 0
        %3154 = vmatpush1.bf16.msra.mxu0 0
        %3155 = vmatprep.subr.bf16.mxu0 0
        %3156 = vmatpush1.bf16.msra.mxu0 0
        %3157 = vmatprep.subr.bf16.mxu0 0
        %3158 = vmatpush1.bf16.msra.mxu0 0
        %3159 = vmatprep.subr.bf16.mxu0 0
        %3160 = vmatpush1.bf16.msra.mxu0 0
        %3161 = vmatprep.subr.bf16.mxu0 0
        %3162 = vmatpush1.bf16.msra.mxu0 0
        %3163 = vmatprep.subr.bf16.mxu0 0
        %3164 = vmatpush1.bf16.msra.mxu0 0
        %3165 = vmatprep.subr.bf16.mxu0 0
        %3166 = vmatpush1.bf16.msra.mxu0 0
        %3167 = vmatprep.mubr.bf16.mxu0 0
        %3168 = vmatmul.mubr.bf16.gmra.mrb[0].mxu0 %v3133
        %v3169 = vpop.f32.mrb[0].mxu0
        %v3170 = vadd.f32 %v3098, %v3169
        %v3171 = vpop.f32.mrb[0].mxu0
        %v3172 = vpop.f32.mrb[0].mxu0
        %v3173 = vadd.f32 %v3098, %v3172
        %v3174 = vpop.f32.mrb[0].mxu0
        %3175 = vdwg.mxu0
        %v3176 = vadd.f32 %v1993, %v3170
        %v3177 = vadd.f32 %v1994, %v3173
        %v3178 = vld [vmem:[%s713 + $0x11] ss:$0 sm:$0xff]
        %v3179 = vld [vmem:[%s713 + $0x12] ss:$0 sm:$0xff]
        %v3180 = vsel %vm901, %v3176, 0.0
        %3181 = vadd.xlane.f32.xlu0 %v3180
        %v3182 = vpop.xlane.xlu0 %3181
        %v3183 = vsel %vm901, %v3177, 0.0
        %3184 = vadd.xlane.f32.xlu0 %v3183
        %v3185 = vpop.xlane.xlu0 %3184
        %v3186 = vmul.f32 %v3182, %v1970
        %v3187 = vmul.f32 %v3185, %v1970
        %v3188 = vsub.f32 %v3176, %v3186
        %v3189 = vsub.f32 %v3177, %v3187
        %v3190 = vmul.f32 %v3188, %v3188
        %v3191 = vmul.f32 %v3189, %v3189
        %v3192 = vsel %vm901, %v3190, 0.0
        %3193 = vadd.xlane.f32.xlu0 %v3192
        %v3194 = vpop.xlane.xlu0 %3193
        %v3195 = vsel %vm901, %v3191, 0.0
        %3196 = vadd.xlane.f32.xlu0 %v3195
        %v3197 = vpop.xlane.xlu0 %3196
        %v3198 = vmul.f32 %v3194, %v1970
        %v3199 = vmul.f32 %v3197, %v1970
        %v3200 = vadd.f32 %v3198, 1e-05
        %v3201 = vadd.f32 %v3199, 1e-05
        %v3202 = vrsqrt.pop %v3200
        %v3203 = vrsqrt.pop %v3201
        %v3204 = vmul.f32 %v3188, %v3202
        %v3205 = vmul.f32 %v3189, %v3203
        %v3206 = vmul.f32 %v3204, %v3178
        %v3207 = vmul.f32 %v3205, %v3178
        %v3208 = vadd.f32 %v3206, %v3179
        %v3209 = vadd.f32 %v3207, %v3179
        %v3210 = vld [vmem:[%s713 + $0x5] ss:$0 sm:$0xff]
        %v3211 = vld [vmem:[%s695] sm:$0xf]
        %v3212 = vld [vmem:[%s695 + $0x4] sm:$0xf]
        %v3213 = vld [vmem:[%s695 + $0x8] sm:$0xf]
        %v3214 = vld [vmem:[%s695 + $0xc] sm:$0xf]
        %v3215 = vld [vmem:[%s695 + $0x10] sm:$0xf]
        %v3216 = vld [vmem:[%s695 + $0x14] sm:$0xf]
        %v3217 = vld [vmem:[%s695 + $0x18] sm:$0xf]
        %v3218 = vld [vmem:[%s695 + $0x1c] sm:$0xf]
        %v3219 = vpack.c.bf16 %v3209, %v3208
        %v3228 = vunpack.c.l.b16 %v3211
        %v3229 = vunpack.c.l.b16 %v3212
        %v3230 = vunpack.c.l.b16 %v3213
        %v3231 = vunpack.c.l.b16 %v3214
        %v3232 = vunpack.c.l.b16 %v3215
        %v3233 = vunpack.c.l.b16 %v3216
        %v3234 = vunpack.c.l.b16 %v3217
        %v3235 = vunpack.c.l.b16 %v3218
        %v3236 = vpack.c.b16 %v3229, %v3228
        %v3237 = vpack.c.b16 %v3231, %v3230
        %v3238 = vpack.c.b16 %v3233, %v3232
        %v3239 = vpack.c.b16 %v3235, %v3234
        %v3245 = vsel %vm901, %v3219, 0
        %3247 = vmatprep.subr.bf16.mxu0 0
        %3248 = vmatpush1.bf16.msra.mxu0 %v3236
        %3249 = vmatprep.subr.bf16.mxu0 0
        %3250 = vmatpush1.bf16.msra.mxu0 %v3237
        %3251 = vmatprep.subr.bf16.mxu0 0
        %3252 = vmatpush1.bf16.msra.mxu0 %v3238
        %3253 = vmatprep.subr.bf16.mxu0 0
        %3254 = vmatpush1.bf16.msra.mxu0 %v3239
        %3255 = vmatprep.subr.bf16.mxu0 0
        %3256 = vmatpush1.bf16.msra.mxu0 0
        %3257 = vmatprep.subr.bf16.mxu0 0
        %3258 = vmatpush1.bf16.msra.mxu0 0
        %3259 = vmatprep.subr.bf16.mxu0 0
        %3260 = vmatpush1.bf16.msra.mxu0 0
        %3261 = vmatprep.subr.bf16.mxu0 0
        %3262 = vmatpush1.bf16.msra.mxu0 0
        %3263 = vmatprep.subr.bf16.mxu0 0
        %3264 = vmatpush1.bf16.msra.mxu0 0
        %3265 = vmatprep.subr.bf16.mxu0 0
        %3266 = vmatpush1.bf16.msra.mxu0 0
        %3267 = vmatprep.subr.bf16.mxu0 0
        %3268 = vmatpush1.bf16.msra.mxu0 0
        %3269 = vmatprep.subr.bf16.mxu0 0
        %3270 = vmatpush1.bf16.msra.mxu0 0
        %3271 = vmatprep.subr.bf16.mxu0 0
        %3272 = vmatpush1.bf16.msra.mxu0 0
        %3273 = vmatprep.subr.bf16.mxu0 0
        %3274 = vmatpush1.bf16.msra.mxu0 0
        %3275 = vmatprep.subr.bf16.mxu0 0
        %3276 = vmatpush1.bf16.msra.mxu0 0
        %3277 = vmatprep.subr.bf16.mxu0 0
        %3278 = vmatpush1.bf16.msra.mxu0 0
        %3279 = vmatprep.mubr.bf16.mxu0 0
        %3280 = vmatmul.mubr.bf16.gmra.mrb[0].mxu0 %v3245
        %v3281 = vpop.f32.mrb[0].mxu0
        %v3282 = vadd.f32 %v3210, %v3281
        %v3283 = vpop.f32.mrb[0].mxu0
        %v3284 = vpop.f32.mrb[0].mxu0
        %v3285 = vadd.f32 %v3210, %v3284
        %v3286 = vpop.f32.mrb[0].mxu0
        %3287 = vdwg.mxu0
        %v3288 = vmul.f32 %v3282, 0.5
        %v3289 = vmul.f32 %v3285, 0.5
        %v3290 = vmul.f32 %v3282, 0.70710677
        %v3291 = vmul.f32 %v3285, 0.70710677
        %v3292 = verf.f32.pop %v3290
        %v3293 = verf.f32.pop %v3291
        %v3294 = vadd.f32 %v3292, 1.0
        %v3295 = vadd.f32 %v3293, 1.0
        %v3296 = vmul.f32 %v3288, %v3294
        %v3297 = vmul.f32 %v3289, %v3295
        %v3298 = vld [vmem:[%s713 + $0x6] ss:$0 sm:$0xff]
        %v3299 = vld [vmem:[%s704] sm:$0xf]
        %v3300 = vld [vmem:[%s704 + $0x4] sm:$0xf]
        %v3301 = vld [vmem:[%s704 + $0x8] sm:$0xf]
        %v3302 = vld [vmem:[%s704 + $0xc] sm:$0xf]
        %v3303 = vld [vmem:[%s704 + $0x10] sm:$0xf]
        %v3304 = vld [vmem:[%s704 + $0x14] sm:$0xf]
        %v3305 = vld [vmem:[%s704 + $0x18] sm:$0xf]
        %v3306 = vld [vmem:[%s704 + $0x1c] sm:$0xf]
        %v3307 = vld [vmem:[%s704 + $0x20] sm:$0xf]
        %v3308 = vld [vmem:[%s704 + $0x24] sm:$0xf]
        %v3309 = vld [vmem:[%s704 + $0x28] sm:$0xf]
        %v3310 = vld [vmem:[%s704 + $0x2c] sm:$0xf]
        %v3311 = vld [vmem:[%s704 + $0x30] sm:$0xf]
        %v3312 = vld [vmem:[%s704 + $0x34] sm:$0xf]
        %v3313 = vld [vmem:[%s704 + $0x38] sm:$0xf]
        %v3314 = vld [vmem:[%s704 + $0x3c] sm:$0xf]
        %v3315 = vpack.c.bf16 %v3297, %v3296
        %v3332 = vunpack.c.l.b16 %v3299
        %v3333 = vunpack.c.l.b16 %v3300
        %v3334 = vunpack.c.l.b16 %v3301
        %v3335 = vunpack.c.l.b16 %v3302
        %v3336 = vunpack.c.l.b16 %v3303
        %v3337 = vunpack.c.l.b16 %v3304
        %v3338 = vunpack.c.l.b16 %v3305
        %v3339 = vunpack.c.l.b16 %v3306
        %v3340 = vunpack.c.l.b16 %v3307
        %v3341 = vunpack.c.l.b16 %v3308
        %v3342 = vunpack.c.l.b16 %v3309
        %v3343 = vunpack.c.l.b16 %v3310
        %v3344 = vunpack.c.l.b16 %v3311
        %v3345 = vunpack.c.l.b16 %v3312
        %v3346 = vunpack.c.l.b16 %v3313
        %v3347 = vunpack.c.l.b16 %v3314
        %v3348 = vpack.c.b16 %v3333, %v3332
        %v3349 = vpack.c.b16 %v3335, %v3334
        %v3350 = vpack.c.b16 %v3337, %v3336
        %v3351 = vpack.c.b16 %v3339, %v3338
        %v3352 = vpack.c.b16 %v3341, %v3340
        %v3353 = vpack.c.b16 %v3343, %v3342
        %v3354 = vpack.c.b16 %v3345, %v3344
        %v3355 = vpack.c.b16 %v3347, %v3346
        %3364 = vmatprep.subr.bf16.mxu0 0
        %3365 = vmatpush1.bf16.msra.mxu0 %v3348
        %3366 = vmatprep.subr.bf16.mxu0 0
        %3367 = vmatpush1.bf16.msra.mxu0 %v3349
        %3368 = vmatprep.subr.bf16.mxu0 0
        %3369 = vmatpush1.bf16.msra.mxu0 %v3350
        %3370 = vmatprep.subr.bf16.mxu0 0
        %3371 = vmatpush1.bf16.msra.mxu0 %v3351
        %3372 = vmatprep.subr.bf16.mxu0 0
        %3373 = vmatpush1.bf16.msra.mxu0 %v3352
        %3374 = vmatprep.subr.bf16.mxu0 0
        %3375 = vmatpush1.bf16.msra.mxu0 %v3353
        %3376 = vmatprep.subr.bf16.mxu0 0
        %3377 = vmatpush1.bf16.msra.mxu0 %v3354
        %3378 = vmatprep.subr.bf16.mxu0 0
        %3379 = vmatpush1.bf16.msra.mxu0 %v3355
        %3380 = vmatprep.subr.bf16.mxu0 0
        %3381 = vmatpush1.bf16.msra.mxu0 0
        %3382 = vmatprep.subr.bf16.mxu0 0
        %3383 = vmatpush1.bf16.msra.mxu0 0
        %3384 = vmatprep.subr.bf16.mxu0 0
        %3385 = vmatpush1.bf16.msra.mxu0 0
        %3386 = vmatprep.subr.bf16.mxu0 0
        %3387 = vmatpush1.bf16.msra.mxu0 0
        %3388 = vmatprep.subr.bf16.mxu0 0
        %3389 = vmatpush1.bf16.msra.mxu0 0
        %3390 = vmatprep.subr.bf16.mxu0 0
        %3391 = vmatpush1.bf16.msra.mxu0 0
        %3392 = vmatprep.subr.bf16.mxu0 0
        %3393 = vmatpush1.bf16.msra.mxu0 0
        %3394 = vmatprep.subr.bf16.mxu0 0
        %3395 = vmatpush1.bf16.msra.mxu0 0
        %3396 = vmatprep.mubr.bf16.mxu0 0
        %3397 = vmatmul.mubr.bf16.gmra.mrb[0].mxu0 %v3315
        %v3398 = vpop.f32.mrb[0].mxu0
        %v3399 = vadd.f32 %v3298, %v3398
        %v3400 = vpop.f32.mrb[0].mxu0
        %v3401 = vpop.f32.mrb[0].mxu0
        %v3402 = vadd.f32 %v3298, %v3401
        %v3403 = vpop.f32.mrb[0].mxu0
        %3404 = vdwg.mxu0
        %v3405 = vadd.f32 %v3208, %v3399
        %v3406 = vadd.f32 %v3209, %v3402
        %v3407 = vld [vmem:[%s713 + $0x13] ss:$0 sm:$0xff]
        %v3408 = vld [vmem:[%s713 + $0x14] ss:$0 sm:$0xff]
        %v3409 = vsel %vm901, %v3405, 0.0
        %3410 = vadd.xlane.f32.xlu0 %v3409
        %v3411 = vpop.xlane.xlu0 %3410
        %v3412 = vsel %vm901, %v3406, 0.0
        %3413 = vadd.xlane.f32.xlu0 %v3412
        %v3414 = vpop.xlane.xlu0 %3413
        %v3415 = vmul.f32 %v3411, %v1970
        %v3416 = vmul.f32 %v3414, %v1970
        %v3417 = vsub.f32 %v3405, %v3415
        %v3418 = vsub.f32 %v3406, %v3416
        %v3419 = vmul.f32 %v3417, %v3417
        %v3420 = vmul.f32 %v3418, %v3418
        %v3421 = vsel %vm901, %v3419, 0.0
        %3422 = vadd.xlane.f32.xlu0 %v3421
        %v3423 = vpop.xlane.xlu0 %3422
        %v3424 = vsel %vm901, %v3420, 0.0
        %3425 = vadd.xlane.f32.xlu0 %v3424
        %v3426 = vpop.xlane.xlu0 %3425
        %v3427 = vmul.f32 %v3423, %v1970
        %v3428 = vmul.f32 %v3426, %v1970
        %v3429 = vadd.f32 %v3427, 1e-05
        %v3430 = vadd.f32 %v3428, 1e-05
        %v3431 = vrsqrt.pop %v3429
        %v3432 = vrsqrt.pop %v3430
        %v3433 = vmul.f32 %v3417, %v3431
        %v3434 = vmul.f32 %v3418, %v3432
        %v3435 = vmul.f32 %v3433, %v3407
        %v3436 = vmul.f32 %v3434, %v3407
        %v3437 = vadd.f32 %v3435, %v3408
        %v3438 = vadd.f32 %v3436, %v3408
        %3439 = vst.msk [vmem:[#allocation20] sm:$0xff] %vm901, %v3437
        %3440 = vst.msk [vmem:[#allocation20 + $0x8] sm:$0xff] %vm901, %v3438
        // Predicated region
        $region121: #{modified_decoder_forward.1} parent=67 // pred_check
          %p3441 = pneg %p369
        $region122: #{modified_decoder_forward.1} parent=67 // pred_check_branch
          %3443 = sbr.rel (%p3441) target = $region124
        $region123: #{modified_decoder_forward.1} parent=67 // pred_region
          %s3444 = smul.u32 2, %s31
          %s3446 = ssub.s32 256, 256
          %3447 = vsyncadd [#allocation6], %s3446
          %s3448 = smul.addr %s3444, 128
          %s3449 = scalar_lea.hbm %s12, %s3448
          %s3450 = sshll.u32 [#allocation20], 4
          %s3451 = int_to_ptr.vmem [resolvable:$true] %s3450
          %3456 = dma.vmem_to_hbm [thread:$0]  %s3451, 256, %s3449, [#allocation6], 128, 128, 8
        $region124: #{modified_decoder_forward.1} parent=67 // pred_fallthru
          _
        // Predicated region
        $region125: #{modified_decoder_forward.1} parent=67 // pred_check
          %p3457 = pneg %p369
        $region126: #{modified_decoder_forward.1} parent=67 // pred_check_branch
          %3459 = sbr.rel (%p3457) target = $region128
        $region127: #{modified_decoder_forward.1} parent=67 // pred_region
          %3460 = dma.done [#allocation6], 256
        $region128: #{modified_decoder_forward.1} parent=67 // pred_fallthru
          _
      $region68: #{modified_decoder_forward.1} parent=5 // pred_fallthru
        _
      %p3461 = scmp.le.s32.totalorder 2, %s22
      // Predicated region
      $region129: #{modified_decoder_forward.1} parent=5 // pred_check
        %p3462 = pneg %p3461
      $region130: #{modified_decoder_forward.1} parent=5 // pred_check_branch
        %3464 = sbr.rel (%p3462) target = $region132
      $region131: #{modified_decoder_forward.1} parent=5 // pred_region
        %s3465 = ssub.s32 %s22, 2
      $region132: #{modified_decoder_forward.1} parent=5 // pred_fallthru
        _
    $region6: #{modified_decoder_forward.1} parent=1 // loop_footer
      %s26 = sadd.s32 1, %s22
    $region7: #{modified_decoder_forward.1} parent=1 // loop_footer_branch
      %21 = sbr.rel target = $region3
    $region8: #{modified_decoder_forward.1} parent=1 // loop_exit
      _
    %3466 = vsyncpa [#allocation5], 1
    %s3467 = scalar_lea.sflag [#allocation5], 1
    %3468 = vsyncpa %s3467, 1
    %3469 = vsyncpa [#allocation8], 1
    %3470 = vsyncpa [#allocation11], 1
    %3471 = vsyncpa [#allocation6], 1
    %s3472 = scalar_lea.sflag [#allocation6], 1
    %3473 = vsyncpa %s3472, 1

// kernel: modified_decoder_forward.1
$region0: #{modified_decoder_forward.1}
  #allocation0 [shape = 'u32[]', space=smem, size = 0x4, offset = 0x4, fixed_abs, tag = 'smem constant byte address 0x4 - core index']
  #allocation1 [shape = 'u32[144,128]{1,0:T(1,128)}', space=vmem, size = 0x12000, scoped, tag = 'internal scratch']
  #allocation2 [shape = 'f32[2,8,8]{2,1,0:T(8,128)}', space=vmem, size = 0x2000, scoped, tag = 'scratch operand']
  #allocation3 [shape = 'f32[2,1,8]{2,1,0:T(1,128)}', space=vmem, size = 0x400, scoped, tag = 'scratch operand']
  %s0 = inlined_call_operand.hbm [shape: f32[2,8,64], index: 0, kind: input, shape index: {}]
  %s1 = inlined_call_operand.hbm [shape: f32[2,8,64], index: 1, kind: input, shape index: {}]
  %s2 = inlined_call_operand.hbm [shape: f32[2,1,8], index: 2, kind: input, shape index: {}]
  %s3 = inlined_call_operand.hbm [shape: f32[2,1,8], index: 3, kind: input, shape index: {}]
  %s4 = inlined_call_operand.hbm [shape: f32[2,64,192], index: 4, kind: input, shape index: {}]
  %s5 = inlined_call_operand.hbm [shape: f32[2,64,64], index: 5, kind: input, shape index: {}]
  %s6 = inlined_call_operand.hbm [shape: f32[2,64,64], index: 6, kind: input, shape index: {}]
  %s7 = inlined_call_operand.hbm [shape: f32[2,64,128], index: 7, kind: input, shape index: {}]
  %s8 = inlined_call_operand.hbm [shape: f32[2,64,64], index: 8, kind: input, shape index: {}]
  %s9 = inlined_call_operand.hbm [shape: f32[2,64,128], index: 9, kind: input, shape index: {}]
  %s10 = inlined_call_operand.hbm [shape: f32[2,128,64], index: 10, kind: input, shape index: {}]
  %s11 = inlined_call_operand.hbm [shape: f32[2,13,192], index: 11, kind: input, shape index: {}]
  %s12 = inlined_call_operand.hbm [shape: f32[2,8,64], index: 12, kind: output, shape index: {}]
  %s13 = sld [smem:[#allocation0]]
  $region133: #{modified_decoder_forward.1} parent=0
    _
  %s15 = ssub.s32 1, %s13
  %s16 = scalar_select 0, %s15, %s13
  $region1: #{modified_decoder_forward.1} parent=0
    #allocation4 [shape = 'u8[8192]{0}', space=vmem, size = 0x2000, scoped, tag = 'input window, operand 0, single buffered']
    #allocation5 [shape = 's32[2]{0}', space=sflag, size = 0x8, scoped, tag = 'scoped memory for modified_decoder_forward.1']
    #allocation6 [shape = 's32[2]{0}', space=sflag, size = 0x8, scoped, tag = 'scoped memory for modified_decoder_forward.1']
    #allocation7 [shape = 'u8[8192]{0}', space=vmem, size = 0x2000, scoped, tag = 'input window, operand 1, single buffered']
    #allocation8 [shape = 's32[1]{0}', space=sflag, size = 0x4, scoped, tag = 'scoped memory for modified_decoder_forward.1']
    #allocation9 [shape = 'u8[1024]{0}', space=vmem, size = 0x400, scoped, tag = 'input window, operand 2, single buffered']
    #allocation10 [shape = 'u8[1024]{0}', space=vmem, size = 0x400, scoped, tag = 'input window, operand 3, single buffered']
    #allocation11 [shape = 's32[1]{0}', space=sflag, size = 0x4, scoped, tag = 'scoped memory for modified_decoder_forward.1']
    #allocation12 [shape = 'u8[131072]{0}', space=vmem, size = 0x20000, scoped, tag = 'input window, operand 4']
    #allocation13 [shape = 'u8[65536]{0}', space=vmem, size = 0x10000, scoped, tag = 'input window, operand 5']
    #allocation14 [shape = 'u8[65536]{0}', space=vmem, size = 0x10000, scoped, tag = 'input window, operand 6']
    #allocation15 [shape = 'u8[65536]{0}', space=vmem, size = 0x10000, scoped, tag = 'input window, operand 7']
    #allocation16 [shape = 'u8[65536]{0}', space=vmem, size = 0x10000, scoped, tag = 'input window, operand 8']
    #allocation17 [shape = 'u8[65536]{0}', space=vmem, size = 0x10000, scoped, tag = 'input window, operand 9']
    #allocation18 [shape = 'u8[131072]{0}', space=vmem, size = 0x20000, scoped, tag = 'input window, operand 10']
    #allocation19 [shape = 'u8[32768]{0}', space=vmem, size = 0x8000, scoped, tag = 'input window, operand 11']
    #allocation20 [shape = 'u8[8192]{0}', space=vmem, size = 0x2000, scoped, tag = 'output window, operand 0, single buffered']
    %17 = vsyncpa [#allocation5], 0
    %18 = vsyncpa [#allocation8], 0
    %19 = vsyncpa [#allocation11], 0
    %20 = vsyncpa [#allocation6], 0
    loop: start=0, step=1, limit=4
    $region2: #{modified_decoder_forward.1} parent=1 // loop_pre_header
      _
    $region3: #{modified_decoder_forward.1} parent=1 // loop_header
      %s22 = sphi 0, %s26
      %p23 = scmp.ge.s32.totalorder %s22, 4
      %s29 = sphi 0, %s41
      %s30 = sphi 0, %s37
      %s31 = sphi 0, %s29
      %s32 = sphi 0, %s30
      %s33 = sphi 0, %s31
      %s34 = sphi 0, %s32
      %s44 = sphi 0, %s46
      %s47 = sphi 0, %s44
      %s48 = sphi 0, %s47
      %s64 = sphi 0, %s48
      %s70 = sphi 0, %s72
      %s73 = sphi 0, %s70
      %s74 = sphi 0, %s73
      %s90 = sphi 0, %s74
      %s96 = sphi 0, %s98
      %s99 = sphi 0, %s96
      %s100 = sphi 0, %s99
      %s116 = sphi 0, %s100
      %s122 = sphi 0, %s124
      %s125 = sphi 0, %s122
      %s126 = sphi 0, %s125
      %s142 = sphi 0, %s126
      %s148 = sphi 0, %s150
      %s151 = sphi 0, %s148
      %s152 = sphi 0, %s151
      %s168 = sphi 0, %s152
      %s174 = sphi 0, %s176
      %s177 = sphi 0, %s174
      %s178 = sphi 0, %s177
      %s194 = sphi 0, %s178
      %s200 = sphi 0, %s202
      %s203 = sphi 0, %s200
      %s204 = sphi 0, %s203
      %s220 = sphi 0, %s204
      %s226 = sphi 0, %s228
      %s229 = sphi 0, %s226
      %s230 = sphi 0, %s229
      %s246 = sphi 0, %s230
      %s252 = sphi 0, %s254
      %s255 = sphi 0, %s252
      %s256 = sphi 0, %s255
      %s272 = sphi 0, %s256
      %s278 = sphi 0, %s280
      %s281 = sphi 0, %s278
      %s282 = sphi 0, %s281
      %s298 = sphi 0, %s282
      %s304 = sphi 0, %s306
      %s307 = sphi 0, %s304
      %s308 = sphi 0, %s307
      %s324 = sphi 0, %s308
      %s330 = sphi 0, %s332
      %s333 = sphi 0, %s330
      %s334 = sphi 0, %s333
      %s350 = sphi 0, %s334
      %s356 = sphi 0, %s358
      %s359 = sphi 0, %s356
      %s360 = sphi 0, %s359
      %s376 = sphi 0, %s360
    $region4: #{modified_decoder_forward.1} parent=1 // loop_header_branch
      %25 = sbr.rel (%p23) target = $region8
    $region5: #{modified_decoder_forward.1} parent=1 // loop_body
      %s27 = ssub.s32 %s22, 1
      %s28 = ssub.s32 %s22, 2
      %s35 = sadd.s32 1, %s30
      %p36 = scmp.ge.s32.totalorder %s35, 2
      %s37 = scalar_select %p36, 0, %s35
      %s38 = sadd.s32 1, %s29
      %s39 = scalar_select %p36, %s38, %s29
      %p40 = scmp.ge.s32.totalorder %s39, 1
      %s41 = scalar_select %p40, 0, %s39
      %s42 = ssub.s32 %s29, %s41
      %p43 = scmp.eq.s32.totalorder %s42, 0
      %s45 = sadd.s32 %s44, 1
      %s46 = scalar_select %p43, %s44, %s45
      %p49 = pneg %p43
      %p50 = scmp.eq.s32.totalorder %s22, 1
      %p51 = por %p49, %p50
      %p52 = scmp.ne.s32.totalorder %s44, %s47
      %p53 = scmp.eq.s32.totalorder %s22, 0
      %p54 = por %p52, %p53
      %p55 = scmp.ne.s32.totalorder %s44, %s47
      %p56 = scmp.eq.s32.totalorder %s27, 1
      %p57 = por %p55, %p56
      %p58 = scmp.ne.s32.totalorder %s47, %s48
      %p59 = scmp.eq.s32.totalorder %s27, 0
      %p60 = por %p58, %p59
      %p61 = scmp.ne.s32.totalorder %s47, %s48
      %p62 = scmp.eq.s32.totalorder %s28, 1
      %p63 = por %p61, %p62
      %p65 = scmp.ne.s32.totalorder %s48, %s64
      %p66 = scmp.eq.s32.totalorder %s28, 0
      %p67 = por %p65, %p66
      %s68 = ssub.s32 %s29, %s41
      %p69 = scmp.eq.s32.totalorder %s68, 0
      %s71 = sadd.s32 %s70, 1
      %s72 = scalar_select %p69, %s70, %s71
      %p75 = pneg %p69
      %p76 = scmp.eq.s32.totalorder %s22, 1
      %p77 = por %p75, %p76
      %p78 = scmp.ne.s32.totalorder %s70, %s73
      %p79 = scmp.eq.s32.totalorder %s22, 0
      %p80 = por %p78, %p79
      %p81 = scmp.ne.s32.totalorder %s70, %s73
      %p82 = scmp.eq.s32.totalorder %s27, 1
      %p83 = por %p81, %p82
      %p84 = scmp.ne.s32.totalorder %s73, %s74
      %p85 = scmp.eq.s32.totalorder %s27, 0
      %p86 = por %p84, %p85
      %p87 = scmp.ne.s32.totalorder %s73, %s74
      %p88 = scmp.eq.s32.totalorder %s28, 1
      %p89 = por %p87, %p88
      %p91 = scmp.ne.s32.totalorder %s74, %s90
      %p92 = scmp.eq.s32.totalorder %s28, 0
      %p93 = por %p91, %p92
      %s94 = ssub.s32 %s29, %s41
      %p95 = scmp.eq.s32.totalorder %s94, 0
      %s97 = sadd.s32 %s96, 1
      %s98 = scalar_select %p95, %s96, %s97
      %p101 = pneg %p95
      %p102 = scmp.eq.s32.totalorder %s22, 1
      %p103 = por %p101, %p102
      %p104 = scmp.ne.s32.totalorder %s96, %s99
      %p105 = scmp.eq.s32.totalorder %s22, 0
      %p106 = por %p104, %p105
      %p107 = scmp.ne.s32.totalorder %s96, %s99
      %p108 = scmp.eq.s32.totalorder %s27, 1
      %p109 = por %p107, %p108
      %p110 = scmp.ne.s32.totalorder %s99, %s100
      %p111 = scmp.eq.s32.totalorder %s27, 0
      %p112 = por %p110, %p111
      %p113 = scmp.ne.s32.totalorder %s99, %s100
      %p114 = scmp.eq.s32.totalorder %s28, 1
      %p115 = por %p113, %p114
      %p117 = scmp.ne.s32.totalorder %s100, %s116
      %p118 = scmp.eq.s32.totalorder %s28, 0
      %p119 = por %p117, %p118
      %s120 = ssub.s32 %s29, %s41
      %p121 = scmp.eq.s32.totalorder %s120, 0
      %s123 = sadd.s32 %s122, 1
      %s124 = scalar_select %p121, %s122, %s123
      %p127 = pneg %p121
      %p128 = scmp.eq.s32.totalorder %s22, 1
      %p129 = por %p127, %p128
      %p130 = scmp.ne.s32.totalorder %s122, %s125
      %p131 = scmp.eq.s32.totalorder %s22, 0
      %p132 = por %p130, %p131
      %p133 = scmp.ne.s32.totalorder %s122, %s125
      %p134 = scmp.eq.s32.totalorder %s27, 1
      %p135 = por %p133, %p134
      %p136 = scmp.ne.s32.totalorder %s125, %s126
      %p137 = scmp.eq.s32.totalorder %s27, 0
      %p138 = por %p136, %p137
      %p139 = scmp.ne.s32.totalorder %s125, %s126
      %p140 = scmp.eq.s32.totalorder %s28, 1
      %p141 = por %p139, %p140
      %p143 = scmp.ne.s32.totalorder %s126, %s142
      %p144 = scmp.eq.s32.totalorder %s28, 0
      %p145 = por %p143, %p144
      %s146 = ssub.s32 %s30, %s37
      %p147 = scmp.eq.s32.totalorder %s146, 0
      %s149 = sadd.s32 %s148, 1
      %s150 = scalar_select %p147, %s148, %s149
      %p153 = pneg %p147
      %p154 = scmp.eq.s32.totalorder %s22, 1
      %p155 = por %p153, %p154
      %p156 = scmp.ne.s32.totalorder %s148, %s151
      %p157 = scmp.eq.s32.totalorder %s22, 0
      %p158 = por %p156, %p157
      %p159 = scmp.ne.s32.totalorder %s148, %s151
      %p160 = scmp.eq.s32.totalorder %s27, 1
      %p161 = por %p159, %p160
      %p162 = scmp.ne.s32.totalorder %s151, %s152
      %p163 = scmp.eq.s32.totalorder %s27, 0
      %p164 = por %p162, %p163
      %p165 = scmp.ne.s32.totalorder %s151, %s152
      %p166 = scmp.eq.s32.totalorder %s28, 1
      %p167 = por %p165, %p166
      %p169 = scmp.ne.s32.totalorder %s152, %s168
      %p170 = scmp.eq.s32.totalorder %s28, 0
      %p171 = por %p169, %p170
      %s172 = ssub.s32 %s30, %s37
      %p173 = scmp.eq.s32.totalorder %s172, 0
      %s175 = sadd.s32 %s174, 1
      %s176 = scalar_select %p173, %s174, %s175
      %p179 = pneg %p173
      %p180 = scmp.eq.s32.totalorder %s22, 1
      %p181 = por %p179, %p180
      %p182 = scmp.ne.s32.totalorder %s174, %s177
      %p183 = scmp.eq.s32.totalorder %s22, 0
      %p184 = por %p182, %p183
      %p185 = scmp.ne.s32.totalorder %s174, %s177
      %p186 = scmp.eq.s32.totalorder %s27, 1
      %p187 = por %p185, %p186
      %p188 = scmp.ne.s32.totalorder %s177, %s178
      %p189 = scmp.eq.s32.totalorder %s27, 0
      %p190 = por %p188, %p189
      %p191 = scmp.ne.s32.totalorder %s177, %s178
      %p192 = scmp.eq.s32.totalorder %s28, 1
      %p193 = por %p191, %p192
      %p195 = scmp.ne.s32.totalorder %s178, %s194
      %p196 = scmp.eq.s32.totalorder %s28, 0
      %p197 = por %p195, %p196
      %s198 = ssub.s32 %s30, %s37
      %p199 = scmp.eq.s32.totalorder %s198, 0
      %s201 = sadd.s32 %s200, 1
      %s202 = scalar_select %p199, %s200, %s201
      %p205 = pneg %p199
      %p206 = scmp.eq.s32.totalorder %s22, 1
      %p207 = por %p205, %p206
      %p208 = scmp.ne.s32.totalorder %s200, %s203
      %p209 = scmp.eq.s32.totalorder %s22, 0
      %p210 = por %p208, %p209
      %p211 = scmp.ne.s32.totalorder %s200, %s203
      %p212 = scmp.eq.s32.totalorder %s27, 1
      %p213 = por %p211, %p212
      %p214 = scmp.ne.s32.totalorder %s203, %s204
      %p215 = scmp.eq.s32.totalorder %s27, 0
      %p216 = por %p214, %p215
      %p217 = scmp.ne.s32.totalorder %s203, %s204
      %p218 = scmp.eq.s32.totalorder %s28, 1
      %p219 = por %p217, %p218
      %p221 = scmp.ne.s32.totalorder %s204, %s220
      %p222 = scmp.eq.s32.totalorder %s28, 0
      %p223 = por %p221, %p222
      %s224 = ssub.s32 %s30, %s37
      %p225 = scmp.eq.s32.totalorder %s224, 0
      %s227 = sadd.s32 %s226, 1
      %s228 = scalar_select %p225, %s226, %s227
      %p231 = pneg %p225
      %p232 = scmp.eq.s32.totalorder %s22, 1
      %p233 = por %p231, %p232
      %p234 = scmp.ne.s32.totalorder %s226, %s229
      %p235 = scmp.eq.s32.totalorder %s22, 0
      %p236 = por %p234, %p235
      %p237 = scmp.ne.s32.totalorder %s226, %s229
      %p238 = scmp.eq.s32.totalorder %s27, 1
      %p239 = por %p237, %p238
      %p240 = scmp.ne.s32.totalorder %s229, %s230
      %p241 = scmp.eq.s32.totalorder %s27, 0
      %p242 = por %p240, %p241
      %p243 = scmp.ne.s32.totalorder %s229, %s230
      %p244 = scmp.eq.s32.totalorder %s28, 1
      %p245 = por %p243, %p244
      %p247 = scmp.ne.s32.totalorder %s230, %s246
      %p248 = scmp.eq.s32.totalorder %s28, 0
      %p249 = por %p247, %p248
      %s250 = ssub.s32 %s30, %s37
      %p251 = scmp.eq.s32.totalorder %s250, 0
      %s253 = sadd.s32 %s252, 1
      %s254 = scalar_select %p251, %s252, %s253
      %p257 = pneg %p251
      %p258 = scmp.eq.s32.totalorder %s22, 1
      %p259 = por %p257, %p258
      %p260 = scmp.ne.s32.totalorder %s252, %s255
      %p261 = scmp.eq.s32.totalorder %s22, 0
      %p262 = por %p260, %p261
      %p263 = scmp.ne.s32.totalorder %s252, %s255
      %p264 = scmp.eq.s32.totalorder %s27, 1
      %p265 = por %p263, %p264
      %p266 = scmp.ne.s32.totalorder %s255, %s256
      %p267 = scmp.eq.s32.totalorder %s27, 0
      %p268 = por %p266, %p267
      %p269 = scmp.ne.s32.totalorder %s255, %s256
      %p270 = scmp.eq.s32.totalorder %s28, 1
      %p271 = por %p269, %p270
      %p273 = scmp.ne.s32.totalorder %s256, %s272
      %p274 = scmp.eq.s32.totalorder %s28, 0
      %p275 = por %p273, %p274
      %s276 = ssub.s32 %s30, %s37
      %p277 = scmp.eq.s32.totalorder %s276, 0
      %s279 = sadd.s32 %s278, 1
      %s280 = scalar_select %p277, %s278, %s279
      %p283 = pneg %p277
      %p284 = scmp.eq.s32.totalorder %s22, 1
      %p285 = por %p283, %p284
      %p286 = scmp.ne.s32.totalorder %s278, %s281
      %p287 = scmp.eq.s32.totalorder %s22, 0
      %p288 = por %p286, %p287
      %p289 = scmp.ne.s32.totalorder %s278, %s281
      %p290 = scmp.eq.s32.totalorder %s27, 1
      %p291 = por %p289, %p290
      %p292 = scmp.ne.s32.totalorder %s281, %s282
      %p293 = scmp.eq.s32.totalorder %s27, 0
      %p294 = por %p292, %p293
      %p295 = scmp.ne.s32.totalorder %s281, %s282
      %p296 = scmp.eq.s32.totalorder %s28, 1
      %p297 = por %p295, %p296
      %p299 = scmp.ne.s32.totalorder %s282, %s298
      %p300 = scmp.eq.s32.totalorder %s28, 0
      %p301 = por %p299, %p300
      %s302 = ssub.s32 %s30, %s37
      %p303 = scmp.eq.s32.totalorder %s302, 0
      %s305 = sadd.s32 %s304, 1
      %s306 = scalar_select %p303, %s304, %s305
      %p309 = pneg %p303
      %p310 = scmp.eq.s32.totalorder %s22, 1
      %p311 = por %p309, %p310
      %p312 = scmp.ne.s32.totalorder %s304, %s307
      %p313 = scmp.eq.s32.totalorder %s22, 0
      %p314 = por %p312, %p313
      %p315 = scmp.ne.s32.totalorder %s304, %s307
      %p316 = scmp.eq.s32.totalorder %s27, 1
      %p317 = por %p315, %p316
      %p318 = scmp.ne.s32.totalorder %s307, %s308
      %p319 = scmp.eq.s32.totalorder %s27, 0
      %p320 = por %p318, %p319
      %p321 = scmp.ne.s32.totalorder %s307, %s308
      %p322 = scmp.eq.s32.totalorder %s28, 1
      %p323 = por %p321, %p322
      %p325 = scmp.ne.s32.totalorder %s308, %s324
      %p326 = scmp.eq.s32.totalorder %s28, 0
      %p327 = por %p325, %p326
      %s328 = ssub.s32 %s30, %s37
      %p329 = scmp.eq.s32.totalorder %s328, 0
      %s331 = sadd.s32 %s330, 1
      %s332 = scalar_select %p329, %s330, %s331
      %p335 = pneg %p329
      %p336 = scmp.eq.s32.totalorder %s22, 1
      %p337 = por %p335, %p336
      %p338 = scmp.ne.s32.totalorder %s330, %s333
      %p339 = scmp.eq.s32.totalorder %s22, 0
      %p340 = por %p338, %p339
      %p341 = scmp.ne.s32.totalorder %s330, %s333
      %p342 = scmp.eq.s32.totalorder %s27, 1
      %p343 = por %p341, %p342
      %p344 = scmp.ne.s32.totalorder %s333, %s334
      %p345 = scmp.eq.s32.totalorder %s27, 0
      %p346 = por %p344, %p345
      %p347 = scmp.ne.s32.totalorder %s333, %s334
      %p348 = scmp.eq.s32.totalorder %s28, 1
      %p349 = por %p347, %p348
      %p351 = scmp.ne.s32.totalorder %s334, %s350
      %p352 = scmp.eq.s32.totalorder %s28, 0
      %p353 = por %p351, %p352
      %s354 = ssub.s32 %s29, %s41
      %p355 = scmp.eq.s32.totalorder %s354, 0
      %s357 = sadd.s32 %s356, 1
      %s358 = scalar_select %p355, %s356, %s357
      %p361 = pneg %p355
      %p362 = scmp.eq.s32.totalorder %s22, 1
      %p363 = por %p361, %p362
      %p364 = scmp.ne.s32.totalorder %s356, %s359
      %p365 = scmp.eq.s32.totalorder %s22, 0
      %p366 = por %p364, %p365
      %p367 = scmp.ne.s32.totalorder %s356, %s359
      %p368 = scmp.eq.s32.totalorder %s27, 1
      %p369 = por %p367, %p368
      %p370 = scmp.ne.s32.totalorder %s359, %s360
      %p371 = scmp.eq.s32.totalorder %s27, 0
      %p372 = por %p370, %p371
      %p373 = scmp.ne.s32.totalorder %s359, %s360
      %p374 = scmp.eq.s32.totalorder %s28, 1
      %p375 = por %p373, %p374
      %p377 = scmp.ne.s32.totalorder %s360, %s376
      %p378 = scmp.eq.s32.totalorder %s28, 0
      %p379 = por %p377, %p378
      %p380 = scmp.le.s32.totalorder 1, %s22
      %p381 = scmp.lt.s32.totalorder %s22, 3
      %p382 = pnand %p380, %p381
      %p383 = pneg %p382
      // Predicated region
      $region9: #{modified_decoder_forward.1} parent=5 // pred_check
        _
      $region10: #{modified_decoder_forward.1} parent=5 // pred_check_branch
        %385 = sbr.rel (%p382) target = $region12
      $region11: #{modified_decoder_forward.1} parent=5 // pred_region
        %s386 = ssub.s32 %s22, 1
        // Predicated region
        $region13: #{modified_decoder_forward.1} parent=11 // pred_check
          %p387 = pneg %p60
        $region14: #{modified_decoder_forward.1} parent=11 // pred_check_branch
          %389 = sbr.rel (%p387) target = $region16
        $region15: #{modified_decoder_forward.1} parent=11 // pred_region
          %s390 = smul.u32 2, %s31
          %s392 = ssub.s32 256, 256
          %393 = vsyncadd [#allocation5], %s392
          %s394 = smul.addr %s390, 128
          %s395 = scalar_lea.hbm %s0, %s394
          %s396 = sshll.u32 [#allocation4], 4
          %s397 = int_to_ptr.vmem [resolvable:$true] %s396
          %402 = dma.hbm_to_vmem [thread:$0]  %s395, 256, %s397, [#allocation5], 128, 128, 8
        $region16: #{modified_decoder_forward.1} parent=11 // pred_fallthru
          _
        // Predicated region
        $region17: #{modified_decoder_forward.1} parent=11 // pred_check
          %p403 = pneg %p86
        $region18: #{modified_decoder_forward.1} parent=11 // pred_check_branch
          %405 = sbr.rel (%p403) target = $region20
        $region19: #{modified_decoder_forward.1} parent=11 // pred_region
          %s406 = smul.u32 2, %s31
          %s408 = ssub.s32 256, 256
          %409 = vsyncadd [#allocation8], %s408
          %s410 = smul.addr %s406, 128
          %s411 = scalar_lea.hbm %s1, %s410
          %s412 = sshll.u32 [#allocation7], 4
          %s413 = int_to_ptr.vmem [resolvable:$true] %s412
          %418 = dma.hbm_to_vmem [thread:$0]  %s411, 256, %s413, [#allocation8], 128, 128, 8
        $region20: #{modified_decoder_forward.1} parent=11 // pred_fallthru
          _
        // Predicated region
        $region21: #{modified_decoder_forward.1} parent=11 // pred_check
          %p419 = pneg %p112
        $region22: #{modified_decoder_forward.1} parent=11 // pred_check_branch
          %421 = sbr.rel (%p419) target = $region24
        $region23: #{modified_decoder_forward.1} parent=11 // pred_region
          %s422 = smul.u32 2, %s31
          %s424 = ssub.s32 32, 32
          %425 = vsyncadd [#allocation8], %s424
          %s426 = smul.addr %s422, 16
          %s427 = scalar_lea.hbm %s2, %s426
          %s428 = sshll.u32 [#allocation9], 4
          %s429 = int_to_ptr.vmem [resolvable:$true] %s428
          %434 = dma.hbm_to_vmem [thread:$0]  %s427, 32, %s429, [#allocation8], 16, 16, 1
        $region24: #{modified_decoder_forward.1} parent=11 // pred_fallthru
          _
        // Predicated region
        $region25: #{modified_decoder_forward.1} parent=11 // pred_check
          %p435 = pneg %p138
        $region26: #{modified_decoder_forward.1} parent=11 // pred_check_branch
          %437 = sbr.rel (%p435) target = $region28
        $region27: #{modified_decoder_forward.1} parent=11 // pred_region
          %s438 = smul.u32 2, %s31
          %s440 = ssub.s32 32, 32
          %441 = vsyncadd [#allocation11], %s440
          %s442 = smul.addr %s438, 16
          %s443 = scalar_lea.hbm %s3, %s442
          %s444 = sshll.u32 [#allocation10], 4
          %s445 = int_to_ptr.vmem [resolvable:$true] %s444
          %450 = dma.hbm_to_vmem [thread:$0]  %s443, 32, %s445, [#allocation11], 16, 16, 1
        $region28: #{modified_decoder_forward.1} parent=11 // pred_fallthru
          _
      $region12: #{modified_decoder_forward.1} parent=5 // pred_fallthru
        _
      %p451 = scmp.lt.s32.totalorder %s22, 2
      // Predicated region
      $region29: #{modified_decoder_forward.1} parent=5 // pred_check
        %p452 = pneg %p451
      $region30: #{modified_decoder_forward.1} parent=5 // pred_check_branch
        %454 = sbr.rel (%p452) target = $region32
      $region31: #{modified_decoder_forward.1} parent=5 // pred_region
        // Predicated region
        $region33: #{modified_decoder_forward.1} parent=31 // pred_check
          %p455 = pneg %p158
        $region34: #{modified_decoder_forward.1} parent=31 // pred_check_branch
          %457 = sbr.rel (%p455) target = $region36
        $region35: #{modified_decoder_forward.1} parent=31 // pred_region
          %s458 = sand.u32 %s22, 1
          %s459 = scalar_lea.sflag [#allocation5], %s458
          %s460 = sand.u32 %s148, 1
          %s461 = smul.addr %s460, 128
          %s462 = scalar_lea.vmem [#allocation12], %s461
          %s464 = ssub.s32 2048, 2048
          %465 = vsyncadd %s459, %s464
          %s466 = smul.addr %s30, 16
          %s467 = smul.addr %s466, 128
          %s468 = scalar_lea.hbm %s4, %s467
          %s469 = sshll.u32 %s462, 4
          %s470 = int_to_ptr.vmem [resolvable:$true] %s469
          %475 = dma.hbm_to_vmem [thread:$0]  %s468, 2048, %s470, %s459, 256, 256, 16
        $region36: #{modified_decoder_forward.1} parent=31 // pred_fallthru
          _
        // Predicated region
        $region37: #{modified_decoder_forward.1} parent=31 // pred_check
          %p476 = pneg %p184
        $region38: #{modified_decoder_forward.1} parent=31 // pred_check_branch
          %478 = sbr.rel (%p476) target = $region40
        $region39: #{modified_decoder_forward.1} parent=31 // pred_region
          %s479 = sand.u32 %s22, 1
          %s480 = scalar_lea.sflag [#allocation5], %s479
          %s481 = sand.u32 %s174, 1
          %s482 = smul.addr %s481, 64
          %s483 = scalar_lea.vmem [#allocation13], %s482
          %s485 = ssub.s32 1024, 1024
          %486 = vsyncadd %s480, %s485
          %s487 = smul.addr %s30, 8
          %s488 = smul.addr %s487, 128
          %s489 = scalar_lea.hbm %s5, %s488
          %s490 = sshll.u32 %s483, 4
          %s491 = int_to_ptr.vmem [resolvable:$true] %s490
          %496 = dma.hbm_to_vmem [thread:$0]  %s489, 1024, %s491, %s480, 128, 128, 8
        $region40: #{modified_decoder_forward.1} parent=31 // pred_fallthru
          _
        // Predicated region
        $region41: #{modified_decoder_forward.1} parent=31 // pred_check
          %p497 = pneg %p210
        $region42: #{modified_decoder_forward.1} parent=31 // pred_check_branch
          %499 = sbr.rel (%p497) target = $region44
        $region43: #{modified_decoder_forward.1} parent=31 // pred_region
          %s500 = sand.u32 %s22, 1
          %s501 = scalar_lea.sflag [#allocation5], %s500
          %s502 = sand.u32 %s200, 1
          %s503 = smul.addr %s502, 64
          %s504 = scalar_lea.vmem [#allocation14], %s503
          %s506 = ssub.s32 1024, 1024
          %507 = vsyncadd %s501, %s506
          %s508 = smul.addr %s30, 8
          %s509 = smul.addr %s508, 128
          %s510 = scalar_lea.hbm %s6, %s509
          %s511 = sshll.u32 %s504, 4
          %s512 = int_to_ptr.vmem [resolvable:$true] %s511
          %517 = dma.hbm_to_vmem [thread:$0]  %s510, 1024, %s512, %s501, 128, 128, 8
        $region44: #{modified_decoder_forward.1} parent=31 // pred_fallthru
          _
        // Predicated region
        $region45: #{modified_decoder_forward.1} parent=31 // pred_check
          %p518 = pneg %p236
        $region46: #{modified_decoder_forward.1} parent=31 // pred_check_branch
          %520 = sbr.rel (%p518) target = $region48
        $region47: #{modified_decoder_forward.1} parent=31 // pred_region
          %s521 = sand.u32 %s22, 1
          %s522 = scalar_lea.sflag [#allocation5], %s521
          %s523 = sand.u32 %s226, 1
          %s524 = smul.addr %s523, 64
          %s525 = scalar_lea.vmem [#allocation15], %s524
          %s527 = ssub.s32 1024, 1024
          %528 = vsyncadd %s522, %s527
          %s529 = smul.addr %s30, 8
          %s530 = smul.addr %s529, 128
          %s531 = scalar_lea.hbm %s7, %s530
          %s532 = sshll.u32 %s525, 4
          %s533 = int_to_ptr.vmem [resolvable:$true] %s532
          %538 = dma.hbm_to_vmem [thread:$0]  %s531, 1024, %s533, %s522, 128, 128, 8
        $region48: #{modified_decoder_forward.1} parent=31 // pred_fallthru
          _
        // Predicated region
        $region49: #{modified_decoder_forward.1} parent=31 // pred_check
          %p539 = pneg %p262
        $region50: #{modified_decoder_forward.1} parent=31 // pred_check_branch
          %541 = sbr.rel (%p539) target = $region52
        $region51: #{modified_decoder_forward.1} parent=31 // pred_region
          %s542 = sand.u32 %s22, 1
          %s543 = scalar_lea.sflag [#allocation5], %s542
          %s544 = sand.u32 %s252, 1
          %s545 = smul.addr %s544, 64
          %s546 = scalar_lea.vmem [#allocation16], %s545
          %s548 = ssub.s32 1024, 1024
          %549 = vsyncadd %s543, %s548
          %s550 = smul.addr %s30, 8
          %s551 = smul.addr %s550, 128
          %s552 = scalar_lea.hbm %s8, %s551
          %s553 = sshll.u32 %s546, 4
          %s554 = int_to_ptr.vmem [resolvable:$true] %s553
          %559 = dma.hbm_to_vmem [thread:$0]  %s552, 1024, %s554, %s543, 128, 128, 8
        $region52: #{modified_decoder_forward.1} parent=31 // pred_fallthru
          _
        // Predicated region
        $region53: #{modified_decoder_forward.1} parent=31 // pred_check
          %p560 = pneg %p288
        $region54: #{modified_decoder_forward.1} parent=31 // pred_check_branch
          %562 = sbr.rel (%p560) target = $region56
        $region55: #{modified_decoder_forward.1} parent=31 // pred_region
          %s563 = sand.u32 %s22, 1
          %s564 = scalar_lea.sflag [#allocation5], %s563
          %s565 = sand.u32 %s278, 1
          %s566 = smul.addr %s565, 64
          %s567 = scalar_lea.vmem [#allocation17], %s566
          %s569 = ssub.s32 1024, 1024
          %570 = vsyncadd %s564, %s569
          %s571 = smul.addr %s30, 8
          %s572 = smul.addr %s571, 128
          %s573 = scalar_lea.hbm %s9, %s572
          %s574 = sshll.u32 %s567, 4
          %s575 = int_to_ptr.vmem [resolvable:$true] %s574
          %580 = dma.hbm_to_vmem [thread:$0]  %s573, 1024, %s575, %s564, 128, 128, 8
        $region56: #{modified_decoder_forward.1} parent=31 // pred_fallthru
          _
        // Predicated region
        $region57: #{modified_decoder_forward.1} parent=31 // pred_check
          %p581 = pneg %p314
        $region58: #{modified_decoder_forward.1} parent=31 // pred_check_branch
          %583 = sbr.rel (%p581) target = $region60
        $region59: #{modified_decoder_forward.1} parent=31 // pred_region
          %s584 = sand.u32 %s22, 1
          %s585 = scalar_lea.sflag [#allocation5], %s584
          %s586 = sand.u32 %s304, 1
          %s587 = smul.addr %s586, 128
          %s588 = scalar_lea.vmem [#allocation18], %s587
          %s590 = ssub.s32 2048, 2048
          %591 = vsyncadd %s585, %s590
          %s592 = smul.addr %s30, 16
          %s593 = smul.addr %s592, 128
          %s594 = scalar_lea.hbm %s10, %s593
          %s595 = sshll.u32 %s588, 4
          %s596 = int_to_ptr.vmem [resolvable:$true] %s595
          %601 = dma.hbm_to_vmem [thread:$0]  %s594, 2048, %s596, %s585, 128, 128, 8
        $region60: #{modified_decoder_forward.1} parent=31 // pred_fallthru
          _
        // Predicated region
        $region61: #{modified_decoder_forward.1} parent=31 // pred_check
          %p602 = pneg %p340
        $region62: #{modified_decoder_forward.1} parent=31 // pred_check_branch
          %604 = sbr.rel (%p602) target = $region64
        $region63: #{modified_decoder_forward.1} parent=31 // pred_region
          %s605 = sand.u32 %s22, 1
          %s606 = scalar_lea.sflag [#allocation5], %s605
          %s607 = sand.u32 %s330, 1
          %s608 = smul.addr %s607, 32
          %s609 = scalar_lea.vmem [#allocation19], %s608
          %s611 = ssub.s32 512, 512
          %612 = vsyncadd %s606, %s611
          %s613 = smul.addr %s30, 4
          %s614 = smul.addr %s613, 128
          %s615 = scalar_lea.hbm %s11, %s614
          %s616 = sshll.u32 %s609, 4
          %s617 = int_to_ptr.vmem [resolvable:$true] %s616
          %622 = dma.hbm_to_vmem [thread:$0]  %s615, 512, %s617, %s606, 256, 256, 16
        $region64: #{modified_decoder_forward.1} parent=31 // pred_fallthru
          _
      $region32: #{modified_decoder_forward.1} parent=5 // pred_fallthru
        _
      %p623 = scmp.le.s32.totalorder 1, %s22
      %p624 = scmp.lt.s32.totalorder %s22, 3
      %p625 = pnand %p623, %p624
      %p626 = pneg %p625
      // Predicated region
      $region65: #{modified_decoder_forward.1} parent=5 // pred_check
        _
      $region66: #{modified_decoder_forward.1} parent=5 // pred_check_branch
        %628 = sbr.rel (%p625) target = $region68
      $region67: #{modified_decoder_forward.1} parent=5 // pred_region
        %s629 = ssub.s32 %s22, 1
        // Predicated region
        $region69: #{modified_decoder_forward.1} parent=67 // pred_check
          %p630 = pneg %p60
        $region70: #{modified_decoder_forward.1} parent=67 // pred_check_branch
          %632 = sbr.rel (%p630) target = $region72
        $region71: #{modified_decoder_forward.1} parent=67 // pred_region
          %633 = dma.done [#allocation5], 256
        $region72: #{modified_decoder_forward.1} parent=67 // pred_fallthru
          _
        // Predicated region
        $region73: #{modified_decoder_forward.1} parent=67 // pred_check
          %p634 = pneg %p86
        $region74: #{modified_decoder_forward.1} parent=67 // pred_check_branch
          %636 = sbr.rel (%p634) target = $region76
        $region75: #{modified_decoder_forward.1} parent=67 // pred_region
          %637 = dma.done [#allocation8], 256
        $region76: #{modified_decoder_forward.1} parent=67 // pred_fallthru
          _
        // Predicated region
        $region77: #{modified_decoder_forward.1} parent=67 // pred_check
          %p638 = pneg %p112
        $region78: #{modified_decoder_forward.1} parent=67 // pred_check_branch
          %640 = sbr.rel (%p638) target = $region80
        $region79: #{modified_decoder_forward.1} parent=67 // pred_region
          %641 = dma.done [#allocation8], 32
        $region80: #{modified_decoder_forward.1} parent=67 // pred_fallthru
          _
        // Predicated region
        $region81: #{modified_decoder_forward.1} parent=67 // pred_check
          %p642 = pneg %p138
        $region82: #{modified_decoder_forward.1} parent=67 // pred_check_branch
          %644 = sbr.rel (%p642) target = $region84
        $region83: #{modified_decoder_forward.1} parent=67 // pred_region
          %645 = dma.done [#allocation11], 32
        $region84: #{modified_decoder_forward.1} parent=67 // pred_fallthru
          _
        %s646 = sand.u32 %s27, 1
        %s647 = scalar_lea.sflag [#allocation5], %s646
        %s648 = sand.u32 %s151, 1
        %s649 = smul.addr %s648, 128
        %s650 = scalar_lea.vmem [#allocation12], %s649
        // Predicated region
        $region85: #{modified_decoder_forward.1} parent=67 // pred_check
          %p651 = pneg %p164
        $region86: #{modified_decoder_forward.1} parent=67 // pred_check_branch
          %653 = sbr.rel (%p651) target = $region88
        $region87: #{modified_decoder_forward.1} parent=67 // pred_region
          %654 = dma.done %s647, 2048
        $region88: #{modified_decoder_forward.1} parent=67 // pred_fallthru
          _
        %s655 = sand.u32 %s27, 1
        %s656 = scalar_lea.sflag [#allocation5], %s655
        %s657 = sand.u32 %s177, 1
        %s658 = smul.addr %s657, 64
        %s659 = scalar_lea.vmem [#allocation13], %s658
        // Predicated region
        $region89: #{modified_decoder_forward.1} parent=67 // pred_check
          %p660 = pneg %p190
        $region90: #{modified_decoder_forward.1} parent=67 // pred_check_branch
          %662 = sbr.rel (%p660) target = $region92
        $region91: #{modified_decoder_forward.1} parent=67 // pred_region
          %663 = dma.done %s656, 1024
        $region92: #{modified_decoder_forward.1} parent=67 // pred_fallthru
          _
        %s664 = sand.u32 %s27, 1
        %s665 = scalar_lea.sflag [#allocation5], %s664
        %s666 = sand.u32 %s203, 1
        %s667 = smul.addr %s666, 64
        %s668 = scalar_lea.vmem [#allocation14], %s667
        // Predicated region
        $region93: #{modified_decoder_forward.1} parent=67 // pred_check
          %p669 = pneg %p216
        $region94: #{modified_decoder_forward.1} parent=67 // pred_check_branch
          %671 = sbr.rel (%p669) target = $region96
        $region95: #{modified_decoder_forward.1} parent=67 // pred_region
          %672 = dma.done %s665, 1024
        $region96: #{modified_decoder_forward.1} parent=67 // pred_fallthru
          _
        %s673 = sand.u32 %s27, 1
        %s674 = scalar_lea.sflag [#allocation5], %s673
        %s675 = sand.u32 %s229, 1
        %s676 = smul.addr %s675, 64
        %s677 = scalar_lea.vmem [#allocation15], %s676
        // Predicated region
        $region97: #{modified_decoder_forward.1} parent=67 // pred_check
          %p678 = pneg %p242
        $region98: #{modified_decoder_forward.1} parent=67 // pred_check_branch
          %680 = sbr.rel (%p678) target = $region100
        $region99: #{modified_decoder_forward.1} parent=67 // pred_region
          %681 = dma.done %s674, 1024
        $region100: #{modified_decoder_forward.1} parent=67 // pred_fallthru
          _
        %s682 = sand.u32 %s27, 1
        %s683 = scalar_lea.sflag [#allocation5], %s682
        %s684 = sand.u32 %s255, 1
        %s685 = smul.addr %s684, 64
        %s686 = scalar_lea.vmem [#allocation16], %s685
        // Predicated region
        $region101: #{modified_decoder_forward.1} parent=67 // pred_check
          %p687 = pneg %p268
        $region102: #{modified_decoder_forward.1} parent=67 // pred_check_branch
          %689 = sbr.rel (%p687) target = $region104
        $region103: #{modified_decoder_forward.1} parent=67 // pred_region
          %690 = dma.done %s683, 1024
        $region104: #{modified_decoder_forward.1} parent=67 // pred_fallthru
          _
        %s691 = sand.u32 %s27, 1
        %s692 = scalar_lea.sflag [#allocation5], %s691
        %s693 = sand.u32 %s281, 1
        %s694 = smul.addr %s693, 64
        %s695 = scalar_lea.vmem [#allocation17], %s694
        // Predicated region
        $region105: #{modified_decoder_forward.1} parent=67 // pred_check
          %p696 = pneg %p294
        $region106: #{modified_decoder_forward.1} parent=67 // pred_check_branch
          %698 = sbr.rel (%p696) target = $region108
        $region107: #{modified_decoder_forward.1} parent=67 // pred_region
          %699 = dma.done %s692, 1024
        $region108: #{modified_decoder_forward.1} parent=67 // pred_fallthru
          _
        %s700 = sand.u32 %s27, 1
        %s701 = scalar_lea.sflag [#allocation5], %s700
        %s702 = sand.u32 %s307, 1
        %s703 = smul.addr %s702, 128
        %s704 = scalar_lea.vmem [#allocation18], %s703
        // Predicated region
        $region109: #{modified_decoder_forward.1} parent=67 // pred_check
          %p705 = pneg %p320
        $region110: #{modified_decoder_forward.1} parent=67 // pred_check_branch
          %707 = sbr.rel (%p705) target = $region112
        $region111: #{modified_decoder_forward.1} parent=67 // pred_region
          %708 = dma.done %s701, 2048
        $region112: #{modified_decoder_forward.1} parent=67 // pred_fallthru
          _
        %s709 = sand.u32 %s27, 1
        %s710 = scalar_lea.sflag [#allocation5], %s709
        %s711 = sand.u32 %s333, 1
        %s712 = smul.addr %s711, 32
        %s713 = scalar_lea.vmem [#allocation19], %s712
        // Predicated region
        $region113: #{modified_decoder_forward.1} parent=67 // pred_check
          %p714 = pneg %p346
        $region114: #{modified_decoder_forward.1} parent=67 // pred_check_branch
          %716 = sbr.rel (%p714) target = $region116
        $region115: #{modified_decoder_forward.1} parent=67 // pred_region
          %717 = dma.done %s710, 512
        $region116: #{modified_decoder_forward.1} parent=67 // pred_fallthru
          _
        %p718 = pneg %p60
        %p719 = pneg %p57
        %p720 = pneg %p86
        %p721 = pneg %p83
        %p722 = pneg %p112
        %p723 = pneg %p109
        %p724 = pneg %p138
        %p725 = pneg %p135
        %s726 = sand.u32 %s27, 1
        %s727 = scalar_lea.sflag [#allocation5], %s726
        %s728 = sand.u32 %s151, 1
        %s729 = smul.addr %s728, 128
        %s730 = scalar_lea.vmem [#allocation12], %s729
        %p731 = pneg %p164
        %p732 = pneg %p161
        %s733 = sand.u32 %s27, 1
        %s734 = scalar_lea.sflag [#allocation5], %s733
        %s735 = sand.u32 %s177, 1
        %s736 = smul.addr %s735, 64
        %s737 = scalar_lea.vmem [#allocation13], %s736
        %p738 = pneg %p190
        %p739 = pneg %p187
        %s740 = sand.u32 %s27, 1
        %s741 = scalar_lea.sflag [#allocation5], %s740
        %s742 = sand.u32 %s203, 1
        %s743 = smul.addr %s742, 64
        %s744 = scalar_lea.vmem [#allocation14], %s743
        %p745 = pneg %p216
        %p746 = pneg %p213
        %s747 = sand.u32 %s27, 1
        %s748 = scalar_lea.sflag [#allocation5], %s747
        %s749 = sand.u32 %s229, 1
        %s750 = smul.addr %s749, 64
        %s751 = scalar_lea.vmem [#allocation15], %s750
        %p752 = pneg %p242
        %p753 = pneg %p239
        %s754 = sand.u32 %s27, 1
        %s755 = scalar_lea.sflag [#allocation5], %s754
        %s756 = sand.u32 %s255, 1
        %s757 = smul.addr %s756, 64
        %s758 = scalar_lea.vmem [#allocation16], %s757
        %p759 = pneg %p268
        %p760 = pneg %p265
        %s761 = sand.u32 %s27, 1
        %s762 = scalar_lea.sflag [#allocation5], %s761
        %s763 = sand.u32 %s281, 1
        %s764 = smul.addr %s763, 64
        %s765 = scalar_lea.vmem [#allocation17], %s764
        %p766 = pneg %p294
        %p767 = pneg %p291
        %s768 = sand.u32 %s27, 1
        %s769 = scalar_lea.sflag [#allocation5], %s768
        %s770 = sand.u32 %s307, 1
        %s771 = smul.addr %s770, 128
        %s772 = scalar_lea.vmem [#allocation18], %s771
        %p773 = pneg %p320
        %p774 = pneg %p317
        %s775 = sand.u32 %s27, 1
        %s776 = scalar_lea.sflag [#allocation5], %s775
        %s777 = sand.u32 %s333, 1
        %s778 = smul.addr %s777, 32
        %s779 = scalar_lea.vmem [#allocation19], %s778
        %p780 = pneg %p346
        %p781 = pneg %p343
        %p782 = pneg %p372
        %p783 = pneg %p369
        %s784 = smul.u32 2, %s31
        %s785 = smul.u32 2, %s31
        %s786 = smul.u32 2, %s31
        %s787 = smul.u32 2, %s31
        %s788 = smul.u32 2, %s31
        %p789 = scmp.eq.s32.totalorder %s32, 0
        // Predicated region
        $region117: #{modified_decoder_forward.1} parent=67 // pred_check
          %p790 = pneg %p789
        $region118: #{modified_decoder_forward.1} parent=67 // pred_check_branch
          %792 = sbr.rel (%p790) target = $region120
        $region119: #{modified_decoder_forward.1} parent=67 // pred_region
          %v793 = vld [vmem:[#allocation4] sm:$0xff]
          %v794 = vld [vmem:[#allocation4 + $0x8] sm:$0xff]
          %vm795 = vcmask 523264
          %796 = vst.msk [vmem:[#allocation20] sm:$0xff] %vm795, %v793
          %797 = vst.msk [vmem:[#allocation20 + $0x8] sm:$0xff] %vm795, %v794
          %v798 = vlaneseq
          %v799 = vshrl.u32 %v798, 7
          %v800 = vlaneseq
          %v801 = vand.u32 %v800, 127
          %vm802 = vcmp.le.s32.totalorder %v801, %v799
          %v803 = vld [vmem:[#allocation9] sm:$0x1]
          %v804 = vld [vmem:[#allocation9 + $0x1] sm:$0x1]
          %vm805 = vcmp.gt.f32.partialorder %v803, 0.0
          %vm806 = vcmp.gt.f32.partialorder %v804, 0.0
          %v807 = vsel %vm802, 1, 0
          %vm808 = vcmp.eq.s32.totalorder %v807, 1
          %v809 = vsel %vm805, 1, 0
          %v810 = vsel %vm806, 1, 0
          %v811 = vlaneseq
          %v812 = vshrl.u32 %v811, 7
          %v813 = vsub.s32 0, %v812
          %v814 = vrot.slane %v809, %v813
          %v815 = vlaneseq
          %v816 = vshrl.u32 %v815, 7
          %v817 = vsub.s32 0, %v816
          %v818 = vrot.slane %v810, %v817
          %vm819 = vcmp.eq.s32.totalorder %v814, 1
          %vm820 = vcmp.eq.s32.totalorder %v818, 1
          %vm821 = vmand %vm808, %vm819
          %vm822 = vmand %vm808, %vm820
          %v823 = vsel %vm821, 0.0, -1e+09
          %v824 = vsel %vm822, 0.0, -1e+09
          %vm825 = vcmask 64512
          %826 = vst.msk [vmem:[#allocation2] sm:$0xff] %vm825, %v823
          %827 = vst.msk [vmem:[#allocation2 + $0x8] sm:$0xff] %vm825, %v824
          %v828 = vld [vmem:[#allocation10] sm:$0x1]
          %v829 = vld [vmem:[#allocation10 + $0x1] sm:$0x1]
          %vm830 = vcmp.gt.f32.partialorder %v828, 0.0
          %vm831 = vcmp.gt.f32.partialorder %v829, 0.0
          %v832 = vsel %vm830, 0.0, -1e+09
          %v833 = vsel %vm831, 0.0, -1e+09
          %vm834 = vcmask 57344
          %835 = vst.msk [vmem:[#allocation3] sm:$0x1] %vm834, %v832
          %836 = vst.msk [vmem:[#allocation3 + $0x1] sm:$0x1] %vm834, %v833
        $region120: #{modified_decoder_forward.1} parent=67 // pred_fallthru
          _
        %v837 = vld [vmem:[#allocation20] sm:$0xff]
        %v838 = vld [vmem:[#allocation20 + $0x8] sm:$0xff]
        %v839 = vld [vmem:[%s713] ss:$8 sm:$0x3]
        %v840 = vld [vmem:[%s650] sm:$0xff]
        %v841 = vld [vmem:[%s650 + $0x8] sm:$0xff]
        %v842 = vld [vmem:[%s650 + $0x10] sm:$0xff]
        %v843 = vld [vmem:[%s650 + $0x18] sm:$0xff]
        %v844 = vld [vmem:[%s650 + $0x20] sm:$0xff]
        %v845 = vld [vmem:[%s650 + $0x28] sm:$0xff]
        %v846 = vld [vmem:[%s650 + $0x30] sm:$0xff]
        %v847 = vld [vmem:[%s650 + $0x38] sm:$0xff]
        %v848 = vld [vmem:[%s650 + $0x40] sm:$0xff]
        %v849 = vld [vmem:[%s650 + $0x48] sm:$0xff]
        %v850 = vld [vmem:[%s650 + $0x50] sm:$0xff]
        %v851 = vld [vmem:[%s650 + $0x58] sm:$0xff]
        %v852 = vld [vmem:[%s650 + $0x60] sm:$0xff]
        %v853 = vld [vmem:[%s650 + $0x68] sm:$0xff]
        %v854 = vld [vmem:[%s650 + $0x70] sm:$0xff]
        %v855 = vld [vmem:[%s650 + $0x78] sm:$0xff]
        %v857 = vlaneseq
        %v858 = vshrl.u32 %v857, 7
        %v859 = vsub.s32 0, %v858
        %v860 = vrot.slane %v839, %v859
        %v861 = vlaneseq
        %v862 = vshrl.u32 %v861, 7
        %v863 = vsub.s32 1, %v862
        %v864 = vrot.slane %v839, %v863
        %vm867 = vcmask 523264
        %v869 = vsel %vm867, %v837, 0
        %v872 = vsel %vm867, %v838, 0
        %874 = vmatprep.subr.mxu0 %v841
        %875 = vmatpush1.msra.mxu0 %v840
        %876 = vmatprep.subr.mxu0 %v843
        %877 = vmatpush1.msra.mxu0 %v842
        %878 = vmatprep.subr.mxu0 %v845
        %879 = vmatpush1.msra.mxu0 %v844
        %880 = vmatprep.subr.mxu0 %v847
        %881 = vmatpush1.msra.mxu0 %v846
        %882 = vmatprep.subr.mxu0 %v849
        %883 = vmatpush1.msra.mxu0 %v848
        %884 = vmatprep.subr.mxu0 %v851
        %885 = vmatpush1.msra.mxu0 %v850
        %886 = vmatprep.subr.mxu0 %v853
        %887 = vmatpush1.msra.mxu0 %v852
        %888 = vmatprep.subr.mxu0 %v855
        %889 = vmatpush1.msra.mxu0 %v854
        %890 = vmatprep.subr.mxu0 0.0
        %891 = vmatpush1.msra.mxu0 0.0
        %892 = vmatprep.subr.mxu0 0.0
        %893 = vmatpush1.msra.mxu0 0.0
        %894 = vmatprep.subr.mxu0 0.0
        %895 = vmatpush1.msra.mxu0 0.0
        %896 = vmatprep.subr.mxu0 0.0
        %897 = vmatpush1.msra.mxu0 0.0
        %898 = vmatprep.subr.mxu0 0.0
        %899 = vmatpush1.msra.mxu0 0.0
        %900 = vmatprep.subr.mxu0 0.0
        %901 = vmatpush1.msra.mxu0 0.0
        %902 = vmatprep.subr.mxu0 0.0
        %903 = vmatpush1.msra.mxu0 0.0
        %904 = vmatprep.subr.mxu0 0.0
        %905 = vmatpush1.msra.mxu0 0.0
        %906 = vmatprep.subr.mxu0 0.0
        %907 = vmatpush1.msra.mxu0 0.0
        %908 = vmatprep.subr.mxu0 0.0
        %909 = vmatpush1.msra.mxu0 0.0
        %910 = vmatprep.subr.mxu0 0.0
        %911 = vmatpush1.msra.mxu0 0.0
        %912 = vmatprep.subr.mxu0 0.0
        %913 = vmatpush1.msra.mxu0 0.0
        %914 = vmatprep.subr.mxu0 0.0
        %915 = vmatpush1.msra.mxu0 0.0
        %916 = vmatprep.subr.mxu0 0.0
        %917 = vmatpush1.msra.mxu0 0.0
        %918 = vmatprep.subr.mxu0 0.0
        %919 = vmatpush1.msra.mxu0 0.0
        %920 = vmatprep.subr.mxu0 0.0
        %921 = vmatpush1.msra.mxu0 0.0
        %922 = vmatprep.subr.mxu0 0.0
        %923 = vmatpush1.msra.mxu0 0.0
        %924 = vmatprep.subr.mxu0 0.0
        %925 = vmatpush1.msra.mxu0 0.0
        %926 = vmatprep.subr.mxu0 0.0
        %927 = vmatpush1.msra.mxu0 0.0
        %928 = vmatprep.subr.mxu0 0.0
        %929 = vmatpush1.msra.mxu0 0.0
        %930 = vmatprep.subr.mxu0 0.0
        %931 = vmatpush1.msra.mxu0 0.0
        %932 = vmatprep.subr.mxu0 0.0
        %933 = vmatpush1.msra.mxu0 0.0
        %934 = vmatprep.subr.mxu0 0.0
        %935 = vmatpush1.msra.mxu0 0.0
        %936 = vmatprep.subr.mxu0 0.0
        %937 = vmatpush1.msra.mxu0 0.0
        %938 = vmatprep.mubr.f32.mxu0 0.0
        %939 = vmatmul.mubr.f32.gmra.mrb[0].mxu0 %v869
        %v940 = vpop.f32.mrb[0].mxu0
        %v941 = vadd.f32 %v860, %v940
        %v942 = vpop.f32.mrb[0].mxu0
        %v943 = vadd.f32 %v864, %v942
        %944 = vmatprep.mubr.f32.mxu0 0.0
        %945 = vmatmul.mubr.f32.gmra.mrb[0].mxu0 %v872
        %v946 = vpop.f32.mrb[0].mxu0
        %v947 = vadd.f32 %v860, %v946
        %v948 = vpop.f32.mrb[0].mxu0
        %v949 = vadd.f32 %v864, %v948
        %950 = vdwg.mxu0
        %v951 = vld [vmem:[#allocation2] sm:$0xff]
        %953 = vrot.lane.b32.xlu0 %v941, 64
        %v954 = vpop.permute.xlu0 %953
        %vm955 = vcmask 130048
        %v956 = vsel %vm955, %v941, 0
        %v958 = vsel %vm955, %v954, 0
        %960 = vmatprep.subr.mxu0 0.0
        %961 = vmatpush1.xpose.msra.mxu0 %v958
        %962 = vmatprep.subr.mxu0 0.0
        %963 = vmatpush1.xpose.msra.mxu0 0.0
        %964 = vmatprep.subr.mxu0 0.0
        %965 = vmatpush1.xpose.msra.mxu0 0.0
        %966 = vmatprep.subr.mxu0 0.0
        %967 = vmatpush1.xpose.msra.mxu0 0.0
        %968 = vmatprep.subr.mxu0 0.0
        %969 = vmatpush1.xpose.msra.mxu0 0.0
        %970 = vmatprep.subr.mxu0 0.0
        %971 = vmatpush1.xpose.msra.mxu0 0.0
        %972 = vmatprep.subr.mxu0 0.0
        %973 = vmatpush1.xpose.msra.mxu0 0.0
        %974 = vmatprep.subr.mxu0 0.0
        %975 = vmatpush1.xpose.msra.mxu0 0.0
        %976 = vmatprep.subr.mxu0 0.0
        %977 = vmatpush1.xpose.msra.mxu0 0.0
        %978 = vmatprep.subr.mxu0 0.0
        %979 = vmatpush1.xpose.msra.mxu0 0.0
        %980 = vmatprep.subr.mxu0 0.0
        %981 = vmatpush1.xpose.msra.mxu0 0.0
        %982 = vmatprep.subr.mxu0 0.0
        %983 = vmatpush1.xpose.msra.mxu0 0.0
        %984 = vmatprep.subr.mxu0 0.0
        %985 = vmatpush1.xpose.msra.mxu0 0.0
        %986 = vmatprep.subr.mxu0 0.0
        %987 = vmatpush1.xpose.msra.mxu0 0.0
        %988 = vmatprep.subr.mxu0 0.0
        %989 = vmatpush1.xpose.msra.mxu0 0.0
        %990 = vmatprep.subr.mxu0 0.0
        %991 = vmatpush1.xpose.msra.mxu0 0.0
        %992 = vmatprep.subr.mxu0 0.0
        %993 = vmatpush1.xpose.msra.mxu0 0.0
        %994 = vmatprep.subr.mxu0 0.0
        %995 = vmatpush1.xpose.msra.mxu0 0.0
        %996 = vmatprep.subr.mxu0 0.0
        %997 = vmatpush1.xpose.msra.mxu0 0.0
        %998 = vmatprep.subr.mxu0 0.0
        %999 = vmatpush1.xpose.msra.mxu0 0.0
        %1000 = vmatprep.subr.mxu0 0.0
        %1001 = vmatpush1.xpose.msra.mxu0 0.0
        %1002 = vmatprep.subr.mxu0 0.0
        %1003 = vmatpush1.xpose.msra.mxu0 0.0
        %1004 = vmatprep.subr.mxu0 0.0
        %1005 = vmatpush1.xpose.msra.mxu0 0.0
        %1006 = vmatprep.subr.mxu0 0.0
        %1007 = vmatpush1.xpose.msra.mxu0 0.0
        %1008 = vmatprep.subr.mxu0 0.0
        %1009 = vmatpush1.xpose.msra.mxu0 0.0
        %1010 = vmatprep.subr.mxu0 0.0
        %1011 = vmatpush1.xpose.msra.mxu0 0.0
        %1012 = vmatprep.subr.mxu0 0.0
        %1013 = vmatpush1.xpose.msra.mxu0 0.0
        %1014 = vmatprep.subr.mxu0 0.0
        %1015 = vmatpush1.xpose.msra.mxu0 0.0
        %1016 = vmatprep.subr.mxu0 0.0
        %1017 = vmatpush1.xpose.msra.mxu0 0.0
        %1018 = vmatprep.subr.mxu0 0.0
        %1019 = vmatpush1.xpose.msra.mxu0 0.0
        %1020 = vmatprep.subr.mxu0 0.0
        %1021 = vmatpush1.xpose.msra.mxu0 0.0
        %1022 = vmatprep.subr.mxu0 0.0
        %1023 = vmatpush1.xpose.msra.mxu0 0.0
        %1024 = vmatprep.mubr.f32.mxu0 0.0
        %1025 = vmatmul.mubr.f32.gmra.mrb[0].mxu0 %v956
        %v1026 = vpop.f32.mrb[0].mxu0
        %v1027 = vadd.f32 0.0, %v1026
        %v1028 = vpop.f32.mrb[0].mxu0
        %1029 = vdwg.mxu0
        %v1030 = vmul.f32 %v1027, 0.25
        %v1031 = vadd.f32 %v1030, %v951
        %vm1032 = vcmask 64512
        %v1033 = vsel %vm1032, %v1031, -inf
        %1034 = vmax.xlane.f32.xlu0 %v1033
        %v1035 = vpop.xlane.xlu0 %1034
        %v1036 = vsub.f32 %v1031, %v1035
        %v1037 = vmul.f32 %v1036, 1.442695
        %v1038 = vpow.pop %v1037
        %v1039 = vsel %vm1032, %v1038, 0.0
        %1040 = vadd.xlane.f32.xlu0 %v1039
        %v1041 = vpop.xlane.xlu0 %1040
        %v1042 = vrcp.pop %v1041
        %v1043 = vmul.f32 %v1038, %v1042
        %v1045 = vsel %vm1032, %v1043, 0
        %1047 = vmatprep.subr.mxu0 0.0
        %1048 = vmatpush1.msra.mxu0 %v943
        %1049 = vmatprep.subr.mxu0 0.0
        %1050 = vmatpush1.msra.mxu0 0.0
        %1051 = vmatprep.subr.mxu0 0.0
        %1052 = vmatpush1.msra.mxu0 0.0
        %1053 = vmatprep.subr.mxu0 0.0
        %1054 = vmatpush1.msra.mxu0 0.0
        %1055 = vmatprep.subr.mxu0 0.0
        %1056 = vmatpush1.msra.mxu0 0.0
        %1057 = vmatprep.subr.mxu0 0.0
        %1058 = vmatpush1.msra.mxu0 0.0
        %1059 = vmatprep.subr.mxu0 0.0
        %1060 = vmatpush1.msra.mxu0 0.0
        %1061 = vmatprep.subr.mxu0 0.0
        %1062 = vmatpush1.msra.mxu0 0.0
        %1063 = vmatprep.subr.mxu0 0.0
        %1064 = vmatpush1.msra.mxu0 0.0
        %1065 = vmatprep.subr.mxu0 0.0
        %1066 = vmatpush1.msra.mxu0 0.0
        %1067 = vmatprep.subr.mxu0 0.0
        %1068 = vmatpush1.msra.mxu0 0.0
        %1069 = vmatprep.subr.mxu0 0.0
        %1070 = vmatpush1.msra.mxu0 0.0
        %1071 = vmatprep.subr.mxu0 0.0
        %1072 = vmatpush1.msra.mxu0 0.0
        %1073 = vmatprep.subr.mxu0 0.0
        %1074 = vmatpush1.msra.mxu0 0.0
        %1075 = vmatprep.subr.mxu0 0.0
        %1076 = vmatpush1.msra.mxu0 0.0
        %1077 = vmatprep.subr.mxu0 0.0
        %1078 = vmatpush1.msra.mxu0 0.0
        %1079 = vmatprep.subr.mxu0 0.0
        %1080 = vmatpush1.msra.mxu0 0.0
        %1081 = vmatprep.subr.mxu0 0.0
        %1082 = vmatpush1.msra.mxu0 0.0
        %1083 = vmatprep.subr.mxu0 0.0
        %1084 = vmatpush1.msra.mxu0 0.0
        %1085 = vmatprep.subr.mxu0 0.0
        %1086 = vmatpush1.msra.mxu0 0.0
        %1087 = vmatprep.subr.mxu0 0.0
        %1088 = vmatpush1.msra.mxu0 0.0
        %1089 = vmatprep.subr.mxu0 0.0
        %1090 = vmatpush1.msra.mxu0 0.0
        %1091 = vmatprep.subr.mxu0 0.0
        %1092 = vmatpush1.msra.mxu0 0.0
        %1093 = vmatprep.subr.mxu0 0.0
        %1094 = vmatpush1.msra.mxu0 0.0
        %1095 = vmatprep.subr.mxu0 0.0
        %1096 = vmatpush1.msra.mxu0 0.0
        %1097 = vmatprep.subr.mxu0 0.0
        %1098 = vmatpush1.msra.mxu0 0.0
        %1099 = vmatprep.subr.mxu0 0.0
        %1100 = vmatpush1.msra.mxu0 0.0
        %1101 = vmatprep.subr.mxu0 0.0
        %1102 = vmatpush1.msra.mxu0 0.0
        %1103 = vmatprep.subr.mxu0 0.0
        %1104 = vmatpush1.msra.mxu0 0.0
        %1105 = vmatprep.subr.mxu0 0.0
        %1106 = vmatpush1.msra.mxu0 0.0
        %1107 = vmatprep.subr.mxu0 0.0
        %1108 = vmatpush1.msra.mxu0 0.0
        %1109 = vmatprep.subr.mxu0 0.0
        %1110 = vmatpush1.msra.mxu0 0.0
        %1111 = vmatprep.mubr.f32.mxu0 0.0
        %1112 = vmatmul.mubr.f32.gmra.mrb[0].mxu0 %v1045
        %v1113 = vpop.f32.mrb[0].mxu0
        %v1114 = vadd.f32 0.0, %v1113
        %v1115 = vpop.f32.mrb[0].mxu0
        %1116 = vdwg.mxu0
        %1117 = vrot.lane.b32.xlu0 %v941, 112
        %v1118 = vpop.permute.xlu0 %1117
        %1119 = vrot.lane.b32.xlu0 %v941, 48
        %v1120 = vpop.permute.xlu0 %1119
        %v1121 = vsel %vm955, %v1118, 0
        %v1123 = vsel %vm955, %v1120, 0
        %1125 = vmatprep.subr.mxu0 0.0
        %1126 = vmatpush1.xpose.msra.mxu0 %v1123
        %1127 = vmatprep.subr.mxu0 0.0
        %1128 = vmatpush1.xpose.msra.mxu0 0.0
        %1129 = vmatprep.subr.mxu0 0.0
        %1130 = vmatpush1.xpose.msra.mxu0 0.0
        %1131 = vmatprep.subr.mxu0 0.0
        %1132 = vmatpush1.xpose.msra.mxu0 0.0
        %1133 = vmatprep.subr.mxu0 0.0
        %1134 = vmatpush1.xpose.msra.mxu0 0.0
        %1135 = vmatprep.subr.mxu0 0.0
        %1136 = vmatpush1.xpose.msra.mxu0 0.0
        %1137 = vmatprep.subr.mxu0 0.0
        %1138 = vmatpush1.xpose.msra.mxu0 0.0
        %1139 = vmatprep.subr.mxu0 0.0
        %1140 = vmatpush1.xpose.msra.mxu0 0.0
        %1141 = vmatprep.subr.mxu0 0.0
        %1142 = vmatpush1.xpose.msra.mxu0 0.0
        %1143 = vmatprep.subr.mxu0 0.0
        %1144 = vmatpush1.xpose.msra.mxu0 0.0
        %1145 = vmatprep.subr.mxu0 0.0
        %1146 = vmatpush1.xpose.msra.mxu0 0.0
        %1147 = vmatprep.subr.mxu0 0.0
        %1148 = vmatpush1.xpose.msra.mxu0 0.0
        %1149 = vmatprep.subr.mxu0 0.0
        %1150 = vmatpush1.xpose.msra.mxu0 0.0
        %1151 = vmatprep.subr.mxu0 0.0
        %1152 = vmatpush1.xpose.msra.mxu0 0.0
        %1153 = vmatprep.subr.mxu0 0.0
        %1154 = vmatpush1.xpose.msra.mxu0 0.0
        %1155 = vmatprep.subr.mxu0 0.0
        %1156 = vmatpush1.xpose.msra.mxu0 0.0
        %1157 = vmatprep.subr.mxu0 0.0
        %1158 = vmatpush1.xpose.msra.mxu0 0.0
        %1159 = vmatprep.subr.mxu0 0.0
        %1160 = vmatpush1.xpose.msra.mxu0 0.0
        %1161 = vmatprep.subr.mxu0 0.0
        %1162 = vmatpush1.xpose.msra.mxu0 0.0
        %1163 = vmatprep.subr.mxu0 0.0
        %1164 = vmatpush1.xpose.msra.mxu0 0.0
        %1165 = vmatprep.subr.mxu0 0.0
        %1166 = vmatpush1.xpose.msra.mxu0 0.0
        %1167 = vmatprep.subr.mxu0 0.0
        %1168 = vmatpush1.xpose.msra.mxu0 0.0
        %1169 = vmatprep.subr.mxu0 0.0
        %1170 = vmatpush1.xpose.msra.mxu0 0.0
        %1171 = vmatprep.subr.mxu0 0.0
        %1172 = vmatpush1.xpose.msra.mxu0 0.0
        %1173 = vmatprep.subr.mxu0 0.0
        %1174 = vmatpush1.xpose.msra.mxu0 0.0
        %1175 = vmatprep.subr.mxu0 0.0
        %1176 = vmatpush1.xpose.msra.mxu0 0.0
        %1177 = vmatprep.subr.mxu0 0.0
        %1178 = vmatpush1.xpose.msra.mxu0 0.0
        %1179 = vmatprep.subr.mxu0 0.0
        %1180 = vmatpush1.xpose.msra.mxu0 0.0
        %1181 = vmatprep.subr.mxu0 0.0
        %1182 = vmatpush1.xpose.msra.mxu0 0.0
        %1183 = vmatprep.subr.mxu0 0.0
        %1184 = vmatpush1.xpose.msra.mxu0 0.0
        %1185 = vmatprep.subr.mxu0 0.0
        %1186 = vmatpush1.xpose.msra.mxu0 0.0
        %1187 = vmatprep.subr.mxu0 0.0
        %1188 = vmatpush1.xpose.msra.mxu0 0.0
        %1189 = vmatprep.mubr.f32.mxu0 0.0
        %1190 = vmatmul.mubr.f32.gmra.mrb[0].mxu0 %v1121
        %v1191 = vpop.f32.mrb[0].mxu0
        %v1192 = vadd.f32 0.0, %v1191
        %v1193 = vpop.f32.mrb[0].mxu0
        %1194 = vdwg.mxu0
        %v1195 = vmul.f32 %v1192, 0.25
        %v1196 = vadd.f32 %v1195, %v951
        %v1197 = vsel %vm1032, %v1196, -inf
        %1198 = vmax.xlane.f32.xlu0 %v1197
        %v1199 = vpop.xlane.xlu0 %1198
        %v1200 = vsub.f32 %v1196, %v1199
        %v1201 = vmul.f32 %v1200, 1.442695
        %v1202 = vpow.pop %v1201
        %v1203 = vsel %vm1032, %v1202, 0.0
        %1204 = vadd.xlane.f32.xlu0 %v1203
        %v1205 = vpop.xlane.xlu0 %1204
        %v1206 = vrcp.pop %v1205
        %v1207 = vmul.f32 %v1202, %v1206
        %1209 = vrot.lane.b32.xlu0 %v943, 112
        %v1210 = vpop.permute.xlu0 %1209
        %v1213 = vsel %vm1032, %v1207, 0
        %1215 = vmatprep.subr.mxu0 0.0
        %1216 = vmatpush1.msra.mxu0 %v1210
        %1217 = vmatprep.subr.mxu0 0.0
        %1218 = vmatpush1.msra.mxu0 0.0
        %1219 = vmatprep.subr.mxu0 0.0
        %1220 = vmatpush1.msra.mxu0 0.0
        %1221 = vmatprep.subr.mxu0 0.0
        %1222 = vmatpush1.msra.mxu0 0.0
        %1223 = vmatprep.subr.mxu0 0.0
        %1224 = vmatpush1.msra.mxu0 0.0
        %1225 = vmatprep.subr.mxu0 0.0
        %1226 = vmatpush1.msra.mxu0 0.0
        %1227 = vmatprep.subr.mxu0 0.0
        %1228 = vmatpush1.msra.mxu0 0.0
        %1229 = vmatprep.subr.mxu0 0.0
        %1230 = vmatpush1.msra.mxu0 0.0
        %1231 = vmatprep.subr.mxu0 0.0
        %1232 = vmatpush1.msra.mxu0 0.0
        %1233 = vmatprep.subr.mxu0 0.0
        %1234 = vmatpush1.msra.mxu0 0.0
        %1235 = vmatprep.subr.mxu0 0.0
        %1236 = vmatpush1.msra.mxu0 0.0
        %1237 = vmatprep.subr.mxu0 0.0
        %1238 = vmatpush1.msra.mxu0 0.0
        %1239 = vmatprep.subr.mxu0 0.0
        %1240 = vmatpush1.msra.mxu0 0.0
        %1241 = vmatprep.subr.mxu0 0.0
        %1242 = vmatpush1.msra.mxu0 0.0
        %1243 = vmatprep.subr.mxu0 0.0
        %1244 = vmatpush1.msra.mxu0 0.0
        %1245 = vmatprep.subr.mxu0 0.0
        %1246 = vmatpush1.msra.mxu0 0.0
        %1247 = vmatprep.subr.mxu0 0.0
        %1248 = vmatpush1.msra.mxu0 0.0
        %1249 = vmatprep.subr.mxu0 0.0
        %1250 = vmatpush1.msra.mxu0 0.0
        %1251 = vmatprep.subr.mxu0 0.0
        %1252 = vmatpush1.msra.mxu0 0.0
        %1253 = vmatprep.subr.mxu0 0.0
        %1254 = vmatpush1.msra.mxu0 0.0
        %1255 = vmatprep.subr.mxu0 0.0
        %1256 = vmatpush1.msra.mxu0 0.0
        %1257 = vmatprep.subr.mxu0 0.0
        %1258 = vmatpush1.msra.mxu0 0.0
        %1259 = vmatprep.subr.mxu0 0.0
        %1260 = vmatpush1.msra.mxu0 0.0
        %1261 = vmatprep.subr.mxu0 0.0
        %1262 = vmatpush1.msra.mxu0 0.0
        %1263 = vmatprep.subr.mxu0 0.0
        %1264 = vmatpush1.msra.mxu0 0.0
        %1265 = vmatprep.subr.mxu0 0.0
        %1266 = vmatpush1.msra.mxu0 0.0
        %1267 = vmatprep.subr.mxu0 0.0
        %1268 = vmatpush1.msra.mxu0 0.0
        %1269 = vmatprep.subr.mxu0 0.0
        %1270 = vmatpush1.msra.mxu0 0.0
        %1271 = vmatprep.subr.mxu0 0.0
        %1272 = vmatpush1.msra.mxu0 0.0
        %1273 = vmatprep.subr.mxu0 0.0
        %1274 = vmatpush1.msra.mxu0 0.0
        %1275 = vmatprep.subr.mxu0 0.0
        %1276 = vmatpush1.msra.mxu0 0.0
        %1277 = vmatprep.subr.mxu0 0.0
        %1278 = vmatpush1.msra.mxu0 0.0
        %1279 = vmatprep.mubr.f32.mxu0 0.0
        %1280 = vmatmul.mubr.f32.gmra.mrb[0].mxu0 %v1213
        %v1281 = vpop.f32.mrb[0].mxu0
        %v1282 = vadd.f32 0.0, %v1281
        %v1283 = vpop.f32.mrb[0].mxu0
        %1284 = vdwg.mxu0
        %1285 = vrot.lane.b32.xlu0 %v941, 96
        %v1286 = vpop.permute.xlu0 %1285
        %1287 = vrot.lane.b32.xlu0 %v941, 32
        %v1288 = vpop.permute.xlu0 %1287
        %v1289 = vsel %vm955, %v1286, 0
        %v1291 = vsel %vm955, %v1288, 0
        %1293 = vmatprep.subr.mxu0 0.0
        %1294 = vmatpush1.xpose.msra.mxu0 %v1291
        %1295 = vmatprep.subr.mxu0 0.0
        %1296 = vmatpush1.xpose.msra.mxu0 0.0
        %1297 = vmatprep.subr.mxu0 0.0
        %1298 = vmatpush1.xpose.msra.mxu0 0.0
        %1299 = vmatprep.subr.mxu0 0.0
        %1300 = vmatpush1.xpose.msra.mxu0 0.0
        %1301 = vmatprep.subr.mxu0 0.0
        %1302 = vmatpush1.xpose.msra.mxu0 0.0
        %1303 = vmatprep.subr.mxu0 0.0
        %1304 = vmatpush1.xpose.msra.mxu0 0.0
        %1305 = vmatprep.subr.mxu0 0.0
        %1306 = vmatpush1.xpose.msra.mxu0 0.0
        %1307 = vmatprep.subr.mxu0 0.0
        %1308 = vmatpush1.xpose.msra.mxu0 0.0
        %1309 = vmatprep.subr.mxu0 0.0
        %1310 = vmatpush1.xpose.msra.mxu0 0.0
        %1311 = vmatprep.subr.mxu0 0.0
        %1312 = vmatpush1.xpose.msra.mxu0 0.0
        %1313 = vmatprep.subr.mxu0 0.0
        %1314 = vmatpush1.xpose.msra.mxu0 0.0
        %1315 = vmatprep.subr.mxu0 0.0
        %1316 = vmatpush1.xpose.msra.mxu0 0.0
        %1317 = vmatprep.subr.mxu0 0.0
        %1318 = vmatpush1.xpose.msra.mxu0 0.0
        %1319 = vmatprep.subr.mxu0 0.0
        %1320 = vmatpush1.xpose.msra.mxu0 0.0
        %1321 = vmatprep.subr.mxu0 0.0
        %1322 = vmatpush1.xpose.msra.mxu0 0.0
        %1323 = vmatprep.subr.mxu0 0.0
        %1324 = vmatpush1.xpose.msra.mxu0 0.0
        %1325 = vmatprep.subr.mxu0 0.0
        %1326 = vmatpush1.xpose.msra.mxu0 0.0
        %1327 = vmatprep.subr.mxu0 0.0
        %1328 = vmatpush1.xpose.msra.mxu0 0.0
        %1329 = vmatprep.subr.mxu0 0.0
        %1330 = vmatpush1.xpose.msra.mxu0 0.0
        %1331 = vmatprep.subr.mxu0 0.0
        %1332 = vmatpush1.xpose.msra.mxu0 0.0
        %1333 = vmatprep.subr.mxu0 0.0
        %1334 = vmatpush1.xpose.msra.mxu0 0.0
        %1335 = vmatprep.subr.mxu0 0.0
        %1336 = vmatpush1.xpose.msra.mxu0 0.0
        %1337 = vmatprep.subr.mxu0 0.0
        %1338 = vmatpush1.xpose.msra.mxu0 0.0
        %1339 = vmatprep.subr.mxu0 0.0
        %1340 = vmatpush1.xpose.msra.mxu0 0.0
        %1341 = vmatprep.subr.mxu0 0.0
        %1342 = vmatpush1.xpose.msra.mxu0 0.0
        %1343 = vmatprep.subr.mxu0 0.0
        %1344 = vmatpush1.xpose.msra.mxu0 0.0
        %1345 = vmatprep.subr.mxu0 0.0
        %1346 = vmatpush1.xpose.msra.mxu0 0.0
        %1347 = vmatprep.subr.mxu0 0.0
        %1348 = vmatpush1.xpose.msra.mxu0 0.0
        %1349 = vmatprep.subr.mxu0 0.0
        %1350 = vmatpush1.xpose.msra.mxu0 0.0
        %1351 = vmatprep.subr.mxu0 0.0
        %1352 = vmatpush1.xpose.msra.mxu0 0.0
        %1353 = vmatprep.subr.mxu0 0.0
        %1354 = vmatpush1.xpose.msra.mxu0 0.0
        %1355 = vmatprep.subr.mxu0 0.0
        %1356 = vmatpush1.xpose.msra.mxu0 0.0
        %1357 = vmatprep.mubr.f32.mxu0 0.0
        %1358 = vmatmul.mubr.f32.gmra.mrb[0].mxu0 %v1289
        %v1359 = vpop.f32.mrb[0].mxu0
        %v1360 = vadd.f32 0.0, %v1359
        %v1361 = vpop.f32.mrb[0].mxu0
        %1362 = vdwg.mxu0
        %v1363 = vmul.f32 %v1360, 0.25
        %v1364 = vadd.f32 %v1363, %v951
        %v1365 = vsel %vm1032, %v1364, -inf
        %1366 = vmax.xlane.f32.xlu0 %v1365
        %v1367 = vpop.xlane.xlu0 %1366
        %v1368 = vsub.f32 %v1364, %v1367
        %v1369 = vmul.f32 %v1368, 1.442695
        %v1370 = vpow.pop %v1369
        %v1371 = vsel %vm1032, %v1370, 0.0
        %1372 = vadd.xlane.f32.xlu0 %v1371
        %v1373 = vpop.xlane.xlu0 %1372
        %v1374 = vrcp.pop %v1373
        %v1375 = vmul.f32 %v1370, %v1374
        %1376 = vrot.lane.b32.xlu0 %v943, 96
        %v1377 = vpop.permute.xlu0 %1376
        %v1380 = vsel %vm1032, %v1375, 0
        %1382 = vmatprep.subr.mxu0 0.0
        %1383 = vmatpush1.msra.mxu0 %v1377
        %1384 = vmatprep.subr.mxu0 0.0
        %1385 = vmatpush1.msra.mxu0 0.0
        %1386 = vmatprep.subr.mxu0 0.0
        %1387 = vmatpush1.msra.mxu0 0.0
        %1388 = vmatprep.subr.mxu0 0.0
        %1389 = vmatpush1.msra.mxu0 0.0
        %1390 = vmatprep.subr.mxu0 0.0
        %1391 = vmatpush1.msra.mxu0 0.0
        %1392 = vmatprep.subr.mxu0 0.0
        %1393 = vmatpush1.msra.mxu0 0.0
        %1394 = vmatprep.subr.mxu0 0.0
        %1395 = vmatpush1.msra.mxu0 0.0
        %1396 = vmatprep.subr.mxu0 0.0
        %1397 = vmatpush1.msra.mxu0 0.0
        %1398 = vmatprep.subr.mxu0 0.0
        %1399 = vmatpush1.msra.mxu0 0.0
        %1400 = vmatprep.subr.mxu0 0.0
        %1401 = vmatpush1.msra.mxu0 0.0
        %1402 = vmatprep.subr.mxu0 0.0
        %1403 = vmatpush1.msra.mxu0 0.0
        %1404 = vmatprep.subr.mxu0 0.0
        %1405 = vmatpush1.msra.mxu0 0.0
        %1406 = vmatprep.subr.mxu0 0.0
        %1407 = vmatpush1.msra.mxu0 0.0
        %1408 = vmatprep.subr.mxu0 0.0
        %1409 = vmatpush1.msra.mxu0 0.0
        %1410 = vmatprep.subr.mxu0 0.0
        %1411 = vmatpush1.msra.mxu0 0.0
        %1412 = vmatprep.subr.mxu0 0.0
        %1413 = vmatpush1.msra.mxu0 0.0
        %1414 = vmatprep.subr.mxu0 0.0
        %1415 = vmatpush1.msra.mxu0 0.0
        %1416 = vmatprep.subr.mxu0 0.0
        %1417 = vmatpush1.msra.mxu0 0.0
        %1418 = vmatprep.subr.mxu0 0.0
        %1419 = vmatpush1.msra.mxu0 0.0
        %1420 = vmatprep.subr.mxu0 0.0
        %1421 = vmatpush1.msra.mxu0 0.0
        %1422 = vmatprep.subr.mxu0 0.0
        %1423 = vmatpush1.msra.mxu0 0.0
        %1424 = vmatprep.subr.mxu0 0.0
        %1425 = vmatpush1.msra.mxu0 0.0
        %1426 = vmatprep.subr.mxu0 0.0
        %1427 = vmatpush1.msra.mxu0 0.0
        %1428 = vmatprep.subr.mxu0 0.0
        %1429 = vmatpush1.msra.mxu0 0.0
        %1430 = vmatprep.subr.mxu0 0.0
        %1431 = vmatpush1.msra.mxu0 0.0
        %1432 = vmatprep.subr.mxu0 0.0
        %1433 = vmatpush1.msra.mxu0 0.0
        %1434 = vmatprep.subr.mxu0 0.0
        %1435 = vmatpush1.msra.mxu0 0.0
        %1436 = vmatprep.subr.mxu0 0.0
        %1437 = vmatpush1.msra.mxu0 0.0
        %1438 = vmatprep.subr.mxu0 0.0
        %1439 = vmatpush1.msra.mxu0 0.0
        %1440 = vmatprep.subr.mxu0 0.0
        %1441 = vmatpush1.msra.mxu0 0.0
        %1442 = vmatprep.subr.mxu0 0.0
        %1443 = vmatpush1.msra.mxu0 0.0
        %1444 = vmatprep.subr.mxu0 0.0
        %1445 = vmatpush1.msra.mxu0 0.0
        %1446 = vmatprep.mubr.f32.mxu0 0.0
        %1447 = vmatmul.mubr.f32.gmra.mrb[0].mxu0 %v1380
        %v1448 = vpop.f32.mrb[0].mxu0
        %v1449 = vadd.f32 0.0, %v1448
        %v1450 = vpop.f32.mrb[0].mxu0
        %1451 = vdwg.mxu0
        %1452 = vrot.lane.b32.xlu0 %v941, 80
        %v1453 = vpop.permute.xlu0 %1452
        %1454 = vrot.lane.b32.xlu0 %v941, 16
        %v1455 = vpop.permute.xlu0 %1454
        %v1456 = vsel %vm955, %v1453, 0
        %v1458 = vsel %vm955, %v1455, 0
        %1460 = vmatprep.subr.mxu0 0.0
        %1461 = vmatpush1.xpose.msra.mxu0 %v1458
        %1462 = vmatprep.subr.mxu0 0.0
        %1463 = vmatpush1.xpose.msra.mxu0 0.0
        %1464 = vmatprep.subr.mxu0 0.0
        %1465 = vmatpush1.xpose.msra.mxu0 0.0
        %1466 = vmatprep.subr.mxu0 0.0
        %1467 = vmatpush1.xpose.msra.mxu0 0.0
        %1468 = vmatprep.subr.mxu0 0.0
        %1469 = vmatpush1.xpose.msra.mxu0 0.0
        %1470 = vmatprep.subr.mxu0 0.0
        %1471 = vmatpush1.xpose.msra.mxu0 0.0
        %1472 = vmatprep.subr.mxu0 0.0
        %1473 = vmatpush1.xpose.msra.mxu0 0.0
        %1474 = vmatprep.subr.mxu0 0.0
        %1475 = vmatpush1.xpose.msra.mxu0 0.0
        %1476 = vmatprep.subr.mxu0 0.0
        %1477 = vmatpush1.xpose.msra.mxu0 0.0
        %1478 = vmatprep.subr.mxu0 0.0
        %1479 = vmatpush1.xpose.msra.mxu0 0.0
        %1480 = vmatprep.subr.mxu0 0.0
        %1481 = vmatpush1.xpose.msra.mxu0 0.0
        %1482 = vmatprep.subr.mxu0 0.0
        %1483 = vmatpush1.xpose.msra.mxu0 0.0
        %1484 = vmatprep.subr.mxu0 0.0
        %1485 = vmatpush1.xpose.msra.mxu0 0.0
        %1486 = vmatprep.subr.mxu0 0.0
        %1487 = vmatpush1.xpose.msra.mxu0 0.0
        %1488 = vmatprep.subr.mxu0 0.0
        %1489 = vmatpush1.xpose.msra.mxu0 0.0
        %1490 = vmatprep.subr.mxu0 0.0
        %1491 = vmatpush1.xpose.msra.mxu0 0.0
        %1492 = vmatprep.subr.mxu0 0.0
        %1493 = vmatpush1.xpose.msra.mxu0 0.0
        %1494 = vmatprep.subr.mxu0 0.0
        %1495 = vmatpush1.xpose.msra.mxu0 0.0
        %1496 = vmatprep.subr.mxu0 0.0
        %1497 = vmatpush1.xpose.msra.mxu0 0.0
        %1498 = vmatprep.subr.mxu0 0.0
        %1499 = vmatpush1.xpose.msra.mxu0 0.0
        %1500 = vmatprep.subr.mxu0 0.0
        %1501 = vmatpush1.xpose.msra.mxu0 0.0
        %1502 = vmatprep.subr.mxu0 0.0
        %1503 = vmatpush1.xpose.msra.mxu0 0.0
        %1504 = vmatprep.subr.mxu0 0.0
        %1505 = vmatpush1.xpose.msra.mxu0 0.0
        %1506 = vmatprep.subr.mxu0 0.0
        %1507 = vmatpush1.xpose.msra.mxu0 0.0
        %1508 = vmatprep.subr.mxu0 0.0
        %1509 = vmatpush1.xpose.msra.mxu0 0.0
        %1510 = vmatprep.subr.mxu0 0.0
        %1511 = vmatpush1.xpose.msra.mxu0 0.0
        %1512 = vmatprep.subr.mxu0 0.0
        %1513 = vmatpush1.xpose.msra.mxu0 0.0
        %1514 = vmatprep.subr.mxu0 0.0
        %1515 = vmatpush1.xpose.msra.mxu0 0.0
        %1516 = vmatprep.subr.mxu0 0.0
        %1517 = vmatpush1.xpose.msra.mxu0 0.0
        %1518 = vmatprep.subr.mxu0 0.0
        %1519 = vmatpush1.xpose.msra.mxu0 0.0
        %1520 = vmatprep.subr.mxu0 0.0
        %1521 = vmatpush1.xpose.msra.mxu0 0.0
        %1522 = vmatprep.subr.mxu0 0.0
        %1523 = vmatpush1.xpose.msra.mxu0 0.0
        %1524 = vmatprep.mubr.f32.mxu0 0.0
        %1525 = vmatmul.mubr.f32.gmra.mrb[0].mxu0 %v1456
        %v1526 = vpop.f32.mrb[0].mxu0
        %v1527 = vadd.f32 0.0, %v1526
        %v1528 = vpop.f32.mrb[0].mxu0
        %1529 = vdwg.mxu0
        %v1530 = vmul.f32 %v1527, 0.25
        %v1531 = vadd.f32 %v1530, %v951
        %v1532 = vsel %vm1032, %v1531, -inf
        %1533 = vmax.xlane.f32.xlu0 %v1532
        %v1534 = vpop.xlane.xlu0 %1533
        %v1535 = vsub.f32 %v1531, %v1534
        %v1536 = vmul.f32 %v1535, 1.442695
        %v1537 = vpow.pop %v1536
        %v1538 = vsel %vm1032, %v1537, 0.0
        %1539 = vadd.xlane.f32.xlu0 %v1538
        %v1540 = vpop.xlane.xlu0 %1539
        %v1541 = vrcp.pop %v1540
        %v1542 = vmul.f32 %v1537, %v1541
        %1543 = vrot.lane.b32.xlu0 %v943, 80
        %v1544 = vpop.permute.xlu0 %1543
        %v1547 = vsel %vm1032, %v1542, 0
        %1549 = vmatprep.subr.mxu0 0.0
        %1550 = vmatpush1.msra.mxu0 %v1544
        %1551 = vmatprep.subr.mxu0 0.0
        %1552 = vmatpush1.msra.mxu0 0.0
        %1553 = vmatprep.subr.mxu0 0.0
        %1554 = vmatpush1.msra.mxu0 0.0
        %1555 = vmatprep.subr.mxu0 0.0
        %1556 = vmatpush1.msra.mxu0 0.0
        %1557 = vmatprep.subr.mxu0 0.0
        %1558 = vmatpush1.msra.mxu0 0.0
        %1559 = vmatprep.subr.mxu0 0.0
        %1560 = vmatpush1.msra.mxu0 0.0
        %1561 = vmatprep.subr.mxu0 0.0
        %1562 = vmatpush1.msra.mxu0 0.0
        %1563 = vmatprep.subr.mxu0 0.0
        %1564 = vmatpush1.msra.mxu0 0.0
        %1565 = vmatprep.subr.mxu0 0.0
        %1566 = vmatpush1.msra.mxu0 0.0
        %1567 = vmatprep.subr.mxu0 0.0
        %1568 = vmatpush1.msra.mxu0 0.0
        %1569 = vmatprep.subr.mxu0 0.0
        %1570 = vmatpush1.msra.mxu0 0.0
        %1571 = vmatprep.subr.mxu0 0.0
        %1572 = vmatpush1.msra.mxu0 0.0
        %1573 = vmatprep.subr.mxu0 0.0
        %1574 = vmatpush1.msra.mxu0 0.0
        %1575 = vmatprep.subr.mxu0 0.0
        %1576 = vmatpush1.msra.mxu0 0.0
        %1577 = vmatprep.subr.mxu0 0.0
        %1578 = vmatpush1.msra.mxu0 0.0
        %1579 = vmatprep.subr.mxu0 0.0
        %1580 = vmatpush1.msra.mxu0 0.0
        %1581 = vmatprep.subr.mxu0 0.0
        %1582 = vmatpush1.msra.mxu0 0.0
        %1583 = vmatprep.subr.mxu0 0.0
        %1584 = vmatpush1.msra.mxu0 0.0
        %1585 = vmatprep.subr.mxu0 0.0
        %1586 = vmatpush1.msra.mxu0 0.0
        %1587 = vmatprep.subr.mxu0 0.0
        %1588 = vmatpush1.msra.mxu0 0.0
        %1589 = vmatprep.subr.mxu0 0.0
        %1590 = vmatpush1.msra.mxu0 0.0
        %1591 = vmatprep.subr.mxu0 0.0
        %1592 = vmatpush1.msra.mxu0 0.0
        %1593 = vmatprep.subr.mxu0 0.0
        %1594 = vmatpush1.msra.mxu0 0.0
        %1595 = vmatprep.subr.mxu0 0.0
        %1596 = vmatpush1.msra.mxu0 0.0
        %1597 = vmatprep.subr.mxu0 0.0
        %1598 = vmatpush1.msra.mxu0 0.0
        %1599 = vmatprep.subr.mxu0 0.0
        %1600 = vmatpush1.msra.mxu0 0.0
        %1601 = vmatprep.subr.mxu0 0.0
        %1602 = vmatpush1.msra.mxu0 0.0
        %1603 = vmatprep.subr.mxu0 0.0
        %1604 = vmatpush1.msra.mxu0 0.0
        %1605 = vmatprep.subr.mxu0 0.0
        %1606 = vmatpush1.msra.mxu0 0.0
        %1607 = vmatprep.subr.mxu0 0.0
        %1608 = vmatpush1.msra.mxu0 0.0
        %1609 = vmatprep.subr.mxu0 0.0
        %1610 = vmatpush1.msra.mxu0 0.0
        %1611 = vmatprep.subr.mxu0 0.0
        %1612 = vmatpush1.msra.mxu0 0.0
        %1613 = vmatprep.mubr.f32.mxu0 0.0
        %1614 = vmatmul.mubr.f32.gmra.mrb[0].mxu0 %v1547
        %v1615 = vpop.f32.mrb[0].mxu0
        %v1616 = vadd.f32 0.0, %v1615
        %v1617 = vpop.f32.mrb[0].mxu0
        %1618 = vdwg.mxu0
        %1620 = vrot.lane.b32.xlu0 %v1282, 16
        %v1621 = vpop.permute.xlu0 %1620
        %1624 = vrot.lane.b32.xlu0 %v1449, 32
        %v1625 = vpop.permute.xlu0 %1624
        %1628 = vrot.lane.b32.xlu0 %v1616, 48
        %v1629 = vpop.permute.xlu0 %1628
        %v1631 = vsel %vm955, %v1114, %v1621
        %vm1632 = vcmask 261120
        %v1633 = vsel %vm1632, %v1631, %v1625
        %vm1634 = vcmask 392192
        %v1635 = vsel %vm1634, %v1633, %v1629
        %s1636 = scalar_lea.vmem [#allocation2], 8
        %v1637 = vld [vmem:[%s1636] sm:$0xff]
        %1639 = vrot.lane.b32.xlu0 %v947, 64
        %v1640 = vpop.permute.xlu0 %1639
        %v1641 = vsel %vm955, %v947, 0
        %v1643 = vsel %vm955, %v1640, 0
        %1645 = vmatprep.subr.mxu0 0.0
        %1646 = vmatpush1.xpose.msra.mxu0 %v1643
        %1647 = vmatprep.subr.mxu0 0.0
        %1648 = vmatpush1.xpose.msra.mxu0 0.0
        %1649 = vmatprep.subr.mxu0 0.0
        %1650 = vmatpush1.xpose.msra.mxu0 0.0
        %1651 = vmatprep.subr.mxu0 0.0
        %1652 = vmatpush1.xpose.msra.mxu0 0.0
        %1653 = vmatprep.subr.mxu0 0.0
        %1654 = vmatpush1.xpose.msra.mxu0 0.0
        %1655 = vmatprep.subr.mxu0 0.0
        %1656 = vmatpush1.xpose.msra.mxu0 0.0
        %1657 = vmatprep.subr.mxu0 0.0
        %1658 = vmatpush1.xpose.msra.mxu0 0.0
        %1659 = vmatprep.subr.mxu0 0.0
        %1660 = vmatpush1.xpose.msra.mxu0 0.0
        %1661 = vmatprep.subr.mxu0 0.0
        %1662 = vmatpush1.xpose.msra.mxu0 0.0
        %1663 = vmatprep.subr.mxu0 0.0
        %1664 = vmatpush1.xpose.msra.mxu0 0.0
        %1665 = vmatprep.subr.mxu0 0.0
        %1666 = vmatpush1.xpose.msra.mxu0 0.0
        %1667 = vmatprep.subr.mxu0 0.0
        %1668 = vmatpush1.xpose.msra.mxu0 0.0
        %1669 = vmatprep.subr.mxu0 0.0
        %1670 = vmatpush1.xpose.msra.mxu0 0.0
        %1671 = vmatprep.subr.mxu0 0.0
        %1672 = vmatpush1.xpose.msra.mxu0 0.0
        %1673 = vmatprep.subr.mxu0 0.0
        %1674 = vmatpush1.xpose.msra.mxu0 0.0
        %1675 = vmatprep.subr.mxu0 0.0
        %1676 = vmatpush1.xpose.msra.mxu0 0.0
        %1677 = vmatprep.subr.mxu0 0.0
        %1678 = vmatpush1.xpose.msra.mxu0 0.0
        %1679 = vmatprep.subr.mxu0 0.0
        %1680 = vmatpush1.xpose.msra.mxu0 0.0
        %1681 = vmatprep.subr.mxu0 0.0
        %1682 = vmatpush1.xpose.msra.mxu0 0.0
        %1683 = vmatprep.subr.mxu0 0.0
        %1684 = vmatpush1.xpose.msra.mxu0 0.0
        %1685 = vmatprep.subr.mxu0 0.0
        %1686 = vmatpush1.xpose.msra.mxu0 0.0
        %1687 = vmatprep.subr.mxu0 0.0
        %1688 = vmatpush1.xpose.msra.mxu0 0.0
        %1689 = vmatprep.subr.mxu0 0.0
        %1690 = vmatpush1.xpose.msra.mxu0 0.0
        %1691 = vmatprep.subr.mxu0 0.0
        %1692 = vmatpush1.xpose.msra.mxu0 0.0
        %1693 = vmatprep.subr.mxu0 0.0
        %1694 = vmatpush1.xpose.msra.mxu0 0.0
        %1695 = vmatprep.subr.mxu0 0.0
        %1696 = vmatpush1.xpose.msra.mxu0 0.0
        %1697 = vmatprep.subr.mxu0 0.0
        %1698 = vmatpush1.xpose.msra.mxu0 0.0
        %1699 = vmatprep.subr.mxu0 0.0
        %1700 = vmatpush1.xpose.msra.mxu0 0.0
        %1701 = vmatprep.subr.mxu0 0.0
        %1702 = vmatpush1.xpose.msra.mxu0 0.0
        %1703 = vmatprep.subr.mxu0 0.0
        %1704 = vmatpush1.xpose.msra.mxu0 0.0
        %1705 = vmatprep.subr.mxu0 0.0
        %1706 = vmatpush1.xpose.msra.mxu0 0.0
        %1707 = vmatprep.subr.mxu0 0.0
        %1708 = vmatpush1.xpose.msra.mxu0 0.0
        %1709 = vmatprep.mubr.f32.mxu0 0.0
        %1710 = vmatmul.mubr.f32.gmra.mrb[0].mxu0 %v1641
        %v1711 = vpop.f32.mrb[0].mxu0
        %v1712 = vadd.f32 0.0, %v1711
        %v1713 = vpop.f32.mrb[0].mxu0
        %1714 = vdwg.mxu0
        %v1715 = vmul.f32 %v1712, 0.25
        %v1716 = vadd.f32 %v1715, %v1637
        %v1717 = vsel %vm1032, %v1716, -inf
        %1718 = vmax.xlane.f32.xlu0 %v1717
        %v1719 = vpop.xlane.xlu0 %1718
        %v1720 = vsub.f32 %v1716, %v1719
        %v1721 = vmul.f32 %v1720, 1.442695
        %v1722 = vpow.pop %v1721
        %v1723 = vsel %vm1032, %v1722, 0.0
        %1724 = vadd.xlane.f32.xlu0 %v1723
        %v1725 = vpop.xlane.xlu0 %1724
        %v1726 = vrcp.pop %v1725
        %v1727 = vmul.f32 %v1722, %v1726
        %v1729 = vsel %vm1032, %v1727, 0
        %1731 = vmatprep.subr.mxu0 0.0
        %1732 = vmatpush1.msra.mxu0 %v949
        %1733 = vmatprep.subr.mxu0 0.0
        %1734 = vmatpush1.msra.mxu0 0.0
        %1735 = vmatprep.subr.mxu0 0.0
        %1736 = vmatpush1.msra.mxu0 0.0
        %1737 = vmatprep.subr.mxu0 0.0
        %1738 = vmatpush1.msra.mxu0 0.0
        %1739 = vmatprep.subr.mxu0 0.0
        %1740 = vmatpush1.msra.mxu0 0.0
        %1741 = vmatprep.subr.mxu0 0.0
        %1742 = vmatpush1.msra.mxu0 0.0
        %1743 = vmatprep.subr.mxu0 0.0
        %1744 = vmatpush1.msra.mxu0 0.0
        %1745 = vmatprep.subr.mxu0 0.0
        %1746 = vmatpush1.msra.mxu0 0.0
        %1747 = vmatprep.subr.mxu0 0.0
        %1748 = vmatpush1.msra.mxu0 0.0
        %1749 = vmatprep.subr.mxu0 0.0
        %1750 = vmatpush1.msra.mxu0 0.0
        %1751 = vmatprep.subr.mxu0 0.0
        %1752 = vmatpush1.msra.mxu0 0.0
        %1753 = vmatprep.subr.mxu0 0.0
        %1754 = vmatpush1.msra.mxu0 0.0
        %1755 = vmatprep.subr.mxu0 0.0
        %1756 = vmatpush1.msra.mxu0 0.0
        %1757 = vmatprep.subr.mxu0 0.0
        %1758 = vmatpush1.msra.mxu0 0.0
        %1759 = vmatprep.subr.mxu0 0.0
        %1760 = vmatpush1.msra.mxu0 0.0
        %1761 = vmatprep.subr.mxu0 0.0
        %1762 = vmatpush1.msra.mxu0 0.0
        %1763 = vmatprep.subr.mxu0 0.0
        %1764 = vmatpush1.msra.mxu0 0.0
        %1765 = vmatprep.subr.mxu0 0.0
        %1766 = vmatpush1.msra.mxu0 0.0
        %1767 = vmatprep.subr.mxu0 0.0
        %1768 = vmatpush1.msra.mxu0 0.0
        %1769 = vmatprep.subr.mxu0 0.0
        %1770 = vmatpush1.msra.mxu0 0.0
        %1771 = vmatprep.subr.mxu0 0.0
        %1772 = vmatpush1.msra.mxu0 0.0
        %1773 = vmatprep.subr.mxu0 0.0
        %1774 = vmatpush1.msra.mxu0 0.0
        %1775 = vmatprep.subr.mxu0 0.0
        %1776 = vmatpush1.msra.mxu0 0.0
        %1777 = vmatprep.subr.mxu0 0.0
        %1778 = vmatpush1.msra.mxu0 0.0
        %1779 = vmatprep.subr.mxu0 0.0
        %1780 = vmatpush1.msra.mxu0 0.0
        %1781 = vmatprep.subr.mxu0 0.0
        %1782 = vmatpush1.msra.mxu0 0.0
        %1783 = vmatprep.subr.mxu0 0.0
        %1784 = vmatpush1.msra.mxu0 0.0
        %1785 = vmatprep.subr.mxu0 0.0
        %1786 = vmatpush1.msra.mxu0 0.0
        %1787 = vmatprep.subr.mxu0 0.0
        %1788 = vmatpush1.msra.mxu0 0.0
        %1789 = vmatprep.subr.mxu0 0.0
        %1790 = vmatpush1.msra.mxu0 0.0
        %1791 = vmatprep.subr.mxu0 0.0
        %1792 = vmatpush1.msra.mxu0 0.0
        %1793 = vmatprep.subr.mxu0 0.0
        %1794 = vmatpush1.msra.mxu0 0.0
        %1795 = vmatprep.mubr.f32.mxu0 0.0
        %1796 = vmatmul.mubr.f32.gmra.mrb[0].mxu0 %v1729
        %v1797 = vpop.f32.mrb[0].mxu0
        %v1798 = vadd.f32 0.0, %v1797
        %v1799 = vpop.f32.mrb[0].mxu0
        %1800 = vdwg.mxu0
        %1801 = vrot.lane.b32.xlu0 %v947, 112
        %v1802 = vpop.permute.xlu0 %1801
        %1803 = vrot.lane.b32.xlu0 %v947, 48
        %v1804 = vpop.permute.xlu0 %1803
        %v1805 = vsel %vm955, %v1802, 0
        %v1807 = vsel %vm955, %v1804, 0
        %1809 = vmatprep.subr.mxu0 0.0
        %1810 = vmatpush1.xpose.msra.mxu0 %v1807
        %1811 = vmatprep.subr.mxu0 0.0
        %1812 = vmatpush1.xpose.msra.mxu0 0.0
        %1813 = vmatprep.subr.mxu0 0.0
        %1814 = vmatpush1.xpose.msra.mxu0 0.0
        %1815 = vmatprep.subr.mxu0 0.0
        %1816 = vmatpush1.xpose.msra.mxu0 0.0
        %1817 = vmatprep.subr.mxu0 0.0
        %1818 = vmatpush1.xpose.msra.mxu0 0.0
        %1819 = vmatprep.subr.mxu0 0.0
        %1820 = vmatpush1.xpose.msra.mxu0 0.0
        %1821 = vmatprep.subr.mxu0 0.0
        %1822 = vmatpush1.xpose.msra.mxu0 0.0
        %1823 = vmatprep.subr.mxu0 0.0
        %1824 = vmatpush1.xpose.msra.mxu0 0.0
        %1825 = vmatprep.subr.mxu0 0.0
        %1826 = vmatpush1.xpose.msra.mxu0 0.0
        %1827 = vmatprep.subr.mxu0 0.0
        %1828 = vmatpush1.xpose.msra.mxu0 0.0
        %1829 = vmatprep.subr.mxu0 0.0
        %1830 = vmatpush1.xpose.msra.mxu0 0.0
        %1831 = vmatprep.subr.mxu0 0.0
        %1832 = vmatpush1.xpose.msra.mxu0 0.0
        %1833 = vmatprep.subr.mxu0 0.0
        %1834 = vmatpush1.xpose.msra.mxu0 0.0
        %1835 = vmatprep.subr.mxu0 0.0
        %1836 = vmatpush1.xpose.msra.mxu0 0.0
        %1837 = vmatprep.subr.mxu0 0.0
        %1838 = vmatpush1.xpose.msra.mxu0 0.0
        %1839 = vmatprep.subr.mxu0 0.0
        %1840 = vmatpush1.xpose.msra.mxu0 0.0
        %1841 = vmatprep.subr.mxu0 0.0
        %1842 = vmatpush1.xpose.msra.mxu0 0.0
        %1843 = vmatprep.subr.mxu0 0.0
        %1844 = vmatpush1.xpose.msra.mxu0 0.0
        %1845 = vmatprep.subr.mxu0 0.0
        %1846 = vmatpush1.xpose.msra.mxu0 0.0
        %1847 = vmatprep.subr.mxu0 0.0
        %1848 = vmatpush1.xpose.msra.mxu0 0.0
        %1849 = vmatprep.subr.mxu0 0.0
        %1850 = vmatpush1.xpose.msra.mxu0 0.0
        %1851 = vmatprep.subr.mxu0 0.0
        %1852 = vmatpush1.xpose.msra.mxu0 0.0
        %1853 = vmatprep.subr.mxu0 0.0
        %1854 = vmatpush1.xpose.msra.mxu0 0.0
        %1855 = vmatprep.subr.mxu0 0.0
        %1856 = vmatpush1.xpose.msra.mxu0 0.0
        %1857 = vmatprep.subr.mxu0 0.0
        %1858 = vmatpush1.xpose.msra.mxu0 0.0
        %1859 = vmatprep.subr.mxu0 0.0
        %1860 = vmatpush1.xpose.msra.mxu0 0.0
        %1861 = vmatprep.subr.mxu0 0.0
        %1862 = vmatpush1.xpose.msra.mxu0 0.0
        %1863 = vmatprep.subr.mxu0 0.0
        %1864 = vmatpush1.xpose.msra.mxu0 0.0
        %1865 = vmatprep.subr.mxu0 0.0
        %1866 = vmatpush1.xpose.msra.mxu0 0.0
        %1867 = vmatprep.subr.mxu0 0.0
        %1868 = vmatpush1.xpose.msra.mxu0 0.0
        %1869 = vmatprep.subr.mxu0 0.0
        %1870 = vmatpush1.xpose.msra.mxu0 0.0
        %1871 = vmatprep.subr.mxu0 0.0
        %1872 = vmatpush1.xpose.msra.mxu0 0.0
        %1873 = vmatprep.mubr.f32.mxu0 0.0
        %1874 = vmatmul.mubr.f32.gmra.mrb[0].mxu0 %v1805
        %v1875 = vpop.f32.mrb[0].mxu0
        %v1876 = vadd.f32 0.0, %v1875
        %v1877 = vpop.f32.mrb[0].mxu0
        %1878 = vdwg.mxu0
        %v1879 = vmul.f32 %v1876, 0.25
        %v1880 = vadd.f32 %v1879, %v1637
        %v1881 = vsel %vm1032, %v1880, -inf
        %1882 = vmax.xlane.f32.xlu0 %v1881
        %v1883 = vpop.xlane.xlu0 %1882
        %v1884 = vsub.f32 %v1880, %v1883
        %v1885 = vmul.f32 %v1884, 1.442695
        %v1886 = vpow.pop %v1885
        %v1887 = vsel %vm1032, %v1886, 0.0
        %1888 = vadd.xlane.f32.xlu0 %v1887
        %v1889 = vpop.xlane.xlu0 %1888
        %v1890 = vrcp.pop %v1889
        %v1891 = vmul.f32 %v1886, %v1890
        %1893 = vrot.lane.b32.xlu0 %v949, 112
        %v1894 = vpop.permute.xlu0 %1893
        %v1897 = vsel %vm1032, %v1891, 0
        %1899 = vmatprep.subr.mxu0 0.0
        %1900 = vmatpush1.msra.mxu0 %v1894
        %1901 = vmatprep.subr.mxu0 0.0
        %1902 = vmatpush1.msra.mxu0 0.0
        %1903 = vmatprep.subr.mxu0 0.0
        %1904 = vmatpush1.msra.mxu0 0.0
        %1905 = vmatprep.subr.mxu0 0.0
        %1906 = vmatpush1.msra.mxu0 0.0
        %1907 = vmatprep.subr.mxu0 0.0
        %1908 = vmatpush1.msra.mxu0 0.0
        %1909 = vmatprep.subr.mxu0 0.0
        %1910 = vmatpush1.msra.mxu0 0.0
        %1911 = vmatprep.subr.mxu0 0.0
        %1912 = vmatpush1.msra.mxu0 0.0
        %1913 = vmatprep.subr.mxu0 0.0
        %1914 = vmatpush1.msra.mxu0 0.0
        %1915 = vmatprep.subr.mxu0 0.0
        %1916 = vmatpush1.msra.mxu0 0.0
        %1917 = vmatprep.subr.mxu0 0.0
        %1918 = vmatpush1.msra.mxu0 0.0
        %1919 = vmatprep.subr.mxu0 0.0
        %1920 = vmatpush1.msra.mxu0 0.0
        %1921 = vmatprep.subr.mxu0 0.0
        %1922 = vmatpush1.msra.mxu0 0.0
        %1923 = vmatprep.subr.mxu0 0.0
        %1924 = vmatpush1.msra.mxu0 0.0
        %1925 = vmatprep.subr.mxu0 0.0
        %1926 = vmatpush1.msra.mxu0 0.0
        %1927 = vmatprep.subr.mxu0 0.0
        %1928 = vmatpush1.msra.mxu0 0.0
        %1929 = vmatprep.subr.mxu0 0.0
        %1930 = vmatpush1.msra.mxu0 0.0
        %1931 = vmatprep.subr.mxu0 0.0
        %1932 = vmatpush1.msra.mxu0 0.0
        %1933 = vmatprep.subr.mxu0 0.0
        %1934 = vmatpush1.msra.mxu0 0.0
        %1935 = vmatprep.subr.mxu0 0.0
        %1936 = vmatpush1.msra.mxu0 0.0
        %1937 = vmatprep.subr.mxu0 0.0
        %1938 = vmatpush1.msra.mxu0 0.0
        %1939 = vmatprep.subr.mxu0 0.0
        %1940 = vmatpush1.msra.mxu0 0.0
        %1941 = vmatprep.subr.mxu0 0.0
        %1942 = vmatpush1.msra.mxu0 0.0
        %1943 = vmatprep.subr.mxu0 0.0
        %1944 = vmatpush1.msra.mxu0 0.0
        %1945 = vmatprep.subr.mxu0 0.0
        %1946 = vmatpush1.msra.mxu0 0.0
        %1947 = vmatprep.subr.mxu0 0.0
        %1948 = vmatpush1.msra.mxu0 0.0
        %1949 = vmatprep.subr.mxu0 0.0
        %1950 = vmatpush1.msra.mxu0 0.0
        %1951 = vmatprep.subr.mxu0 0.0
        %1952 = vmatpush1.msra.mxu0 0.0
        %1953 = vmatprep.subr.mxu0 0.0
        %1954 = vmatpush1.msra.mxu0 0.0
        %1955 = vmatprep.subr.mxu0 0.0
        %1956 = vmatpush1.msra.mxu0 0.0
        %1957 = vmatprep.subr.mxu0 0.0
        %1958 = vmatpush1.msra.mxu0 0.0
        %1959 = vmatprep.subr.mxu0 0.0
        %1960 = vmatpush1.msra.mxu0 0.0
        %1961 = vmatprep.subr.mxu0 0.0
        %1962 = vmatpush1.msra.mxu0 0.0
        %1963 = vmatprep.mubr.f32.mxu0 0.0
        %1964 = vmatmul.mubr.f32.gmra.mrb[0].mxu0 %v1897
        %v1965 = vpop.f32.mrb[0].mxu0
        %v1966 = vadd.f32 0.0, %v1965
        %v1967 = vpop.f32.mrb[0].mxu0
        %1968 = vdwg.mxu0
        %1969 = vrot.lane.b32.xlu0 %v947, 96
        %v1970 = vpop.permute.xlu0 %1969
        %1971 = vrot.lane.b32.xlu0 %v947, 32
        %v1972 = vpop.permute.xlu0 %1971
        %v1973 = vsel %vm955, %v1970, 0
        %v1975 = vsel %vm955, %v1972, 0
        %1977 = vmatprep.subr.mxu0 0.0
        %1978 = vmatpush1.xpose.msra.mxu0 %v1975
        %1979 = vmatprep.subr.mxu0 0.0
        %1980 = vmatpush1.xpose.msra.mxu0 0.0
        %1981 = vmatprep.subr.mxu0 0.0
        %1982 = vmatpush1.xpose.msra.mxu0 0.0
        %1983 = vmatprep.subr.mxu0 0.0
        %1984 = vmatpush1.xpose.msra.mxu0 0.0
        %1985 = vmatprep.subr.mxu0 0.0
        %1986 = vmatpush1.xpose.msra.mxu0 0.0
        %1987 = vmatprep.subr.mxu0 0.0
        %1988 = vmatpush1.xpose.msra.mxu0 0.0
        %1989 = vmatprep.subr.mxu0 0.0
        %1990 = vmatpush1.xpose.msra.mxu0 0.0
        %1991 = vmatprep.subr.mxu0 0.0
        %1992 = vmatpush1.xpose.msra.mxu0 0.0
        %1993 = vmatprep.subr.mxu0 0.0
        %1994 = vmatpush1.xpose.msra.mxu0 0.0
        %1995 = vmatprep.subr.mxu0 0.0
        %1996 = vmatpush1.xpose.msra.mxu0 0.0
        %1997 = vmatprep.subr.mxu0 0.0
        %1998 = vmatpush1.xpose.msra.mxu0 0.0
        %1999 = vmatprep.subr.mxu0 0.0
        %2000 = vmatpush1.xpose.msra.mxu0 0.0
        %2001 = vmatprep.subr.mxu0 0.0
        %2002 = vmatpush1.xpose.msra.mxu0 0.0
        %2003 = vmatprep.subr.mxu0 0.0
        %2004 = vmatpush1.xpose.msra.mxu0 0.0
        %2005 = vmatprep.subr.mxu0 0.0
        %2006 = vmatpush1.xpose.msra.mxu0 0.0
        %2007 = vmatprep.subr.mxu0 0.0
        %2008 = vmatpush1.xpose.msra.mxu0 0.0
        %2009 = vmatprep.subr.mxu0 0.0
        %2010 = vmatpush1.xpose.msra.mxu0 0.0
        %2011 = vmatprep.subr.mxu0 0.0
        %2012 = vmatpush1.xpose.msra.mxu0 0.0
        %2013 = vmatprep.subr.mxu0 0.0
        %2014 = vmatpush1.xpose.msra.mxu0 0.0
        %2015 = vmatprep.subr.mxu0 0.0
        %2016 = vmatpush1.xpose.msra.mxu0 0.0
        %2017 = vmatprep.subr.mxu0 0.0
        %2018 = vmatpush1.xpose.msra.mxu0 0.0
        %2019 = vmatprep.subr.mxu0 0.0
        %2020 = vmatpush1.xpose.msra.mxu0 0.0
        %2021 = vmatprep.subr.mxu0 0.0
        %2022 = vmatpush1.xpose.msra.mxu0 0.0
        %2023 = vmatprep.subr.mxu0 0.0
        %2024 = vmatpush1.xpose.msra.mxu0 0.0
        %2025 = vmatprep.subr.mxu0 0.0
        %2026 = vmatpush1.xpose.msra.mxu0 0.0
        %2027 = vmatprep.subr.mxu0 0.0
        %2028 = vmatpush1.xpose.msra.mxu0 0.0
        %2029 = vmatprep.subr.mxu0 0.0
        %2030 = vmatpush1.xpose.msra.mxu0 0.0
        %2031 = vmatprep.subr.mxu0 0.0
        %2032 = vmatpush1.xpose.msra.mxu0 0.0
        %2033 = vmatprep.subr.mxu0 0.0
        %2034 = vmatpush1.xpose.msra.mxu0 0.0
        %2035 = vmatprep.subr.mxu0 0.0
        %2036 = vmatpush1.xpose.msra.mxu0 0.0
        %2037 = vmatprep.subr.mxu0 0.0
        %2038 = vmatpush1.xpose.msra.mxu0 0.0
        %2039 = vmatprep.subr.mxu0 0.0
        %2040 = vmatpush1.xpose.msra.mxu0 0.0
        %2041 = vmatprep.mubr.f32.mxu0 0.0
        %2042 = vmatmul.mubr.f32.gmra.mrb[0].mxu0 %v1973
        %v2043 = vpop.f32.mrb[0].mxu0
        %v2044 = vadd.f32 0.0, %v2043
        %v2045 = vpop.f32.mrb[0].mxu0
        %2046 = vdwg.mxu0
        %v2047 = vmul.f32 %v2044, 0.25
        %v2048 = vadd.f32 %v2047, %v1637
        %v2049 = vsel %vm1032, %v2048, -inf
        %2050 = vmax.xlane.f32.xlu0 %v2049
        %v2051 = vpop.xlane.xlu0 %2050
        %v2052 = vsub.f32 %v2048, %v2051
        %v2053 = vmul.f32 %v2052, 1.442695
        %v2054 = vpow.pop %v2053
        %v2055 = vsel %vm1032, %v2054, 0.0
        %2056 = vadd.xlane.f32.xlu0 %v2055
        %v2057 = vpop.xlane.xlu0 %2056
        %v2058 = vrcp.pop %v2057
        %v2059 = vmul.f32 %v2054, %v2058
        %2060 = vrot.lane.b32.xlu0 %v949, 96
        %v2061 = vpop.permute.xlu0 %2060
        %v2064 = vsel %vm1032, %v2059, 0
        %2066 = vmatprep.subr.mxu0 0.0
        %2067 = vmatpush1.msra.mxu0 %v2061
        %2068 = vmatprep.subr.mxu0 0.0
        %2069 = vmatpush1.msra.mxu0 0.0
        %2070 = vmatprep.subr.mxu0 0.0
        %2071 = vmatpush1.msra.mxu0 0.0
        %2072 = vmatprep.subr.mxu0 0.0
        %2073 = vmatpush1.msra.mxu0 0.0
        %2074 = vmatprep.subr.mxu0 0.0
        %2075 = vmatpush1.msra.mxu0 0.0
        %2076 = vmatprep.subr.mxu0 0.0
        %2077 = vmatpush1.msra.mxu0 0.0
        %2078 = vmatprep.subr.mxu0 0.0
        %2079 = vmatpush1.msra.mxu0 0.0
        %2080 = vmatprep.subr.mxu0 0.0
        %2081 = vmatpush1.msra.mxu0 0.0
        %2082 = vmatprep.subr.mxu0 0.0
        %2083 = vmatpush1.msra.mxu0 0.0
        %2084 = vmatprep.subr.mxu0 0.0
        %2085 = vmatpush1.msra.mxu0 0.0
        %2086 = vmatprep.subr.mxu0 0.0
        %2087 = vmatpush1.msra.mxu0 0.0
        %2088 = vmatprep.subr.mxu0 0.0
        %2089 = vmatpush1.msra.mxu0 0.0
        %2090 = vmatprep.subr.mxu0 0.0
        %2091 = vmatpush1.msra.mxu0 0.0
        %2092 = vmatprep.subr.mxu0 0.0
        %2093 = vmatpush1.msra.mxu0 0.0
        %2094 = vmatprep.subr.mxu0 0.0
        %2095 = vmatpush1.msra.mxu0 0.0
        %2096 = vmatprep.subr.mxu0 0.0
        %2097 = vmatpush1.msra.mxu0 0.0
        %2098 = vmatprep.subr.mxu0 0.0
        %2099 = vmatpush1.msra.mxu0 0.0
        %2100 = vmatprep.subr.mxu0 0.0
        %2101 = vmatpush1.msra.mxu0 0.0
        %2102 = vmatprep.subr.mxu0 0.0
        %2103 = vmatpush1.msra.mxu0 0.0
        %2104 = vmatprep.subr.mxu0 0.0
        %2105 = vmatpush1.msra.mxu0 0.0
        %2106 = vmatprep.subr.mxu0 0.0
        %2107 = vmatpush1.msra.mxu0 0.0
        %2108 = vmatprep.subr.mxu0 0.0
        %2109 = vmatpush1.msra.mxu0 0.0
        %2110 = vmatprep.subr.mxu0 0.0
        %2111 = vmatpush1.msra.mxu0 0.0
        %2112 = vmatprep.subr.mxu0 0.0
        %2113 = vmatpush1.msra.mxu0 0.0
        %2114 = vmatprep.subr.mxu0 0.0
        %2115 = vmatpush1.msra.mxu0 0.0
        %2116 = vmatprep.subr.mxu0 0.0
        %2117 = vmatpush1.msra.mxu0 0.0
        %2118 = vmatprep.subr.mxu0 0.0
        %2119 = vmatpush1.msra.mxu0 0.0
        %2120 = vmatprep.subr.mxu0 0.0
        %2121 = vmatpush1.msra.mxu0 0.0
        %2122 = vmatprep.subr.mxu0 0.0
        %2123 = vmatpush1.msra.mxu0 0.0
        %2124 = vmatprep.subr.mxu0 0.0
        %2125 = vmatpush1.msra.mxu0 0.0
        %2126 = vmatprep.subr.mxu0 0.0
        %2127 = vmatpush1.msra.mxu0 0.0
        %2128 = vmatprep.subr.mxu0 0.0
        %2129 = vmatpush1.msra.mxu0 0.0
        %2130 = vmatprep.mubr.f32.mxu0 0.0
        %2131 = vmatmul.mubr.f32.gmra.mrb[0].mxu0 %v2064
        %v2132 = vpop.f32.mrb[0].mxu0
        %v2133 = vadd.f32 0.0, %v2132
        %v2134 = vpop.f32.mrb[0].mxu0
        %2135 = vdwg.mxu0
        %2136 = vrot.lane.b32.xlu0 %v947, 80
        %v2137 = vpop.permute.xlu0 %2136
        %2138 = vrot.lane.b32.xlu0 %v947, 16
        %v2139 = vpop.permute.xlu0 %2138
        %v2140 = vsel %vm955, %v2137, 0
        %v2142 = vsel %vm955, %v2139, 0
        %2144 = vmatprep.subr.mxu0 0.0
        %2145 = vmatpush1.xpose.msra.mxu0 %v2142
        %2146 = vmatprep.subr.mxu0 0.0
        %2147 = vmatpush1.xpose.msra.mxu0 0.0
        %2148 = vmatprep.subr.mxu0 0.0
        %2149 = vmatpush1.xpose.msra.mxu0 0.0
        %2150 = vmatprep.subr.mxu0 0.0
        %2151 = vmatpush1.xpose.msra.mxu0 0.0
        %2152 = vmatprep.subr.mxu0 0.0
        %2153 = vmatpush1.xpose.msra.mxu0 0.0
        %2154 = vmatprep.subr.mxu0 0.0
        %2155 = vmatpush1.xpose.msra.mxu0 0.0
        %2156 = vmatprep.subr.mxu0 0.0
        %2157 = vmatpush1.xpose.msra.mxu0 0.0
        %2158 = vmatprep.subr.mxu0 0.0
        %2159 = vmatpush1.xpose.msra.mxu0 0.0
        %2160 = vmatprep.subr.mxu0 0.0
        %2161 = vmatpush1.xpose.msra.mxu0 0.0
        %2162 = vmatprep.subr.mxu0 0.0
        %2163 = vmatpush1.xpose.msra.mxu0 0.0
        %2164 = vmatprep.subr.mxu0 0.0
        %2165 = vmatpush1.xpose.msra.mxu0 0.0
        %2166 = vmatprep.subr.mxu0 0.0
        %2167 = vmatpush1.xpose.msra.mxu0 0.0
        %2168 = vmatprep.subr.mxu0 0.0
        %2169 = vmatpush1.xpose.msra.mxu0 0.0
        %2170 = vmatprep.subr.mxu0 0.0
        %2171 = vmatpush1.xpose.msra.mxu0 0.0
        %2172 = vmatprep.subr.mxu0 0.0
        %2173 = vmatpush1.xpose.msra.mxu0 0.0
        %2174 = vmatprep.subr.mxu0 0.0
        %2175 = vmatpush1.xpose.msra.mxu0 0.0
        %2176 = vmatprep.subr.mxu0 0.0
        %2177 = vmatpush1.xpose.msra.mxu0 0.0
        %2178 = vmatprep.subr.mxu0 0.0
        %2179 = vmatpush1.xpose.msra.mxu0 0.0
        %2180 = vmatprep.subr.mxu0 0.0
        %2181 = vmatpush1.xpose.msra.mxu0 0.0
        %2182 = vmatprep.subr.mxu0 0.0
        %2183 = vmatpush1.xpose.msra.mxu0 0.0
        %2184 = vmatprep.subr.mxu0 0.0
        %2185 = vmatpush1.xpose.msra.mxu0 0.0
        %2186 = vmatprep.subr.mxu0 0.0
        %2187 = vmatpush1.xpose.msra.mxu0 0.0
        %2188 = vmatprep.subr.mxu0 0.0
        %2189 = vmatpush1.xpose.msra.mxu0 0.0
        %2190 = vmatprep.subr.mxu0 0.0
        %2191 = vmatpush1.xpose.msra.mxu0 0.0
        %2192 = vmatprep.subr.mxu0 0.0
        %2193 = vmatpush1.xpose.msra.mxu0 0.0
        %2194 = vmatprep.subr.mxu0 0.0
        %2195 = vmatpush1.xpose.msra.mxu0 0.0
        %2196 = vmatprep.subr.mxu0 0.0
        %2197 = vmatpush1.xpose.msra.mxu0 0.0
        %2198 = vmatprep.subr.mxu0 0.0
        %2199 = vmatpush1.xpose.msra.mxu0 0.0
        %2200 = vmatprep.subr.mxu0 0.0
        %2201 = vmatpush1.xpose.msra.mxu0 0.0
        %2202 = vmatprep.subr.mxu0 0.0
        %2203 = vmatpush1.xpose.msra.mxu0 0.0
        %2204 = vmatprep.subr.mxu0 0.0
        %2205 = vmatpush1.xpose.msra.mxu0 0.0
        %2206 = vmatprep.subr.mxu0 0.0
        %2207 = vmatpush1.xpose.msra.mxu0 0.0
        %2208 = vmatprep.mubr.f32.mxu0 0.0
        %2209 = vmatmul.mubr.f32.gmra.mrb[0].mxu0 %v2140
        %v2210 = vpop.f32.mrb[0].mxu0
        %v2211 = vadd.f32 0.0, %v2210
        %v2212 = vpop.f32.mrb[0].mxu0
        %2213 = vdwg.mxu0
        %v2214 = vmul.f32 %v2211, 0.25
        %v2215 = vadd.f32 %v2214, %v1637
        %v2216 = vsel %vm1032, %v2215, -inf
        %2217 = vmax.xlane.f32.xlu0 %v2216
        %v2218 = vpop.xlane.xlu0 %2217
        %v2219 = vsub.f32 %v2215, %v2218
        %v2220 = vmul.f32 %v2219, 1.442695
        %v2221 = vpow.pop %v2220
        %v2222 = vsel %vm1032, %v2221, 0.0
        %2223 = vadd.xlane.f32.xlu0 %v2222
        %v2224 = vpop.xlane.xlu0 %2223
        %v2225 = vrcp.pop %v2224
        %v2226 = vmul.f32 %v2221, %v2225
        %2227 = vrot.lane.b32.xlu0 %v949, 80
        %v2228 = vpop.permute.xlu0 %2227
        %v2231 = vsel %vm1032, %v2226, 0
        %2233 = vmatprep.subr.mxu0 0.0
        %2234 = vmatpush1.msra.mxu0 %v2228
        %2235 = vmatprep.subr.mxu0 0.0
        %2236 = vmatpush1.msra.mxu0 0.0
        %2237 = vmatprep.subr.mxu0 0.0
        %2238 = vmatpush1.msra.mxu0 0.0
        %2239 = vmatprep.subr.mxu0 0.0
        %2240 = vmatpush1.msra.mxu0 0.0
        %2241 = vmatprep.subr.mxu0 0.0
        %2242 = vmatpush1.msra.mxu0 0.0
        %2243 = vmatprep.subr.mxu0 0.0
        %2244 = vmatpush1.msra.mxu0 0.0
        %2245 = vmatprep.subr.mxu0 0.0
        %2246 = vmatpush1.msra.mxu0 0.0
        %2247 = vmatprep.subr.mxu0 0.0
        %2248 = vmatpush1.msra.mxu0 0.0
        %2249 = vmatprep.subr.mxu0 0.0
        %2250 = vmatpush1.msra.mxu0 0.0
        %2251 = vmatprep.subr.mxu0 0.0
        %2252 = vmatpush1.msra.mxu0 0.0
        %2253 = vmatprep.subr.mxu0 0.0
        %2254 = vmatpush1.msra.mxu0 0.0
        %2255 = vmatprep.subr.mxu0 0.0
        %2256 = vmatpush1.msra.mxu0 0.0
        %2257 = vmatprep.subr.mxu0 0.0
        %2258 = vmatpush1.msra.mxu0 0.0
        %2259 = vmatprep.subr.mxu0 0.0
        %2260 = vmatpush1.msra.mxu0 0.0
        %2261 = vmatprep.subr.mxu0 0.0
        %2262 = vmatpush1.msra.mxu0 0.0
        %2263 = vmatprep.subr.mxu0 0.0
        %2264 = vmatpush1.msra.mxu0 0.0
        %2265 = vmatprep.subr.mxu0 0.0
        %2266 = vmatpush1.msra.mxu0 0.0
        %2267 = vmatprep.subr.mxu0 0.0
        %2268 = vmatpush1.msra.mxu0 0.0
        %2269 = vmatprep.subr.mxu0 0.0
        %2270 = vmatpush1.msra.mxu0 0.0
        %2271 = vmatprep.subr.mxu0 0.0
        %2272 = vmatpush1.msra.mxu0 0.0
        %2273 = vmatprep.subr.mxu0 0.0
        %2274 = vmatpush1.msra.mxu0 0.0
        %2275 = vmatprep.subr.mxu0 0.0
        %2276 = vmatpush1.msra.mxu0 0.0
        %2277 = vmatprep.subr.mxu0 0.0
        %2278 = vmatpush1.msra.mxu0 0.0
        %2279 = vmatprep.subr.mxu0 0.0
        %2280 = vmatpush1.msra.mxu0 0.0
        %2281 = vmatprep.subr.mxu0 0.0
        %2282 = vmatpush1.msra.mxu0 0.0
        %2283 = vmatprep.subr.mxu0 0.0
        %2284 = vmatpush1.msra.mxu0 0.0
        %2285 = vmatprep.subr.mxu0 0.0
        %2286 = vmatpush1.msra.mxu0 0.0
        %2287 = vmatprep.subr.mxu0 0.0
        %2288 = vmatpush1.msra.mxu0 0.0
        %2289 = vmatprep.subr.mxu0 0.0
        %2290 = vmatpush1.msra.mxu0 0.0
        %2291 = vmatprep.subr.mxu0 0.0
        %2292 = vmatpush1.msra.mxu0 0.0
        %2293 = vmatprep.subr.mxu0 0.0
        %2294 = vmatpush1.msra.mxu0 0.0
        %2295 = vmatprep.subr.mxu0 0.0
        %2296 = vmatpush1.msra.mxu0 0.0
        %2297 = vmatprep.mubr.f32.mxu0 0.0
        %2298 = vmatmul.mubr.f32.gmra.mrb[0].mxu0 %v2231
        %v2299 = vpop.f32.mrb[0].mxu0
        %v2300 = vadd.f32 0.0, %v2299
        %v2301 = vpop.f32.mrb[0].mxu0
        %2302 = vdwg.mxu0
        %2304 = vrot.lane.b32.xlu0 %v1966, 16
        %v2305 = vpop.permute.xlu0 %2304
        %2308 = vrot.lane.b32.xlu0 %v2133, 32
        %v2309 = vpop.permute.xlu0 %2308
        %2312 = vrot.lane.b32.xlu0 %v2300, 48
        %v2313 = vpop.permute.xlu0 %2312
        %v2315 = vsel %vm955, %v1798, %v2305
        %v2316 = vsel %vm1632, %v2315, %v2309
        %v2317 = vsel %vm1634, %v2316, %v2313
        %v2318 = vld [vmem:[%s713 + $0x1] ss:$0 sm:$0xff]
        %v2319 = vld [vmem:[%s659] sm:$0xff]
        %v2320 = vld [vmem:[%s659 + $0x8] sm:$0xff]
        %v2321 = vld [vmem:[%s659 + $0x10] sm:$0xff]
        %v2322 = vld [vmem:[%s659 + $0x18] sm:$0xff]
        %v2323 = vld [vmem:[%s659 + $0x20] sm:$0xff]
        %v2324 = vld [vmem:[%s659 + $0x28] sm:$0xff]
        %v2325 = vld [vmem:[%s659 + $0x30] sm:$0xff]
        %v2326 = vld [vmem:[%s659 + $0x38] sm:$0xff]
        %v2328 = vsel %vm867, %v1635, 0
        %v2331 = vsel %vm867, %v2317, 0
        %2333 = vmatprep.subr.mxu0 0.0
        %2334 = vmatpush1.msra.mxu0 %v2319
        %2335 = vmatprep.subr.mxu0 0.0
        %2336 = vmatpush1.msra.mxu0 %v2320
        %2337 = vmatprep.subr.mxu0 0.0
        %2338 = vmatpush1.msra.mxu0 %v2321
        %2339 = vmatprep.subr.mxu0 0.0
        %2340 = vmatpush1.msra.mxu0 %v2322
        %2341 = vmatprep.subr.mxu0 0.0
        %2342 = vmatpush1.msra.mxu0 %v2323
        %2343 = vmatprep.subr.mxu0 0.0
        %2344 = vmatpush1.msra.mxu0 %v2324
        %2345 = vmatprep.subr.mxu0 0.0
        %2346 = vmatpush1.msra.mxu0 %v2325
        %2347 = vmatprep.subr.mxu0 0.0
        %2348 = vmatpush1.msra.mxu0 %v2326
        %2349 = vmatprep.subr.mxu0 0.0
        %2350 = vmatpush1.msra.mxu0 0.0
        %2351 = vmatprep.subr.mxu0 0.0
        %2352 = vmatpush1.msra.mxu0 0.0
        %2353 = vmatprep.subr.mxu0 0.0
        %2354 = vmatpush1.msra.mxu0 0.0
        %2355 = vmatprep.subr.mxu0 0.0
        %2356 = vmatpush1.msra.mxu0 0.0
        %2357 = vmatprep.subr.mxu0 0.0
        %2358 = vmatpush1.msra.mxu0 0.0
        %2359 = vmatprep.subr.mxu0 0.0
        %2360 = vmatpush1.msra.mxu0 0.0
        %2361 = vmatprep.subr.mxu0 0.0
        %2362 = vmatpush1.msra.mxu0 0.0
        %2363 = vmatprep.subr.mxu0 0.0
        %2364 = vmatpush1.msra.mxu0 0.0
        %2365 = vmatprep.subr.mxu0 0.0
        %2366 = vmatpush1.msra.mxu0 0.0
        %2367 = vmatprep.subr.mxu0 0.0
        %2368 = vmatpush1.msra.mxu0 0.0
        %2369 = vmatprep.subr.mxu0 0.0
        %2370 = vmatpush1.msra.mxu0 0.0
        %2371 = vmatprep.subr.mxu0 0.0
        %2372 = vmatpush1.msra.mxu0 0.0
        %2373 = vmatprep.subr.mxu0 0.0
        %2374 = vmatpush1.msra.mxu0 0.0
        %2375 = vmatprep.subr.mxu0 0.0
        %2376 = vmatpush1.msra.mxu0 0.0
        %2377 = vmatprep.subr.mxu0 0.0
        %2378 = vmatpush1.msra.mxu0 0.0
        %2379 = vmatprep.subr.mxu0 0.0
        %2380 = vmatpush1.msra.mxu0 0.0
        %2381 = vmatprep.subr.mxu0 0.0
        %2382 = vmatpush1.msra.mxu0 0.0
        %2383 = vmatprep.subr.mxu0 0.0
        %2384 = vmatpush1.msra.mxu0 0.0
        %2385 = vmatprep.subr.mxu0 0.0
        %2386 = vmatpush1.msra.mxu0 0.0
        %2387 = vmatprep.subr.mxu0 0.0
        %2388 = vmatpush1.msra.mxu0 0.0
        %2389 = vmatprep.subr.mxu0 0.0
        %2390 = vmatpush1.msra.mxu0 0.0
        %2391 = vmatprep.subr.mxu0 0.0
        %2392 = vmatpush1.msra.mxu0 0.0
        %2393 = vmatprep.subr.mxu0 0.0
        %2394 = vmatpush1.msra.mxu0 0.0
        %2395 = vmatprep.subr.mxu0 0.0
        %2396 = vmatpush1.msra.mxu0 0.0
        %2397 = vmatprep.mubr.f32.mxu0 0.0
        %2398 = vmatmul.mubr.f32.gmra.mrb[0].mxu0 %v2328
        %v2399 = vpop.f32.mrb[0].mxu0
        %v2400 = vadd.f32 %v2318, %v2399
        %v2401 = vpop.f32.mrb[0].mxu0
        %2402 = vmatprep.mubr.f32.mxu0 0.0
        %2403 = vmatmul.mubr.f32.gmra.mrb[0].mxu0 %v2331
        %v2404 = vpop.f32.mrb[0].mxu0
        %v2405 = vadd.f32 %v2318, %v2404
        %v2406 = vpop.f32.mrb[0].mxu0
        %2407 = vdwg.mxu0
        %v2408 = vadd.f32 %v837, %v2400
        %v2409 = vadd.f32 %v838, %v2405
        %v2410 = vld [vmem:[%s713 + $0x7] ss:$0 sm:$0xff]
        %v2411 = vld [vmem:[%s713 + $0x10] ss:$0 sm:$0xff]
        %v2412 = vsel %vm867, %v2408, 0.0
        %2413 = vadd.xlane.f32.xlu0 %v2412
        %v2414 = vpop.xlane.xlu0 %2413
        %v2415 = vsel %vm867, %v2409, 0.0
        %2416 = vadd.xlane.f32.xlu0 %v2415
        %v2417 = vpop.xlane.xlu0 %2416
        %v2418 = vrcp.pop 64.0
        %v2419 = vmul.f32 %v2414, %v2418
        %v2420 = vmul.f32 %v2417, %v2418
        %v2421 = vsub.f32 %v2408, %v2419
        %v2422 = vsub.f32 %v2409, %v2420
        %v2423 = vmul.f32 %v2421, %v2421
        %v2424 = vmul.f32 %v2422, %v2422
        %v2425 = vsel %vm867, %v2423, 0.0
        %2426 = vadd.xlane.f32.xlu0 %v2425
        %v2427 = vpop.xlane.xlu0 %2426
        %v2428 = vsel %vm867, %v2424, 0.0
        %2429 = vadd.xlane.f32.xlu0 %v2428
        %v2430 = vpop.xlane.xlu0 %2429
        %v2431 = vmul.f32 %v2427, %v2418
        %v2432 = vmul.f32 %v2430, %v2418
        %v2433 = vadd.f32 %v2431, 1e-05
        %v2434 = vadd.f32 %v2432, 1e-05
        %v2435 = vrsqrt.pop %v2433
        %v2436 = vrsqrt.pop %v2434
        %v2437 = vmul.f32 %v2421, %v2435
        %v2438 = vmul.f32 %v2422, %v2436
        %v2439 = vmul.f32 %v2437, %v2410
        %v2440 = vmul.f32 %v2438, %v2410
        %v2441 = vadd.f32 %v2439, %v2411
        %v2442 = vadd.f32 %v2440, %v2411
        %v2443 = vld [vmem:[%s713 + $0x2] ss:$0 sm:$0xff]
        %v2444 = vld [vmem:[%s668] sm:$0xff]
        %v2445 = vld [vmem:[%s668 + $0x8] sm:$0xff]
        %v2446 = vld [vmem:[%s668 + $0x10] sm:$0xff]
        %v2447 = vld [vmem:[%s668 + $0x18] sm:$0xff]
        %v2448 = vld [vmem:[%s668 + $0x20] sm:$0xff]
        %v2449 = vld [vmem:[%s668 + $0x28] sm:$0xff]
        %v2450 = vld [vmem:[%s668 + $0x30] sm:$0xff]
        %v2451 = vld [vmem:[%s668 + $0x38] sm:$0xff]
        %v2453 = vsel %vm867, %v2441, 0
        %v2456 = vsel %vm867, %v2442, 0
        %2458 = vmatprep.subr.mxu0 0.0
        %2459 = vmatpush1.msra.mxu0 %v2444
        %2460 = vmatprep.subr.mxu0 0.0
        %2461 = vmatpush1.msra.mxu0 %v2445
        %2462 = vmatprep.subr.mxu0 0.0
        %2463 = vmatpush1.msra.mxu0 %v2446
        %2464 = vmatprep.subr.mxu0 0.0
        %2465 = vmatpush1.msra.mxu0 %v2447
        %2466 = vmatprep.subr.mxu0 0.0
        %2467 = vmatpush1.msra.mxu0 %v2448
        %2468 = vmatprep.subr.mxu0 0.0
        %2469 = vmatpush1.msra.mxu0 %v2449
        %2470 = vmatprep.subr.mxu0 0.0
        %2471 = vmatpush1.msra.mxu0 %v2450
        %2472 = vmatprep.subr.mxu0 0.0
        %2473 = vmatpush1.msra.mxu0 %v2451
        %2474 = vmatprep.subr.mxu0 0.0
        %2475 = vmatpush1.msra.mxu0 0.0
        %2476 = vmatprep.subr.mxu0 0.0
        %2477 = vmatpush1.msra.mxu0 0.0
        %2478 = vmatprep.subr.mxu0 0.0
        %2479 = vmatpush1.msra.mxu0 0.0
        %2480 = vmatprep.subr.mxu0 0.0
        %2481 = vmatpush1.msra.mxu0 0.0
        %2482 = vmatprep.subr.mxu0 0.0
        %2483 = vmatpush1.msra.mxu0 0.0
        %2484 = vmatprep.subr.mxu0 0.0
        %2485 = vmatpush1.msra.mxu0 0.0
        %2486 = vmatprep.subr.mxu0 0.0
        %2487 = vmatpush1.msra.mxu0 0.0
        %2488 = vmatprep.subr.mxu0 0.0
        %2489 = vmatpush1.msra.mxu0 0.0
        %2490 = vmatprep.subr.mxu0 0.0
        %2491 = vmatpush1.msra.mxu0 0.0
        %2492 = vmatprep.subr.mxu0 0.0
        %2493 = vmatpush1.msra.mxu0 0.0
        %2494 = vmatprep.subr.mxu0 0.0
        %2495 = vmatpush1.msra.mxu0 0.0
        %2496 = vmatprep.subr.mxu0 0.0
        %2497 = vmatpush1.msra.mxu0 0.0
        %2498 = vmatprep.subr.mxu0 0.0
        %2499 = vmatpush1.msra.mxu0 0.0
        %2500 = vmatprep.subr.mxu0 0.0
        %2501 = vmatpush1.msra.mxu0 0.0
        %2502 = vmatprep.subr.mxu0 0.0
        %2503 = vmatpush1.msra.mxu0 0.0
        %2504 = vmatprep.subr.mxu0 0.0
        %2505 = vmatpush1.msra.mxu0 0.0
        %2506 = vmatprep.subr.mxu0 0.0
        %2507 = vmatpush1.msra.mxu0 0.0
        %2508 = vmatprep.subr.mxu0 0.0
        %2509 = vmatpush1.msra.mxu0 0.0
        %2510 = vmatprep.subr.mxu0 0.0
        %2511 = vmatpush1.msra.mxu0 0.0
        %2512 = vmatprep.subr.mxu0 0.0
        %2513 = vmatpush1.msra.mxu0 0.0
        %2514 = vmatprep.subr.mxu0 0.0
        %2515 = vmatpush1.msra.mxu0 0.0
        %2516 = vmatprep.subr.mxu0 0.0
        %2517 = vmatpush1.msra.mxu0 0.0
        %2518 = vmatprep.subr.mxu0 0.0
        %2519 = vmatpush1.msra.mxu0 0.0
        %2520 = vmatprep.subr.mxu0 0.0
        %2521 = vmatpush1.msra.mxu0 0.0
        %2522 = vmatprep.mubr.f32.mxu0 0.0
        %2523 = vmatmul.mubr.f32.gmra.mrb[0].mxu0 %v2453
        %v2524 = vpop.f32.mrb[0].mxu0
        %v2525 = vadd.f32 %v2443, %v2524
        %v2526 = vpop.f32.mrb[0].mxu0
        %2527 = vmatprep.mubr.f32.mxu0 0.0
        %2528 = vmatmul.mubr.f32.gmra.mrb[0].mxu0 %v2456
        %v2529 = vpop.f32.mrb[0].mxu0
        %v2530 = vadd.f32 %v2443, %v2529
        %v2531 = vpop.f32.mrb[0].mxu0
        %2532 = vdwg.mxu0
        %v2533 = vld [vmem:[#allocation7] sm:$0xff]
        %v2534 = vld [vmem:[#allocation7 + $0x8] sm:$0xff]
        %v2535 = vld [vmem:[%s713 + $0x3] ss:$0 sm:$0xff]
        %v2536 = vld [vmem:[%s677] sm:$0xff]
        %v2537 = vld [vmem:[%s677 + $0x8] sm:$0xff]
        %v2538 = vld [vmem:[%s677 + $0x10] sm:$0xff]
        %v2539 = vld [vmem:[%s677 + $0x18] sm:$0xff]
        %v2540 = vld [vmem:[%s677 + $0x20] sm:$0xff]
        %v2541 = vld [vmem:[%s677 + $0x28] sm:$0xff]
        %v2542 = vld [vmem:[%s677 + $0x30] sm:$0xff]
        %v2543 = vld [vmem:[%s677 + $0x38] sm:$0xff]
        %v2545 = vsel %vm867, %v2533, 0
        %v2548 = vsel %vm867, %v2534, 0
        %2550 = vmatprep.subr.mxu0 0.0
        %2551 = vmatpush1.msra.mxu0 %v2536
        %2552 = vmatprep.subr.mxu0 0.0
        %2553 = vmatpush1.msra.mxu0 %v2537
        %2554 = vmatprep.subr.mxu0 0.0
        %2555 = vmatpush1.msra.mxu0 %v2538
        %2556 = vmatprep.subr.mxu0 0.0
        %2557 = vmatpush1.msra.mxu0 %v2539
        %2558 = vmatprep.subr.mxu0 0.0
        %2559 = vmatpush1.msra.mxu0 %v2540
        %2560 = vmatprep.subr.mxu0 0.0
        %2561 = vmatpush1.msra.mxu0 %v2541
        %2562 = vmatprep.subr.mxu0 0.0
        %2563 = vmatpush1.msra.mxu0 %v2542
        %2564 = vmatprep.subr.mxu0 0.0
        %2565 = vmatpush1.msra.mxu0 %v2543
        %2566 = vmatprep.subr.mxu0 0.0
        %2567 = vmatpush1.msra.mxu0 0.0
        %2568 = vmatprep.subr.mxu0 0.0
        %2569 = vmatpush1.msra.mxu0 0.0
        %2570 = vmatprep.subr.mxu0 0.0
        %2571 = vmatpush1.msra.mxu0 0.0
        %2572 = vmatprep.subr.mxu0 0.0
        %2573 = vmatpush1.msra.mxu0 0.0
        %2574 = vmatprep.subr.mxu0 0.0
        %2575 = vmatpush1.msra.mxu0 0.0
        %2576 = vmatprep.subr.mxu0 0.0
        %2577 = vmatpush1.msra.mxu0 0.0
        %2578 = vmatprep.subr.mxu0 0.0
        %2579 = vmatpush1.msra.mxu0 0.0
        %2580 = vmatprep.subr.mxu0 0.0
        %2581 = vmatpush1.msra.mxu0 0.0
        %2582 = vmatprep.subr.mxu0 0.0
        %2583 = vmatpush1.msra.mxu0 0.0
        %2584 = vmatprep.subr.mxu0 0.0
        %2585 = vmatpush1.msra.mxu0 0.0
        %2586 = vmatprep.subr.mxu0 0.0
        %2587 = vmatpush1.msra.mxu0 0.0
        %2588 = vmatprep.subr.mxu0 0.0
        %2589 = vmatpush1.msra.mxu0 0.0
        %2590 = vmatprep.subr.mxu0 0.0
        %2591 = vmatpush1.msra.mxu0 0.0
        %2592 = vmatprep.subr.mxu0 0.0
        %2593 = vmatpush1.msra.mxu0 0.0
        %2594 = vmatprep.subr.mxu0 0.0
        %2595 = vmatpush1.msra.mxu0 0.0
        %2596 = vmatprep.subr.mxu0 0.0
        %2597 = vmatpush1.msra.mxu0 0.0
        %2598 = vmatprep.subr.mxu0 0.0
        %2599 = vmatpush1.msra.mxu0 0.0
        %2600 = vmatprep.subr.mxu0 0.0
        %2601 = vmatpush1.msra.mxu0 0.0
        %2602 = vmatprep.subr.mxu0 0.0
        %2603 = vmatpush1.msra.mxu0 0.0
        %2604 = vmatprep.subr.mxu0 0.0
        %2605 = vmatpush1.msra.mxu0 0.0
        %2606 = vmatprep.subr.mxu0 0.0
        %2607 = vmatpush1.msra.mxu0 0.0
        %2608 = vmatprep.subr.mxu0 0.0
        %2609 = vmatpush1.msra.mxu0 0.0
        %2610 = vmatprep.subr.mxu0 0.0
        %2611 = vmatpush1.msra.mxu0 0.0
        %2612 = vmatprep.subr.mxu0 0.0
        %2613 = vmatpush1.msra.mxu0 0.0
        %2614 = vmatprep.mubr.f32.mxu0 0.0
        %2615 = vmatmul.mubr.f32.gmra.mrb[0].mxu0 %v2545
        %v2616 = vpop.f32.mrb[0].mxu0
        %v2617 = vadd.f32 %v2535, %v2616
        %v2618 = vpop.f32.mrb[0].mxu0
        %2619 = vmatprep.mubr.f32.mxu0 0.0
        %2620 = vmatmul.mubr.f32.gmra.mrb[0].mxu0 %v2548
        %v2621 = vpop.f32.mrb[0].mxu0
        %v2622 = vadd.f32 %v2535, %v2621
        %v2623 = vpop.f32.mrb[0].mxu0
        %2624 = vdwg.mxu0
        %v2625 = vld [vmem:[#allocation3] sm:$0x1]
        %v2627 = vsel %vm955, %v2525, 0
        %v2630 = vsel %vm955, %v2617, 0
        %2632 = vmatprep.subr.mxu0 0.0
        %2633 = vmatpush1.xpose.msra.mxu0 %v2630
        %2634 = vmatprep.subr.mxu0 0.0
        %2635 = vmatpush1.xpose.msra.mxu0 0.0
        %2636 = vmatprep.subr.mxu0 0.0
        %2637 = vmatpush1.xpose.msra.mxu0 0.0
        %2638 = vmatprep.subr.mxu0 0.0
        %2639 = vmatpush1.xpose.msra.mxu0 0.0
        %2640 = vmatprep.subr.mxu0 0.0
        %2641 = vmatpush1.xpose.msra.mxu0 0.0
        %2642 = vmatprep.subr.mxu0 0.0
        %2643 = vmatpush1.xpose.msra.mxu0 0.0
        %2644 = vmatprep.subr.mxu0 0.0
        %2645 = vmatpush1.xpose.msra.mxu0 0.0
        %2646 = vmatprep.subr.mxu0 0.0
        %2647 = vmatpush1.xpose.msra.mxu0 0.0
        %2648 = vmatprep.subr.mxu0 0.0
        %2649 = vmatpush1.xpose.msra.mxu0 0.0
        %2650 = vmatprep.subr.mxu0 0.0
        %2651 = vmatpush1.xpose.msra.mxu0 0.0
        %2652 = vmatprep.subr.mxu0 0.0
        %2653 = vmatpush1.xpose.msra.mxu0 0.0
        %2654 = vmatprep.subr.mxu0 0.0
        %2655 = vmatpush1.xpose.msra.mxu0 0.0
        %2656 = vmatprep.subr.mxu0 0.0
        %2657 = vmatpush1.xpose.msra.mxu0 0.0
        %2658 = vmatprep.subr.mxu0 0.0
        %2659 = vmatpush1.xpose.msra.mxu0 0.0
        %2660 = vmatprep.subr.mxu0 0.0
        %2661 = vmatpush1.xpose.msra.mxu0 0.0
        %2662 = vmatprep.subr.mxu0 0.0
        %2663 = vmatpush1.xpose.msra.mxu0 0.0
        %2664 = vmatprep.subr.mxu0 0.0
        %2665 = vmatpush1.xpose.msra.mxu0 0.0
        %2666 = vmatprep.subr.mxu0 0.0
        %2667 = vmatpush1.xpose.msra.mxu0 0.0
        %2668 = vmatprep.subr.mxu0 0.0
        %2669 = vmatpush1.xpose.msra.mxu0 0.0
        %2670 = vmatprep.subr.mxu0 0.0
        %2671 = vmatpush1.xpose.msra.mxu0 0.0
        %2672 = vmatprep.subr.mxu0 0.0
        %2673 = vmatpush1.xpose.msra.mxu0 0.0
        %2674 = vmatprep.subr.mxu0 0.0
        %2675 = vmatpush1.xpose.msra.mxu0 0.0
        %2676 = vmatprep.subr.mxu0 0.0
        %2677 = vmatpush1.xpose.msra.mxu0 0.0
        %2678 = vmatprep.subr.mxu0 0.0
        %2679 = vmatpush1.xpose.msra.mxu0 0.0
        %2680 = vmatprep.subr.mxu0 0.0
        %2681 = vmatpush1.xpose.msra.mxu0 0.0
        %2682 = vmatprep.subr.mxu0 0.0
        %2683 = vmatpush1.xpose.msra.mxu0 0.0
        %2684 = vmatprep.subr.mxu0 0.0
        %2685 = vmatpush1.xpose.msra.mxu0 0.0
        %2686 = vmatprep.subr.mxu0 0.0
        %2687 = vmatpush1.xpose.msra.mxu0 0.0
        %2688 = vmatprep.subr.mxu0 0.0
        %2689 = vmatpush1.xpose.msra.mxu0 0.0
        %2690 = vmatprep.subr.mxu0 0.0
        %2691 = vmatpush1.xpose.msra.mxu0 0.0
        %2692 = vmatprep.subr.mxu0 0.0
        %2693 = vmatpush1.xpose.msra.mxu0 0.0
        %2694 = vmatprep.subr.mxu0 0.0
        %2695 = vmatpush1.xpose.msra.mxu0 0.0
        %2696 = vmatprep.mubr.f32.mxu0 0.0
        %2697 = vmatmul.mubr.f32.gmra.mrb[0].mxu0 %v2627
        %v2698 = vpop.f32.mrb[0].mxu0
        %v2699 = vadd.f32 0.0, %v2698
        %v2700 = vpop.f32.mrb[0].mxu0
        %2701 = vdwg.mxu0
        %v2702 = vmul.f32 %v2699, 0.25
        %v2704 = vlaneseq
        %v2705 = vshrl.u32 %v2704, 7
        %v2706 = vsub.s32 0, %v2705
        %v2707 = vrot.slane %v2625, %v2706
        %v2709 = vadd.f32 %v2702, %v2707
        %v2710 = vsel %vm1032, %v2709, -inf
        %2711 = vmax.xlane.f32.xlu0 %v2710
        %v2712 = vpop.xlane.xlu0 %2711
        %v2713 = vsub.f32 %v2709, %v2712
        %v2714 = vmul.f32 %v2713, 1.442695
        %v2715 = vpow.pop %v2714
        %v2716 = vsel %vm1032, %v2715, 0.0
        %2717 = vadd.xlane.f32.xlu0 %v2716
        %v2718 = vpop.xlane.xlu0 %2717
        %v2719 = vrcp.pop %v2718
        %v2720 = vmul.f32 %v2715, %v2719
        %2721 = vrot.lane.b32.xlu0 %v2617, 64
        %v2722 = vpop.permute.xlu0 %2721
        %v2725 = vsel %vm1032, %v2720, 0
        %2727 = vmatprep.subr.mxu0 0.0
        %2728 = vmatpush1.msra.mxu0 %v2722
        %2729 = vmatprep.subr.mxu0 0.0
        %2730 = vmatpush1.msra.mxu0 0.0
        %2731 = vmatprep.subr.mxu0 0.0
        %2732 = vmatpush1.msra.mxu0 0.0
        %2733 = vmatprep.subr.mxu0 0.0
        %2734 = vmatpush1.msra.mxu0 0.0
        %2735 = vmatprep.subr.mxu0 0.0
        %2736 = vmatpush1.msra.mxu0 0.0
        %2737 = vmatprep.subr.mxu0 0.0
        %2738 = vmatpush1.msra.mxu0 0.0
        %2739 = vmatprep.subr.mxu0 0.0
        %2740 = vmatpush1.msra.mxu0 0.0
        %2741 = vmatprep.subr.mxu0 0.0
        %2742 = vmatpush1.msra.mxu0 0.0
        %2743 = vmatprep.subr.mxu0 0.0
        %2744 = vmatpush1.msra.mxu0 0.0
        %2745 = vmatprep.subr.mxu0 0.0
        %2746 = vmatpush1.msra.mxu0 0.0
        %2747 = vmatprep.subr.mxu0 0.0
        %2748 = vmatpush1.msra.mxu0 0.0
        %2749 = vmatprep.subr.mxu0 0.0
        %2750 = vmatpush1.msra.mxu0 0.0
        %2751 = vmatprep.subr.mxu0 0.0
        %2752 = vmatpush1.msra.mxu0 0.0
        %2753 = vmatprep.subr.mxu0 0.0
        %2754 = vmatpush1.msra.mxu0 0.0
        %2755 = vmatprep.subr.mxu0 0.0
        %2756 = vmatpush1.msra.mxu0 0.0
        %2757 = vmatprep.subr.mxu0 0.0
        %2758 = vmatpush1.msra.mxu0 0.0
        %2759 = vmatprep.subr.mxu0 0.0
        %2760 = vmatpush1.msra.mxu0 0.0
        %2761 = vmatprep.subr.mxu0 0.0
        %2762 = vmatpush1.msra.mxu0 0.0
        %2763 = vmatprep.subr.mxu0 0.0
        %2764 = vmatpush1.msra.mxu0 0.0
        %2765 = vmatprep.subr.mxu0 0.0
        %2766 = vmatpush1.msra.mxu0 0.0
        %2767 = vmatprep.subr.mxu0 0.0
        %2768 = vmatpush1.msra.mxu0 0.0
        %2769 = vmatprep.subr.mxu0 0.0
        %2770 = vmatpush1.msra.mxu0 0.0
        %2771 = vmatprep.subr.mxu0 0.0
        %2772 = vmatpush1.msra.mxu0 0.0
        %2773 = vmatprep.subr.mxu0 0.0
        %2774 = vmatpush1.msra.mxu0 0.0
        %2775 = vmatprep.subr.mxu0 0.0
        %2776 = vmatpush1.msra.mxu0 0.0
        %2777 = vmatprep.subr.mxu0 0.0
        %2778 = vmatpush1.msra.mxu0 0.0
        %2779 = vmatprep.subr.mxu0 0.0
        %2780 = vmatpush1.msra.mxu0 0.0
        %2781 = vmatprep.subr.mxu0 0.0
        %2782 = vmatpush1.msra.mxu0 0.0
        %2783 = vmatprep.subr.mxu0 0.0
        %2784 = vmatpush1.msra.mxu0 0.0
        %2785 = vmatprep.subr.mxu0 0.0
        %2786 = vmatpush1.msra.mxu0 0.0
        %2787 = vmatprep.subr.mxu0 0.0
        %2788 = vmatpush1.msra.mxu0 0.0
        %2789 = vmatprep.subr.mxu0 0.0
        %2790 = vmatpush1.msra.mxu0 0.0
        %2791 = vmatprep.mubr.f32.mxu0 0.0
        %2792 = vmatmul.mubr.f32.gmra.mrb[0].mxu0 %v2725
        %v2793 = vpop.f32.mrb[0].mxu0
        %v2794 = vadd.f32 0.0, %v2793
        %v2795 = vpop.f32.mrb[0].mxu0
        %2796 = vdwg.mxu0
        %2797 = vrot.lane.b32.xlu0 %v2525, 112
        %v2798 = vpop.permute.xlu0 %2797
        %2799 = vrot.lane.b32.xlu0 %v2617, 112
        %v2800 = vpop.permute.xlu0 %2799
        %v2801 = vsel %vm955, %v2798, 0
        %v2803 = vsel %vm955, %v2800, 0
        %2805 = vmatprep.subr.mxu0 0.0
        %2806 = vmatpush1.xpose.msra.mxu0 %v2803
        %2807 = vmatprep.subr.mxu0 0.0
        %2808 = vmatpush1.xpose.msra.mxu0 0.0
        %2809 = vmatprep.subr.mxu0 0.0
        %2810 = vmatpush1.xpose.msra.mxu0 0.0
        %2811 = vmatprep.subr.mxu0 0.0
        %2812 = vmatpush1.xpose.msra.mxu0 0.0
        %2813 = vmatprep.subr.mxu0 0.0
        %2814 = vmatpush1.xpose.msra.mxu0 0.0
        %2815 = vmatprep.subr.mxu0 0.0
        %2816 = vmatpush1.xpose.msra.mxu0 0.0
        %2817 = vmatprep.subr.mxu0 0.0
        %2818 = vmatpush1.xpose.msra.mxu0 0.0
        %2819 = vmatprep.subr.mxu0 0.0
        %2820 = vmatpush1.xpose.msra.mxu0 0.0
        %2821 = vmatprep.subr.mxu0 0.0
        %2822 = vmatpush1.xpose.msra.mxu0 0.0
        %2823 = vmatprep.subr.mxu0 0.0
        %2824 = vmatpush1.xpose.msra.mxu0 0.0
        %2825 = vmatprep.subr.mxu0 0.0
        %2826 = vmatpush1.xpose.msra.mxu0 0.0
        %2827 = vmatprep.subr.mxu0 0.0
        %2828 = vmatpush1.xpose.msra.mxu0 0.0
        %2829 = vmatprep.subr.mxu0 0.0
        %2830 = vmatpush1.xpose.msra.mxu0 0.0
        %2831 = vmatprep.subr.mxu0 0.0
        %2832 = vmatpush1.xpose.msra.mxu0 0.0
        %2833 = vmatprep.subr.mxu0 0.0
        %2834 = vmatpush1.xpose.msra.mxu0 0.0
        %2835 = vmatprep.subr.mxu0 0.0
        %2836 = vmatpush1.xpose.msra.mxu0 0.0
        %2837 = vmatprep.subr.mxu0 0.0
        %2838 = vmatpush1.xpose.msra.mxu0 0.0
        %2839 = vmatprep.subr.mxu0 0.0
        %2840 = vmatpush1.xpose.msra.mxu0 0.0
        %2841 = vmatprep.subr.mxu0 0.0
        %2842 = vmatpush1.xpose.msra.mxu0 0.0
        %2843 = vmatprep.subr.mxu0 0.0
        %2844 = vmatpush1.xpose.msra.mxu0 0.0
        %2845 = vmatprep.subr.mxu0 0.0
        %2846 = vmatpush1.xpose.msra.mxu0 0.0
        %2847 = vmatprep.subr.mxu0 0.0
        %2848 = vmatpush1.xpose.msra.mxu0 0.0
        %2849 = vmatprep.subr.mxu0 0.0
        %2850 = vmatpush1.xpose.msra.mxu0 0.0
        %2851 = vmatprep.subr.mxu0 0.0
        %2852 = vmatpush1.xpose.msra.mxu0 0.0
        %2853 = vmatprep.subr.mxu0 0.0
        %2854 = vmatpush1.xpose.msra.mxu0 0.0
        %2855 = vmatprep.subr.mxu0 0.0
        %2856 = vmatpush1.xpose.msra.mxu0 0.0
        %2857 = vmatprep.subr.mxu0 0.0
        %2858 = vmatpush1.xpose.msra.mxu0 0.0
        %2859 = vmatprep.subr.mxu0 0.0
        %2860 = vmatpush1.xpose.msra.mxu0 0.0
        %2861 = vmatprep.subr.mxu0 0.0
        %2862 = vmatpush1.xpose.msra.mxu0 0.0
        %2863 = vmatprep.subr.mxu0 0.0
        %2864 = vmatpush1.xpose.msra.mxu0 0.0
        %2865 = vmatprep.subr.mxu0 0.0
        %2866 = vmatpush1.xpose.msra.mxu0 0.0
        %2867 = vmatprep.subr.mxu0 0.0
        %2868 = vmatpush1.xpose.msra.mxu0 0.0
        %2869 = vmatprep.mubr.f32.mxu0 0.0
        %2870 = vmatmul.mubr.f32.gmra.mrb[0].mxu0 %v2801
        %v2871 = vpop.f32.mrb[0].mxu0
        %v2872 = vadd.f32 0.0, %v2871
        %v2873 = vpop.f32.mrb[0].mxu0
        %2874 = vdwg.mxu0
        %v2875 = vmul.f32 %v2872, 0.25
        %v2876 = vadd.f32 %v2875, %v2707
        %v2877 = vsel %vm1032, %v2876, -inf
        %2878 = vmax.xlane.f32.xlu0 %v2877
        %v2879 = vpop.xlane.xlu0 %2878
        %v2880 = vsub.f32 %v2876, %v2879
        %v2881 = vmul.f32 %v2880, 1.442695
        %v2882 = vpow.pop %v2881
        %v2883 = vsel %vm1032, %v2882, 0.0
        %2884 = vadd.xlane.f32.xlu0 %v2883
        %v2885 = vpop.xlane.xlu0 %2884
        %v2886 = vrcp.pop %v2885
        %v2887 = vmul.f32 %v2882, %v2886
        %2888 = vrot.lane.b32.xlu0 %v2617, 48
        %v2889 = vpop.permute.xlu0 %2888
        %v2892 = vsel %vm1032, %v2887, 0
        %2894 = vmatprep.subr.mxu0 0.0
        %2895 = vmatpush1.msra.mxu0 %v2889
        %2896 = vmatprep.subr.mxu0 0.0
        %2897 = vmatpush1.msra.mxu0 0.0
        %2898 = vmatprep.subr.mxu0 0.0
        %2899 = vmatpush1.msra.mxu0 0.0
        %2900 = vmatprep.subr.mxu0 0.0
        %2901 = vmatpush1.msra.mxu0 0.0
        %2902 = vmatprep.subr.mxu0 0.0
        %2903 = vmatpush1.msra.mxu0 0.0
        %2904 = vmatprep.subr.mxu0 0.0
        %2905 = vmatpush1.msra.mxu0 0.0
        %2906 = vmatprep.subr.mxu0 0.0
        %2907 = vmatpush1.msra.mxu0 0.0
        %2908 = vmatprep.subr.mxu0 0.0
        %2909 = vmatpush1.msra.mxu0 0.0
        %2910 = vmatprep.subr.mxu0 0.0
        %2911 = vmatpush1.msra.mxu0 0.0
        %2912 = vmatprep.subr.mxu0 0.0
        %2913 = vmatpush1.msra.mxu0 0.0
        %2914 = vmatprep.subr.mxu0 0.0
        %2915 = vmatpush1.msra.mxu0 0.0
        %2916 = vmatprep.subr.mxu0 0.0
        %2917 = vmatpush1.msra.mxu0 0.0
        %2918 = vmatprep.subr.mxu0 0.0
        %2919 = vmatpush1.msra.mxu0 0.0
        %2920 = vmatprep.subr.mxu0 0.0
        %2921 = vmatpush1.msra.mxu0 0.0
        %2922 = vmatprep.subr.mxu0 0.0
        %2923 = vmatpush1.msra.mxu0 0.0
        %2924 = vmatprep.subr.mxu0 0.0
        %2925 = vmatpush1.msra.mxu0 0.0
        %2926 = vmatprep.subr.mxu0 0.0
        %2927 = vmatpush1.msra.mxu0 0.0
        %2928 = vmatprep.subr.mxu0 0.0
        %2929 = vmatpush1.msra.mxu0 0.0
        %2930 = vmatprep.subr.mxu0 0.0
        %2931 = vmatpush1.msra.mxu0 0.0
        %2932 = vmatprep.subr.mxu0 0.0
        %2933 = vmatpush1.msra.mxu0 0.0
        %2934 = vmatprep.subr.mxu0 0.0
        %2935 = vmatpush1.msra.mxu0 0.0
        %2936 = vmatprep.subr.mxu0 0.0
        %2937 = vmatpush1.msra.mxu0 0.0
        %2938 = vmatprep.subr.mxu0 0.0
        %2939 = vmatpush1.msra.mxu0 0.0
        %2940 = vmatprep.subr.mxu0 0.0
        %2941 = vmatpush1.msra.mxu0 0.0
        %2942 = vmatprep.subr.mxu0 0.0
        %2943 = vmatpush1.msra.mxu0 0.0
        %2944 = vmatprep.subr.mxu0 0.0
        %2945 = vmatpush1.msra.mxu0 0.0
        %2946 = vmatprep.subr.mxu0 0.0
        %2947 = vmatpush1.msra.mxu0 0.0
        %2948 = vmatprep.subr.mxu0 0.0
        %2949 = vmatpush1.msra.mxu0 0.0
        %2950 = vmatprep.subr.mxu0 0.0
        %2951 = vmatpush1.msra.mxu0 0.0
        %2952 = vmatprep.subr.mxu0 0.0
        %2953 = vmatpush1.msra.mxu0 0.0
        %2954 = vmatprep.subr.mxu0 0.0
        %2955 = vmatpush1.msra.mxu0 0.0
        %2956 = vmatprep.subr.mxu0 0.0
        %2957 = vmatpush1.msra.mxu0 0.0
        %2958 = vmatprep.mubr.f32.mxu0 0.0
        %2959 = vmatmul.mubr.f32.gmra.mrb[0].mxu0 %v2892
        %v2960 = vpop.f32.mrb[0].mxu0
        %v2961 = vadd.f32 0.0, %v2960
        %v2962 = vpop.f32.mrb[0].mxu0
        %2963 = vdwg.mxu0
        %2964 = vrot.lane.b32.xlu0 %v2525, 96
        %v2965 = vpop.permute.xlu0 %2964
        %2966 = vrot.lane.b32.xlu0 %v2617, 96
        %v2967 = vpop.permute.xlu0 %2966
        %v2968 = vsel %vm955, %v2965, 0
        %v2970 = vsel %vm955, %v2967, 0
        %2972 = vmatprep.subr.mxu0 0.0
        %2973 = vmatpush1.xpose.msra.mxu0 %v2970
        %2974 = vmatprep.subr.mxu0 0.0
        %2975 = vmatpush1.xpose.msra.mxu0 0.0
        %2976 = vmatprep.subr.mxu0 0.0
        %2977 = vmatpush1.xpose.msra.mxu0 0.0
        %2978 = vmatprep.subr.mxu0 0.0
        %2979 = vmatpush1.xpose.msra.mxu0 0.0
        %2980 = vmatprep.subr.mxu0 0.0
        %2981 = vmatpush1.xpose.msra.mxu0 0.0
        %2982 = vmatprep.subr.mxu0 0.0
        %2983 = vmatpush1.xpose.msra.mxu0 0.0
        %2984 = vmatprep.subr.mxu0 0.0
        %2985 = vmatpush1.xpose.msra.mxu0 0.0
        %2986 = vmatprep.subr.mxu0 0.0
        %2987 = vmatpush1.xpose.msra.mxu0 0.0
        %2988 = vmatprep.subr.mxu0 0.0
        %2989 = vmatpush1.xpose.msra.mxu0 0.0
        %2990 = vmatprep.subr.mxu0 0.0
        %2991 = vmatpush1.xpose.msra.mxu0 0.0
        %2992 = vmatprep.subr.mxu0 0.0
        %2993 = vmatpush1.xpose.msra.mxu0 0.0
        %2994 = vmatprep.subr.mxu0 0.0
        %2995 = vmatpush1.xpose.msra.mxu0 0.0
        %2996 = vmatprep.subr.mxu0 0.0
        %2997 = vmatpush1.xpose.msra.mxu0 0.0
        %2998 = vmatprep.subr.mxu0 0.0
        %2999 = vmatpush1.xpose.msra.mxu0 0.0
        %3000 = vmatprep.subr.mxu0 0.0
        %3001 = vmatpush1.xpose.msra.mxu0 0.0
        %3002 = vmatprep.subr.mxu0 0.0
        %3003 = vmatpush1.xpose.msra.mxu0 0.0
        %3004 = vmatprep.subr.mxu0 0.0
        %3005 = vmatpush1.xpose.msra.mxu0 0.0
        %3006 = vmatprep.subr.mxu0 0.0
        %3007 = vmatpush1.xpose.msra.mxu0 0.0
        %3008 = vmatprep.subr.mxu0 0.0
        %3009 = vmatpush1.xpose.msra.mxu0 0.0
        %3010 = vmatprep.subr.mxu0 0.0
        %3011 = vmatpush1.xpose.msra.mxu0 0.0
        %3012 = vmatprep.subr.mxu0 0.0
        %3013 = vmatpush1.xpose.msra.mxu0 0.0
        %3014 = vmatprep.subr.mxu0 0.0
        %3015 = vmatpush1.xpose.msra.mxu0 0.0
        %3016 = vmatprep.subr.mxu0 0.0
        %3017 = vmatpush1.xpose.msra.mxu0 0.0
        %3018 = vmatprep.subr.mxu0 0.0
        %3019 = vmatpush1.xpose.msra.mxu0 0.0
        %3020 = vmatprep.subr.mxu0 0.0
        %3021 = vmatpush1.xpose.msra.mxu0 0.0
        %3022 = vmatprep.subr.mxu0 0.0
        %3023 = vmatpush1.xpose.msra.mxu0 0.0
        %3024 = vmatprep.subr.mxu0 0.0
        %3025 = vmatpush1.xpose.msra.mxu0 0.0
        %3026 = vmatprep.subr.mxu0 0.0
        %3027 = vmatpush1.xpose.msra.mxu0 0.0
        %3028 = vmatprep.subr.mxu0 0.0
        %3029 = vmatpush1.xpose.msra.mxu0 0.0
        %3030 = vmatprep.subr.mxu0 0.0
        %3031 = vmatpush1.xpose.msra.mxu0 0.0
        %3032 = vmatprep.subr.mxu0 0.0
        %3033 = vmatpush1.xpose.msra.mxu0 0.0
        %3034 = vmatprep.subr.mxu0 0.0
        %3035 = vmatpush1.xpose.msra.mxu0 0.0
        %3036 = vmatprep.mubr.f32.mxu0 0.0
        %3037 = vmatmul.mubr.f32.gmra.mrb[0].mxu0 %v2968
        %v3038 = vpop.f32.mrb[0].mxu0
        %v3039 = vadd.f32 0.0, %v3038
        %v3040 = vpop.f32.mrb[0].mxu0
        %3041 = vdwg.mxu0
        %v3042 = vmul.f32 %v3039, 0.25
        %v3043 = vadd.f32 %v3042, %v2707
        %v3044 = vsel %vm1032, %v3043, -inf
        %3045 = vmax.xlane.f32.xlu0 %v3044
        %v3046 = vpop.xlane.xlu0 %3045
        %v3047 = vsub.f32 %v3043, %v3046
        %v3048 = vmul.f32 %v3047, 1.442695
        %v3049 = vpow.pop %v3048
        %v3050 = vsel %vm1032, %v3049, 0.0
        %3051 = vadd.xlane.f32.xlu0 %v3050
        %v3052 = vpop.xlane.xlu0 %3051
        %v3053 = vrcp.pop %v3052
        %v3054 = vmul.f32 %v3049, %v3053
        %3055 = vrot.lane.b32.xlu0 %v2617, 32
        %v3056 = vpop.permute.xlu0 %3055
        %v3059 = vsel %vm1032, %v3054, 0
        %3061 = vmatprep.subr.mxu0 0.0
        %3062 = vmatpush1.msra.mxu0 %v3056
        %3063 = vmatprep.subr.mxu0 0.0
        %3064 = vmatpush1.msra.mxu0 0.0
        %3065 = vmatprep.subr.mxu0 0.0
        %3066 = vmatpush1.msra.mxu0 0.0
        %3067 = vmatprep.subr.mxu0 0.0
        %3068 = vmatpush1.msra.mxu0 0.0
        %3069 = vmatprep.subr.mxu0 0.0
        %3070 = vmatpush1.msra.mxu0 0.0
        %3071 = vmatprep.subr.mxu0 0.0
        %3072 = vmatpush1.msra.mxu0 0.0
        %3073 = vmatprep.subr.mxu0 0.0
        %3074 = vmatpush1.msra.mxu0 0.0
        %3075 = vmatprep.subr.mxu0 0.0
        %3076 = vmatpush1.msra.mxu0 0.0
        %3077 = vmatprep.subr.mxu0 0.0
        %3078 = vmatpush1.msra.mxu0 0.0
        %3079 = vmatprep.subr.mxu0 0.0
        %3080 = vmatpush1.msra.mxu0 0.0
        %3081 = vmatprep.subr.mxu0 0.0
        %3082 = vmatpush1.msra.mxu0 0.0
        %3083 = vmatprep.subr.mxu0 0.0
        %3084 = vmatpush1.msra.mxu0 0.0
        %3085 = vmatprep.subr.mxu0 0.0
        %3086 = vmatpush1.msra.mxu0 0.0
        %3087 = vmatprep.subr.mxu0 0.0
        %3088 = vmatpush1.msra.mxu0 0.0
        %3089 = vmatprep.subr.mxu0 0.0
        %3090 = vmatpush1.msra.mxu0 0.0
        %3091 = vmatprep.subr.mxu0 0.0
        %3092 = vmatpush1.msra.mxu0 0.0
        %3093 = vmatprep.subr.mxu0 0.0
        %3094 = vmatpush1.msra.mxu0 0.0
        %3095 = vmatprep.subr.mxu0 0.0
        %3096 = vmatpush1.msra.mxu0 0.0
        %3097 = vmatprep.subr.mxu0 0.0
        %3098 = vmatpush1.msra.mxu0 0.0
        %3099 = vmatprep.subr.mxu0 0.0
        %3100 = vmatpush1.msra.mxu0 0.0
        %3101 = vmatprep.subr.mxu0 0.0
        %3102 = vmatpush1.msra.mxu0 0.0
        %3103 = vmatprep.subr.mxu0 0.0
        %3104 = vmatpush1.msra.mxu0 0.0
        %3105 = vmatprep.subr.mxu0 0.0
        %3106 = vmatpush1.msra.mxu0 0.0
        %3107 = vmatprep.subr.mxu0 0.0
        %3108 = vmatpush1.msra.mxu0 0.0
        %3109 = vmatprep.subr.mxu0 0.0
        %3110 = vmatpush1.msra.mxu0 0.0
        %3111 = vmatprep.subr.mxu0 0.0
        %3112 = vmatpush1.msra.mxu0 0.0
        %3113 = vmatprep.subr.mxu0 0.0
        %3114 = vmatpush1.msra.mxu0 0.0
        %3115 = vmatprep.subr.mxu0 0.0
        %3116 = vmatpush1.msra.mxu0 0.0
        %3117 = vmatprep.subr.mxu0 0.0
        %3118 = vmatpush1.msra.mxu0 0.0
        %3119 = vmatprep.subr.mxu0 0.0
        %3120 = vmatpush1.msra.mxu0 0.0
        %3121 = vmatprep.subr.mxu0 0.0
        %3122 = vmatpush1.msra.mxu0 0.0
        %3123 = vmatprep.subr.mxu0 0.0
        %3124 = vmatpush1.msra.mxu0 0.0
        %3125 = vmatprep.mubr.f32.mxu0 0.0
        %3126 = vmatmul.mubr.f32.gmra.mrb[0].mxu0 %v3059
        %v3127 = vpop.f32.mrb[0].mxu0
        %v3128 = vadd.f32 0.0, %v3127
        %v3129 = vpop.f32.mrb[0].mxu0
        %3130 = vdwg.mxu0
        %3131 = vrot.lane.b32.xlu0 %v2525, 80
        %v3132 = vpop.permute.xlu0 %3131
        %3133 = vrot.lane.b32.xlu0 %v2617, 80
        %v3134 = vpop.permute.xlu0 %3133
        %v3135 = vsel %vm955, %v3132, 0
        %v3137 = vsel %vm955, %v3134, 0
        %3139 = vmatprep.subr.mxu0 0.0
        %3140 = vmatpush1.xpose.msra.mxu0 %v3137
        %3141 = vmatprep.subr.mxu0 0.0
        %3142 = vmatpush1.xpose.msra.mxu0 0.0
        %3143 = vmatprep.subr.mxu0 0.0
        %3144 = vmatpush1.xpose.msra.mxu0 0.0
        %3145 = vmatprep.subr.mxu0 0.0
        %3146 = vmatpush1.xpose.msra.mxu0 0.0
        %3147 = vmatprep.subr.mxu0 0.0
        %3148 = vmatpush1.xpose.msra.mxu0 0.0
        %3149 = vmatprep.subr.mxu0 0.0
        %3150 = vmatpush1.xpose.msra.mxu0 0.0
        %3151 = vmatprep.subr.mxu0 0.0
        %3152 = vmatpush1.xpose.msra.mxu0 0.0
        %3153 = vmatprep.subr.mxu0 0.0
        %3154 = vmatpush1.xpose.msra.mxu0 0.0
        %3155 = vmatprep.subr.mxu0 0.0
        %3156 = vmatpush1.xpose.msra.mxu0 0.0
        %3157 = vmatprep.subr.mxu0 0.0
        %3158 = vmatpush1.xpose.msra.mxu0 0.0
        %3159 = vmatprep.subr.mxu0 0.0
        %3160 = vmatpush1.xpose.msra.mxu0 0.0
        %3161 = vmatprep.subr.mxu0 0.0
        %3162 = vmatpush1.xpose.msra.mxu0 0.0
        %3163 = vmatprep.subr.mxu0 0.0
        %3164 = vmatpush1.xpose.msra.mxu0 0.0
        %3165 = vmatprep.subr.mxu0 0.0
        %3166 = vmatpush1.xpose.msra.mxu0 0.0
        %3167 = vmatprep.subr.mxu0 0.0
        %3168 = vmatpush1.xpose.msra.mxu0 0.0
        %3169 = vmatprep.subr.mxu0 0.0
        %3170 = vmatpush1.xpose.msra.mxu0 0.0
        %3171 = vmatprep.subr.mxu0 0.0
        %3172 = vmatpush1.xpose.msra.mxu0 0.0
        %3173 = vmatprep.subr.mxu0 0.0
        %3174 = vmatpush1.xpose.msra.mxu0 0.0
        %3175 = vmatprep.subr.mxu0 0.0
        %3176 = vmatpush1.xpose.msra.mxu0 0.0
        %3177 = vmatprep.subr.mxu0 0.0
        %3178 = vmatpush1.xpose.msra.mxu0 0.0
        %3179 = vmatprep.subr.mxu0 0.0
        %3180 = vmatpush1.xpose.msra.mxu0 0.0
        %3181 = vmatprep.subr.mxu0 0.0
        %3182 = vmatpush1.xpose.msra.mxu0 0.0
        %3183 = vmatprep.subr.mxu0 0.0
        %3184 = vmatpush1.xpose.msra.mxu0 0.0
        %3185 = vmatprep.subr.mxu0 0.0
        %3186 = vmatpush1.xpose.msra.mxu0 0.0
        %3187 = vmatprep.subr.mxu0 0.0
        %3188 = vmatpush1.xpose.msra.mxu0 0.0
        %3189 = vmatprep.subr.mxu0 0.0
        %3190 = vmatpush1.xpose.msra.mxu0 0.0
        %3191 = vmatprep.subr.mxu0 0.0
        %3192 = vmatpush1.xpose.msra.mxu0 0.0
        %3193 = vmatprep.subr.mxu0 0.0
        %3194 = vmatpush1.xpose.msra.mxu0 0.0
        %3195 = vmatprep.subr.mxu0 0.0
        %3196 = vmatpush1.xpose.msra.mxu0 0.0
        %3197 = vmatprep.subr.mxu0 0.0
        %3198 = vmatpush1.xpose.msra.mxu0 0.0
        %3199 = vmatprep.subr.mxu0 0.0
        %3200 = vmatpush1.xpose.msra.mxu0 0.0
        %3201 = vmatprep.subr.mxu0 0.0
        %3202 = vmatpush1.xpose.msra.mxu0 0.0
        %3203 = vmatprep.mubr.f32.mxu0 0.0
        %3204 = vmatmul.mubr.f32.gmra.mrb[0].mxu0 %v3135
        %v3205 = vpop.f32.mrb[0].mxu0
        %v3206 = vadd.f32 0.0, %v3205
        %v3207 = vpop.f32.mrb[0].mxu0
        %3208 = vdwg.mxu0
        %v3209 = vmul.f32 %v3206, 0.25
        %v3210 = vadd.f32 %v3209, %v2707
        %v3211 = vsel %vm1032, %v3210, -inf
        %3212 = vmax.xlane.f32.xlu0 %v3211
        %v3213 = vpop.xlane.xlu0 %3212
        %v3214 = vsub.f32 %v3210, %v3213
        %v3215 = vmul.f32 %v3214, 1.442695
        %v3216 = vpow.pop %v3215
        %v3217 = vsel %vm1032, %v3216, 0.0
        %3218 = vadd.xlane.f32.xlu0 %v3217
        %v3219 = vpop.xlane.xlu0 %3218
        %v3220 = vrcp.pop %v3219
        %v3221 = vmul.f32 %v3216, %v3220
        %3222 = vrot.lane.b32.xlu0 %v2617, 16
        %v3223 = vpop.permute.xlu0 %3222
        %v3226 = vsel %vm1032, %v3221, 0
        %3228 = vmatprep.subr.mxu0 0.0
        %3229 = vmatpush1.msra.mxu0 %v3223
        %3230 = vmatprep.subr.mxu0 0.0
        %3231 = vmatpush1.msra.mxu0 0.0
        %3232 = vmatprep.subr.mxu0 0.0
        %3233 = vmatpush1.msra.mxu0 0.0
        %3234 = vmatprep.subr.mxu0 0.0
        %3235 = vmatpush1.msra.mxu0 0.0
        %3236 = vmatprep.subr.mxu0 0.0
        %3237 = vmatpush1.msra.mxu0 0.0
        %3238 = vmatprep.subr.mxu0 0.0
        %3239 = vmatpush1.msra.mxu0 0.0
        %3240 = vmatprep.subr.mxu0 0.0
        %3241 = vmatpush1.msra.mxu0 0.0
        %3242 = vmatprep.subr.mxu0 0.0
        %3243 = vmatpush1.msra.mxu0 0.0
        %3244 = vmatprep.subr.mxu0 0.0
        %3245 = vmatpush1.msra.mxu0 0.0
        %3246 = vmatprep.subr.mxu0 0.0
        %3247 = vmatpush1.msra.mxu0 0.0
        %3248 = vmatprep.subr.mxu0 0.0
        %3249 = vmatpush1.msra.mxu0 0.0
        %3250 = vmatprep.subr.mxu0 0.0
        %3251 = vmatpush1.msra.mxu0 0.0
        %3252 = vmatprep.subr.mxu0 0.0
        %3253 = vmatpush1.msra.mxu0 0.0
        %3254 = vmatprep.subr.mxu0 0.0
        %3255 = vmatpush1.msra.mxu0 0.0
        %3256 = vmatprep.subr.mxu0 0.0
        %3257 = vmatpush1.msra.mxu0 0.0
        %3258 = vmatprep.subr.mxu0 0.0
        %3259 = vmatpush1.msra.mxu0 0.0
        %3260 = vmatprep.subr.mxu0 0.0
        %3261 = vmatpush1.msra.mxu0 0.0
        %3262 = vmatprep.subr.mxu0 0.0
        %3263 = vmatpush1.msra.mxu0 0.0
        %3264 = vmatprep.subr.mxu0 0.0
        %3265 = vmatpush1.msra.mxu0 0.0
        %3266 = vmatprep.subr.mxu0 0.0
        %3267 = vmatpush1.msra.mxu0 0.0
        %3268 = vmatprep.subr.mxu0 0.0
        %3269 = vmatpush1.msra.mxu0 0.0
        %3270 = vmatprep.subr.mxu0 0.0
        %3271 = vmatpush1.msra.mxu0 0.0
        %3272 = vmatprep.subr.mxu0 0.0
        %3273 = vmatpush1.msra.mxu0 0.0
        %3274 = vmatprep.subr.mxu0 0.0
        %3275 = vmatpush1.msra.mxu0 0.0
        %3276 = vmatprep.subr.mxu0 0.0
        %3277 = vmatpush1.msra.mxu0 0.0
        %3278 = vmatprep.subr.mxu0 0.0
        %3279 = vmatpush1.msra.mxu0 0.0
        %3280 = vmatprep.subr.mxu0 0.0
        %3281 = vmatpush1.msra.mxu0 0.0
        %3282 = vmatprep.subr.mxu0 0.0
        %3283 = vmatpush1.msra.mxu0 0.0
        %3284 = vmatprep.subr.mxu0 0.0
        %3285 = vmatpush1.msra.mxu0 0.0
        %3286 = vmatprep.subr.mxu0 0.0
        %3287 = vmatpush1.msra.mxu0 0.0
        %3288 = vmatprep.subr.mxu0 0.0
        %3289 = vmatpush1.msra.mxu0 0.0
        %3290 = vmatprep.subr.mxu0 0.0
        %3291 = vmatpush1.msra.mxu0 0.0
        %3292 = vmatprep.mubr.f32.mxu0 0.0
        %3293 = vmatmul.mubr.f32.gmra.mrb[0].mxu0 %v3226
        %v3294 = vpop.f32.mrb[0].mxu0
        %v3295 = vadd.f32 0.0, %v3294
        %v3296 = vpop.f32.mrb[0].mxu0
        %3297 = vdwg.mxu0
        %3299 = vrot.lane.b32.xlu0 %v2961, 16
        %v3300 = vpop.permute.xlu0 %3299
        %3303 = vrot.lane.b32.xlu0 %v3128, 32
        %v3304 = vpop.permute.xlu0 %3303
        %3307 = vrot.lane.b32.xlu0 %v3295, 48
        %v3308 = vpop.permute.xlu0 %3307
        %v3310 = vsel %vm955, %v2794, %v3300
        %v3311 = vsel %vm1632, %v3310, %v3304
        %v3312 = vsel %vm1634, %v3311, %v3308
        %s3313 = scalar_lea.vmem [#allocation3], 1
        %v3314 = vld [vmem:[%s3313] sm:$0x1]
        %v3316 = vsel %vm955, %v2530, 0
        %v3319 = vsel %vm955, %v2622, 0
        %3321 = vmatprep.subr.mxu0 0.0
        %3322 = vmatpush1.xpose.msra.mxu0 %v3319
        %3323 = vmatprep.subr.mxu0 0.0
        %3324 = vmatpush1.xpose.msra.mxu0 0.0
        %3325 = vmatprep.subr.mxu0 0.0
        %3326 = vmatpush1.xpose.msra.mxu0 0.0
        %3327 = vmatprep.subr.mxu0 0.0
        %3328 = vmatpush1.xpose.msra.mxu0 0.0
        %3329 = vmatprep.subr.mxu0 0.0
        %3330 = vmatpush1.xpose.msra.mxu0 0.0
        %3331 = vmatprep.subr.mxu0 0.0
        %3332 = vmatpush1.xpose.msra.mxu0 0.0
        %3333 = vmatprep.subr.mxu0 0.0
        %3334 = vmatpush1.xpose.msra.mxu0 0.0
        %3335 = vmatprep.subr.mxu0 0.0
        %3336 = vmatpush1.xpose.msra.mxu0 0.0
        %3337 = vmatprep.subr.mxu0 0.0
        %3338 = vmatpush1.xpose.msra.mxu0 0.0
        %3339 = vmatprep.subr.mxu0 0.0
        %3340 = vmatpush1.xpose.msra.mxu0 0.0
        %3341 = vmatprep.subr.mxu0 0.0
        %3342 = vmatpush1.xpose.msra.mxu0 0.0
        %3343 = vmatprep.subr.mxu0 0.0
        %3344 = vmatpush1.xpose.msra.mxu0 0.0
        %3345 = vmatprep.subr.mxu0 0.0
        %3346 = vmatpush1.xpose.msra.mxu0 0.0
        %3347 = vmatprep.subr.mxu0 0.0
        %3348 = vmatpush1.xpose.msra.mxu0 0.0
        %3349 = vmatprep.subr.mxu0 0.0
        %3350 = vmatpush1.xpose.msra.mxu0 0.0
        %3351 = vmatprep.subr.mxu0 0.0
        %3352 = vmatpush1.xpose.msra.mxu0 0.0
        %3353 = vmatprep.subr.mxu0 0.0
        %3354 = vmatpush1.xpose.msra.mxu0 0.0
        %3355 = vmatprep.subr.mxu0 0.0
        %3356 = vmatpush1.xpose.msra.mxu0 0.0
        %3357 = vmatprep.subr.mxu0 0.0
        %3358 = vmatpush1.xpose.msra.mxu0 0.0
        %3359 = vmatprep.subr.mxu0 0.0
        %3360 = vmatpush1.xpose.msra.mxu0 0.0
        %3361 = vmatprep.subr.mxu0 0.0
        %3362 = vmatpush1.xpose.msra.mxu0 0.0
        %3363 = vmatprep.subr.mxu0 0.0
        %3364 = vmatpush1.xpose.msra.mxu0 0.0
        %3365 = vmatprep.subr.mxu0 0.0
        %3366 = vmatpush1.xpose.msra.mxu0 0.0
        %3367 = vmatprep.subr.mxu0 0.0
        %3368 = vmatpush1.xpose.msra.mxu0 0.0
        %3369 = vmatprep.subr.mxu0 0.0
        %3370 = vmatpush1.xpose.msra.mxu0 0.0
        %3371 = vmatprep.subr.mxu0 0.0
        %3372 = vmatpush1.xpose.msra.mxu0 0.0
        %3373 = vmatprep.subr.mxu0 0.0
        %3374 = vmatpush1.xpose.msra.mxu0 0.0
        %3375 = vmatprep.subr.mxu0 0.0
        %3376 = vmatpush1.xpose.msra.mxu0 0.0
        %3377 = vmatprep.subr.mxu0 0.0
        %3378 = vmatpush1.xpose.msra.mxu0 0.0
        %3379 = vmatprep.subr.mxu0 0.0
        %3380 = vmatpush1.xpose.msra.mxu0 0.0
        %3381 = vmatprep.subr.mxu0 0.0
        %3382 = vmatpush1.xpose.msra.mxu0 0.0
        %3383 = vmatprep.subr.mxu0 0.0
        %3384 = vmatpush1.xpose.msra.mxu0 0.0
        %3385 = vmatprep.mubr.f32.mxu0 0.0
        %3386 = vmatmul.mubr.f32.gmra.mrb[0].mxu0 %v3316
        %v3387 = vpop.f32.mrb[0].mxu0
        %v3388 = vadd.f32 0.0, %v3387
        %v3389 = vpop.f32.mrb[0].mxu0
        %3390 = vdwg.mxu0
        %v3391 = vmul.f32 %v3388, 0.25
        %v3393 = vlaneseq
        %v3394 = vshrl.u32 %v3393, 7
        %v3395 = vsub.s32 0, %v3394
        %v3396 = vrot.slane %v3314, %v3395
        %v3398 = vadd.f32 %v3391, %v3396
        %v3399 = vsel %vm1032, %v3398, -inf
        %3400 = vmax.xlane.f32.xlu0 %v3399
        %v3401 = vpop.xlane.xlu0 %3400
        %v3402 = vsub.f32 %v3398, %v3401
        %v3403 = vmul.f32 %v3402, 1.442695
        %v3404 = vpow.pop %v3403
        %v3405 = vsel %vm1032, %v3404, 0.0
        %3406 = vadd.xlane.f32.xlu0 %v3405
        %v3407 = vpop.xlane.xlu0 %3406
        %v3408 = vrcp.pop %v3407
        %v3409 = vmul.f32 %v3404, %v3408
        %3410 = vrot.lane.b32.xlu0 %v2622, 64
        %v3411 = vpop.permute.xlu0 %3410
        %v3414 = vsel %vm1032, %v3409, 0
        %3416 = vmatprep.subr.mxu0 0.0
        %3417 = vmatpush1.msra.mxu0 %v3411
        %3418 = vmatprep.subr.mxu0 0.0
        %3419 = vmatpush1.msra.mxu0 0.0
        %3420 = vmatprep.subr.mxu0 0.0
        %3421 = vmatpush1.msra.mxu0 0.0
        %3422 = vmatprep.subr.mxu0 0.0
        %3423 = vmatpush1.msra.mxu0 0.0
        %3424 = vmatprep.subr.mxu0 0.0
        %3425 = vmatpush1.msra.mxu0 0.0
        %3426 = vmatprep.subr.mxu0 0.0
        %3427 = vmatpush1.msra.mxu0 0.0
        %3428 = vmatprep.subr.mxu0 0.0
        %3429 = vmatpush1.msra.mxu0 0.0
        %3430 = vmatprep.subr.mxu0 0.0
        %3431 = vmatpush1.msra.mxu0 0.0
        %3432 = vmatprep.subr.mxu0 0.0
        %3433 = vmatpush1.msra.mxu0 0.0
        %3434 = vmatprep.subr.mxu0 0.0
        %3435 = vmatpush1.msra.mxu0 0.0
        %3436 = vmatprep.subr.mxu0 0.0
        %3437 = vmatpush1.msra.mxu0 0.0
        %3438 = vmatprep.subr.mxu0 0.0
        %3439 = vmatpush1.msra.mxu0 0.0
        %3440 = vmatprep.subr.mxu0 0.0
        %3441 = vmatpush1.msra.mxu0 0.0
        %3442 = vmatprep.subr.mxu0 0.0
        %3443 = vmatpush1.msra.mxu0 0.0
        %3444 = vmatprep.subr.mxu0 0.0
        %3445 = vmatpush1.msra.mxu0 0.0
        %3446 = vmatprep.subr.mxu0 0.0
        %3447 = vmatpush1.msra.mxu0 0.0
        %3448 = vmatprep.subr.mxu0 0.0
        %3449 = vmatpush1.msra.mxu0 0.0
        %3450 = vmatprep.subr.mxu0 0.0
        %3451 = vmatpush1.msra.mxu0 0.0
        %3452 = vmatprep.subr.mxu0 0.0
        %3453 = vmatpush1.msra.mxu0 0.0
        %3454 = vmatprep.subr.mxu0 0.0
        %3455 = vmatpush1.msra.mxu0 0.0
        %3456 = vmatprep.subr.mxu0 0.0
        %3457 = vmatpush1.msra.mxu0 0.0
        %3458 = vmatprep.subr.mxu0 0.0
        %3459 = vmatpush1.msra.mxu0 0.0
        %3460 = vmatprep.subr.mxu0 0.0
        %3461 = vmatpush1.msra.mxu0 0.0
        %3462 = vmatprep.subr.mxu0 0.0
        %3463 = vmatpush1.msra.mxu0 0.0
        %3464 = vmatprep.subr.mxu0 0.0
        %3465 = vmatpush1.msra.mxu0 0.0
        %3466 = vmatprep.subr.mxu0 0.0
        %3467 = vmatpush1.msra.mxu0 0.0
        %3468 = vmatprep.subr.mxu0 0.0
        %3469 = vmatpush1.msra.mxu0 0.0
        %3470 = vmatprep.subr.mxu0 0.0
        %3471 = vmatpush1.msra.mxu0 0.0
        %3472 = vmatprep.subr.mxu0 0.0
        %3473 = vmatpush1.msra.mxu0 0.0
        %3474 = vmatprep.subr.mxu0 0.0
        %3475 = vmatpush1.msra.mxu0 0.0
        %3476 = vmatprep.subr.mxu0 0.0
        %3477 = vmatpush1.msra.mxu0 0.0
        %3478 = vmatprep.subr.mxu0 0.0
        %3479 = vmatpush1.msra.mxu0 0.0
        %3480 = vmatprep.mubr.f32.mxu0 0.0
        %3481 = vmatmul.mubr.f32.gmra.mrb[0].mxu0 %v3414
        %v3482 = vpop.f32.mrb[0].mxu0
        %v3483 = vadd.f32 0.0, %v3482
        %v3484 = vpop.f32.mrb[0].mxu0
        %3485 = vdwg.mxu0
        %3486 = vrot.lane.b32.xlu0 %v2530, 112
        %v3487 = vpop.permute.xlu0 %3486
        %3488 = vrot.lane.b32.xlu0 %v2622, 112
        %v3489 = vpop.permute.xlu0 %3488
        %v3490 = vsel %vm955, %v3487, 0
        %v3492 = vsel %vm955, %v3489, 0
        %3494 = vmatprep.subr.mxu0 0.0
        %3495 = vmatpush1.xpose.msra.mxu0 %v3492
        %3496 = vmatprep.subr.mxu0 0.0
        %3497 = vmatpush1.xpose.msra.mxu0 0.0
        %3498 = vmatprep.subr.mxu0 0.0
        %3499 = vmatpush1.xpose.msra.mxu0 0.0
        %3500 = vmatprep.subr.mxu0 0.0
        %3501 = vmatpush1.xpose.msra.mxu0 0.0
        %3502 = vmatprep.subr.mxu0 0.0
        %3503 = vmatpush1.xpose.msra.mxu0 0.0
        %3504 = vmatprep.subr.mxu0 0.0
        %3505 = vmatpush1.xpose.msra.mxu0 0.0
        %3506 = vmatprep.subr.mxu0 0.0
        %3507 = vmatpush1.xpose.msra.mxu0 0.0
        %3508 = vmatprep.subr.mxu0 0.0
        %3509 = vmatpush1.xpose.msra.mxu0 0.0
        %3510 = vmatprep.subr.mxu0 0.0
        %3511 = vmatpush1.xpose.msra.mxu0 0.0
        %3512 = vmatprep.subr.mxu0 0.0
        %3513 = vmatpush1.xpose.msra.mxu0 0.0
        %3514 = vmatprep.subr.mxu0 0.0
        %3515 = vmatpush1.xpose.msra.mxu0 0.0
        %3516 = vmatprep.subr.mxu0 0.0
        %3517 = vmatpush1.xpose.msra.mxu0 0.0
        %3518 = vmatprep.subr.mxu0 0.0
        %3519 = vmatpush1.xpose.msra.mxu0 0.0
        %3520 = vmatprep.subr.mxu0 0.0
        %3521 = vmatpush1.xpose.msra.mxu0 0.0
        %3522 = vmatprep.subr.mxu0 0.0
        %3523 = vmatpush1.xpose.msra.mxu0 0.0
        %3524 = vmatprep.subr.mxu0 0.0
        %3525 = vmatpush1.xpose.msra.mxu0 0.0
        %3526 = vmatprep.subr.mxu0 0.0
        %3527 = vmatpush1.xpose.msra.mxu0 0.0
        %3528 = vmatprep.subr.mxu0 0.0
        %3529 = vmatpush1.xpose.msra.mxu0 0.0
        %3530 = vmatprep.subr.mxu0 0.0
        %3531 = vmatpush1.xpose.msra.mxu0 0.0
        %3532 = vmatprep.subr.mxu0 0.0
        %3533 = vmatpush1.xpose.msra.mxu0 0.0
        %3534 = vmatprep.subr.mxu0 0.0
        %3535 = vmatpush1.xpose.msra.mxu0 0.0
        %3536 = vmatprep.subr.mxu0 0.0
        %3537 = vmatpush1.xpose.msra.mxu0 0.0
        %3538 = vmatprep.subr.mxu0 0.0
        %3539 = vmatpush1.xpose.msra.mxu0 0.0
        %3540 = vmatprep.subr.mxu0 0.0
        %3541 = vmatpush1.xpose.msra.mxu0 0.0
        %3542 = vmatprep.subr.mxu0 0.0
        %3543 = vmatpush1.xpose.msra.mxu0 0.0
        %3544 = vmatprep.subr.mxu0 0.0
        %3545 = vmatpush1.xpose.msra.mxu0 0.0
        %3546 = vmatprep.subr.mxu0 0.0
        %3547 = vmatpush1.xpose.msra.mxu0 0.0
        %3548 = vmatprep.subr.mxu0 0.0
        %3549 = vmatpush1.xpose.msra.mxu0 0.0
        %3550 = vmatprep.subr.mxu0 0.0
        %3551 = vmatpush1.xpose.msra.mxu0 0.0
        %3552 = vmatprep.subr.mxu0 0.0
        %3553 = vmatpush1.xpose.msra.mxu0 0.0
        %3554 = vmatprep.subr.mxu0 0.0
        %3555 = vmatpush1.xpose.msra.mxu0 0.0
        %3556 = vmatprep.subr.mxu0 0.0
        %3557 = vmatpush1.xpose.msra.mxu0 0.0
        %3558 = vmatprep.mubr.f32.mxu0 0.0
        %3559 = vmatmul.mubr.f32.gmra.mrb[0].mxu0 %v3490
        %v3560 = vpop.f32.mrb[0].mxu0
        %v3561 = vadd.f32 0.0, %v3560
        %v3562 = vpop.f32.mrb[0].mxu0
        %3563 = vdwg.mxu0
        %v3564 = vmul.f32 %v3561, 0.25
        %v3565 = vadd.f32 %v3564, %v3396
        %v3566 = vsel %vm1032, %v3565, -inf
        %3567 = vmax.xlane.f32.xlu0 %v3566
        %v3568 = vpop.xlane.xlu0 %3567
        %v3569 = vsub.f32 %v3565, %v3568
        %v3570 = vmul.f32 %v3569, 1.442695
        %v3571 = vpow.pop %v3570
        %v3572 = vsel %vm1032, %v3571, 0.0
        %3573 = vadd.xlane.f32.xlu0 %v3572
        %v3574 = vpop.xlane.xlu0 %3573
        %v3575 = vrcp.pop %v3574
        %v3576 = vmul.f32 %v3571, %v3575
        %3577 = vrot.lane.b32.xlu0 %v2622, 48
        %v3578 = vpop.permute.xlu0 %3577
        %v3581 = vsel %vm1032, %v3576, 0
        %3583 = vmatprep.subr.mxu0 0.0
        %3584 = vmatpush1.msra.mxu0 %v3578
        %3585 = vmatprep.subr.mxu0 0.0
        %3586 = vmatpush1.msra.mxu0 0.0
        %3587 = vmatprep.subr.mxu0 0.0
        %3588 = vmatpush1.msra.mxu0 0.0
        %3589 = vmatprep.subr.mxu0 0.0
        %3590 = vmatpush1.msra.mxu0 0.0
        %3591 = vmatprep.subr.mxu0 0.0
        %3592 = vmatpush1.msra.mxu0 0.0
        %3593 = vmatprep.subr.mxu0 0.0
        %3594 = vmatpush1.msra.mxu0 0.0
        %3595 = vmatprep.subr.mxu0 0.0
        %3596 = vmatpush1.msra.mxu0 0.0
        %3597 = vmatprep.subr.mxu0 0.0
        %3598 = vmatpush1.msra.mxu0 0.0
        %3599 = vmatprep.subr.mxu0 0.0
        %3600 = vmatpush1.msra.mxu0 0.0
        %3601 = vmatprep.subr.mxu0 0.0
        %3602 = vmatpush1.msra.mxu0 0.0
        %3603 = vmatprep.subr.mxu0 0.0
        %3604 = vmatpush1.msra.mxu0 0.0
        %3605 = vmatprep.subr.mxu0 0.0
        %3606 = vmatpush1.msra.mxu0 0.0
        %3607 = vmatprep.subr.mxu0 0.0
        %3608 = vmatpush1.msra.mxu0 0.0
        %3609 = vmatprep.subr.mxu0 0.0
        %3610 = vmatpush1.msra.mxu0 0.0
        %3611 = vmatprep.subr.mxu0 0.0
        %3612 = vmatpush1.msra.mxu0 0.0
        %3613 = vmatprep.subr.mxu0 0.0
        %3614 = vmatpush1.msra.mxu0 0.0
        %3615 = vmatprep.subr.mxu0 0.0
        %3616 = vmatpush1.msra.mxu0 0.0
        %3617 = vmatprep.subr.mxu0 0.0
        %3618 = vmatpush1.msra.mxu0 0.0
        %3619 = vmatprep.subr.mxu0 0.0
        %3620 = vmatpush1.msra.mxu0 0.0
        %3621 = vmatprep.subr.mxu0 0.0
        %3622 = vmatpush1.msra.mxu0 0.0
        %3623 = vmatprep.subr.mxu0 0.0
        %3624 = vmatpush1.msra.mxu0 0.0
        %3625 = vmatprep.subr.mxu0 0.0
        %3626 = vmatpush1.msra.mxu0 0.0
        %3627 = vmatprep.subr.mxu0 0.0
        %3628 = vmatpush1.msra.mxu0 0.0
        %3629 = vmatprep.subr.mxu0 0.0
        %3630 = vmatpush1.msra.mxu0 0.0
        %3631 = vmatprep.subr.mxu0 0.0
        %3632 = vmatpush1.msra.mxu0 0.0
        %3633 = vmatprep.subr.mxu0 0.0
        %3634 = vmatpush1.msra.mxu0 0.0
        %3635 = vmatprep.subr.mxu0 0.0
        %3636 = vmatpush1.msra.mxu0 0.0
        %3637 = vmatprep.subr.mxu0 0.0
        %3638 = vmatpush1.msra.mxu0 0.0
        %3639 = vmatprep.subr.mxu0 0.0
        %3640 = vmatpush1.msra.mxu0 0.0
        %3641 = vmatprep.subr.mxu0 0.0
        %3642 = vmatpush1.msra.mxu0 0.0
        %3643 = vmatprep.subr.mxu0 0.0
        %3644 = vmatpush1.msra.mxu0 0.0
        %3645 = vmatprep.subr.mxu0 0.0
        %3646 = vmatpush1.msra.mxu0 0.0
        %3647 = vmatprep.mubr.f32.mxu0 0.0
        %3648 = vmatmul.mubr.f32.gmra.mrb[0].mxu0 %v3581
        %v3649 = vpop.f32.mrb[0].mxu0
        %v3650 = vadd.f32 0.0, %v3649
        %v3651 = vpop.f32.mrb[0].mxu0
        %3652 = vdwg.mxu0
        %3653 = vrot.lane.b32.xlu0 %v2530, 96
        %v3654 = vpop.permute.xlu0 %3653
        %3655 = vrot.lane.b32.xlu0 %v2622, 96
        %v3656 = vpop.permute.xlu0 %3655
        %v3657 = vsel %vm955, %v3654, 0
        %v3659 = vsel %vm955, %v3656, 0
        %3661 = vmatprep.subr.mxu0 0.0
        %3662 = vmatpush1.xpose.msra.mxu0 %v3659
        %3663 = vmatprep.subr.mxu0 0.0
        %3664 = vmatpush1.xpose.msra.mxu0 0.0
        %3665 = vmatprep.subr.mxu0 0.0
        %3666 = vmatpush1.xpose.msra.mxu0 0.0
        %3667 = vmatprep.subr.mxu0 0.0
        %3668 = vmatpush1.xpose.msra.mxu0 0.0
        %3669 = vmatprep.subr.mxu0 0.0
        %3670 = vmatpush1.xpose.msra.mxu0 0.0
        %3671 = vmatprep.subr.mxu0 0.0
        %3672 = vmatpush1.xpose.msra.mxu0 0.0
        %3673 = vmatprep.subr.mxu0 0.0
        %3674 = vmatpush1.xpose.msra.mxu0 0.0
        %3675 = vmatprep.subr.mxu0 0.0
        %3676 = vmatpush1.xpose.msra.mxu0 0.0
        %3677 = vmatprep.subr.mxu0 0.0
        %3678 = vmatpush1.xpose.msra.mxu0 0.0
        %3679 = vmatprep.subr.mxu0 0.0
        %3680 = vmatpush1.xpose.msra.mxu0 0.0
        %3681 = vmatprep.subr.mxu0 0.0
        %3682 = vmatpush1.xpose.msra.mxu0 0.0
        %3683 = vmatprep.subr.mxu0 0.0
        %3684 = vmatpush1.xpose.msra.mxu0 0.0
        %3685 = vmatprep.subr.mxu0 0.0
        %3686 = vmatpush1.xpose.msra.mxu0 0.0
        %3687 = vmatprep.subr.mxu0 0.0
        %3688 = vmatpush1.xpose.msra.mxu0 0.0
        %3689 = vmatprep.subr.mxu0 0.0
        %3690 = vmatpush1.xpose.msra.mxu0 0.0
        %3691 = vmatprep.subr.mxu0 0.0
        %3692 = vmatpush1.xpose.msra.mxu0 0.0
        %3693 = vmatprep.subr.mxu0 0.0
        %3694 = vmatpush1.xpose.msra.mxu0 0.0
        %3695 = vmatprep.subr.mxu0 0.0
        %3696 = vmatpush1.xpose.msra.mxu0 0.0
        %3697 = vmatprep.subr.mxu0 0.0
        %3698 = vmatpush1.xpose.msra.mxu0 0.0
        %3699 = vmatprep.subr.mxu0 0.0
        %3700 = vmatpush1.xpose.msra.mxu0 0.0
        %3701 = vmatprep.subr.mxu0 0.0
        %3702 = vmatpush1.xpose.msra.mxu0 0.0
        %3703 = vmatprep.subr.mxu0 0.0
        %3704 = vmatpush1.xpose.msra.mxu0 0.0
        %3705 = vmatprep.subr.mxu0 0.0
        %3706 = vmatpush1.xpose.msra.mxu0 0.0
        %3707 = vmatprep.subr.mxu0 0.0
        %3708 = vmatpush1.xpose.msra.mxu0 0.0
        %3709 = vmatprep.subr.mxu0 0.0
        %3710 = vmatpush1.xpose.msra.mxu0 0.0
        %3711 = vmatprep.subr.mxu0 0.0
        %3712 = vmatpush1.xpose.msra.mxu0 0.0
        %3713 = vmatprep.subr.mxu0 0.0
        %3714 = vmatpush1.xpose.msra.mxu0 0.0
        %3715 = vmatprep.subr.mxu0 0.0
        %3716 = vmatpush1.xpose.msra.mxu0 0.0
        %3717 = vmatprep.subr.mxu0 0.0
        %3718 = vmatpush1.xpose.msra.mxu0 0.0
        %3719 = vmatprep.subr.mxu0 0.0
        %3720 = vmatpush1.xpose.msra.mxu0 0.0
        %3721 = vmatprep.subr.mxu0 0.0
        %3722 = vmatpush1.xpose.msra.mxu0 0.0
        %3723 = vmatprep.subr.mxu0 0.0
        %3724 = vmatpush1.xpose.msra.mxu0 0.0
        %3725 = vmatprep.mubr.f32.mxu0 0.0
        %3726 = vmatmul.mubr.f32.gmra.mrb[0].mxu0 %v3657
        %v3727 = vpop.f32.mrb[0].mxu0
        %v3728 = vadd.f32 0.0, %v3727
        %v3729 = vpop.f32.mrb[0].mxu0
        %3730 = vdwg.mxu0
        %v3731 = vmul.f32 %v3728, 0.25
        %v3732 = vadd.f32 %v3731, %v3396
        %v3733 = vsel %vm1032, %v3732, -inf
        %3734 = vmax.xlane.f32.xlu0 %v3733
        %v3735 = vpop.xlane.xlu0 %3734
        %v3736 = vsub.f32 %v3732, %v3735
        %v3737 = vmul.f32 %v3736, 1.442695
        %v3738 = vpow.pop %v3737
        %v3739 = vsel %vm1032, %v3738, 0.0
        %3740 = vadd.xlane.f32.xlu0 %v3739
        %v3741 = vpop.xlane.xlu0 %3740
        %v3742 = vrcp.pop %v3741
        %v3743 = vmul.f32 %v3738, %v3742
        %3744 = vrot.lane.b32.xlu0 %v2622, 32
        %v3745 = vpop.permute.xlu0 %3744
        %v3748 = vsel %vm1032, %v3743, 0
        %3750 = vmatprep.subr.mxu0 0.0
        %3751 = vmatpush1.msra.mxu0 %v3745
        %3752 = vmatprep.subr.mxu0 0.0
        %3753 = vmatpush1.msra.mxu0 0.0
        %3754 = vmatprep.subr.mxu0 0.0
        %3755 = vmatpush1.msra.mxu0 0.0
        %3756 = vmatprep.subr.mxu0 0.0
        %3757 = vmatpush1.msra.mxu0 0.0
        %3758 = vmatprep.subr.mxu0 0.0
        %3759 = vmatpush1.msra.mxu0 0.0
        %3760 = vmatprep.subr.mxu0 0.0
        %3761 = vmatpush1.msra.mxu0 0.0
        %3762 = vmatprep.subr.mxu0 0.0
        %3763 = vmatpush1.msra.mxu0 0.0
        %3764 = vmatprep.subr.mxu0 0.0
        %3765 = vmatpush1.msra.mxu0 0.0
        %3766 = vmatprep.subr.mxu0 0.0
        %3767 = vmatpush1.msra.mxu0 0.0
        %3768 = vmatprep.subr.mxu0 0.0
        %3769 = vmatpush1.msra.mxu0 0.0
        %3770 = vmatprep.subr.mxu0 0.0
        %3771 = vmatpush1.msra.mxu0 0.0
        %3772 = vmatprep.subr.mxu0 0.0
        %3773 = vmatpush1.msra.mxu0 0.0
        %3774 = vmatprep.subr.mxu0 0.0
        %3775 = vmatpush1.msra.mxu0 0.0
        %3776 = vmatprep.subr.mxu0 0.0
        %3777 = vmatpush1.msra.mxu0 0.0
        %3778 = vmatprep.subr.mxu0 0.0
        %3779 = vmatpush1.msra.mxu0 0.0
        %3780 = vmatprep.subr.mxu0 0.0
        %3781 = vmatpush1.msra.mxu0 0.0
        %3782 = vmatprep.subr.mxu0 0.0
        %3783 = vmatpush1.msra.mxu0 0.0
        %3784 = vmatprep.subr.mxu0 0.0
        %3785 = vmatpush1.msra.mxu0 0.0
        %3786 = vmatprep.subr.mxu0 0.0
        %3787 = vmatpush1.msra.mxu0 0.0
        %3788 = vmatprep.subr.mxu0 0.0
        %3789 = vmatpush1.msra.mxu0 0.0
        %3790 = vmatprep.subr.mxu0 0.0
        %3791 = vmatpush1.msra.mxu0 0.0
        %3792 = vmatprep.subr.mxu0 0.0
        %3793 = vmatpush1.msra.mxu0 0.0
        %3794 = vmatprep.subr.mxu0 0.0
        %3795 = vmatpush1.msra.mxu0 0.0
        %3796 = vmatprep.subr.mxu0 0.0
        %3797 = vmatpush1.msra.mxu0 0.0
        %3798 = vmatprep.subr.mxu0 0.0
        %3799 = vmatpush1.msra.mxu0 0.0
        %3800 = vmatprep.subr.mxu0 0.0
        %3801 = vmatpush1.msra.mxu0 0.0
        %3802 = vmatprep.subr.mxu0 0.0
        %3803 = vmatpush1.msra.mxu0 0.0
        %3804 = vmatprep.subr.mxu0 0.0
        %3805 = vmatpush1.msra.mxu0 0.0
        %3806 = vmatprep.subr.mxu0 0.0
        %3807 = vmatpush1.msra.mxu0 0.0
        %3808 = vmatprep.subr.mxu0 0.0
        %3809 = vmatpush1.msra.mxu0 0.0
        %3810 = vmatprep.subr.mxu0 0.0
        %3811 = vmatpush1.msra.mxu0 0.0
        %3812 = vmatprep.subr.mxu0 0.0
        %3813 = vmatpush1.msra.mxu0 0.0
        %3814 = vmatprep.mubr.f32.mxu0 0.0
        %3815 = vmatmul.mubr.f32.gmra.mrb[0].mxu0 %v3748
        %v3816 = vpop.f32.mrb[0].mxu0
        %v3817 = vadd.f32 0.0, %v3816
        %v3818 = vpop.f32.mrb[0].mxu0
        %3819 = vdwg.mxu0
        %3820 = vrot.lane.b32.xlu0 %v2530, 80
        %v3821 = vpop.permute.xlu0 %3820
        %3822 = vrot.lane.b32.xlu0 %v2622, 80
        %v3823 = vpop.permute.xlu0 %3822
        %v3824 = vsel %vm955, %v3821, 0
        %v3826 = vsel %vm955, %v3823, 0
        %3828 = vmatprep.subr.mxu0 0.0
        %3829 = vmatpush1.xpose.msra.mxu0 %v3826
        %3830 = vmatprep.subr.mxu0 0.0
        %3831 = vmatpush1.xpose.msra.mxu0 0.0
        %3832 = vmatprep.subr.mxu0 0.0
        %3833 = vmatpush1.xpose.msra.mxu0 0.0
        %3834 = vmatprep.subr.mxu0 0.0
        %3835 = vmatpush1.xpose.msra.mxu0 0.0
        %3836 = vmatprep.subr.mxu0 0.0
        %3837 = vmatpush1.xpose.msra.mxu0 0.0
        %3838 = vmatprep.subr.mxu0 0.0
        %3839 = vmatpush1.xpose.msra.mxu0 0.0
        %3840 = vmatprep.subr.mxu0 0.0
        %3841 = vmatpush1.xpose.msra.mxu0 0.0
        %3842 = vmatprep.subr.mxu0 0.0
        %3843 = vmatpush1.xpose.msra.mxu0 0.0
        %3844 = vmatprep.subr.mxu0 0.0
        %3845 = vmatpush1.xpose.msra.mxu0 0.0
        %3846 = vmatprep.subr.mxu0 0.0
        %3847 = vmatpush1.xpose.msra.mxu0 0.0
        %3848 = vmatprep.subr.mxu0 0.0
        %3849 = vmatpush1.xpose.msra.mxu0 0.0
        %3850 = vmatprep.subr.mxu0 0.0
        %3851 = vmatpush1.xpose.msra.mxu0 0.0
        %3852 = vmatprep.subr.mxu0 0.0
        %3853 = vmatpush1.xpose.msra.mxu0 0.0
        %3854 = vmatprep.subr.mxu0 0.0
        %3855 = vmatpush1.xpose.msra.mxu0 0.0
        %3856 = vmatprep.subr.mxu0 0.0
        %3857 = vmatpush1.xpose.msra.mxu0 0.0
        %3858 = vmatprep.subr.mxu0 0.0
        %3859 = vmatpush1.xpose.msra.mxu0 0.0
        %3860 = vmatprep.subr.mxu0 0.0
        %3861 = vmatpush1.xpose.msra.mxu0 0.0
        %3862 = vmatprep.subr.mxu0 0.0
        %3863 = vmatpush1.xpose.msra.mxu0 0.0
        %3864 = vmatprep.subr.mxu0 0.0
        %3865 = vmatpush1.xpose.msra.mxu0 0.0
        %3866 = vmatprep.subr.mxu0 0.0
        %3867 = vmatpush1.xpose.msra.mxu0 0.0
        %3868 = vmatprep.subr.mxu0 0.0
        %3869 = vmatpush1.xpose.msra.mxu0 0.0
        %3870 = vmatprep.subr.mxu0 0.0
        %3871 = vmatpush1.xpose.msra.mxu0 0.0
        %3872 = vmatprep.subr.mxu0 0.0
        %3873 = vmatpush1.xpose.msra.mxu0 0.0
        %3874 = vmatprep.subr.mxu0 0.0
        %3875 = vmatpush1.xpose.msra.mxu0 0.0
        %3876 = vmatprep.subr.mxu0 0.0
        %3877 = vmatpush1.xpose.msra.mxu0 0.0
        %3878 = vmatprep.subr.mxu0 0.0
        %3879 = vmatpush1.xpose.msra.mxu0 0.0
        %3880 = vmatprep.subr.mxu0 0.0
        %3881 = vmatpush1.xpose.msra.mxu0 0.0
        %3882 = vmatprep.subr.mxu0 0.0
        %3883 = vmatpush1.xpose.msra.mxu0 0.0
        %3884 = vmatprep.subr.mxu0 0.0
        %3885 = vmatpush1.xpose.msra.mxu0 0.0
        %3886 = vmatprep.subr.mxu0 0.0
        %3887 = vmatpush1.xpose.msra.mxu0 0.0
        %3888 = vmatprep.subr.mxu0 0.0
        %3889 = vmatpush1.xpose.msra.mxu0 0.0
        %3890 = vmatprep.subr.mxu0 0.0
        %3891 = vmatpush1.xpose.msra.mxu0 0.0
        %3892 = vmatprep.mubr.f32.mxu0 0.0
        %3893 = vmatmul.mubr.f32.gmra.mrb[0].mxu0 %v3824
        %v3894 = vpop.f32.mrb[0].mxu0
        %v3895 = vadd.f32 0.0, %v3894
        %v3896 = vpop.f32.mrb[0].mxu0
        %3897 = vdwg.mxu0
        %v3898 = vmul.f32 %v3895, 0.25
        %v3899 = vadd.f32 %v3898, %v3396
        %v3900 = vsel %vm1032, %v3899, -inf
        %3901 = vmax.xlane.f32.xlu0 %v3900
        %v3902 = vpop.xlane.xlu0 %3901
        %v3903 = vsub.f32 %v3899, %v3902
        %v3904 = vmul.f32 %v3903, 1.442695
        %v3905 = vpow.pop %v3904
        %v3906 = vsel %vm1032, %v3905, 0.0
        %3907 = vadd.xlane.f32.xlu0 %v3906
        %v3908 = vpop.xlane.xlu0 %3907
        %v3909 = vrcp.pop %v3908
        %v3910 = vmul.f32 %v3905, %v3909
        %3911 = vrot.lane.b32.xlu0 %v2622, 16
        %v3912 = vpop.permute.xlu0 %3911
        %v3915 = vsel %vm1032, %v3910, 0
        %3917 = vmatprep.subr.mxu0 0.0
        %3918 = vmatpush1.msra.mxu0 %v3912
        %3919 = vmatprep.subr.mxu0 0.0
        %3920 = vmatpush1.msra.mxu0 0.0
        %3921 = vmatprep.subr.mxu0 0.0
        %3922 = vmatpush1.msra.mxu0 0.0
        %3923 = vmatprep.subr.mxu0 0.0
        %3924 = vmatpush1.msra.mxu0 0.0
        %3925 = vmatprep.subr.mxu0 0.0
        %3926 = vmatpush1.msra.mxu0 0.0
        %3927 = vmatprep.subr.mxu0 0.0
        %3928 = vmatpush1.msra.mxu0 0.0
        %3929 = vmatprep.subr.mxu0 0.0
        %3930 = vmatpush1.msra.mxu0 0.0
        %3931 = vmatprep.subr.mxu0 0.0
        %3932 = vmatpush1.msra.mxu0 0.0
        %3933 = vmatprep.subr.mxu0 0.0
        %3934 = vmatpush1.msra.mxu0 0.0
        %3935 = vmatprep.subr.mxu0 0.0
        %3936 = vmatpush1.msra.mxu0 0.0
        %3937 = vmatprep.subr.mxu0 0.0
        %3938 = vmatpush1.msra.mxu0 0.0
        %3939 = vmatprep.subr.mxu0 0.0
        %3940 = vmatpush1.msra.mxu0 0.0
        %3941 = vmatprep.subr.mxu0 0.0
        %3942 = vmatpush1.msra.mxu0 0.0
        %3943 = vmatprep.subr.mxu0 0.0
        %3944 = vmatpush1.msra.mxu0 0.0
        %3945 = vmatprep.subr.mxu0 0.0
        %3946 = vmatpush1.msra.mxu0 0.0
        %3947 = vmatprep.subr.mxu0 0.0
        %3948 = vmatpush1.msra.mxu0 0.0
        %3949 = vmatprep.subr.mxu0 0.0
        %3950 = vmatpush1.msra.mxu0 0.0
        %3951 = vmatprep.subr.mxu0 0.0
        %3952 = vmatpush1.msra.mxu0 0.0
        %3953 = vmatprep.subr.mxu0 0.0
        %3954 = vmatpush1.msra.mxu0 0.0
        %3955 = vmatprep.subr.mxu0 0.0
        %3956 = vmatpush1.msra.mxu0 0.0
        %3957 = vmatprep.subr.mxu0 0.0
        %3958 = vmatpush1.msra.mxu0 0.0
        %3959 = vmatprep.subr.mxu0 0.0
        %3960 = vmatpush1.msra.mxu0 0.0
        %3961 = vmatprep.subr.mxu0 0.0
        %3962 = vmatpush1.msra.mxu0 0.0
        %3963 = vmatprep.subr.mxu0 0.0
        %3964 = vmatpush1.msra.mxu0 0.0
        %3965 = vmatprep.subr.mxu0 0.0
        %3966 = vmatpush1.msra.mxu0 0.0
        %3967 = vmatprep.subr.mxu0 0.0
        %3968 = vmatpush1.msra.mxu0 0.0
        %3969 = vmatprep.subr.mxu0 0.0
        %3970 = vmatpush1.msra.mxu0 0.0
        %3971 = vmatprep.subr.mxu0 0.0
        %3972 = vmatpush1.msra.mxu0 0.0
        %3973 = vmatprep.subr.mxu0 0.0
        %3974 = vmatpush1.msra.mxu0 0.0
        %3975 = vmatprep.subr.mxu0 0.0
        %3976 = vmatpush1.msra.mxu0 0.0
        %3977 = vmatprep.subr.mxu0 0.0
        %3978 = vmatpush1.msra.mxu0 0.0
        %3979 = vmatprep.subr.mxu0 0.0
        %3980 = vmatpush1.msra.mxu0 0.0
        %3981 = vmatprep.mubr.f32.mxu0 0.0
        %3982 = vmatmul.mubr.f32.gmra.mrb[0].mxu0 %v3915
        %v3983 = vpop.f32.mrb[0].mxu0
        %v3984 = vadd.f32 0.0, %v3983
        %v3985 = vpop.f32.mrb[0].mxu0
        %3986 = vdwg.mxu0
        %3988 = vrot.lane.b32.xlu0 %v3650, 16
        %v3989 = vpop.permute.xlu0 %3988
        %3992 = vrot.lane.b32.xlu0 %v3817, 32
        %v3993 = vpop.permute.xlu0 %3992
        %3996 = vrot.lane.b32.xlu0 %v3984, 48
        %v3997 = vpop.permute.xlu0 %3996
        %v3999 = vsel %vm955, %v3483, %v3989
        %v4000 = vsel %vm1632, %v3999, %v3993
        %v4001 = vsel %vm1634, %v4000, %v3997
        %v4002 = vld [vmem:[%s713 + $0x4] ss:$0 sm:$0xff]
        %v4003 = vld [vmem:[%s686] sm:$0xff]
        %v4004 = vld [vmem:[%s686 + $0x8] sm:$0xff]
        %v4005 = vld [vmem:[%s686 + $0x10] sm:$0xff]
        %v4006 = vld [vmem:[%s686 + $0x18] sm:$0xff]
        %v4007 = vld [vmem:[%s686 + $0x20] sm:$0xff]
        %v4008 = vld [vmem:[%s686 + $0x28] sm:$0xff]
        %v4009 = vld [vmem:[%s686 + $0x30] sm:$0xff]
        %v4010 = vld [vmem:[%s686 + $0x38] sm:$0xff]
        %v4012 = vsel %vm867, %v3312, 0
        %v4015 = vsel %vm867, %v4001, 0
        %4017 = vmatprep.subr.mxu0 0.0
        %4018 = vmatpush1.msra.mxu0 %v4003
        %4019 = vmatprep.subr.mxu0 0.0
        %4020 = vmatpush1.msra.mxu0 %v4004
        %4021 = vmatprep.subr.mxu0 0.0
        %4022 = vmatpush1.msra.mxu0 %v4005
        %4023 = vmatprep.subr.mxu0 0.0
        %4024 = vmatpush1.msra.mxu0 %v4006
        %4025 = vmatprep.subr.mxu0 0.0
        %4026 = vmatpush1.msra.mxu0 %v4007
        %4027 = vmatprep.subr.mxu0 0.0
        %4028 = vmatpush1.msra.mxu0 %v4008
        %4029 = vmatprep.subr.mxu0 0.0
        %4030 = vmatpush1.msra.mxu0 %v4009
        %4031 = vmatprep.subr.mxu0 0.0
        %4032 = vmatpush1.msra.mxu0 %v4010
        %4033 = vmatprep.subr.mxu0 0.0
        %4034 = vmatpush1.msra.mxu0 0.0
        %4035 = vmatprep.subr.mxu0 0.0
        %4036 = vmatpush1.msra.mxu0 0.0
        %4037 = vmatprep.subr.mxu0 0.0
        %4038 = vmatpush1.msra.mxu0 0.0
        %4039 = vmatprep.subr.mxu0 0.0
        %4040 = vmatpush1.msra.mxu0 0.0
        %4041 = vmatprep.subr.mxu0 0.0
        %4042 = vmatpush1.msra.mxu0 0.0
        %4043 = vmatprep.subr.mxu0 0.0
        %4044 = vmatpush1.msra.mxu0 0.0
        %4045 = vmatprep.subr.mxu0 0.0
        %4046 = vmatpush1.msra.mxu0 0.0
        %4047 = vmatprep.subr.mxu0 0.0
        %4048 = vmatpush1.msra.mxu0 0.0
        %4049 = vmatprep.subr.mxu0 0.0
        %4050 = vmatpush1.msra.mxu0 0.0
        %4051 = vmatprep.subr.mxu0 0.0
        %4052 = vmatpush1.msra.mxu0 0.0
        %4053 = vmatprep.subr.mxu0 0.0
        %4054 = vmatpush1.msra.mxu0 0.0
        %4055 = vmatprep.subr.mxu0 0.0
        %4056 = vmatpush1.msra.mxu0 0.0
        %4057 = vmatprep.subr.mxu0 0.0
        %4058 = vmatpush1.msra.mxu0 0.0
        %4059 = vmatprep.subr.mxu0 0.0
        %4060 = vmatpush1.msra.mxu0 0.0
        %4061 = vmatprep.subr.mxu0 0.0
        %4062 = vmatpush1.msra.mxu0 0.0
        %4063 = vmatprep.subr.mxu0 0.0
        %4064 = vmatpush1.msra.mxu0 0.0
        %4065 = vmatprep.subr.mxu0 0.0
        %4066 = vmatpush1.msra.mxu0 0.0
        %4067 = vmatprep.subr.mxu0 0.0
        %4068 = vmatpush1.msra.mxu0 0.0
        %4069 = vmatprep.subr.mxu0 0.0
        %4070 = vmatpush1.msra.mxu0 0.0
        %4071 = vmatprep.subr.mxu0 0.0
        %4072 = vmatpush1.msra.mxu0 0.0
        %4073 = vmatprep.subr.mxu0 0.0
        %4074 = vmatpush1.msra.mxu0 0.0
        %4075 = vmatprep.subr.mxu0 0.0
        %4076 = vmatpush1.msra.mxu0 0.0
        %4077 = vmatprep.subr.mxu0 0.0
        %4078 = vmatpush1.msra.mxu0 0.0
        %4079 = vmatprep.subr.mxu0 0.0
        %4080 = vmatpush1.msra.mxu0 0.0
        %4081 = vmatprep.mubr.f32.mxu0 0.0
        %4082 = vmatmul.mubr.f32.gmra.mrb[0].mxu0 %v4012
        %v4083 = vpop.f32.mrb[0].mxu0
        %v4084 = vadd.f32 %v4002, %v4083
        %v4085 = vpop.f32.mrb[0].mxu0
        %4086 = vmatprep.mubr.f32.mxu0 0.0
        %4087 = vmatmul.mubr.f32.gmra.mrb[0].mxu0 %v4015
        %v4088 = vpop.f32.mrb[0].mxu0
        %v4089 = vadd.f32 %v4002, %v4088
        %v4090 = vpop.f32.mrb[0].mxu0
        %4091 = vdwg.mxu0
        %v4092 = vadd.f32 %v2441, %v4084
        %v4093 = vadd.f32 %v2442, %v4089
        %v4094 = vld [vmem:[%s713 + $0x11] ss:$0 sm:$0xff]
        %v4095 = vld [vmem:[%s713 + $0x12] ss:$0 sm:$0xff]
        %v4096 = vsel %vm867, %v4092, 0.0
        %4097 = vadd.xlane.f32.xlu0 %v4096
        %v4098 = vpop.xlane.xlu0 %4097
        %v4099 = vsel %vm867, %v4093, 0.0
        %4100 = vadd.xlane.f32.xlu0 %v4099
        %v4101 = vpop.xlane.xlu0 %4100
        %v4102 = vmul.f32 %v4098, %v2418
        %v4103 = vmul.f32 %v4101, %v2418
        %v4104 = vsub.f32 %v4092, %v4102
        %v4105 = vsub.f32 %v4093, %v4103
        %v4106 = vmul.f32 %v4104, %v4104
        %v4107 = vmul.f32 %v4105, %v4105
        %v4108 = vsel %vm867, %v4106, 0.0
        %4109 = vadd.xlane.f32.xlu0 %v4108
        %v4110 = vpop.xlane.xlu0 %4109
        %v4111 = vsel %vm867, %v4107, 0.0
        %4112 = vadd.xlane.f32.xlu0 %v4111
        %v4113 = vpop.xlane.xlu0 %4112
        %v4114 = vmul.f32 %v4110, %v2418
        %v4115 = vmul.f32 %v4113, %v2418
        %v4116 = vadd.f32 %v4114, 1e-05
        %v4117 = vadd.f32 %v4115, 1e-05
        %v4118 = vrsqrt.pop %v4116
        %v4119 = vrsqrt.pop %v4117
        %v4120 = vmul.f32 %v4104, %v4118
        %v4121 = vmul.f32 %v4105, %v4119
        %v4122 = vmul.f32 %v4120, %v4094
        %v4123 = vmul.f32 %v4121, %v4094
        %v4124 = vadd.f32 %v4122, %v4095
        %v4125 = vadd.f32 %v4123, %v4095
        %v4126 = vld [vmem:[%s713 + $0x5] ss:$0 sm:$0xff]
        %v4127 = vld [vmem:[%s695] sm:$0xff]
        %v4128 = vld [vmem:[%s695 + $0x8] sm:$0xff]
        %v4129 = vld [vmem:[%s695 + $0x10] sm:$0xff]
        %v4130 = vld [vmem:[%s695 + $0x18] sm:$0xff]
        %v4131 = vld [vmem:[%s695 + $0x20] sm:$0xff]
        %v4132 = vld [vmem:[%s695 + $0x28] sm:$0xff]
        %v4133 = vld [vmem:[%s695 + $0x30] sm:$0xff]
        %v4134 = vld [vmem:[%s695 + $0x38] sm:$0xff]
        %v4136 = vsel %vm867, %v4124, 0
        %v4139 = vsel %vm867, %v4125, 0
        %4141 = vmatprep.subr.mxu0 0.0
        %4142 = vmatpush1.msra.mxu0 %v4127
        %4143 = vmatprep.subr.mxu0 0.0
        %4144 = vmatpush1.msra.mxu0 %v4128
        %4145 = vmatprep.subr.mxu0 0.0
        %4146 = vmatpush1.msra.mxu0 %v4129
        %4147 = vmatprep.subr.mxu0 0.0
        %4148 = vmatpush1.msra.mxu0 %v4130
        %4149 = vmatprep.subr.mxu0 0.0
        %4150 = vmatpush1.msra.mxu0 %v4131
        %4151 = vmatprep.subr.mxu0 0.0
        %4152 = vmatpush1.msra.mxu0 %v4132
        %4153 = vmatprep.subr.mxu0 0.0
        %4154 = vmatpush1.msra.mxu0 %v4133
        %4155 = vmatprep.subr.mxu0 0.0
        %4156 = vmatpush1.msra.mxu0 %v4134
        %4157 = vmatprep.subr.mxu0 0.0
        %4158 = vmatpush1.msra.mxu0 0.0
        %4159 = vmatprep.subr.mxu0 0.0
        %4160 = vmatpush1.msra.mxu0 0.0
        %4161 = vmatprep.subr.mxu0 0.0
        %4162 = vmatpush1.msra.mxu0 0.0
        %4163 = vmatprep.subr.mxu0 0.0
        %4164 = vmatpush1.msra.mxu0 0.0
        %4165 = vmatprep.subr.mxu0 0.0
        %4166 = vmatpush1.msra.mxu0 0.0
        %4167 = vmatprep.subr.mxu0 0.0
        %4168 = vmatpush1.msra.mxu0 0.0
        %4169 = vmatprep.subr.mxu0 0.0
        %4170 = vmatpush1.msra.mxu0 0.0
        %4171 = vmatprep.subr.mxu0 0.0
        %4172 = vmatpush1.msra.mxu0 0.0
        %4173 = vmatprep.subr.mxu0 0.0
        %4174 = vmatpush1.msra.mxu0 0.0
        %4175 = vmatprep.subr.mxu0 0.0
        %4176 = vmatpush1.msra.mxu0 0.0
        %4177 = vmatprep.subr.mxu0 0.0
        %4178 = vmatpush1.msra.mxu0 0.0
        %4179 = vmatprep.subr.mxu0 0.0
        %4180 = vmatpush1.msra.mxu0 0.0
        %4181 = vmatprep.subr.mxu0 0.0
        %4182 = vmatpush1.msra.mxu0 0.0
        %4183 = vmatprep.subr.mxu0 0.0
        %4184 = vmatpush1.msra.mxu0 0.0
        %4185 = vmatprep.subr.mxu0 0.0
        %4186 = vmatpush1.msra.mxu0 0.0
        %4187 = vmatprep.subr.mxu0 0.0
        %4188 = vmatpush1.msra.mxu0 0.0
        %4189 = vmatprep.subr.mxu0 0.0
        %4190 = vmatpush1.msra.mxu0 0.0
        %4191 = vmatprep.subr.mxu0 0.0
        %4192 = vmatpush1.msra.mxu0 0.0
        %4193 = vmatprep.subr.mxu0 0.0
        %4194 = vmatpush1.msra.mxu0 0.0
        %4195 = vmatprep.subr.mxu0 0.0
        %4196 = vmatpush1.msra.mxu0 0.0
        %4197 = vmatprep.subr.mxu0 0.0
        %4198 = vmatpush1.msra.mxu0 0.0
        %4199 = vmatprep.subr.mxu0 0.0
        %4200 = vmatpush1.msra.mxu0 0.0
        %4201 = vmatprep.subr.mxu0 0.0
        %4202 = vmatpush1.msra.mxu0 0.0
        %4203 = vmatprep.subr.mxu0 0.0
        %4204 = vmatpush1.msra.mxu0 0.0
        %4205 = vmatprep.mubr.f32.mxu0 0.0
        %4206 = vmatmul.mubr.f32.gmra.mrb[0].mxu0 %v4136
        %v4207 = vpop.f32.mrb[0].mxu0
        %v4208 = vadd.f32 %v4126, %v4207
        %v4209 = vpop.f32.mrb[0].mxu0
        %4210 = vmatprep.mubr.f32.mxu0 0.0
        %4211 = vmatmul.mubr.f32.gmra.mrb[0].mxu0 %v4139
        %v4212 = vpop.f32.mrb[0].mxu0
        %v4213 = vadd.f32 %v4126, %v4212
        %v4214 = vpop.f32.mrb[0].mxu0
        %4215 = vdwg.mxu0
        %v4216 = vmul.f32 %v4208, 0.5
        %v4217 = vmul.f32 %v4213, 0.5
        %v4218 = vmul.f32 %v4208, 0.70710677
        %v4219 = vmul.f32 %v4213, 0.70710677
        %v4220 = verf.f32.pop %v4218
        %v4221 = verf.f32.pop %v4219
        %v4222 = vadd.f32 %v4220, 1.0
        %v4223 = vadd.f32 %v4221, 1.0
        %v4224 = vmul.f32 %v4216, %v4222
        %v4225 = vmul.f32 %v4217, %v4223
        %v4226 = vld [vmem:[%s713 + $0x6] ss:$0 sm:$0xff]
        %v4227 = vld [vmem:[%s704] sm:$0xff]
        %v4228 = vld [vmem:[%s704 + $0x8] sm:$0xff]
        %v4229 = vld [vmem:[%s704 + $0x10] sm:$0xff]
        %v4230 = vld [vmem:[%s704 + $0x18] sm:$0xff]
        %v4231 = vld [vmem:[%s704 + $0x20] sm:$0xff]
        %v4232 = vld [vmem:[%s704 + $0x28] sm:$0xff]
        %v4233 = vld [vmem:[%s704 + $0x30] sm:$0xff]
        %v4234 = vld [vmem:[%s704 + $0x38] sm:$0xff]
        %v4235 = vld [vmem:[%s704 + $0x40] sm:$0xff]
        %v4236 = vld [vmem:[%s704 + $0x48] sm:$0xff]
        %v4237 = vld [vmem:[%s704 + $0x50] sm:$0xff]
        %v4238 = vld [vmem:[%s704 + $0x58] sm:$0xff]
        %v4239 = vld [vmem:[%s704 + $0x60] sm:$0xff]
        %v4240 = vld [vmem:[%s704 + $0x68] sm:$0xff]
        %v4241 = vld [vmem:[%s704 + $0x70] sm:$0xff]
        %v4242 = vld [vmem:[%s704 + $0x78] sm:$0xff]
        %4243 = vmatprep.subr.mxu0 0.0
        %4244 = vmatpush1.msra.mxu0 %v4227
        %4245 = vmatprep.subr.mxu0 0.0
        %4246 = vmatpush1.msra.mxu0 %v4228
        %4247 = vmatprep.subr.mxu0 0.0
        %4248 = vmatpush1.msra.mxu0 %v4229
        %4249 = vmatprep.subr.mxu0 0.0
        %4250 = vmatpush1.msra.mxu0 %v4230
        %4251 = vmatprep.subr.mxu0 0.0
        %4252 = vmatpush1.msra.mxu0 %v4231
        %4253 = vmatprep.subr.mxu0 0.0
        %4254 = vmatpush1.msra.mxu0 %v4232
        %4255 = vmatprep.subr.mxu0 0.0
        %4256 = vmatpush1.msra.mxu0 %v4233
        %4257 = vmatprep.subr.mxu0 0.0
        %4258 = vmatpush1.msra.mxu0 %v4234
        %4259 = vmatprep.subr.mxu0 0.0
        %4260 = vmatpush1.msra.mxu0 %v4235
        %4261 = vmatprep.subr.mxu0 0.0
        %4262 = vmatpush1.msra.mxu0 %v4236
        %4263 = vmatprep.subr.mxu0 0.0
        %4264 = vmatpush1.msra.mxu0 %v4237
        %4265 = vmatprep.subr.mxu0 0.0
        %4266 = vmatpush1.msra.mxu0 %v4238
        %4267 = vmatprep.subr.mxu0 0.0
        %4268 = vmatpush1.msra.mxu0 %v4239
        %4269 = vmatprep.subr.mxu0 0.0
        %4270 = vmatpush1.msra.mxu0 %v4240
        %4271 = vmatprep.subr.mxu0 0.0
        %4272 = vmatpush1.msra.mxu0 %v4241
        %4273 = vmatprep.subr.mxu0 0.0
        %4274 = vmatpush1.msra.mxu0 %v4242
        %4275 = vmatprep.subr.mxu0 0.0
        %4276 = vmatpush1.msra.mxu0 0.0
        %4277 = vmatprep.subr.mxu0 0.0
        %4278 = vmatpush1.msra.mxu0 0.0
        %4279 = vmatprep.subr.mxu0 0.0
        %4280 = vmatpush1.msra.mxu0 0.0
        %4281 = vmatprep.subr.mxu0 0.0
        %4282 = vmatpush1.msra.mxu0 0.0
        %4283 = vmatprep.subr.mxu0 0.0
        %4284 = vmatpush1.msra.mxu0 0.0
        %4285 = vmatprep.subr.mxu0 0.0
        %4286 = vmatpush1.msra.mxu0 0.0
        %4287 = vmatprep.subr.mxu0 0.0
        %4288 = vmatpush1.msra.mxu0 0.0
        %4289 = vmatprep.subr.mxu0 0.0
        %4290 = vmatpush1.msra.mxu0 0.0
        %4291 = vmatprep.subr.mxu0 0.0
        %4292 = vmatpush1.msra.mxu0 0.0
        %4293 = vmatprep.subr.mxu0 0.0
        %4294 = vmatpush1.msra.mxu0 0.0
        %4295 = vmatprep.subr.mxu0 0.0
        %4296 = vmatpush1.msra.mxu0 0.0
        %4297 = vmatprep.subr.mxu0 0.0
        %4298 = vmatpush1.msra.mxu0 0.0
        %4299 = vmatprep.subr.mxu0 0.0
        %4300 = vmatpush1.msra.mxu0 0.0
        %4301 = vmatprep.subr.mxu0 0.0
        %4302 = vmatpush1.msra.mxu0 0.0
        %4303 = vmatprep.subr.mxu0 0.0
        %4304 = vmatpush1.msra.mxu0 0.0
        %4305 = vmatprep.subr.mxu0 0.0
        %4306 = vmatpush1.msra.mxu0 0.0
        %4307 = vmatprep.mubr.f32.mxu0 0.0
        %4308 = vmatmul.mubr.f32.gmra.mrb[0].mxu0 %v4224
        %v4309 = vpop.f32.mrb[0].mxu0
        %v4310 = vadd.f32 %v4226, %v4309
        %v4311 = vpop.f32.mrb[0].mxu0
        %4312 = vmatprep.mubr.f32.mxu0 0.0
        %4313 = vmatmul.mubr.f32.gmra.mrb[0].mxu0 %v4225
        %v4314 = vpop.f32.mrb[0].mxu0
        %v4315 = vadd.f32 %v4226, %v4314
        %v4316 = vpop.f32.mrb[0].mxu0
        %4317 = vdwg.mxu0
        %v4318 = vadd.f32 %v4124, %v4310
        %v4319 = vadd.f32 %v4125, %v4315
        %v4320 = vld [vmem:[%s713 + $0x13] ss:$0 sm:$0xff]
        %v4321 = vld [vmem:[%s713 + $0x14] ss:$0 sm:$0xff]
        %v4322 = vsel %vm867, %v4318, 0.0
        %4323 = vadd.xlane.f32.xlu0 %v4322
        %v4324 = vpop.xlane.xlu0 %4323
        %v4325 = vsel %vm867, %v4319, 0.0
        %4326 = vadd.xlane.f32.xlu0 %v4325
        %v4327 = vpop.xlane.xlu0 %4326
        %v4328 = vmul.f32 %v4324, %v2418
        %v4329 = vmul.f32 %v4327, %v2418
        %v4330 = vsub.f32 %v4318, %v4328
        %v4331 = vsub.f32 %v4319, %v4329
        %v4332 = vmul.f32 %v4330, %v4330
        %v4333 = vmul.f32 %v4331, %v4331
        %v4334 = vsel %vm867, %v4332, 0.0
        %4335 = vadd.xlane.f32.xlu0 %v4334
        %v4336 = vpop.xlane.xlu0 %4335
        %v4337 = vsel %vm867, %v4333, 0.0
        %4338 = vadd.xlane.f32.xlu0 %v4337
        %v4339 = vpop.xlane.xlu0 %4338
        %v4340 = vmul.f32 %v4336, %v2418
        %v4341 = vmul.f32 %v4339, %v2418
        %v4342 = vadd.f32 %v4340, 1e-05
        %v4343 = vadd.f32 %v4341, 1e-05
        %v4344 = vrsqrt.pop %v4342
        %v4345 = vrsqrt.pop %v4343
        %v4346 = vmul.f32 %v4330, %v4344
        %v4347 = vmul.f32 %v4331, %v4345
        %v4348 = vmul.f32 %v4346, %v4320
        %v4349 = vmul.f32 %v4347, %v4320
        %v4350 = vadd.f32 %v4348, %v4321
        %v4351 = vadd.f32 %v4349, %v4321
        %4352 = vst.msk [vmem:[#allocation20] sm:$0xff] %vm867, %v4350
        %4353 = vst.msk [vmem:[#allocation20 + $0x8] sm:$0xff] %vm867, %v4351
        // Predicated region
        $region121: #{modified_decoder_forward.1} parent=67 // pred_check
          %p4354 = pneg %p369
        $region122: #{modified_decoder_forward.1} parent=67 // pred_check_branch
          %4356 = sbr.rel (%p4354) target = $region124
        $region123: #{modified_decoder_forward.1} parent=67 // pred_region
          %s4357 = smul.u32 2, %s31
          %s4359 = ssub.s32 256, 256
          %4360 = vsyncadd [#allocation6], %s4359
          %s4361 = smul.addr %s4357, 128
          %s4362 = scalar_lea.hbm %s12, %s4361
          %s4363 = sshll.u32 [#allocation20], 4
          %s4364 = int_to_ptr.vmem [resolvable:$true] %s4363
          %4369 = dma.vmem_to_hbm [thread:$0]  %s4364, 256, %s4362, [#allocation6], 128, 128, 8
        $region124: #{modified_decoder_forward.1} parent=67 // pred_fallthru
          _
        // Predicated region
        $region125: #{modified_decoder_forward.1} parent=67 // pred_check
          %p4370 = pneg %p369
        $region126: #{modified_decoder_forward.1} parent=67 // pred_check_branch
          %4372 = sbr.rel (%p4370) target = $region128
        $region127: #{modified_decoder_forward.1} parent=67 // pred_region
          %4373 = dma.done [#allocation6], 256
        $region128: #{modified_decoder_forward.1} parent=67 // pred_fallthru
          _
      $region68: #{modified_decoder_forward.1} parent=5 // pred_fallthru
        _
      %p4374 = scmp.le.s32.totalorder 2, %s22
      // Predicated region
      $region129: #{modified_decoder_forward.1} parent=5 // pred_check
        %p4375 = pneg %p4374
      $region130: #{modified_decoder_forward.1} parent=5 // pred_check_branch
        %4377 = sbr.rel (%p4375) target = $region132
      $region131: #{modified_decoder_forward.1} parent=5 // pred_region
        %s4378 = ssub.s32 %s22, 2
      $region132: #{modified_decoder_forward.1} parent=5 // pred_fallthru
        _
    $region6: #{modified_decoder_forward.1} parent=1 // loop_footer
      %s26 = sadd.s32 1, %s22
    $region7: #{modified_decoder_forward.1} parent=1 // loop_footer_branch
      %21 = sbr.rel target = $region3
    $region8: #{modified_decoder_forward.1} parent=1 // loop_exit
      _
    %4379 = vsyncpa [#allocation5], 1
    %s4380 = scalar_lea.sflag [#allocation5], 1
    %4381 = vsyncpa %s4380, 1
    %4382 = vsyncpa [#allocation8], 1
    %4383 = vsyncpa [#allocation11], 1
    %4384 = vsyncpa [#allocation6], 1
    %s4385 = scalar_lea.sflag [#allocation6], 1
    %4386 = vsyncpa %s4385, 1

</llo_original>
